<compile_context>
chip_gen: v7x
topology: tpu7x:2x2x1
jax: 0.10.0
libtpu: 0.0.40
codegen_flags: <defaults>
</compile_context>

<pallas_src>
import functools

import jax
import jax.numpy as jnp
from jax.experimental import pallas as pl
from jax.experimental.pallas import tpu as pltpu

C_IN = 12              # num_input_channels
DYN = 4                # dynamic_size
TOT = C_IN + DYN - 3   # 13 = tot_input_channels
KSIZE = 7              # bilateral window
RB = KSIZE // 2        # 3


# ----------------------------------------------------------------------------
# Fused per-(batch,frame) kernel.
# ----------------------------------------------------------------------------
def _fpcnn_kernel(x_ref, mask_ref, w1_ref, b1_ref, w2_ref, b2_ref,
                  wd_ref, bd_ref, a_ref, s_ref, o_ref,
                  h_ref, ext_ref, *, H, W, LBUF):
    HW = H * W

    def colmask(ox):
        # validity of the horizontal neighbour offset `ox` per output column
        return mask_ref[ox + RB:ox + RB + 1, :]               # (1, HW)

    def shifted(buf_ref, oy, ox):
        # buf is [data(HW) | zeros(tail)]; circular roll emulates vertical
        # zero padding, horizontal wrap is masked by colmask afterwards.
        v = buf_ref[...]
        sh = (-(oy * W + ox)) % LBUF
        if sh:
            v = pltpu.roll(v, sh, axis=1)
        return v[:, 0:HW]

    def conv3x3(buf_ref, w_ref, b_ref, relu):
        cout = w_ref.shape[1]
        acc = jnp.zeros((cout, HW), jnp.float32)
        for oy in range(-1, 2):
            for ox in range(-1, 2):
                t = (oy + 1) * 3 + (ox + 1)
                xs = shifted(buf_ref, oy, ox) * colmask(ox)    # (cin, HW)
                acc = acc + jnp.dot(w_ref[t], xs,
                                    preferred_element_type=jnp.float32)
        acc = acc + b_ref[...]
        if relu:
            acc = jnp.maximum(acc, 0.0)
        return acc

    # ---- stage 1: fused fixed/dyn encoder conv1 (12 -> 26) + ReLU --------
    h = conv3x3(x_ref, w1_ref, b1_ref, relu=True)              # (26, HW)
    h_ref[:, 0:HW] = h
    h_ref[:, HW:LBUF] = jnp.zeros((2 * TOT, LBUF - HW), jnp.float32)

    # ---- stage 2: fused conv2 (26 -> 13): rows 0:4 = enc, 4:13 = fixed ---
    ext = conv3x3(h_ref, w2_ref, b2_ref, relu=False)           # (13, HW)

    # ---- stage 3: semi-fixed bilateral filter (7x7, expanded square) -----
    a = jnp.maximum(a_ref[...], 0.0)                           # clamp >= 0
    q = jnp.sum(a * ext * ext, axis=0, keepdims=True)          # (1, HW)
    ext_ref[0:TOT, 0:HW] = ext
    ext_ref[TOT:TOT + 1, 0:HW] = jnp.ones((1, HW), jnp.float32)   # validity
    ext_ref[TOT + 1:TOT + 2, 0:HW] = q
    ext_ref[:, HW:LBUF] = jnp.zeros((TOT + 2, LBUF - HW), jnp.float32)

    axc = a * ext                                              # (13, HW)
    num = jnp.zeros((DYN, HW), jnp.float32)
    den = jnp.zeros((1, HW), jnp.float32)
    for oy in range(-RB, RB + 1):
        for ox in range(-RB, RB + 1):
            t = (oy + RB) * KSIZE + (ox + RB)
            v = ext_ref[...]
            sh = (-(oy * W + ox)) % LBUF
            if sh:
                v = pltpu.roll(v, sh, axis=1)
            v = v[:, 0:HW]
            xs = v[0:TOT, :]                                   # neighbour values
            vs = v[TOT:TOT + 1, :] * colmask(ox)               # neighbour validity
            qs = v[TOT + 1:TOT + 2, :]                         # neighbour q
            cross = jnp.sum(axc * xs, axis=0, keepdims=True)
            d2 = q + qs - 2.0 * cross                          # sum_c a_c (xc-xs)^2
            wgt = jnp.exp(-(d2 + s_ref[t])) * vs               # (1, HW)
            num = num + wgt * xs[0:DYN, :]
            den = den + wgt
    filt = num * pl.reciprocal(den, approx=True)               # (4, HW)

    # ---- stage 4: decoder on [filt | fixed] (reuses ext buffer) ----------
    # Overwrite the enc rows with filt; rows 13/14 (validity, q) get zero
    # decoder weights so they contribute nothing.
    ext_ref[0:DYN, 0:HW] = filt
    dec = conv3x3(ext_ref, wd_ref, bd_ref, relu=False)         # (3, HW)

    albedo = x_ref[3:6, 0:HW]                                  # input chans 3:6
    o_ref[...] = (albedo * dec).astype(o_ref.dtype)


# ----------------------------------------------------------------------------
# Parameter preparation (kernel-friendly layouts).
# ----------------------------------------------------------------------------
def _conv_w_taps(w_hwio):
    # (3, 3, cin, cout) -> (9, cout, cin), tap-major (oy, ox)
    kh, kw, cin, cout = w_hwio.shape
    return jnp.transpose(w_hwio, (0, 1, 3, 2)).reshape(kh * kw, cout, cin)


def prepare_kernel_params(params):
    w_fe1, b_fe1 = params["fe1"]
    w_fe2, b_fe2 = params["fe2"]
    w_de1, b_de1 = params["de1"]
    w_de2, b_de2 = params["de2"]
    w_dec, b_dec = params["dec"]

    # fused first conv: outputs 0:13 = fixed_encoder path, 13:26 = dyn path
    w1 = _conv_w_taps(jnp.concatenate([w_fe1, w_de1], axis=3))       # (9, 26, 12)
    b1 = jnp.concatenate([b_fe1, b_de1], axis=1).reshape(2 * TOT, 1)

    # fused second conv -> ext: rows 0:4 = de2(h[13:26]), rows 4:13 = fe2(h[0:13])
    w_de2_t = _conv_w_taps(w_de2)                                    # (9, 4, 13)
    w_fe2_t = _conv_w_taps(w_fe2)                                    # (9, 9, 13)
    top = jnp.concatenate(
        [jnp.zeros((9, DYN, TOT), jnp.float32), w_de2_t], axis=2)    # (9, 4, 26)
    bot = jnp.concatenate(
        [w_fe2_t, jnp.zeros((9, C_IN - 3, TOT), jnp.float32)], axis=2)  # (9, 9, 26)
    w2 = jnp.concatenate([top, bot], axis=1)                         # (9, 13, 26)
    b2 = jnp.concatenate([b_de2, b_fe2], axis=1).reshape(TOT, 1)

    # decoder: input = [filt(4) | fixed(9)] + 2 zero channels (validity, q)
    wd = jnp.concatenate([_conv_w_taps(w_dec),
                          jnp.zeros((9, 3, 2), jnp.float32)], axis=2)  # (9, 3, 15)
    bd = b_dec.reshape(3, 1)

    return {"w1": w1, "b1": b1, "w2": w2, "b2": b2, "wd": wd, "bd": bd,
            "a": params["bf_a"].reshape(TOT, 1),
            "spatial": params["bf_spatial"].reshape(KSIZE * KSIZE)}


def _col_masks(H, W):
    # (7, H*W): mask[k, n] = 1 iff column(n) + (k-3) is inside [0, W)
    col = jnp.arange(H * W, dtype=jnp.int32) % W
    offs = jnp.arange(-RB, RB + 1, dtype=jnp.int32)
    nb = col[None, :] + offs[:, None]
    return jnp.logical_and(nb >= 0, nb < W).astype(jnp.float32)


# ----------------------------------------------------------------------------
# Deterministic parameter init (synthetic; no checkpoint).
# ----------------------------------------------------------------------------
def init_params(key):
    ks = jax.random.split(key, 6)

    def conv_init(k, cin, cout, scale=0.1):
        kw_, kb_ = jax.random.split(k)
        w = scale * jax.random.normal(kw_, (3, 3, cin, cout), jnp.float32)
        b = scale * jax.random.normal(kb_, (1, cout), jnp.float32)
        return w, b

    params = {
        "fe1": conv_init(ks[0], C_IN, TOT),        # fixed_encoder conv1 (12->13)
        "fe2": conv_init(ks[1], TOT, C_IN - 3),    # fixed_encoder conv2 (13->9)
        "de1": conv_init(ks[2], C_IN, TOT),        # dyn_encoder conv1   (12->13)
        "de2": conv_init(ks[3], TOT, DYN),         # dyn_encoder conv2   (13->4)
        "dec": conv_init(ks[4], TOT, 3),           # decoder             (13->3)
    }
    a = 0.5 + 0.1 * jax.random.normal(ks[5], (TOT, 1), jnp.float32)
    params["bf_a"] = jnp.maximum(a, 0.0)
    sigma_sp = 2.0
    d = jnp.arange(KSIZE, dtype=jnp.float32) - RB
    dist2 = (d[:, None] ** 2 + d[None, :] ** 2).reshape(-1)            # (49,)
    params["bf_spatial"] = dist2 / (2.0 * sigma_sp * sigma_sp)
    return params


# ----------------------------------------------------------------------------
# Forward pass (NCHW in / NCHW out, like the PyTorch module).
# ----------------------------------------------------------------------------
def forward(x_nchw, params):
    B, c_all, H, W = x_nchw.shape
    nf = c_all // C_IN
    HW = H * W
    # zero tail so a circular lane roll emulates vertical zero padding
    tail = 128 * pl.cdiv(RB * W + RB, 128)
    LBUF = 128 * pl.cdiv(HW, 128) + tail

    x_flat = x_nchw.reshape(B * nf, C_IN, HW)
    x_buf = jnp.pad(x_flat, ((0, 0), (0, 0), (0, LBUF - HW)))

    kp = prepare_kernel_params(params)
    masks = _col_masks(H, W)

    out = pl.pallas_call(
        functools.partial(_fpcnn_kernel, H=H, W=W, LBUF=LBUF),
        out_shape=jax.ShapeDtypeStruct((B * nf, 3, HW), jnp.float32),
        grid=(B * nf,),
        in_specs=[
            pl.BlockSpec((None, C_IN, LBUF), lambda n: (n, 0, 0)),   # frame
            pl.BlockSpec((KSIZE, HW), lambda n: (0, 0)),             # col masks
            pl.BlockSpec((9, 2 * TOT, C_IN), lambda n: (0, 0, 0)),   # w1
            pl.BlockSpec((2 * TOT, 1), lambda n: (0, 0)),            # b1
            pl.BlockSpec((9, TOT, 2 * TOT), lambda n: (0, 0, 0)),    # w2
            pl.BlockSpec((TOT, 1), lambda n: (0, 0)),                # b2
            pl.BlockSpec((9, 3, TOT + 2), lambda n: (0, 0, 0)),      # w_dec
            pl.BlockSpec((3, 1), lambda n: (0, 0)),                  # b_dec
            pl.BlockSpec((TOT, 1), lambda n: (0, 0)),                # bf_a
            pl.BlockSpec(memory_space=pltpu.MemorySpace.SMEM),       # spatial
        ],
        out_specs=pl.BlockSpec((None, 3, HW), lambda n: (n, 0, 0)),
        scratch_shapes=[
            pltpu.VMEM((2 * TOT, LBUF), jnp.float32),    # hidden (26, LBUF)
            pltpu.VMEM((TOT + 2, LBUF), jnp.float32),    # ext + validity + q
        ],
        compiler_params=pltpu.CompilerParams(
            dimension_semantics=("parallel",)),
    )(x_buf, masks, kp["w1"], kp["b1"], kp["w2"], kp["b2"],
      kp["wd"], kp["bd"], kp["a"], kp["spatial"])

    return out.reshape(B, 3 * nf, H, W)


if __name__ == "__main__":
    key = jax.random.PRNGKey(0)
    kx, kp_ = jax.random.split(key)
    B, NUM_FRAMES, H, W = 2, 2, 16, 16
    x = jax.random.normal(kx, (B, C_IN * NUM_FRAMES, H, W), jnp.float32)
    params = init_params(kp_)

    out = jax.jit(forward)(x, params)
    out = jax.block_until_ready(out)
    assert out.shape == (B, 3 * NUM_FRAMES, H, W), out.shape
    assert bool(jnp.all(jnp.isfinite(out)))
    print("KERNEL_OK")
</pallas_src>

<mosaic_0001>
module attributes {stable_mosaic.version = 11 : i64} {
  func.func @_fpcnn_kernel(%arg0: i32, %arg1: memref<1x12x384xf32, #tpu.memory_space<vmem>>, %arg2: memref<7x256xf32, #tpu.memory_space<vmem>>, %arg3: memref<9x26x12xf32, #tpu.memory_space<vmem>>, %arg4: memref<26x1xf32, #tpu.memory_space<vmem>>, %arg5: memref<9x13x26xf32, #tpu.memory_space<vmem>>, %arg6: memref<13x1xf32, #tpu.memory_space<vmem>>, %arg7: memref<9x3x15xf32, #tpu.memory_space<vmem>>, %arg8: memref<3x1xf32, #tpu.memory_space<vmem>>, %arg9: memref<13x1xf32, #tpu.memory_space<vmem>>, %arg10: memref<49xf32, #tpu.memory_space<smem>>, %arg11: memref<1x3x256xf32, #tpu.memory_space<vmem>>, %arg12: memref<26x384xf32, #tpu.memory_space<vmem>>, %arg13: memref<15x384xf32, #tpu.memory_space<vmem>>) attributes {dimension_semantics = [#tpu.dimension_semantics<parallel>], iteration_bounds = array<i64: 4>, scalar_prefetch = 0 : i64, scratch_operands = 2 : i64, tpu.core_type = #tpu.core_type<tc>, window_params = [{transform_indices = @transform_0, window_bounds = array<i64: 1, 12, 384>}, {pipeline_mode = #tpu.pipeline_mode<synchronous>, transform_indices = @transform_1, window_bounds = array<i64: 7, 256>}, {pipeline_mode = #tpu.pipeline_mode<synchronous>, transform_indices = @transform_2, window_bounds = array<i64: 9, 26, 12>}, {pipeline_mode = #tpu.pipeline_mode<synchronous>, transform_indices = @transform_3, window_bounds = array<i64: 26, 1>}, {pipeline_mode = #tpu.pipeline_mode<synchronous>, transform_indices = @transform_4, window_bounds = array<i64: 9, 13, 26>}, {pipeline_mode = #tpu.pipeline_mode<synchronous>, transform_indices = @transform_5, window_bounds = array<i64: 13, 1>}, {pipeline_mode = #tpu.pipeline_mode<synchronous>, transform_indices = @transform_6, window_bounds = array<i64: 9, 3, 15>}, {pipeline_mode = #tpu.pipeline_mode<synchronous>, transform_indices = @transform_7, window_bounds = array<i64: 3, 1>}, {pipeline_mode = #tpu.pipeline_mode<synchronous>, transform_indices = @transform_8, window_bounds = array<i64: 13, 1>}, {transform_indices = @transform_9, window_bounds = array<i64: 49>}, {transform_indices = @transform_10, window_bounds = array<i64: 1, 3, 256>}]} {
    %cst = arith.constant 0.000000e+00 : f32
    %0 = vector.broadcast %cst : f32 to vector<26x256xf32>
    %c0 = arith.constant 0 : index
    %c0_0 = arith.constant 0 : index
    %c0_1 = arith.constant 0 : index
    %1 = vector.load %arg1[%c0, %c0_0, %c0_1] : memref<1x12x384xf32, #tpu.memory_space<vmem>>, vector<1x12x384xf32>
    %2 = vector.shape_cast %1 : vector<1x12x384xf32> to vector<12x384xf32>
    %c17_i32 = arith.constant 17 : i32
    %3 = tpu.dynamic_rotate %2 by %c17_i32 dim 1 : vector<12x384xf32>, i32 -> vector<12x384xf32>
    %4 = vector.extract_strided_slice %3 {offsets = [0, 0], sizes = [12, 256], strides = [1, 1]} : vector<12x384xf32> to vector<12x256xf32>
    %c2 = arith.constant 2 : index
    %c0_2 = arith.constant 0 : index
    %5 = vector.load %arg2[%c2, %c0_2] : memref<7x256xf32, #tpu.memory_space<vmem>>, vector<1x256xf32>
    %6 = vector.broadcast %5 : vector<1x256xf32> to vector<12x256xf32>
    %7 = arith.mulf %4, %6 : vector<12x256xf32>
    %c0_3 = arith.constant 0 : index
    %c0_4 = arith.constant 0 : index
    %c0_5 = arith.constant 0 : index
    %8 = vector.load %arg3[%c0_3, %c0_4, %c0_5] : memref<9x26x12xf32, #tpu.memory_space<vmem>>, vector<1x26x12xf32>
    %9 = vector.shape_cast %8 : vector<1x26x12xf32> to vector<26x12xf32>
    %cst_6 = arith.constant dense<0.000000e+00> : vector<26x256xf32>
    %10 = tpu.matmul %9, %7, %cst_6 {dimension_numbers = #tpu.dot_dimension_numbers<[1], [0], [0], [1], [0, 0, 1, 1], [], []>} : vector<26x12xf32>, vector<12x256xf32>, vector<26x256xf32> -> vector<26x256xf32>
    %11 = arith.addf %0, %10 : vector<26x256xf32>
    %c0_7 = arith.constant 0 : index
    %c0_8 = arith.constant 0 : index
    %c0_9 = arith.constant 0 : index
    %12 = vector.load %arg1[%c0_7, %c0_8, %c0_9] : memref<1x12x384xf32, #tpu.memory_space<vmem>>, vector<1x12x384xf32>
    %13 = vector.shape_cast %12 : vector<1x12x384xf32> to vector<12x384xf32>
    %c16_i32 = arith.constant 16 : i32
    %14 = tpu.dynamic_rotate %13 by %c16_i32 dim 1 : vector<12x384xf32>, i32 -> vector<12x384xf32>
    %15 = vector.extract_strided_slice %14 {offsets = [0, 0], sizes = [12, 256], strides = [1, 1]} : vector<12x384xf32> to vector<12x256xf32>
    %c3 = arith.constant 3 : index
    %c0_10 = arith.constant 0 : index
    %16 = vector.load %arg2[%c3, %c0_10] : memref<7x256xf32, #tpu.memory_space<vmem>>, vector<1x256xf32>
    %17 = vector.broadcast %16 : vector<1x256xf32> to vector<12x256xf32>
    %18 = arith.mulf %15, %17 : vector<12x256xf32>
    %c1 = arith.constant 1 : index
    %c0_11 = arith.constant 0 : index
    %c0_12 = arith.constant 0 : index
    %19 = vector.load %arg3[%c1, %c0_11, %c0_12] : memref<9x26x12xf32, #tpu.memory_space<vmem>>, vector<1x26x12xf32>
    %20 = vector.shape_cast %19 : vector<1x26x12xf32> to vector<26x12xf32>
    %cst_13 = arith.constant dense<0.000000e+00> : vector<26x256xf32>
    %21 = tpu.matmul %20, %18, %cst_13 {dimension_numbers = #tpu.dot_dimension_numbers<[1], [0], [0], [1], [0, 0, 1, 1], [], []>} : vector<26x12xf32>, vector<12x256xf32>, vector<26x256xf32> -> vector<26x256xf32>
    %22 = arith.addf %11, %21 : vector<26x256xf32>
    %c0_14 = arith.constant 0 : index
    %c0_15 = arith.constant 0 : index
    %c0_16 = arith.constant 0 : index
    %23 = vector.load %arg1[%c0_14, %c0_15, %c0_16] : memref<1x12x384xf32, #tpu.memory_space<vmem>>, vector<1x12x384xf32>
    %24 = vector.shape_cast %23 : vector<1x12x384xf32> to vector<12x384xf32>
    %c15_i32 = arith.constant 15 : i32
    %25 = tpu.dynamic_rotate %24 by %c15_i32 dim 1 : vector<12x384xf32>, i32 -> vector<12x384xf32>
    %26 = vector.extract_strided_slice %25 {offsets = [0, 0], sizes = [12, 256], strides = [1, 1]} : vector<12x384xf32> to vector<12x256xf32>
    %c4 = arith.constant 4 : index
    %c0_17 = arith.constant 0 : index
    %27 = vector.load %arg2[%c4, %c0_17] : memref<7x256xf32, #tpu.memory_space<vmem>>, vector<1x256xf32>
    %28 = vector.broadcast %27 : vector<1x256xf32> to vector<12x256xf32>
    %29 = arith.mulf %26, %28 : vector<12x256xf32>
    %c2_18 = arith.constant 2 : index
    %c0_19 = arith.constant 0 : index
    %c0_20 = arith.constant 0 : index
    %30 = vector.load %arg3[%c2_18, %c0_19, %c0_20] : memref<9x26x12xf32, #tpu.memory_space<vmem>>, vector<1x26x12xf32>
    %31 = vector.shape_cast %30 : vector<1x26x12xf32> to vector<26x12xf32>
    %cst_21 = arith.constant dense<0.000000e+00> : vector<26x256xf32>
    %32 = tpu.matmul %31, %29, %cst_21 {dimension_numbers = #tpu.dot_dimension_numbers<[1], [0], [0], [1], [0, 0, 1, 1], [], []>} : vector<26x12xf32>, vector<12x256xf32>, vector<26x256xf32> -> vector<26x256xf32>
    %33 = arith.addf %22, %32 : vector<26x256xf32>
    %c0_22 = arith.constant 0 : index
    %c0_23 = arith.constant 0 : index
    %c0_24 = arith.constant 0 : index
    %34 = vector.load %arg1[%c0_22, %c0_23, %c0_24] : memref<1x12x384xf32, #tpu.memory_space<vmem>>, vector<1x12x384xf32>
    %35 = vector.shape_cast %34 : vector<1x12x384xf32> to vector<12x384xf32>
    %c1_i32 = arith.constant 1 : i32
    %36 = tpu.dynamic_rotate %35 by %c1_i32 dim 1 : vector<12x384xf32>, i32 -> vector<12x384xf32>
    %37 = vector.extract_strided_slice %36 {offsets = [0, 0], sizes = [12, 256], strides = [1, 1]} : vector<12x384xf32> to vector<12x256xf32>
    %c2_25 = arith.constant 2 : index
    %c0_26 = arith.constant 0 : index
    %38 = vector.load %arg2[%c2_25, %c0_26] : memref<7x256xf32, #tpu.memory_space<vmem>>, vector<1x256xf32>
    %39 = vector.broadcast %38 : vector<1x256xf32> to vector<12x256xf32>
    %40 = arith.mulf %37, %39 : vector<12x256xf32>
    %c3_27 = arith.constant 3 : index
    %c0_28 = arith.constant 0 : index
    %c0_29 = arith.constant 0 : index
    %41 = vector.load %arg3[%c3_27, %c0_28, %c0_29] : memref<9x26x12xf32, #tpu.memory_space<vmem>>, vector<1x26x12xf32>
    %42 = vector.shape_cast %41 : vector<1x26x12xf32> to vector<26x12xf32>
    %cst_30 = arith.constant dense<0.000000e+00> : vector<26x256xf32>
    %43 = tpu.matmul %42, %40, %cst_30 {dimension_numbers = #tpu.dot_dimension_numbers<[1], [0], [0], [1], [0, 0, 1, 1], [], []>} : vector<26x12xf32>, vector<12x256xf32>, vector<26x256xf32> -> vector<26x256xf32>
    %44 = arith.addf %33, %43 : vector<26x256xf32>
    %c0_31 = arith.constant 0 : index
    %c0_32 = arith.constant 0 : index
    %c0_33 = arith.constant 0 : index
    %45 = vector.load %arg1[%c0_31, %c0_32, %c0_33] : memref<1x12x384xf32, #tpu.memory_space<vmem>>, vector<1x12x384xf32>
    %46 = vector.shape_cast %45 : vector<1x12x384xf32> to vector<12x384xf32>
    %47 = vector.extract_strided_slice %46 {offsets = [0, 0], sizes = [12, 256], strides = [1, 1]} : vector<12x384xf32> to vector<12x256xf32>
    %c3_34 = arith.constant 3 : index
    %c0_35 = arith.constant 0 : index
    %48 = vector.load %arg2[%c3_34, %c0_35] : memref<7x256xf32, #tpu.memory_space<vmem>>, vector<1x256xf32>
    %49 = vector.broadcast %48 : vector<1x256xf32> to vector<12x256xf32>
    %50 = arith.mulf %47, %49 : vector<12x256xf32>
    %c4_36 = arith.constant 4 : index
    %c0_37 = arith.constant 0 : index
    %c0_38 = arith.constant 0 : index
    %51 = vector.load %arg3[%c4_36, %c0_37, %c0_38] : memref<9x26x12xf32, #tpu.memory_space<vmem>>, vector<1x26x12xf32>
    %52 = vector.shape_cast %51 : vector<1x26x12xf32> to vector<26x12xf32>
    %cst_39 = arith.constant dense<0.000000e+00> : vector<26x256xf32>
    %53 = tpu.matmul %52, %50, %cst_39 {dimension_numbers = #tpu.dot_dimension_numbers<[1], [0], [0], [1], [0, 0, 1, 1], [], []>} : vector<26x12xf32>, vector<12x256xf32>, vector<26x256xf32> -> vector<26x256xf32>
    %54 = arith.addf %44, %53 : vector<26x256xf32>
    %c0_40 = arith.constant 0 : index
    %c0_41 = arith.constant 0 : index
    %c0_42 = arith.constant 0 : index
    %55 = vector.load %arg1[%c0_40, %c0_41, %c0_42] : memref<1x12x384xf32, #tpu.memory_space<vmem>>, vector<1x12x384xf32>
    %56 = vector.shape_cast %55 : vector<1x12x384xf32> to vector<12x384xf32>
    %c383_i32 = arith.constant 383 : i32
    %57 = tpu.dynamic_rotate %56 by %c383_i32 dim 1 : vector<12x384xf32>, i32 -> vector<12x384xf32>
    %58 = vector.extract_strided_slice %57 {offsets = [0, 0], sizes = [12, 256], strides = [1, 1]} : vector<12x384xf32> to vector<12x256xf32>
    %c4_43 = arith.constant 4 : index
    %c0_44 = arith.constant 0 : index
    %59 = vector.load %arg2[%c4_43, %c0_44] : memref<7x256xf32, #tpu.memory_space<vmem>>, vector<1x256xf32>
    %60 = vector.broadcast %59 : vector<1x256xf32> to vector<12x256xf32>
    %61 = arith.mulf %58, %60 : vector<12x256xf32>
    %c5 = arith.constant 5 : index
    %c0_45 = arith.constant 0 : index
    %c0_46 = arith.constant 0 : index
    %62 = vector.load %arg3[%c5, %c0_45, %c0_46] : memref<9x26x12xf32, #tpu.memory_space<vmem>>, vector<1x26x12xf32>
    %63 = vector.shape_cast %62 : vector<1x26x12xf32> to vector<26x12xf32>
    %cst_47 = arith.constant dense<0.000000e+00> : vector<26x256xf32>
    %64 = tpu.matmul %63, %61, %cst_47 {dimension_numbers = #tpu.dot_dimension_numbers<[1], [0], [0], [1], [0, 0, 1, 1], [], []>} : vector<26x12xf32>, vector<12x256xf32>, vector<26x256xf32> -> vector<26x256xf32>
    %65 = arith.addf %54, %64 : vector<26x256xf32>
    %c0_48 = arith.constant 0 : index
    %c0_49 = arith.constant 0 : index
    %c0_50 = arith.constant 0 : index
    %66 = vector.load %arg1[%c0_48, %c0_49, %c0_50] : memref<1x12x384xf32, #tpu.memory_space<vmem>>, vector<1x12x384xf32>
    %67 = vector.shape_cast %66 : vector<1x12x384xf32> to vector<12x384xf32>
    %c369_i32 = arith.constant 369 : i32
    %68 = tpu.dynamic_rotate %67 by %c369_i32 dim 1 : vector<12x384xf32>, i32 -> vector<12x384xf32>
    %69 = vector.extract_strided_slice %68 {offsets = [0, 0], sizes = [12, 256], strides = [1, 1]} : vector<12x384xf32> to vector<12x256xf32>
    %c2_51 = arith.constant 2 : index
    %c0_52 = arith.constant 0 : index
    %70 = vector.load %arg2[%c2_51, %c0_52] : memref<7x256xf32, #tpu.memory_space<vmem>>, vector<1x256xf32>
    %71 = vector.broadcast %70 : vector<1x256xf32> to vector<12x256xf32>
    %72 = arith.mulf %69, %71 : vector<12x256xf32>
    %c6 = arith.constant 6 : index
    %c0_53 = arith.constant 0 : index
    %c0_54 = arith.constant 0 : index
    %73 = vector.load %arg3[%c6, %c0_53, %c0_54] : memref<9x26x12xf32, #tpu.memory_space<vmem>>, vector<1x26x12xf32>
    %74 = vector.shape_cast %73 : vector<1x26x12xf32> to vector<26x12xf32>
    %cst_55 = arith.constant dense<0.000000e+00> : vector<26x256xf32>
    %75 = tpu.matmul %74, %72, %cst_55 {dimension_numbers = #tpu.dot_dimension_numbers<[1], [0], [0], [1], [0, 0, 1, 1], [], []>} : vector<26x12xf32>, vector<12x256xf32>, vector<26x256xf32> -> vector<26x256xf32>
    %76 = arith.addf %65, %75 : vector<26x256xf32>
    %c0_56 = arith.constant 0 : index
    %c0_57 = arith.constant 0 : index
    %c0_58 = arith.constant 0 : index
    %77 = vector.load %arg1[%c0_56, %c0_57, %c0_58] : memref<1x12x384xf32, #tpu.memory_space<vmem>>, vector<1x12x384xf32>
    %78 = vector.shape_cast %77 : vector<1x12x384xf32> to vector<12x384xf32>
    %c368_i32 = arith.constant 368 : i32
    %79 = tpu.dynamic_rotate %78 by %c368_i32 dim 1 : vector<12x384xf32>, i32 -> vector<12x384xf32>
    %80 = vector.extract_strided_slice %79 {offsets = [0, 0], sizes = [12, 256], strides = [1, 1]} : vector<12x384xf32> to vector<12x256xf32>
    %c3_59 = arith.constant 3 : index
    %c0_60 = arith.constant 0 : index
    %81 = vector.load %arg2[%c3_59, %c0_60] : memref<7x256xf32, #tpu.memory_space<vmem>>, vector<1x256xf32>
    %82 = vector.broadcast %81 : vector<1x256xf32> to vector<12x256xf32>
    %83 = arith.mulf %80, %82 : vector<12x256xf32>
    %c7 = arith.constant 7 : index
    %c0_61 = arith.constant 0 : index
    %c0_62 = arith.constant 0 : index
    %84 = vector.load %arg3[%c7, %c0_61, %c0_62] : memref<9x26x12xf32, #tpu.memory_space<vmem>>, vector<1x26x12xf32>
    %85 = vector.shape_cast %84 : vector<1x26x12xf32> to vector<26x12xf32>
    %cst_63 = arith.constant dense<0.000000e+00> : vector<26x256xf32>
    %86 = tpu.matmul %85, %83, %cst_63 {dimension_numbers = #tpu.dot_dimension_numbers<[1], [0], [0], [1], [0, 0, 1, 1], [], []>} : vector<26x12xf32>, vector<12x256xf32>, vector<26x256xf32> -> vector<26x256xf32>
    %87 = arith.addf %76, %86 : vector<26x256xf32>
    %c0_64 = arith.constant 0 : index
    %c0_65 = arith.constant 0 : index
    %c0_66 = arith.constant 0 : index
    %88 = vector.load %arg1[%c0_64, %c0_65, %c0_66] : memref<1x12x384xf32, #tpu.memory_space<vmem>>, vector<1x12x384xf32>
    %89 = vector.shape_cast %88 : vector<1x12x384xf32> to vector<12x384xf32>
    %c367_i32 = arith.constant 367 : i32
    %90 = tpu.dynamic_rotate %89 by %c367_i32 dim 1 : vector<12x384xf32>, i32 -> vector<12x384xf32>
    %91 = vector.extract_strided_slice %90 {offsets = [0, 0], sizes = [12, 256], strides = [1, 1]} : vector<12x384xf32> to vector<12x256xf32>
    %c4_67 = arith.constant 4 : index
    %c0_68 = arith.constant 0 : index
    %92 = vector.load %arg2[%c4_67, %c0_68] : memref<7x256xf32, #tpu.memory_space<vmem>>, vector<1x256xf32>
    %93 = vector.broadcast %92 : vector<1x256xf32> to vector<12x256xf32>
    %94 = arith.mulf %91, %93 : vector<12x256xf32>
    %c8 = arith.constant 8 : index
    %c0_69 = arith.constant 0 : index
    %c0_70 = arith.constant 0 : index
    %95 = vector.load %arg3[%c8, %c0_69, %c0_70] : memref<9x26x12xf32, #tpu.memory_space<vmem>>, vector<1x26x12xf32>
    %96 = vector.shape_cast %95 : vector<1x26x12xf32> to vector<26x12xf32>
    %cst_71 = arith.constant dense<0.000000e+00> : vector<26x256xf32>
    %97 = tpu.matmul %96, %94, %cst_71 {dimension_numbers = #tpu.dot_dimension_numbers<[1], [0], [0], [1], [0, 0, 1, 1], [], []>} : vector<26x12xf32>, vector<12x256xf32>, vector<26x256xf32> -> vector<26x256xf32>
    %98 = arith.addf %87, %97 : vector<26x256xf32>
    %c0_72 = arith.constant 0 : index
    %c0_73 = arith.constant 0 : index
    %99 = vector.load %arg4[%c0_72, %c0_73] : memref<26x1xf32, #tpu.memory_space<vmem>>, vector<26x1xf32>
    %100 = vector.broadcast %99 : vector<26x1xf32> to vector<26x256xf32>
    %101 = arith.addf %98, %100 : vector<26x256xf32>
    %cst_74 = arith.constant 0.000000e+00 : f32
    %102 = vector.broadcast %cst_74 : f32 to vector<26x256xf32>
    %103 = arith.maximumf %101, %102 : vector<26x256xf32>
    %c0_75 = arith.constant 0 : index
    %c0_76 = arith.constant 0 : index
    %104 = vector.load %arg12[%c0_75, %c0_76] : memref<26x384xf32, #tpu.memory_space<vmem>>, vector<26x256xf32>
    tpu.vector_store %arg12[%c0_75, %c0_76], %103 {strides = array<i32>} : memref<26x384xf32, #tpu.memory_space<vmem>>, vector<26x256xf32>,
    %cst_77 = arith.constant 0.000000e+00 : f32
    %105 = vector.broadcast %cst_77 : f32 to vector<26x128xf32>
    %c0_78 = arith.constant 0 : index
    %c256 = arith.constant 256 : index
    %106 = vector.load %arg12[%c0_78, %c256] : memref<26x384xf32, #tpu.memory_space<vmem>>, vector<26x128xf32>
    tpu.vector_store %arg12[%c0_78, %c256], %105 {strides = array<i32>} : memref<26x384xf32, #tpu.memory_space<vmem>>, vector<26x128xf32>,
    %cst_79 = arith.constant 0.000000e+00 : f32
    %107 = vector.broadcast %cst_79 : f32 to vector<13x256xf32>
    %c0_80 = arith.constant 0 : index
    %c0_81 = arith.constant 0 : index
    %108 = vector.load %arg12[%c0_80, %c0_81] : memref<26x384xf32, #tpu.memory_space<vmem>>, vector<26x384xf32>
    %c17_i32_82 = arith.constant 17 : i32
    %109 = tpu.dynamic_rotate %108 by %c17_i32_82 dim 1 : vector<26x384xf32>, i32 -> vector<26x384xf32>
    %110 = vector.extract_strided_slice %109 {offsets = [0, 0], sizes = [26, 256], strides = [1, 1]} : vector<26x384xf32> to vector<26x256xf32>
    %c2_83 = arith.constant 2 : index
    %c0_84 = arith.constant 0 : index
    %111 = vector.load %arg2[%c2_83, %c0_84] : memref<7x256xf32, #tpu.memory_space<vmem>>, vector<1x256xf32>
    %112 = vector.broadcast %111 : vector<1x256xf32> to vector<26x256xf32>
    %113 = arith.mulf %110, %112 : vector<26x256xf32>
    %c0_85 = arith.constant 0 : index
    %c0_86 = arith.constant 0 : index
    %c0_87 = arith.constant 0 : index
    %114 = vector.load %arg5[%c0_85, %c0_86, %c0_87] : memref<9x13x26xf32, #tpu.memory_space<vmem>>, vector<1x13x26xf32>
    %115 = vector.shape_cast %114 : vector<1x13x26xf32> to vector<13x26xf32>
    %cst_88 = arith.constant dense<0.000000e+00> : vector<13x256xf32>
    %116 = tpu.matmul %115, %113, %cst_88 {dimension_numbers = #tpu.dot_dimension_numbers<[1], [0], [0], [1], [0, 0, 1, 1], [], []>} : vector<13x26xf32>, vector<26x256xf32>, vector<13x256xf32> -> vector<13x256xf32>
    %117 = arith.addf %107, %116 : vector<13x256xf32>
    %c0_89 = arith.constant 0 : index
    %c0_90 = arith.constant 0 : index
    %118 = vector.load %arg12[%c0_89, %c0_90] : memref<26x384xf32, #tpu.memory_space<vmem>>, vector<26x384xf32>
    %c16_i32_91 = arith.constant 16 : i32
    %119 = tpu.dynamic_rotate %118 by %c16_i32_91 dim 1 : vector<26x384xf32>, i32 -> vector<26x384xf32>
    %120 = vector.extract_strided_slice %119 {offsets = [0, 0], sizes = [26, 256], strides = [1, 1]} : vector<26x384xf32> to vector<26x256xf32>
    %c3_92 = arith.constant 3 : index
    %c0_93 = arith.constant 0 : index
    %121 = vector.load %arg2[%c3_92, %c0_93] : memref<7x256xf32, #tpu.memory_space<vmem>>, vector<1x256xf32>
    %122 = vector.broadcast %121 : vector<1x256xf32> to vector<26x256xf32>
    %123 = arith.mulf %120, %122 : vector<26x256xf32>
    %c1_94 = arith.constant 1 : index
    %c0_95 = arith.constant 0 : index
    %c0_96 = arith.constant 0 : index
    %124 = vector.load %arg5[%c1_94, %c0_95, %c0_96] : memref<9x13x26xf32, #tpu.memory_space<vmem>>, vector<1x13x26xf32>
    %125 = vector.shape_cast %124 : vector<1x13x26xf32> to vector<13x26xf32>
    %cst_97 = arith.constant dense<0.000000e+00> : vector<13x256xf32>
    %126 = tpu.matmul %125, %123, %cst_97 {dimension_numbers = #tpu.dot_dimension_numbers<[1], [0], [0], [1], [0, 0, 1, 1], [], []>} : vector<13x26xf32>, vector<26x256xf32>, vector<13x256xf32> -> vector<13x256xf32>
    %127 = arith.addf %117, %126 : vector<13x256xf32>
    %c0_98 = arith.constant 0 : index
    %c0_99 = arith.constant 0 : index
    %128 = vector.load %arg12[%c0_98, %c0_99] : memref<26x384xf32, #tpu.memory_space<vmem>>, vector<26x384xf32>
    %c15_i32_100 = arith.constant 15 : i32
    %129 = tpu.dynamic_rotate %128 by %c15_i32_100 dim 1 : vector<26x384xf32>, i32 -> vector<26x384xf32>
    %130 = vector.extract_strided_slice %129 {offsets = [0, 0], sizes = [26, 256], strides = [1, 1]} : vector<26x384xf32> to vector<26x256xf32>
    %c4_101 = arith.constant 4 : index
    %c0_102 = arith.constant 0 : index
    %131 = vector.load %arg2[%c4_101, %c0_102] : memref<7x256xf32, #tpu.memory_space<vmem>>, vector<1x256xf32>
    %132 = vector.broadcast %131 : vector<1x256xf32> to vector<26x256xf32>
    %133 = arith.mulf %130, %132 : vector<26x256xf32>
    %c2_103 = arith.constant 2 : index
    %c0_104 = arith.constant 0 : index
    %c0_105 = arith.constant 0 : index
    %134 = vector.load %arg5[%c2_103, %c0_104, %c0_105] : memref<9x13x26xf32, #tpu.memory_space<vmem>>, vector<1x13x26xf32>
    %135 = vector.shape_cast %134 : vector<1x13x26xf32> to vector<13x26xf32>
    %cst_106 = arith.constant dense<0.000000e+00> : vector<13x256xf32>
    %136 = tpu.matmul %135, %133, %cst_106 {dimension_numbers = #tpu.dot_dimension_numbers<[1], [0], [0], [1], [0, 0, 1, 1], [], []>} : vector<13x26xf32>, vector<26x256xf32>, vector<13x256xf32> -> vector<13x256xf32>
    %137 = arith.addf %127, %136 : vector<13x256xf32>
    %c0_107 = arith.constant 0 : index
    %c0_108 = arith.constant 0 : index
    %138 = vector.load %arg12[%c0_107, %c0_108] : memref<26x384xf32, #tpu.memory_space<vmem>>, vector<26x384xf32>
    %c1_i32_109 = arith.constant 1 : i32
    %139 = tpu.dynamic_rotate %138 by %c1_i32_109 dim 1 : vector<26x384xf32>, i32 -> vector<26x384xf32>
    %140 = vector.extract_strided_slice %139 {offsets = [0, 0], sizes = [26, 256], strides = [1, 1]} : vector<26x384xf32> to vector<26x256xf32>
    %c2_110 = arith.constant 2 : index
    %c0_111 = arith.constant 0 : index
    %141 = vector.load %arg2[%c2_110, %c0_111] : memref<7x256xf32, #tpu.memory_space<vmem>>, vector<1x256xf32>
    %142 = vector.broadcast %141 : vector<1x256xf32> to vector<26x256xf32>
    %143 = arith.mulf %140, %142 : vector<26x256xf32>
    %c3_112 = arith.constant 3 : index
    %c0_113 = arith.constant 0 : index
    %c0_114 = arith.constant 0 : index
    %144 = vector.load %arg5[%c3_112, %c0_113, %c0_114] : memref<9x13x26xf32, #tpu.memory_space<vmem>>, vector<1x13x26xf32>
    %145 = vector.shape_cast %144 : vector<1x13x26xf32> to vector<13x26xf32>
    %cst_115 = arith.constant dense<0.000000e+00> : vector<13x256xf32>
    %146 = tpu.matmul %145, %143, %cst_115 {dimension_numbers = #tpu.dot_dimension_numbers<[1], [0], [0], [1], [0, 0, 1, 1], [], []>} : vector<13x26xf32>, vector<26x256xf32>, vector<13x256xf32> -> vector<13x256xf32>
    %147 = arith.addf %137, %146 : vector<13x256xf32>
    %c0_116 = arith.constant 0 : index
    %c0_117 = arith.constant 0 : index
    %148 = vector.load %arg12[%c0_116, %c0_117] : memref<26x384xf32, #tpu.memory_space<vmem>>, vector<26x384xf32>
    %149 = vector.extract_strided_slice %148 {offsets = [0, 0], sizes = [26, 256], strides = [1, 1]} : vector<26x384xf32> to vector<26x256xf32>
    %c3_118 = arith.constant 3 : index
    %c0_119 = arith.constant 0 : index
    %150 = vector.load %arg2[%c3_118, %c0_119] : memref<7x256xf32, #tpu.memory_space<vmem>>, vector<1x256xf32>
    %151 = vector.broadcast %150 : vector<1x256xf32> to vector<26x256xf32>
    %152 = arith.mulf %149, %151 : vector<26x256xf32>
    %c4_120 = arith.constant 4 : index
    %c0_121 = arith.constant 0 : index
    %c0_122 = arith.constant 0 : index
    %153 = vector.load %arg5[%c4_120, %c0_121, %c0_122] : memref<9x13x26xf32, #tpu.memory_space<vmem>>, vector<1x13x26xf32>
    %154 = vector.shape_cast %153 : vector<1x13x26xf32> to vector<13x26xf32>
    %cst_123 = arith.constant dense<0.000000e+00> : vector<13x256xf32>
    %155 = tpu.matmul %154, %152, %cst_123 {dimension_numbers = #tpu.dot_dimension_numbers<[1], [0], [0], [1], [0, 0, 1, 1], [], []>} : vector<13x26xf32>, vector<26x256xf32>, vector<13x256xf32> -> vector<13x256xf32>
    %156 = arith.addf %147, %155 : vector<13x256xf32>
    %c0_124 = arith.constant 0 : index
    %c0_125 = arith.constant 0 : index
    %157 = vector.load %arg12[%c0_124, %c0_125] : memref<26x384xf32, #tpu.memory_space<vmem>>, vector<26x384xf32>
    %c383_i32_126 = arith.constant 383 : i32
    %158 = tpu.dynamic_rotate %157 by %c383_i32_126 dim 1 : vector<26x384xf32>, i32 -> vector<26x384xf32>
    %159 = vector.extract_strided_slice %158 {offsets = [0, 0], sizes = [26, 256], strides = [1, 1]} : vector<26x384xf32> to vector<26x256xf32>
    %c4_127 = arith.constant 4 : index
    %c0_128 = arith.constant 0 : index
    %160 = vector.load %arg2[%c4_127, %c0_128] : memref<7x256xf32, #tpu.memory_space<vmem>>, vector<1x256xf32>
    %161 = vector.broadcast %160 : vector<1x256xf32> to vector<26x256xf32>
    %162 = arith.mulf %159, %161 : vector<26x256xf32>
    %c5_129 = arith.constant 5 : index
    %c0_130 = arith.constant 0 : index
    %c0_131 = arith.constant 0 : index
    %163 = vector.load %arg5[%c5_129, %c0_130, %c0_131] : memref<9x13x26xf32, #tpu.memory_space<vmem>>, vector<1x13x26xf32>
    %164 = vector.shape_cast %163 : vector<1x13x26xf32> to vector<13x26xf32>
    %cst_132 = arith.constant dense<0.000000e+00> : vector<13x256xf32>
    %165 = tpu.matmul %164, %162, %cst_132 {dimension_numbers = #tpu.dot_dimension_numbers<[1], [0], [0], [1], [0, 0, 1, 1], [], []>} : vector<13x26xf32>, vector<26x256xf32>, vector<13x256xf32> -> vector<13x256xf32>
    %166 = arith.addf %156, %165 : vector<13x256xf32>
    %c0_133 = arith.constant 0 : index
    %c0_134 = arith.constant 0 : index
    %167 = vector.load %arg12[%c0_133, %c0_134] : memref<26x384xf32, #tpu.memory_space<vmem>>, vector<26x384xf32>
    %c369_i32_135 = arith.constant 369 : i32
    %168 = tpu.dynamic_rotate %167 by %c369_i32_135 dim 1 : vector<26x384xf32>, i32 -> vector<26x384xf32>
    %169 = vector.extract_strided_slice %168 {offsets = [0, 0], sizes = [26, 256], strides = [1, 1]} : vector<26x384xf32> to vector<26x256xf32>
    %c2_136 = arith.constant 2 : index
    %c0_137 = arith.constant 0 : index
    %170 = vector.load %arg2[%c2_136, %c0_137] : memref<7x256xf32, #tpu.memory_space<vmem>>, vector<1x256xf32>
    %171 = vector.broadcast %170 : vector<1x256xf32> to vector<26x256xf32>
    %172 = arith.mulf %169, %171 : vector<26x256xf32>
    %c6_138 = arith.constant 6 : index
    %c0_139 = arith.constant 0 : index
    %c0_140 = arith.constant 0 : index
    %173 = vector.load %arg5[%c6_138, %c0_139, %c0_140] : memref<9x13x26xf32, #tpu.memory_space<vmem>>, vector<1x13x26xf32>
    %174 = vector.shape_cast %173 : vector<1x13x26xf32> to vector<13x26xf32>
    %cst_141 = arith.constant dense<0.000000e+00> : vector<13x256xf32>
    %175 = tpu.matmul %174, %172, %cst_141 {dimension_numbers = #tpu.dot_dimension_numbers<[1], [0], [0], [1], [0, 0, 1, 1], [], []>} : vector<13x26xf32>, vector<26x256xf32>, vector<13x256xf32> -> vector<13x256xf32>
    %176 = arith.addf %166, %175 : vector<13x256xf32>
    %c0_142 = arith.constant 0 : index
    %c0_143 = arith.constant 0 : index
    %177 = vector.load %arg12[%c0_142, %c0_143] : memref<26x384xf32, #tpu.memory_space<vmem>>, vector<26x384xf32>
    %c368_i32_144 = arith.constant 368 : i32
    %178 = tpu.dynamic_rotate %177 by %c368_i32_144 dim 1 : vector<26x384xf32>, i32 -> vector<26x384xf32>
    %179 = vector.extract_strided_slice %178 {offsets = [0, 0], sizes = [26, 256], strides = [1, 1]} : vector<26x384xf32> to vector<26x256xf32>
    %c3_145 = arith.constant 3 : index
    %c0_146 = arith.constant 0 : index
    %180 = vector.load %arg2[%c3_145, %c0_146] : memref<7x256xf32, #tpu.memory_space<vmem>>, vector<1x256xf32>
    %181 = vector.broadcast %180 : vector<1x256xf32> to vector<26x256xf32>
    %182 = arith.mulf %179, %181 : vector<26x256xf32>
    %c7_147 = arith.constant 7 : index
    %c0_148 = arith.constant 0 : index
    %c0_149 = arith.constant 0 : index
    %183 = vector.load %arg5[%c7_147, %c0_148, %c0_149] : memref<9x13x26xf32, #tpu.memory_space<vmem>>, vector<1x13x26xf32>
    %184 = vector.shape_cast %183 : vector<1x13x26xf32> to vector<13x26xf32>
    %cst_150 = arith.constant dense<0.000000e+00> : vector<13x256xf32>
    %185 = tpu.matmul %184, %182, %cst_150 {dimension_numbers = #tpu.dot_dimension_numbers<[1], [0], [0], [1], [0, 0, 1, 1], [], []>} : vector<13x26xf32>, vector<26x256xf32>, vector<13x256xf32> -> vector<13x256xf32>
    %186 = arith.addf %176, %185 : vector<13x256xf32>
    %c0_151 = arith.constant 0 : index
    %c0_152 = arith.constant 0 : index
    %187 = vector.load %arg12[%c0_151, %c0_152] : memref<26x384xf32, #tpu.memory_space<vmem>>, vector<26x384xf32>
    %c367_i32_153 = arith.constant 367 : i32
    %188 = tpu.dynamic_rotate %187 by %c367_i32_153 dim 1 : vector<26x384xf32>, i32 -> vector<26x384xf32>
    %189 = vector.extract_strided_slice %188 {offsets = [0, 0], sizes = [26, 256], strides = [1, 1]} : vector<26x384xf32> to vector<26x256xf32>
    %c4_154 = arith.constant 4 : index
    %c0_155 = arith.constant 0 : index
    %190 = vector.load %arg2[%c4_154, %c0_155] : memref<7x256xf32, #tpu.memory_space<vmem>>, vector<1x256xf32>
    %191 = vector.broadcast %190 : vector<1x256xf32> to vector<26x256xf32>
    %192 = arith.mulf %189, %191 : vector<26x256xf32>
    %c8_156 = arith.constant 8 : index
    %c0_157 = arith.constant 0 : index
    %c0_158 = arith.constant 0 : index
    %193 = vector.load %arg5[%c8_156, %c0_157, %c0_158] : memref<9x13x26xf32, #tpu.memory_space<vmem>>, vector<1x13x26xf32>
    %194 = vector.shape_cast %193 : vector<1x13x26xf32> to vector<13x26xf32>
    %cst_159 = arith.constant dense<0.000000e+00> : vector<13x256xf32>
    %195 = tpu.matmul %194, %192, %cst_159 {dimension_numbers = #tpu.dot_dimension_numbers<[1], [0], [0], [1], [0, 0, 1, 1], [], []>} : vector<13x26xf32>, vector<26x256xf32>, vector<13x256xf32> -> vector<13x256xf32>
    %196 = arith.addf %186, %195 : vector<13x256xf32>
    %c0_160 = arith.constant 0 : index
    %c0_161 = arith.constant 0 : index
    %197 = vector.load %arg6[%c0_160, %c0_161] : memref<13x1xf32, #tpu.memory_space<vmem>>, vector<13x1xf32>
    %198 = vector.broadcast %197 : vector<13x1xf32> to vector<13x256xf32>
    %199 = arith.addf %196, %198 : vector<13x256xf32>
    %c0_162 = arith.constant 0 : index
    %c0_163 = arith.constant 0 : index
    %200 = vector.load %arg9[%c0_162, %c0_163] : memref<13x1xf32, #tpu.memory_space<vmem>>, vector<13x1xf32>
    %cst_164 = arith.constant 0.000000e+00 : f32
    %201 = vector.broadcast %cst_164 : f32 to vector<13x1xf32>
    %202 = arith.maximumf %200, %201 : vector<13x1xf32>
    %203 = vector.broadcast %202 : vector<13x1xf32> to vector<13x256xf32>
    %204 = arith.mulf %203, %199 : vector<13x256xf32>
    %205 = arith.mulf %204, %199 : vector<13x256xf32>
    %cst_165 = arith.constant dense<0.000000e+00> : vector<256xf32>
    %206 = vector.multi_reduction <add>, %205, %cst_165 [0] : vector<13x256xf32> to vector<256xf32>
    %207 = vector.shape_cast %206 : vector<256xf32> to vector<1x256xf32>
    %c0_166 = arith.constant 0 : index
    %c0_167 = arith.constant 0 : index
    %208 = vector.load %arg13[%c0_166, %c0_167] : memref<15x384xf32, #tpu.memory_space<vmem>>, vector<13x256xf32>
    tpu.vector_store %arg13[%c0_166, %c0_167], %199 {strides = array<i32>} : memref<15x384xf32, #tpu.memory_space<vmem>>, vector<13x256xf32>,
    %cst_168 = arith.constant 1.000000e+00 : f32
    %209 = vector.broadcast %cst_168 : f32 to vector<1x256xf32>
    %c13 = arith.constant 13 : index
    %c0_169 = arith.constant 0 : index
    %210 = vector.load %arg13[%c13, %c0_169] : memref<15x384xf32, #tpu.memory_space<vmem>>, vector<1x256xf32>
    tpu.vector_store %arg13[%c13, %c0_169], %209 {strides = array<i32>} : memref<15x384xf32, #tpu.memory_space<vmem>>, vector<1x256xf32>,
    %c14 = arith.constant 14 : index
    %c0_170 = arith.constant 0 : index
    %211 = vector.load %arg13[%c14, %c0_170] : memref<15x384xf32, #tpu.memory_space<vmem>>, vector<1x256xf32>
    tpu.vector_store %arg13[%c14, %c0_170], %207 {strides = array<i32>} : memref<15x384xf32, #tpu.memory_space<vmem>>, vector<1x256xf32>,
    %cst_171 = arith.constant 0.000000e+00 : f32
    %212 = vector.broadcast %cst_171 : f32 to vector<15x128xf32>
    %c0_172 = arith.constant 0 : index
    %c256_173 = arith.constant 256 : index
    %213 = vector.load %arg13[%c0_172, %c256_173] : memref<15x384xf32, #tpu.memory_space<vmem>>, vector<15x128xf32>
    tpu.vector_store %arg13[%c0_172, %c256_173], %212 {strides = array<i32>} : memref<15x384xf32, #tpu.memory_space<vmem>>, vector<15x128xf32>,
    %214 = vector.broadcast %202 : vector<13x1xf32> to vector<13x256xf32>
    %215 = arith.mulf %214, %199 : vector<13x256xf32>
    %cst_174 = arith.constant 0.000000e+00 : f32
    %216 = vector.broadcast %cst_174 : f32 to vector<4x256xf32>
    %cst_175 = arith.constant 0.000000e+00 : f32
    %217 = vector.broadcast %cst_175 : f32 to vector<1x256xf32>
    %c0_176 = arith.constant 0 : index
    %c0_177 = arith.constant 0 : index
    %218 = vector.load %arg13[%c0_176, %c0_177] : memref<15x384xf32, #tpu.memory_space<vmem>>, vector<15x384xf32>
    %c51_i32 = arith.constant 51 : i32
    %219 = tpu.dynamic_rotate %218 by %c51_i32 dim 1 : vector<15x384xf32>, i32 -> vector<15x384xf32>
    %220 = vector.extract_strided_slice %219 {offsets = [0, 0], sizes = [15, 256], strides = [1, 1]} : vector<15x384xf32> to vector<15x256xf32>
    %221 = vector.extract_strided_slice %220 {offsets = [0, 0], sizes = [13, 256], strides = [1, 1]} : vector<15x256xf32> to vector<13x256xf32>
    %222 = vector.extract_strided_slice %220 {offsets = [13, 0], sizes = [1, 256], strides = [1, 1]} : vector<15x256xf32> to vector<1x256xf32>
    %c0_178 = arith.constant 0 : index
    %c0_179 = arith.constant 0 : index
    %223 = vector.load %arg2[%c0_178, %c0_179] : memref<7x256xf32, #tpu.memory_space<vmem>>, vector<1x256xf32>
    %224 = arith.mulf %222, %223 : vector<1x256xf32>
    %225 = vector.extract_strided_slice %220 {offsets = [14, 0], sizes = [1, 256], strides = [1, 1]} : vector<15x256xf32> to vector<1x256xf32>
    %226 = arith.mulf %215, %221 : vector<13x256xf32>
    %cst_180 = arith.constant dense<0.000000e+00> : vector<256xf32>
    %227 = vector.multi_reduction <add>, %226, %cst_180 [0] : vector<13x256xf32> to vector<256xf32>
    %228 = vector.shape_cast %227 : vector<256xf32> to vector<1x256xf32>
    %229 = arith.addf %207, %225 : vector<1x256xf32>
    %cst_181 = arith.constant 2.000000e+00 : f32
    %230 = vector.broadcast %cst_181 : f32 to vector<1x256xf32>
    %231 = arith.mulf %230, %228 : vector<1x256xf32>
    %232 = arith.subf %229, %231 : vector<1x256xf32>
    %c0_182 = arith.constant 0 : index
    %233 = memref.load %arg10[%c0_182] : memref<49xf32, #tpu.memory_space<smem>>
    %234 = vector.broadcast %233 : f32 to vector<1x256xf32>
    %235 = arith.addf %232, %234 : vector<1x256xf32>
    %cst_183 = arith.constant 0.000000e+00 : f32
    %236 = vector.broadcast %cst_183 : f32 to vector<1x256xf32>
    %237 = arith.subf %236, %235 : vector<1x256xf32>
    %238 = math.exp %237 : vector<1x256xf32>
    %239 = arith.mulf %238, %224 : vector<1x256xf32>
    %240 = vector.extract_strided_slice %221 {offsets = [0, 0], sizes = [4, 256], strides = [1, 1]} : vector<13x256xf32> to vector<4x256xf32>
    %241 = vector.broadcast %239 : vector<1x256xf32> to vector<4x256xf32>
    %242 = arith.mulf %241, %240 : vector<4x256xf32>
    %243 = arith.addf %216, %242 : vector<4x256xf32>
    %244 = arith.addf %217, %239 : vector<1x256xf32>
    %c0_184 = arith.constant 0 : index
    %c0_185 = arith.constant 0 : index
    %245 = vector.load %arg13[%c0_184, %c0_185] : memref<15x384xf32, #tpu.memory_space<vmem>>, vector<15x384xf32>
    %c50_i32 = arith.constant 50 : i32
    %246 = tpu.dynamic_rotate %245 by %c50_i32 dim 1 : vector<15x384xf32>, i32 -> vector<15x384xf32>
    %247 = vector.extract_strided_slice %246 {offsets = [0, 0], sizes = [15, 256], strides = [1, 1]} : vector<15x384xf32> to vector<15x256xf32>
    %248 = vector.extract_strided_slice %247 {offsets = [0, 0], sizes = [13, 256], strides = [1, 1]} : vector<15x256xf32> to vector<13x256xf32>
    %249 = vector.extract_strided_slice %247 {offsets = [13, 0], sizes = [1, 256], strides = [1, 1]} : vector<15x256xf32> to vector<1x256xf32>
    %c1_186 = arith.constant 1 : index
    %c0_187 = arith.constant 0 : index
    %250 = vector.load %arg2[%c1_186, %c0_187] : memref<7x256xf32, #tpu.memory_space<vmem>>, vector<1x256xf32>
    %251 = arith.mulf %249, %250 : vector<1x256xf32>
    %252 = vector.extract_strided_slice %247 {offsets = [14, 0], sizes = [1, 256], strides = [1, 1]} : vector<15x256xf32> to vector<1x256xf32>
    %253 = arith.mulf %215, %248 : vector<13x256xf32>
    %cst_188 = arith.constant dense<0.000000e+00> : vector<256xf32>
    %254 = vector.multi_reduction <add>, %253, %cst_188 [0] : vector<13x256xf32> to vector<256xf32>
    %255 = vector.shape_cast %254 : vector<256xf32> to vector<1x256xf32>
    %256 = arith.addf %207, %252 : vector<1x256xf32>
    %cst_189 = arith.constant 2.000000e+00 : f32
    %257 = vector.broadcast %cst_189 : f32 to vector<1x256xf32>
    %258 = arith.mulf %257, %255 : vector<1x256xf32>
    %259 = arith.subf %256, %258 : vector<1x256xf32>
    %c1_190 = arith.constant 1 : index
    %260 = memref.load %arg10[%c1_190] : memref<49xf32, #tpu.memory_space<smem>>
    %261 = vector.broadcast %260 : f32 to vector<1x256xf32>
    %262 = arith.addf %259, %261 : vector<1x256xf32>
    %cst_191 = arith.constant 0.000000e+00 : f32
    %263 = vector.broadcast %cst_191 : f32 to vector<1x256xf32>
    %264 = arith.subf %263, %262 : vector<1x256xf32>
    %265 = math.exp %264 : vector<1x256xf32>
    %266 = arith.mulf %265, %251 : vector<1x256xf32>
    %267 = vector.extract_strided_slice %248 {offsets = [0, 0], sizes = [4, 256], strides = [1, 1]} : vector<13x256xf32> to vector<4x256xf32>
    %268 = vector.broadcast %266 : vector<1x256xf32> to vector<4x256xf32>
    %269 = arith.mulf %268, %267 : vector<4x256xf32>
    %270 = arith.addf %243, %269 : vector<4x256xf32>
    %271 = arith.addf %244, %266 : vector<1x256xf32>
    %c0_192 = arith.constant 0 : index
    %c0_193 = arith.constant 0 : index
    %272 = vector.load %arg13[%c0_192, %c0_193] : memref<15x384xf32, #tpu.memory_space<vmem>>, vector<15x384xf32>
    %c49_i32 = arith.constant 49 : i32
    %273 = tpu.dynamic_rotate %272 by %c49_i32 dim 1 : vector<15x384xf32>, i32 -> vector<15x384xf32>
    %274 = vector.extract_strided_slice %273 {offsets = [0, 0], sizes = [15, 256], strides = [1, 1]} : vector<15x384xf32> to vector<15x256xf32>
    %275 = vector.extract_strided_slice %274 {offsets = [0, 0], sizes = [13, 256], strides = [1, 1]} : vector<15x256xf32> to vector<13x256xf32>
    %276 = vector.extract_strided_slice %274 {offsets = [13, 0], sizes = [1, 256], strides = [1, 1]} : vector<15x256xf32> to vector<1x256xf32>
    %c2_194 = arith.constant 2 : index
    %c0_195 = arith.constant 0 : index
    %277 = vector.load %arg2[%c2_194, %c0_195] : memref<7x256xf32, #tpu.memory_space<vmem>>, vector<1x256xf32>
    %278 = arith.mulf %276, %277 : vector<1x256xf32>
    %279 = vector.extract_strided_slice %274 {offsets = [14, 0], sizes = [1, 256], strides = [1, 1]} : vector<15x256xf32> to vector<1x256xf32>
    %280 = arith.mulf %215, %275 : vector<13x256xf32>
    %cst_196 = arith.constant dense<0.000000e+00> : vector<256xf32>
    %281 = vector.multi_reduction <add>, %280, %cst_196 [0] : vector<13x256xf32> to vector<256xf32>
    %282 = vector.shape_cast %281 : vector<256xf32> to vector<1x256xf32>
    %283 = arith.addf %207, %279 : vector<1x256xf32>
    %cst_197 = arith.constant 2.000000e+00 : f32
    %284 = vector.broadcast %cst_197 : f32 to vector<1x256xf32>
    %285 = arith.mulf %284, %282 : vector<1x256xf32>
    %286 = arith.subf %283, %285 : vector<1x256xf32>
    %c2_198 = arith.constant 2 : index
    %287 = memref.load %arg10[%c2_198] : memref<49xf32, #tpu.memory_space<smem>>
    %288 = vector.broadcast %287 : f32 to vector<1x256xf32>
    %289 = arith.addf %286, %288 : vector<1x256xf32>
    %cst_199 = arith.constant 0.000000e+00 : f32
    %290 = vector.broadcast %cst_199 : f32 to vector<1x256xf32>
    %291 = arith.subf %290, %289 : vector<1x256xf32>
    %292 = math.exp %291 : vector<1x256xf32>
    %293 = arith.mulf %292, %278 : vector<1x256xf32>
    %294 = vector.extract_strided_slice %275 {offsets = [0, 0], sizes = [4, 256], strides = [1, 1]} : vector<13x256xf32> to vector<4x256xf32>
    %295 = vector.broadcast %293 : vector<1x256xf32> to vector<4x256xf32>
    %296 = arith.mulf %295, %294 : vector<4x256xf32>
    %297 = arith.addf %270, %296 : vector<4x256xf32>
    %298 = arith.addf %271, %293 : vector<1x256xf32>
    %c0_200 = arith.constant 0 : index
    %c0_201 = arith.constant 0 : index
    %299 = vector.load %arg13[%c0_200, %c0_201] : memref<15x384xf32, #tpu.memory_space<vmem>>, vector<15x384xf32>
    %c48_i32 = arith.constant 48 : i32
    %300 = tpu.dynamic_rotate %299 by %c48_i32 dim 1 : vector<15x384xf32>, i32 -> vector<15x384xf32>
    %301 = vector.extract_strided_slice %300 {offsets = [0, 0], sizes = [15, 256], strides = [1, 1]} : vector<15x384xf32> to vector<15x256xf32>
    %302 = vector.extract_strided_slice %301 {offsets = [0, 0], sizes = [13, 256], strides = [1, 1]} : vector<15x256xf32> to vector<13x256xf32>
    %303 = vector.extract_strided_slice %301 {offsets = [13, 0], sizes = [1, 256], strides = [1, 1]} : vector<15x256xf32> to vector<1x256xf32>
    %c3_202 = arith.constant 3 : index
    %c0_203 = arith.constant 0 : index
    %304 = vector.load %arg2[%c3_202, %c0_203] : memref<7x256xf32, #tpu.memory_space<vmem>>, vector<1x256xf32>
    %305 = arith.mulf %303, %304 : vector<1x256xf32>
    %306 = vector.extract_strided_slice %301 {offsets = [14, 0], sizes = [1, 256], strides = [1, 1]} : vector<15x256xf32> to vector<1x256xf32>
    %307 = arith.mulf %215, %302 : vector<13x256xf32>
    %cst_204 = arith.constant dense<0.000000e+00> : vector<256xf32>
    %308 = vector.multi_reduction <add>, %307, %cst_204 [0] : vector<13x256xf32> to vector<256xf32>
    %309 = vector.shape_cast %308 : vector<256xf32> to vector<1x256xf32>
    %310 = arith.addf %207, %306 : vector<1x256xf32>
    %cst_205 = arith.constant 2.000000e+00 : f32
    %311 = vector.broadcast %cst_205 : f32 to vector<1x256xf32>
    %312 = arith.mulf %311, %309 : vector<1x256xf32>
    %313 = arith.subf %310, %312 : vector<1x256xf32>
    %c3_206 = arith.constant 3 : index
    %314 = memref.load %arg10[%c3_206] : memref<49xf32, #tpu.memory_space<smem>>
    %315 = vector.broadcast %314 : f32 to vector<1x256xf32>
    %316 = arith.addf %313, %315 : vector<1x256xf32>
    %cst_207 = arith.constant 0.000000e+00 : f32
    %317 = vector.broadcast %cst_207 : f32 to vector<1x256xf32>
    %318 = arith.subf %317, %316 : vector<1x256xf32>
    %319 = math.exp %318 : vector<1x256xf32>
    %320 = arith.mulf %319, %305 : vector<1x256xf32>
    %321 = vector.extract_strided_slice %302 {offsets = [0, 0], sizes = [4, 256], strides = [1, 1]} : vector<13x256xf32> to vector<4x256xf32>
    %322 = vector.broadcast %320 : vector<1x256xf32> to vector<4x256xf32>
    %323 = arith.mulf %322, %321 : vector<4x256xf32>
    %324 = arith.addf %297, %323 : vector<4x256xf32>
    %325 = arith.addf %298, %320 : vector<1x256xf32>
    %c0_208 = arith.constant 0 : index
    %c0_209 = arith.constant 0 : index
    %326 = vector.load %arg13[%c0_208, %c0_209] : memref<15x384xf32, #tpu.memory_space<vmem>>, vector<15x384xf32>
    %c47_i32 = arith.constant 47 : i32
    %327 = tpu.dynamic_rotate %326 by %c47_i32 dim 1 : vector<15x384xf32>, i32 -> vector<15x384xf32>
    %328 = vector.extract_strided_slice %327 {offsets = [0, 0], sizes = [15, 256], strides = [1, 1]} : vector<15x384xf32> to vector<15x256xf32>
    %329 = vector.extract_strided_slice %328 {offsets = [0, 0], sizes = [13, 256], strides = [1, 1]} : vector<15x256xf32> to vector<13x256xf32>
    %330 = vector.extract_strided_slice %328 {offsets = [13, 0], sizes = [1, 256], strides = [1, 1]} : vector<15x256xf32> to vector<1x256xf32>
    %c4_210 = arith.constant 4 : index
    %c0_211 = arith.constant 0 : index
    %331 = vector.load %arg2[%c4_210, %c0_211] : memref<7x256xf32, #tpu.memory_space<vmem>>, vector<1x256xf32>
    %332 = arith.mulf %330, %331 : vector<1x256xf32>
    %333 = vector.extract_strided_slice %328 {offsets = [14, 0], sizes = [1, 256], strides = [1, 1]} : vector<15x256xf32> to vector<1x256xf32>
    %334 = arith.mulf %215, %329 : vector<13x256xf32>
    %cst_212 = arith.constant dense<0.000000e+00> : vector<256xf32>
    %335 = vector.multi_reduction <add>, %334, %cst_212 [0] : vector<13x256xf32> to vector<256xf32>
    %336 = vector.shape_cast %335 : vector<256xf32> to vector<1x256xf32>
    %337 = arith.addf %207, %333 : vector<1x256xf32>
    %cst_213 = arith.constant 2.000000e+00 : f32
    %338 = vector.broadcast %cst_213 : f32 to vector<1x256xf32>
    %339 = arith.mulf %338, %336 : vector<1x256xf32>
    %340 = arith.subf %337, %339 : vector<1x256xf32>
    %c4_214 = arith.constant 4 : index
    %341 = memref.load %arg10[%c4_214] : memref<49xf32, #tpu.memory_space<smem>>
    %342 = vector.broadcast %341 : f32 to vector<1x256xf32>
    %343 = arith.addf %340, %342 : vector<1x256xf32>
    %cst_215 = arith.constant 0.000000e+00 : f32
    %344 = vector.broadcast %cst_215 : f32 to vector<1x256xf32>
    %345 = arith.subf %344, %343 : vector<1x256xf32>
    %346 = math.exp %345 : vector<1x256xf32>
    %347 = arith.mulf %346, %332 : vector<1x256xf32>
    %348 = vector.extract_strided_slice %329 {offsets = [0, 0], sizes = [4, 256], strides = [1, 1]} : vector<13x256xf32> to vector<4x256xf32>
    %349 = vector.broadcast %347 : vector<1x256xf32> to vector<4x256xf32>
    %350 = arith.mulf %349, %348 : vector<4x256xf32>
    %351 = arith.addf %324, %350 : vector<4x256xf32>
    %352 = arith.addf %325, %347 : vector<1x256xf32>
    %c0_216 = arith.constant 0 : index
    %c0_217 = arith.constant 0 : index
    %353 = vector.load %arg13[%c0_216, %c0_217] : memref<15x384xf32, #tpu.memory_space<vmem>>, vector<15x384xf32>
    %c46_i32 = arith.constant 46 : i32
    %354 = tpu.dynamic_rotate %353 by %c46_i32 dim 1 : vector<15x384xf32>, i32 -> vector<15x384xf32>
    %355 = vector.extract_strided_slice %354 {offsets = [0, 0], sizes = [15, 256], strides = [1, 1]} : vector<15x384xf32> to vector<15x256xf32>
    %356 = vector.extract_strided_slice %355 {offsets = [0, 0], sizes = [13, 256], strides = [1, 1]} : vector<15x256xf32> to vector<13x256xf32>
    %357 = vector.extract_strided_slice %355 {offsets = [13, 0], sizes = [1, 256], strides = [1, 1]} : vector<15x256xf32> to vector<1x256xf32>
    %c5_218 = arith.constant 5 : index
    %c0_219 = arith.constant 0 : index
    %358 = vector.load %arg2[%c5_218, %c0_219] : memref<7x256xf32, #tpu.memory_space<vmem>>, vector<1x256xf32>
    %359 = arith.mulf %357, %358 : vector<1x256xf32>
    %360 = vector.extract_strided_slice %355 {offsets = [14, 0], sizes = [1, 256], strides = [1, 1]} : vector<15x256xf32> to vector<1x256xf32>
    %361 = arith.mulf %215, %356 : vector<13x256xf32>
    %cst_220 = arith.constant dense<0.000000e+00> : vector<256xf32>
    %362 = vector.multi_reduction <add>, %361, %cst_220 [0] : vector<13x256xf32> to vector<256xf32>
    %363 = vector.shape_cast %362 : vector<256xf32> to vector<1x256xf32>
    %364 = arith.addf %207, %360 : vector<1x256xf32>
    %cst_221 = arith.constant 2.000000e+00 : f32
    %365 = vector.broadcast %cst_221 : f32 to vector<1x256xf32>
    %366 = arith.mulf %365, %363 : vector<1x256xf32>
    %367 = arith.subf %364, %366 : vector<1x256xf32>
    %c5_222 = arith.constant 5 : index
    %368 = memref.load %arg10[%c5_222] : memref<49xf32, #tpu.memory_space<smem>>
    %369 = vector.broadcast %368 : f32 to vector<1x256xf32>
    %370 = arith.addf %367, %369 : vector<1x256xf32>
    %cst_223 = arith.constant 0.000000e+00 : f32
    %371 = vector.broadcast %cst_223 : f32 to vector<1x256xf32>
    %372 = arith.subf %371, %370 : vector<1x256xf32>
    %373 = math.exp %372 : vector<1x256xf32>
    %374 = arith.mulf %373, %359 : vector<1x256xf32>
    %375 = vector.extract_strided_slice %356 {offsets = [0, 0], sizes = [4, 256], strides = [1, 1]} : vector<13x256xf32> to vector<4x256xf32>
    %376 = vector.broadcast %374 : vector<1x256xf32> to vector<4x256xf32>
    %377 = arith.mulf %376, %375 : vector<4x256xf32>
    %378 = arith.addf %351, %377 : vector<4x256xf32>
    %379 = arith.addf %352, %374 : vector<1x256xf32>
    %c0_224 = arith.constant 0 : index
    %c0_225 = arith.constant 0 : index
    %380 = vector.load %arg13[%c0_224, %c0_225] : memref<15x384xf32, #tpu.memory_space<vmem>>, vector<15x384xf32>
    %c45_i32 = arith.constant 45 : i32
    %381 = tpu.dynamic_rotate %380 by %c45_i32 dim 1 : vector<15x384xf32>, i32 -> vector<15x384xf32>
    %382 = vector.extract_strided_slice %381 {offsets = [0, 0], sizes = [15, 256], strides = [1, 1]} : vector<15x384xf32> to vector<15x256xf32>
    %383 = vector.extract_strided_slice %382 {offsets = [0, 0], sizes = [13, 256], strides = [1, 1]} : vector<15x256xf32> to vector<13x256xf32>
    %384 = vector.extract_strided_slice %382 {offsets = [13, 0], sizes = [1, 256], strides = [1, 1]} : vector<15x256xf32> to vector<1x256xf32>
    %c6_226 = arith.constant 6 : index
    %c0_227 = arith.constant 0 : index
    %385 = vector.load %arg2[%c6_226, %c0_227] : memref<7x256xf32, #tpu.memory_space<vmem>>, vector<1x256xf32>
    %386 = arith.mulf %384, %385 : vector<1x256xf32>
    %387 = vector.extract_strided_slice %382 {offsets = [14, 0], sizes = [1, 256], strides = [1, 1]} : vector<15x256xf32> to vector<1x256xf32>
    %388 = arith.mulf %215, %383 : vector<13x256xf32>
    %cst_228 = arith.constant dense<0.000000e+00> : vector<256xf32>
    %389 = vector.multi_reduction <add>, %388, %cst_228 [0] : vector<13x256xf32> to vector<256xf32>
    %390 = vector.shape_cast %389 : vector<256xf32> to vector<1x256xf32>
    %391 = arith.addf %207, %387 : vector<1x256xf32>
    %cst_229 = arith.constant 2.000000e+00 : f32
    %392 = vector.broadcast %cst_229 : f32 to vector<1x256xf32>
    %393 = arith.mulf %392, %390 : vector<1x256xf32>
    %394 = arith.subf %391, %393 : vector<1x256xf32>
    %c6_230 = arith.constant 6 : index
    %395 = memref.load %arg10[%c6_230] : memref<49xf32, #tpu.memory_space<smem>>
    %396 = vector.broadcast %395 : f32 to vector<1x256xf32>
    %397 = arith.addf %394, %396 : vector<1x256xf32>
    %cst_231 = arith.constant 0.000000e+00 : f32
    %398 = vector.broadcast %cst_231 : f32 to vector<1x256xf32>
    %399 = arith.subf %398, %397 : vector<1x256xf32>
    %400 = math.exp %399 : vector<1x256xf32>
    %401 = arith.mulf %400, %386 : vector<1x256xf32>
    %402 = vector.extract_strided_slice %383 {offsets = [0, 0], sizes = [4, 256], strides = [1, 1]} : vector<13x256xf32> to vector<4x256xf32>
    %403 = vector.broadcast %401 : vector<1x256xf32> to vector<4x256xf32>
    %404 = arith.mulf %403, %402 : vector<4x256xf32>
    %405 = arith.addf %378, %404 : vector<4x256xf32>
    %406 = arith.addf %379, %401 : vector<1x256xf32>
    %c0_232 = arith.constant 0 : index
    %c0_233 = arith.constant 0 : index
    %407 = vector.load %arg13[%c0_232, %c0_233] : memref<15x384xf32, #tpu.memory_space<vmem>>, vector<15x384xf32>
    %c35_i32 = arith.constant 35 : i32
    %408 = tpu.dynamic_rotate %407 by %c35_i32 dim 1 : vector<15x384xf32>, i32 -> vector<15x384xf32>
    %409 = vector.extract_strided_slice %408 {offsets = [0, 0], sizes = [15, 256], strides = [1, 1]} : vector<15x384xf32> to vector<15x256xf32>
    %410 = vector.extract_strided_slice %409 {offsets = [0, 0], sizes = [13, 256], strides = [1, 1]} : vector<15x256xf32> to vector<13x256xf32>
    %411 = vector.extract_strided_slice %409 {offsets = [13, 0], sizes = [1, 256], strides = [1, 1]} : vector<15x256xf32> to vector<1x256xf32>
    %c0_234 = arith.constant 0 : index
    %c0_235 = arith.constant 0 : index
    %412 = vector.load %arg2[%c0_234, %c0_235] : memref<7x256xf32, #tpu.memory_space<vmem>>, vector<1x256xf32>
    %413 = arith.mulf %411, %412 : vector<1x256xf32>
    %414 = vector.extract_strided_slice %409 {offsets = [14, 0], sizes = [1, 256], strides = [1, 1]} : vector<15x256xf32> to vector<1x256xf32>
    %415 = arith.mulf %215, %410 : vector<13x256xf32>
    %cst_236 = arith.constant dense<0.000000e+00> : vector<256xf32>
    %416 = vector.multi_reduction <add>, %415, %cst_236 [0] : vector<13x256xf32> to vector<256xf32>
    %417 = vector.shape_cast %416 : vector<256xf32> to vector<1x256xf32>
    %418 = arith.addf %207, %414 : vector<1x256xf32>
    %cst_237 = arith.constant 2.000000e+00 : f32
    %419 = vector.broadcast %cst_237 : f32 to vector<1x256xf32>
    %420 = arith.mulf %419, %417 : vector<1x256xf32>
    %421 = arith.subf %418, %420 : vector<1x256xf32>
    %c7_238 = arith.constant 7 : index
    %422 = memref.load %arg10[%c7_238] : memref<49xf32, #tpu.memory_space<smem>>
    %423 = vector.broadcast %422 : f32 to vector<1x256xf32>
    %424 = arith.addf %421, %423 : vector<1x256xf32>
    %cst_239 = arith.constant 0.000000e+00 : f32
    %425 = vector.broadcast %cst_239 : f32 to vector<1x256xf32>
    %426 = arith.subf %425, %424 : vector<1x256xf32>
    %427 = math.exp %426 : vector<1x256xf32>
    %428 = arith.mulf %427, %413 : vector<1x256xf32>
    %429 = vector.extract_strided_slice %410 {offsets = [0, 0], sizes = [4, 256], strides = [1, 1]} : vector<13x256xf32> to vector<4x256xf32>
    %430 = vector.broadcast %428 : vector<1x256xf32> to vector<4x256xf32>
    %431 = arith.mulf %430, %429 : vector<4x256xf32>
    %432 = arith.addf %405, %431 : vector<4x256xf32>
    %433 = arith.addf %406, %428 : vector<1x256xf32>
    %c0_240 = arith.constant 0 : index
    %c0_241 = arith.constant 0 : index
    %434 = vector.load %arg13[%c0_240, %c0_241] : memref<15x384xf32, #tpu.memory_space<vmem>>, vector<15x384xf32>
    %c34_i32 = arith.constant 34 : i32
    %435 = tpu.dynamic_rotate %434 by %c34_i32 dim 1 : vector<15x384xf32>, i32 -> vector<15x384xf32>
    %436 = vector.extract_strided_slice %435 {offsets = [0, 0], sizes = [15, 256], strides = [1, 1]} : vector<15x384xf32> to vector<15x256xf32>
    %437 = vector.extract_strided_slice %436 {offsets = [0, 0], sizes = [13, 256], strides = [1, 1]} : vector<15x256xf32> to vector<13x256xf32>
    %438 = vector.extract_strided_slice %436 {offsets = [13, 0], sizes = [1, 256], strides = [1, 1]} : vector<15x256xf32> to vector<1x256xf32>
    %c1_242 = arith.constant 1 : index
    %c0_243 = arith.constant 0 : index
    %439 = vector.load %arg2[%c1_242, %c0_243] : memref<7x256xf32, #tpu.memory_space<vmem>>, vector<1x256xf32>
    %440 = arith.mulf %438, %439 : vector<1x256xf32>
    %441 = vector.extract_strided_slice %436 {offsets = [14, 0], sizes = [1, 256], strides = [1, 1]} : vector<15x256xf32> to vector<1x256xf32>
    %442 = arith.mulf %215, %437 : vector<13x256xf32>
    %cst_244 = arith.constant dense<0.000000e+00> : vector<256xf32>
    %443 = vector.multi_reduction <add>, %442, %cst_244 [0] : vector<13x256xf32> to vector<256xf32>
    %444 = vector.shape_cast %443 : vector<256xf32> to vector<1x256xf32>
    %445 = arith.addf %207, %441 : vector<1x256xf32>
    %cst_245 = arith.constant 2.000000e+00 : f32
    %446 = vector.broadcast %cst_245 : f32 to vector<1x256xf32>
    %447 = arith.mulf %446, %444 : vector<1x256xf32>
    %448 = arith.subf %445, %447 : vector<1x256xf32>
    %c8_246 = arith.constant 8 : index
    %449 = memref.load %arg10[%c8_246] : memref<49xf32, #tpu.memory_space<smem>>
    %450 = vector.broadcast %449 : f32 to vector<1x256xf32>
    %451 = arith.addf %448, %450 : vector<1x256xf32>
    %cst_247 = arith.constant 0.000000e+00 : f32
    %452 = vector.broadcast %cst_247 : f32 to vector<1x256xf32>
    %453 = arith.subf %452, %451 : vector<1x256xf32>
    %454 = math.exp %453 : vector<1x256xf32>
    %455 = arith.mulf %454, %440 : vector<1x256xf32>
    %456 = vector.extract_strided_slice %437 {offsets = [0, 0], sizes = [4, 256], strides = [1, 1]} : vector<13x256xf32> to vector<4x256xf32>
    %457 = vector.broadcast %455 : vector<1x256xf32> to vector<4x256xf32>
    %458 = arith.mulf %457, %456 : vector<4x256xf32>
    %459 = arith.addf %432, %458 : vector<4x256xf32>
    %460 = arith.addf %433, %455 : vector<1x256xf32>
    %c0_248 = arith.constant 0 : index
    %c0_249 = arith.constant 0 : index
    %461 = vector.load %arg13[%c0_248, %c0_249] : memref<15x384xf32, #tpu.memory_space<vmem>>, vector<15x384xf32>
    %c33_i32 = arith.constant 33 : i32
    %462 = tpu.dynamic_rotate %461 by %c33_i32 dim 1 : vector<15x384xf32>, i32 -> vector<15x384xf32>
    %463 = vector.extract_strided_slice %462 {offsets = [0, 0], sizes = [15, 256], strides = [1, 1]} : vector<15x384xf32> to vector<15x256xf32>
    %464 = vector.extract_strided_slice %463 {offsets = [0, 0], sizes = [13, 256], strides = [1, 1]} : vector<15x256xf32> to vector<13x256xf32>
    %465 = vector.extract_strided_slice %463 {offsets = [13, 0], sizes = [1, 256], strides = [1, 1]} : vector<15x256xf32> to vector<1x256xf32>
    %c2_250 = arith.constant 2 : index
    %c0_251 = arith.constant 0 : index
    %466 = vector.load %arg2[%c2_250, %c0_251] : memref<7x256xf32, #tpu.memory_space<vmem>>, vector<1x256xf32>
    %467 = arith.mulf %465, %466 : vector<1x256xf32>
    %468 = vector.extract_strided_slice %463 {offsets = [14, 0], sizes = [1, 256], strides = [1, 1]} : vector<15x256xf32> to vector<1x256xf32>
    %469 = arith.mulf %215, %464 : vector<13x256xf32>
    %cst_252 = arith.constant dense<0.000000e+00> : vector<256xf32>
    %470 = vector.multi_reduction <add>, %469, %cst_252 [0] : vector<13x256xf32> to vector<256xf32>
    %471 = vector.shape_cast %470 : vector<256xf32> to vector<1x256xf32>
    %472 = arith.addf %207, %468 : vector<1x256xf32>
    %cst_253 = arith.constant 2.000000e+00 : f32
    %473 = vector.broadcast %cst_253 : f32 to vector<1x256xf32>
    %474 = arith.mulf %473, %471 : vector<1x256xf32>
    %475 = arith.subf %472, %474 : vector<1x256xf32>
    %c9 = arith.constant 9 : index
    %476 = memref.load %arg10[%c9] : memref<49xf32, #tpu.memory_space<smem>>
    %477 = vector.broadcast %476 : f32 to vector<1x256xf32>
    %478 = arith.addf %475, %477 : vector<1x256xf32>
    %cst_254 = arith.constant 0.000000e+00 : f32
    %479 = vector.broadcast %cst_254 : f32 to vector<1x256xf32>
    %480 = arith.subf %479, %478 : vector<1x256xf32>
    %481 = math.exp %480 : vector<1x256xf32>
    %482 = arith.mulf %481, %467 : vector<1x256xf32>
    %483 = vector.extract_strided_slice %464 {offsets = [0, 0], sizes = [4, 256], strides = [1, 1]} : vector<13x256xf32> to vector<4x256xf32>
    %484 = vector.broadcast %482 : vector<1x256xf32> to vector<4x256xf32>
    %485 = arith.mulf %484, %483 : vector<4x256xf32>
    %486 = arith.addf %459, %485 : vector<4x256xf32>
    %487 = arith.addf %460, %482 : vector<1x256xf32>
    %c0_255 = arith.constant 0 : index
    %c0_256 = arith.constant 0 : index
    %488 = vector.load %arg13[%c0_255, %c0_256] : memref<15x384xf32, #tpu.memory_space<vmem>>, vector<15x384xf32>
    %c32_i32 = arith.constant 32 : i32
    %489 = tpu.dynamic_rotate %488 by %c32_i32 dim 1 : vector<15x384xf32>, i32 -> vector<15x384xf32>
    %490 = vector.extract_strided_slice %489 {offsets = [0, 0], sizes = [15, 256], strides = [1, 1]} : vector<15x384xf32> to vector<15x256xf32>
    %491 = vector.extract_strided_slice %490 {offsets = [0, 0], sizes = [13, 256], strides = [1, 1]} : vector<15x256xf32> to vector<13x256xf32>
    %492 = vector.extract_strided_slice %490 {offsets = [13, 0], sizes = [1, 256], strides = [1, 1]} : vector<15x256xf32> to vector<1x256xf32>
    %c3_257 = arith.constant 3 : index
    %c0_258 = arith.constant 0 : index
    %493 = vector.load %arg2[%c3_257, %c0_258] : memref<7x256xf32, #tpu.memory_space<vmem>>, vector<1x256xf32>
    %494 = arith.mulf %492, %493 : vector<1x256xf32>
    %495 = vector.extract_strided_slice %490 {offsets = [14, 0], sizes = [1, 256], strides = [1, 1]} : vector<15x256xf32> to vector<1x256xf32>
    %496 = arith.mulf %215, %491 : vector<13x256xf32>
    %cst_259 = arith.constant dense<0.000000e+00> : vector<256xf32>
    %497 = vector.multi_reduction <add>, %496, %cst_259 [0] : vector<13x256xf32> to vector<256xf32>
    %498 = vector.shape_cast %497 : vector<256xf32> to vector<1x256xf32>
    %499 = arith.addf %207, %495 : vector<1x256xf32>
    %cst_260 = arith.constant 2.000000e+00 : f32
    %500 = vector.broadcast %cst_260 : f32 to vector<1x256xf32>
    %501 = arith.mulf %500, %498 : vector<1x256xf32>
    %502 = arith.subf %499, %501 : vector<1x256xf32>
    %c10 = arith.constant 10 : index
    %503 = memref.load %arg10[%c10] : memref<49xf32, #tpu.memory_space<smem>>
    %504 = vector.broadcast %503 : f32 to vector<1x256xf32>
    %505 = arith.addf %502, %504 : vector<1x256xf32>
    %cst_261 = arith.constant 0.000000e+00 : f32
    %506 = vector.broadcast %cst_261 : f32 to vector<1x256xf32>
    %507 = arith.subf %506, %505 : vector<1x256xf32>
    %508 = math.exp %507 : vector<1x256xf32>
    %509 = arith.mulf %508, %494 : vector<1x256xf32>
    %510 = vector.extract_strided_slice %491 {offsets = [0, 0], sizes = [4, 256], strides = [1, 1]} : vector<13x256xf32> to vector<4x256xf32>
    %511 = vector.broadcast %509 : vector<1x256xf32> to vector<4x256xf32>
    %512 = arith.mulf %511, %510 : vector<4x256xf32>
    %513 = arith.addf %486, %512 : vector<4x256xf32>
    %514 = arith.addf %487, %509 : vector<1x256xf32>
    %c0_262 = arith.constant 0 : index
    %c0_263 = arith.constant 0 : index
    %515 = vector.load %arg13[%c0_262, %c0_263] : memref<15x384xf32, #tpu.memory_space<vmem>>, vector<15x384xf32>
    %c31_i32 = arith.constant 31 : i32
    %516 = tpu.dynamic_rotate %515 by %c31_i32 dim 1 : vector<15x384xf32>, i32 -> vector<15x384xf32>
    %517 = vector.extract_strided_slice %516 {offsets = [0, 0], sizes = [15, 256], strides = [1, 1]} : vector<15x384xf32> to vector<15x256xf32>
    %518 = vector.extract_strided_slice %517 {offsets = [0, 0], sizes = [13, 256], strides = [1, 1]} : vector<15x256xf32> to vector<13x256xf32>
    %519 = vector.extract_strided_slice %517 {offsets = [13, 0], sizes = [1, 256], strides = [1, 1]} : vector<15x256xf32> to vector<1x256xf32>
    %c4_264 = arith.constant 4 : index
    %c0_265 = arith.constant 0 : index
    %520 = vector.load %arg2[%c4_264, %c0_265] : memref<7x256xf32, #tpu.memory_space<vmem>>, vector<1x256xf32>
    %521 = arith.mulf %519, %520 : vector<1x256xf32>
    %522 = vector.extract_strided_slice %517 {offsets = [14, 0], sizes = [1, 256], strides = [1, 1]} : vector<15x256xf32> to vector<1x256xf32>
    %523 = arith.mulf %215, %518 : vector<13x256xf32>
    %cst_266 = arith.constant dense<0.000000e+00> : vector<256xf32>
    %524 = vector.multi_reduction <add>, %523, %cst_266 [0] : vector<13x256xf32> to vector<256xf32>
    %525 = vector.shape_cast %524 : vector<256xf32> to vector<1x256xf32>
    %526 = arith.addf %207, %522 : vector<1x256xf32>
    %cst_267 = arith.constant 2.000000e+00 : f32
    %527 = vector.broadcast %cst_267 : f32 to vector<1x256xf32>
    %528 = arith.mulf %527, %525 : vector<1x256xf32>
    %529 = arith.subf %526, %528 : vector<1x256xf32>
    %c11 = arith.constant 11 : index
    %530 = memref.load %arg10[%c11] : memref<49xf32, #tpu.memory_space<smem>>
    %531 = vector.broadcast %530 : f32 to vector<1x256xf32>
    %532 = arith.addf %529, %531 : vector<1x256xf32>
    %cst_268 = arith.constant 0.000000e+00 : f32
    %533 = vector.broadcast %cst_268 : f32 to vector<1x256xf32>
    %534 = arith.subf %533, %532 : vector<1x256xf32>
    %535 = math.exp %534 : vector<1x256xf32>
    %536 = arith.mulf %535, %521 : vector<1x256xf32>
    %537 = vector.extract_strided_slice %518 {offsets = [0, 0], sizes = [4, 256], strides = [1, 1]} : vector<13x256xf32> to vector<4x256xf32>
    %538 = vector.broadcast %536 : vector<1x256xf32> to vector<4x256xf32>
    %539 = arith.mulf %538, %537 : vector<4x256xf32>
    %540 = arith.addf %513, %539 : vector<4x256xf32>
    %541 = arith.addf %514, %536 : vector<1x256xf32>
    %c0_269 = arith.constant 0 : index
    %c0_270 = arith.constant 0 : index
    %542 = vector.load %arg13[%c0_269, %c0_270] : memref<15x384xf32, #tpu.memory_space<vmem>>, vector<15x384xf32>
    %c30_i32 = arith.constant 30 : i32
    %543 = tpu.dynamic_rotate %542 by %c30_i32 dim 1 : vector<15x384xf32>, i32 -> vector<15x384xf32>
    %544 = vector.extract_strided_slice %543 {offsets = [0, 0], sizes = [15, 256], strides = [1, 1]} : vector<15x384xf32> to vector<15x256xf32>
    %545 = vector.extract_strided_slice %544 {offsets = [0, 0], sizes = [13, 256], strides = [1, 1]} : vector<15x256xf32> to vector<13x256xf32>
    %546 = vector.extract_strided_slice %544 {offsets = [13, 0], sizes = [1, 256], strides = [1, 1]} : vector<15x256xf32> to vector<1x256xf32>
    %c5_271 = arith.constant 5 : index
    %c0_272 = arith.constant 0 : index
    %547 = vector.load %arg2[%c5_271, %c0_272] : memref<7x256xf32, #tpu.memory_space<vmem>>, vector<1x256xf32>
    %548 = arith.mulf %546, %547 : vector<1x256xf32>
    %549 = vector.extract_strided_slice %544 {offsets = [14, 0], sizes = [1, 256], strides = [1, 1]} : vector<15x256xf32> to vector<1x256xf32>
    %550 = arith.mulf %215, %545 : vector<13x256xf32>
    %cst_273 = arith.constant dense<0.000000e+00> : vector<256xf32>
    %551 = vector.multi_reduction <add>, %550, %cst_273 [0] : vector<13x256xf32> to vector<256xf32>
    %552 = vector.shape_cast %551 : vector<256xf32> to vector<1x256xf32>
    %553 = arith.addf %207, %549 : vector<1x256xf32>
    %cst_274 = arith.constant 2.000000e+00 : f32
    %554 = vector.broadcast %cst_274 : f32 to vector<1x256xf32>
    %555 = arith.mulf %554, %552 : vector<1x256xf32>
    %556 = arith.subf %553, %555 : vector<1x256xf32>
    %c12 = arith.constant 12 : index
    %557 = memref.load %arg10[%c12] : memref<49xf32, #tpu.memory_space<smem>>
    %558 = vector.broadcast %557 : f32 to vector<1x256xf32>
    %559 = arith.addf %556, %558 : vector<1x256xf32>
    %cst_275 = arith.constant 0.000000e+00 : f32
    %560 = vector.broadcast %cst_275 : f32 to vector<1x256xf32>
    %561 = arith.subf %560, %559 : vector<1x256xf32>
    %562 = math.exp %561 : vector<1x256xf32>
    %563 = arith.mulf %562, %548 : vector<1x256xf32>
    %564 = vector.extract_strided_slice %545 {offsets = [0, 0], sizes = [4, 256], strides = [1, 1]} : vector<13x256xf32> to vector<4x256xf32>
    %565 = vector.broadcast %563 : vector<1x256xf32> to vector<4x256xf32>
    %566 = arith.mulf %565, %564 : vector<4x256xf32>
    %567 = arith.addf %540, %566 : vector<4x256xf32>
    %568 = arith.addf %541, %563 : vector<1x256xf32>
    %c0_276 = arith.constant 0 : index
    %c0_277 = arith.constant 0 : index
    %569 = vector.load %arg13[%c0_276, %c0_277] : memref<15x384xf32, #tpu.memory_space<vmem>>, vector<15x384xf32>
    %c29_i32 = arith.constant 29 : i32
    %570 = tpu.dynamic_rotate %569 by %c29_i32 dim 1 : vector<15x384xf32>, i32 -> vector<15x384xf32>
    %571 = vector.extract_strided_slice %570 {offsets = [0, 0], sizes = [15, 256], strides = [1, 1]} : vector<15x384xf32> to vector<15x256xf32>
    %572 = vector.extract_strided_slice %571 {offsets = [0, 0], sizes = [13, 256], strides = [1, 1]} : vector<15x256xf32> to vector<13x256xf32>
    %573 = vector.extract_strided_slice %571 {offsets = [13, 0], sizes = [1, 256], strides = [1, 1]} : vector<15x256xf32> to vector<1x256xf32>
    %c6_278 = arith.constant 6 : index
    %c0_279 = arith.constant 0 : index
    %574 = vector.load %arg2[%c6_278, %c0_279] : memref<7x256xf32, #tpu.memory_space<vmem>>, vector<1x256xf32>
    %575 = arith.mulf %573, %574 : vector<1x256xf32>
    %576 = vector.extract_strided_slice %571 {offsets = [14, 0], sizes = [1, 256], strides = [1, 1]} : vector<15x256xf32> to vector<1x256xf32>
    %577 = arith.mulf %215, %572 : vector<13x256xf32>
    %cst_280 = arith.constant dense<0.000000e+00> : vector<256xf32>
    %578 = vector.multi_reduction <add>, %577, %cst_280 [0] : vector<13x256xf32> to vector<256xf32>
    %579 = vector.shape_cast %578 : vector<256xf32> to vector<1x256xf32>
    %580 = arith.addf %207, %576 : vector<1x256xf32>
    %cst_281 = arith.constant 2.000000e+00 : f32
    %581 = vector.broadcast %cst_281 : f32 to vector<1x256xf32>
    %582 = arith.mulf %581, %579 : vector<1x256xf32>
    %583 = arith.subf %580, %582 : vector<1x256xf32>
    %c13_282 = arith.constant 13 : index
    %584 = memref.load %arg10[%c13_282] : memref<49xf32, #tpu.memory_space<smem>>
    %585 = vector.broadcast %584 : f32 to vector<1x256xf32>
    %586 = arith.addf %583, %585 : vector<1x256xf32>
    %cst_283 = arith.constant 0.000000e+00 : f32
    %587 = vector.broadcast %cst_283 : f32 to vector<1x256xf32>
    %588 = arith.subf %587, %586 : vector<1x256xf32>
    %589 = math.exp %588 : vector<1x256xf32>
    %590 = arith.mulf %589, %575 : vector<1x256xf32>
    %591 = vector.extract_strided_slice %572 {offsets = [0, 0], sizes = [4, 256], strides = [1, 1]} : vector<13x256xf32> to vector<4x256xf32>
    %592 = vector.broadcast %590 : vector<1x256xf32> to vector<4x256xf32>
    %593 = arith.mulf %592, %591 : vector<4x256xf32>
    %594 = arith.addf %567, %593 : vector<4x256xf32>
    %595 = arith.addf %568, %590 : vector<1x256xf32>
    %c0_284 = arith.constant 0 : index
    %c0_285 = arith.constant 0 : index
    %596 = vector.load %arg13[%c0_284, %c0_285] : memref<15x384xf32, #tpu.memory_space<vmem>>, vector<15x384xf32>
    %c19_i32 = arith.constant 19 : i32
    %597 = tpu.dynamic_rotate %596 by %c19_i32 dim 1 : vector<15x384xf32>, i32 -> vector<15x384xf32>
    %598 = vector.extract_strided_slice %597 {offsets = [0, 0], sizes = [15, 256], strides = [1, 1]} : vector<15x384xf32> to vector<15x256xf32>
    %599 = vector.extract_strided_slice %598 {offsets = [0, 0], sizes = [13, 256], strides = [1, 1]} : vector<15x256xf32> to vector<13x256xf32>
    %600 = vector.extract_strided_slice %598 {offsets = [13, 0], sizes = [1, 256], strides = [1, 1]} : vector<15x256xf32> to vector<1x256xf32>
    %c0_286 = arith.constant 0 : index
    %c0_287 = arith.constant 0 : index
    %601 = vector.load %arg2[%c0_286, %c0_287] : memref<7x256xf32, #tpu.memory_space<vmem>>, vector<1x256xf32>
    %602 = arith.mulf %600, %601 : vector<1x256xf32>
    %603 = vector.extract_strided_slice %598 {offsets = [14, 0], sizes = [1, 256], strides = [1, 1]} : vector<15x256xf32> to vector<1x256xf32>
    %604 = arith.mulf %215, %599 : vector<13x256xf32>
    %cst_288 = arith.constant dense<0.000000e+00> : vector<256xf32>
    %605 = vector.multi_reduction <add>, %604, %cst_288 [0] : vector<13x256xf32> to vector<256xf32>
    %606 = vector.shape_cast %605 : vector<256xf32> to vector<1x256xf32>
    %607 = arith.addf %207, %603 : vector<1x256xf32>
    %cst_289 = arith.constant 2.000000e+00 : f32
    %608 = vector.broadcast %cst_289 : f32 to vector<1x256xf32>
    %609 = arith.mulf %608, %606 : vector<1x256xf32>
    %610 = arith.subf %607, %609 : vector<1x256xf32>
    %c14_290 = arith.constant 14 : index
    %611 = memref.load %arg10[%c14_290] : memref<49xf32, #tpu.memory_space<smem>>
    %612 = vector.broadcast %611 : f32 to vector<1x256xf32>
    %613 = arith.addf %610, %612 : vector<1x256xf32>
    %cst_291 = arith.constant 0.000000e+00 : f32
    %614 = vector.broadcast %cst_291 : f32 to vector<1x256xf32>
    %615 = arith.subf %614, %613 : vector<1x256xf32>
    %616 = math.exp %615 : vector<1x256xf32>
    %617 = arith.mulf %616, %602 : vector<1x256xf32>
    %618 = vector.extract_strided_slice %599 {offsets = [0, 0], sizes = [4, 256], strides = [1, 1]} : vector<13x256xf32> to vector<4x256xf32>
    %619 = vector.broadcast %617 : vector<1x256xf32> to vector<4x256xf32>
    %620 = arith.mulf %619, %618 : vector<4x256xf32>
    %621 = arith.addf %594, %620 : vector<4x256xf32>
    %622 = arith.addf %595, %617 : vector<1x256xf32>
    %c0_292 = arith.constant 0 : index
    %c0_293 = arith.constant 0 : index
    %623 = vector.load %arg13[%c0_292, %c0_293] : memref<15x384xf32, #tpu.memory_space<vmem>>, vector<15x384xf32>
    %c18_i32 = arith.constant 18 : i32
    %624 = tpu.dynamic_rotate %623 by %c18_i32 dim 1 : vector<15x384xf32>, i32 -> vector<15x384xf32>
    %625 = vector.extract_strided_slice %624 {offsets = [0, 0], sizes = [15, 256], strides = [1, 1]} : vector<15x384xf32> to vector<15x256xf32>
    %626 = vector.extract_strided_slice %625 {offsets = [0, 0], sizes = [13, 256], strides = [1, 1]} : vector<15x256xf32> to vector<13x256xf32>
    %627 = vector.extract_strided_slice %625 {offsets = [13, 0], sizes = [1, 256], strides = [1, 1]} : vector<15x256xf32> to vector<1x256xf32>
    %c1_294 = arith.constant 1 : index
    %c0_295 = arith.constant 0 : index
    %628 = vector.load %arg2[%c1_294, %c0_295] : memref<7x256xf32, #tpu.memory_space<vmem>>, vector<1x256xf32>
    %629 = arith.mulf %627, %628 : vector<1x256xf32>
    %630 = vector.extract_strided_slice %625 {offsets = [14, 0], sizes = [1, 256], strides = [1, 1]} : vector<15x256xf32> to vector<1x256xf32>
    %631 = arith.mulf %215, %626 : vector<13x256xf32>
    %cst_296 = arith.constant dense<0.000000e+00> : vector<256xf32>
    %632 = vector.multi_reduction <add>, %631, %cst_296 [0] : vector<13x256xf32> to vector<256xf32>
    %633 = vector.shape_cast %632 : vector<256xf32> to vector<1x256xf32>
    %634 = arith.addf %207, %630 : vector<1x256xf32>
    %cst_297 = arith.constant 2.000000e+00 : f32
    %635 = vector.broadcast %cst_297 : f32 to vector<1x256xf32>
    %636 = arith.mulf %635, %633 : vector<1x256xf32>
    %637 = arith.subf %634, %636 : vector<1x256xf32>
    %c15 = arith.constant 15 : index
    %638 = memref.load %arg10[%c15] : memref<49xf32, #tpu.memory_space<smem>>
    %639 = vector.broadcast %638 : f32 to vector<1x256xf32>
    %640 = arith.addf %637, %639 : vector<1x256xf32>
    %cst_298 = arith.constant 0.000000e+00 : f32
    %641 = vector.broadcast %cst_298 : f32 to vector<1x256xf32>
    %642 = arith.subf %641, %640 : vector<1x256xf32>
    %643 = math.exp %642 : vector<1x256xf32>
    %644 = arith.mulf %643, %629 : vector<1x256xf32>
    %645 = vector.extract_strided_slice %626 {offsets = [0, 0], sizes = [4, 256], strides = [1, 1]} : vector<13x256xf32> to vector<4x256xf32>
    %646 = vector.broadcast %644 : vector<1x256xf32> to vector<4x256xf32>
    %647 = arith.mulf %646, %645 : vector<4x256xf32>
    %648 = arith.addf %621, %647 : vector<4x256xf32>
    %649 = arith.addf %622, %644 : vector<1x256xf32>
    %c0_299 = arith.constant 0 : index
    %c0_300 = arith.constant 0 : index
    %650 = vector.load %arg13[%c0_299, %c0_300] : memref<15x384xf32, #tpu.memory_space<vmem>>, vector<15x384xf32>
    %c17_i32_301 = arith.constant 17 : i32
    %651 = tpu.dynamic_rotate %650 by %c17_i32_301 dim 1 : vector<15x384xf32>, i32 -> vector<15x384xf32>
    %652 = vector.extract_strided_slice %651 {offsets = [0, 0], sizes = [15, 256], strides = [1, 1]} : vector<15x384xf32> to vector<15x256xf32>
    %653 = vector.extract_strided_slice %652 {offsets = [0, 0], sizes = [13, 256], strides = [1, 1]} : vector<15x256xf32> to vector<13x256xf32>
    %654 = vector.extract_strided_slice %652 {offsets = [13, 0], sizes = [1, 256], strides = [1, 1]} : vector<15x256xf32> to vector<1x256xf32>
    %c2_302 = arith.constant 2 : index
    %c0_303 = arith.constant 0 : index
    %655 = vector.load %arg2[%c2_302, %c0_303] : memref<7x256xf32, #tpu.memory_space<vmem>>, vector<1x256xf32>
    %656 = arith.mulf %654, %655 : vector<1x256xf32>
    %657 = vector.extract_strided_slice %652 {offsets = [14, 0], sizes = [1, 256], strides = [1, 1]} : vector<15x256xf32> to vector<1x256xf32>
    %658 = arith.mulf %215, %653 : vector<13x256xf32>
    %cst_304 = arith.constant dense<0.000000e+00> : vector<256xf32>
    %659 = vector.multi_reduction <add>, %658, %cst_304 [0] : vector<13x256xf32> to vector<256xf32>
    %660 = vector.shape_cast %659 : vector<256xf32> to vector<1x256xf32>
    %661 = arith.addf %207, %657 : vector<1x256xf32>
    %cst_305 = arith.constant 2.000000e+00 : f32
    %662 = vector.broadcast %cst_305 : f32 to vector<1x256xf32>
    %663 = arith.mulf %662, %660 : vector<1x256xf32>
    %664 = arith.subf %661, %663 : vector<1x256xf32>
    %c16 = arith.constant 16 : index
    %665 = memref.load %arg10[%c16] : memref<49xf32, #tpu.memory_space<smem>>
    %666 = vector.broadcast %665 : f32 to vector<1x256xf32>
    %667 = arith.addf %664, %666 : vector<1x256xf32>
    %cst_306 = arith.constant 0.000000e+00 : f32
    %668 = vector.broadcast %cst_306 : f32 to vector<1x256xf32>
    %669 = arith.subf %668, %667 : vector<1x256xf32>
    %670 = math.exp %669 : vector<1x256xf32>
    %671 = arith.mulf %670, %656 : vector<1x256xf32>
    %672 = vector.extract_strided_slice %653 {offsets = [0, 0], sizes = [4, 256], strides = [1, 1]} : vector<13x256xf32> to vector<4x256xf32>
    %673 = vector.broadcast %671 : vector<1x256xf32> to vector<4x256xf32>
    %674 = arith.mulf %673, %672 : vector<4x256xf32>
    %675 = arith.addf %648, %674 : vector<4x256xf32>
    %676 = arith.addf %649, %671 : vector<1x256xf32>
    %c0_307 = arith.constant 0 : index
    %c0_308 = arith.constant 0 : index
    %677 = vector.load %arg13[%c0_307, %c0_308] : memref<15x384xf32, #tpu.memory_space<vmem>>, vector<15x384xf32>
    %c16_i32_309 = arith.constant 16 : i32
    %678 = tpu.dynamic_rotate %677 by %c16_i32_309 dim 1 : vector<15x384xf32>, i32 -> vector<15x384xf32>
    %679 = vector.extract_strided_slice %678 {offsets = [0, 0], sizes = [15, 256], strides = [1, 1]} : vector<15x384xf32> to vector<15x256xf32>
    %680 = vector.extract_strided_slice %679 {offsets = [0, 0], sizes = [13, 256], strides = [1, 1]} : vector<15x256xf32> to vector<13x256xf32>
    %681 = vector.extract_strided_slice %679 {offsets = [13, 0], sizes = [1, 256], strides = [1, 1]} : vector<15x256xf32> to vector<1x256xf32>
    %c3_310 = arith.constant 3 : index
    %c0_311 = arith.constant 0 : index
    %682 = vector.load %arg2[%c3_310, %c0_311] : memref<7x256xf32, #tpu.memory_space<vmem>>, vector<1x256xf32>
    %683 = arith.mulf %681, %682 : vector<1x256xf32>
    %684 = vector.extract_strided_slice %679 {offsets = [14, 0], sizes = [1, 256], strides = [1, 1]} : vector<15x256xf32> to vector<1x256xf32>
    %685 = arith.mulf %215, %680 : vector<13x256xf32>
    %cst_312 = arith.constant dense<0.000000e+00> : vector<256xf32>
    %686 = vector.multi_reduction <add>, %685, %cst_312 [0] : vector<13x256xf32> to vector<256xf32>
    %687 = vector.shape_cast %686 : vector<256xf32> to vector<1x256xf32>
    %688 = arith.addf %207, %684 : vector<1x256xf32>
    %cst_313 = arith.constant 2.000000e+00 : f32
    %689 = vector.broadcast %cst_313 : f32 to vector<1x256xf32>
    %690 = arith.mulf %689, %687 : vector<1x256xf32>
    %691 = arith.subf %688, %690 : vector<1x256xf32>
    %c17 = arith.constant 17 : index
    %692 = memref.load %arg10[%c17] : memref<49xf32, #tpu.memory_space<smem>>
    %693 = vector.broadcast %692 : f32 to vector<1x256xf32>
    %694 = arith.addf %691, %693 : vector<1x256xf32>
    %cst_314 = arith.constant 0.000000e+00 : f32
    %695 = vector.broadcast %cst_314 : f32 to vector<1x256xf32>
    %696 = arith.subf %695, %694 : vector<1x256xf32>
    %697 = math.exp %696 : vector<1x256xf32>
    %698 = arith.mulf %697, %683 : vector<1x256xf32>
    %699 = vector.extract_strided_slice %680 {offsets = [0, 0], sizes = [4, 256], strides = [1, 1]} : vector<13x256xf32> to vector<4x256xf32>
    %700 = vector.broadcast %698 : vector<1x256xf32> to vector<4x256xf32>
    %701 = arith.mulf %700, %699 : vector<4x256xf32>
    %702 = arith.addf %675, %701 : vector<4x256xf32>
    %703 = arith.addf %676, %698 : vector<1x256xf32>
    %c0_315 = arith.constant 0 : index
    %c0_316 = arith.constant 0 : index
    %704 = vector.load %arg13[%c0_315, %c0_316] : memref<15x384xf32, #tpu.memory_space<vmem>>, vector<15x384xf32>
    %c15_i32_317 = arith.constant 15 : i32
    %705 = tpu.dynamic_rotate %704 by %c15_i32_317 dim 1 : vector<15x384xf32>, i32 -> vector<15x384xf32>
    %706 = vector.extract_strided_slice %705 {offsets = [0, 0], sizes = [15, 256], strides = [1, 1]} : vector<15x384xf32> to vector<15x256xf32>
    %707 = vector.extract_strided_slice %706 {offsets = [0, 0], sizes = [13, 256], strides = [1, 1]} : vector<15x256xf32> to vector<13x256xf32>
    %708 = vector.extract_strided_slice %706 {offsets = [13, 0], sizes = [1, 256], strides = [1, 1]} : vector<15x256xf32> to vector<1x256xf32>
    %c4_318 = arith.constant 4 : index
    %c0_319 = arith.constant 0 : index
    %709 = vector.load %arg2[%c4_318, %c0_319] : memref<7x256xf32, #tpu.memory_space<vmem>>, vector<1x256xf32>
    %710 = arith.mulf %708, %709 : vector<1x256xf32>
    %711 = vector.extract_strided_slice %706 {offsets = [14, 0], sizes = [1, 256], strides = [1, 1]} : vector<15x256xf32> to vector<1x256xf32>
    %712 = arith.mulf %215, %707 : vector<13x256xf32>
    %cst_320 = arith.constant dense<0.000000e+00> : vector<256xf32>
    %713 = vector.multi_reduction <add>, %712, %cst_320 [0] : vector<13x256xf32> to vector<256xf32>
    %714 = vector.shape_cast %713 : vector<256xf32> to vector<1x256xf32>
    %715 = arith.addf %207, %711 : vector<1x256xf32>
    %cst_321 = arith.constant 2.000000e+00 : f32
    %716 = vector.broadcast %cst_321 : f32 to vector<1x256xf32>
    %717 = arith.mulf %716, %714 : vector<1x256xf32>
    %718 = arith.subf %715, %717 : vector<1x256xf32>
    %c18 = arith.constant 18 : index
    %719 = memref.load %arg10[%c18] : memref<49xf32, #tpu.memory_space<smem>>
    %720 = vector.broadcast %719 : f32 to vector<1x256xf32>
    %721 = arith.addf %718, %720 : vector<1x256xf32>
    %cst_322 = arith.constant 0.000000e+00 : f32
    %722 = vector.broadcast %cst_322 : f32 to vector<1x256xf32>
    %723 = arith.subf %722, %721 : vector<1x256xf32>
    %724 = math.exp %723 : vector<1x256xf32>
    %725 = arith.mulf %724, %710 : vector<1x256xf32>
    %726 = vector.extract_strided_slice %707 {offsets = [0, 0], sizes = [4, 256], strides = [1, 1]} : vector<13x256xf32> to vector<4x256xf32>
    %727 = vector.broadcast %725 : vector<1x256xf32> to vector<4x256xf32>
    %728 = arith.mulf %727, %726 : vector<4x256xf32>
    %729 = arith.addf %702, %728 : vector<4x256xf32>
    %730 = arith.addf %703, %725 : vector<1x256xf32>
    %c0_323 = arith.constant 0 : index
    %c0_324 = arith.constant 0 : index
    %731 = vector.load %arg13[%c0_323, %c0_324] : memref<15x384xf32, #tpu.memory_space<vmem>>, vector<15x384xf32>
    %c14_i32 = arith.constant 14 : i32
    %732 = tpu.dynamic_rotate %731 by %c14_i32 dim 1 : vector<15x384xf32>, i32 -> vector<15x384xf32>
    %733 = vector.extract_strided_slice %732 {offsets = [0, 0], sizes = [15, 256], strides = [1, 1]} : vector<15x384xf32> to vector<15x256xf32>
    %734 = vector.extract_strided_slice %733 {offsets = [0, 0], sizes = [13, 256], strides = [1, 1]} : vector<15x256xf32> to vector<13x256xf32>
    %735 = vector.extract_strided_slice %733 {offsets = [13, 0], sizes = [1, 256], strides = [1, 1]} : vector<15x256xf32> to vector<1x256xf32>
    %c5_325 = arith.constant 5 : index
    %c0_326 = arith.constant 0 : index
    %736 = vector.load %arg2[%c5_325, %c0_326] : memref<7x256xf32, #tpu.memory_space<vmem>>, vector<1x256xf32>
    %737 = arith.mulf %735, %736 : vector<1x256xf32>
    %738 = vector.extract_strided_slice %733 {offsets = [14, 0], sizes = [1, 256], strides = [1, 1]} : vector<15x256xf32> to vector<1x256xf32>
    %739 = arith.mulf %215, %734 : vector<13x256xf32>
    %cst_327 = arith.constant dense<0.000000e+00> : vector<256xf32>
    %740 = vector.multi_reduction <add>, %739, %cst_327 [0] : vector<13x256xf32> to vector<256xf32>
    %741 = vector.shape_cast %740 : vector<256xf32> to vector<1x256xf32>
    %742 = arith.addf %207, %738 : vector<1x256xf32>
    %cst_328 = arith.constant 2.000000e+00 : f32
    %743 = vector.broadcast %cst_328 : f32 to vector<1x256xf32>
    %744 = arith.mulf %743, %741 : vector<1x256xf32>
    %745 = arith.subf %742, %744 : vector<1x256xf32>
    %c19 = arith.constant 19 : index
    %746 = memref.load %arg10[%c19] : memref<49xf32, #tpu.memory_space<smem>>
    %747 = vector.broadcast %746 : f32 to vector<1x256xf32>
    %748 = arith.addf %745, %747 : vector<1x256xf32>
    %cst_329 = arith.constant 0.000000e+00 : f32
    %749 = vector.broadcast %cst_329 : f32 to vector<1x256xf32>
    %750 = arith.subf %749, %748 : vector<1x256xf32>
    %751 = math.exp %750 : vector<1x256xf32>
    %752 = arith.mulf %751, %737 : vector<1x256xf32>
    %753 = vector.extract_strided_slice %734 {offsets = [0, 0], sizes = [4, 256], strides = [1, 1]} : vector<13x256xf32> to vector<4x256xf32>
    %754 = vector.broadcast %752 : vector<1x256xf32> to vector<4x256xf32>
    %755 = arith.mulf %754, %753 : vector<4x256xf32>
    %756 = arith.addf %729, %755 : vector<4x256xf32>
    %757 = arith.addf %730, %752 : vector<1x256xf32>
    %c0_330 = arith.constant 0 : index
    %c0_331 = arith.constant 0 : index
    %758 = vector.load %arg13[%c0_330, %c0_331] : memref<15x384xf32, #tpu.memory_space<vmem>>, vector<15x384xf32>
    %c13_i32 = arith.constant 13 : i32
    %759 = tpu.dynamic_rotate %758 by %c13_i32 dim 1 : vector<15x384xf32>, i32 -> vector<15x384xf32>
    %760 = vector.extract_strided_slice %759 {offsets = [0, 0], sizes = [15, 256], strides = [1, 1]} : vector<15x384xf32> to vector<15x256xf32>
    %761 = vector.extract_strided_slice %760 {offsets = [0, 0], sizes = [13, 256], strides = [1, 1]} : vector<15x256xf32> to vector<13x256xf32>
    %762 = vector.extract_strided_slice %760 {offsets = [13, 0], sizes = [1, 256], strides = [1, 1]} : vector<15x256xf32> to vector<1x256xf32>
    %c6_332 = arith.constant 6 : index
    %c0_333 = arith.constant 0 : index
    %763 = vector.load %arg2[%c6_332, %c0_333] : memref<7x256xf32, #tpu.memory_space<vmem>>, vector<1x256xf32>
    %764 = arith.mulf %762, %763 : vector<1x256xf32>
    %765 = vector.extract_strided_slice %760 {offsets = [14, 0], sizes = [1, 256], strides = [1, 1]} : vector<15x256xf32> to vector<1x256xf32>
    %766 = arith.mulf %215, %761 : vector<13x256xf32>
    %cst_334 = arith.constant dense<0.000000e+00> : vector<256xf32>
    %767 = vector.multi_reduction <add>, %766, %cst_334 [0] : vector<13x256xf32> to vector<256xf32>
    %768 = vector.shape_cast %767 : vector<256xf32> to vector<1x256xf32>
    %769 = arith.addf %207, %765 : vector<1x256xf32>
    %cst_335 = arith.constant 2.000000e+00 : f32
    %770 = vector.broadcast %cst_335 : f32 to vector<1x256xf32>
    %771 = arith.mulf %770, %768 : vector<1x256xf32>
    %772 = arith.subf %769, %771 : vector<1x256xf32>
    %c20 = arith.constant 20 : index
    %773 = memref.load %arg10[%c20] : memref<49xf32, #tpu.memory_space<smem>>
    %774 = vector.broadcast %773 : f32 to vector<1x256xf32>
    %775 = arith.addf %772, %774 : vector<1x256xf32>
    %cst_336 = arith.constant 0.000000e+00 : f32
    %776 = vector.broadcast %cst_336 : f32 to vector<1x256xf32>
    %777 = arith.subf %776, %775 : vector<1x256xf32>
    %778 = math.exp %777 : vector<1x256xf32>
    %779 = arith.mulf %778, %764 : vector<1x256xf32>
    %780 = vector.extract_strided_slice %761 {offsets = [0, 0], sizes = [4, 256], strides = [1, 1]} : vector<13x256xf32> to vector<4x256xf32>
    %781 = vector.broadcast %779 : vector<1x256xf32> to vector<4x256xf32>
    %782 = arith.mulf %781, %780 : vector<4x256xf32>
    %783 = arith.addf %756, %782 : vector<4x256xf32>
    %784 = arith.addf %757, %779 : vector<1x256xf32>
    %c0_337 = arith.constant 0 : index
    %c0_338 = arith.constant 0 : index
    %785 = vector.load %arg13[%c0_337, %c0_338] : memref<15x384xf32, #tpu.memory_space<vmem>>, vector<15x384xf32>
    %c3_i32 = arith.constant 3 : i32
    %786 = tpu.dynamic_rotate %785 by %c3_i32 dim 1 : vector<15x384xf32>, i32 -> vector<15x384xf32>
    %787 = vector.extract_strided_slice %786 {offsets = [0, 0], sizes = [15, 256], strides = [1, 1]} : vector<15x384xf32> to vector<15x256xf32>
    %788 = vector.extract_strided_slice %787 {offsets = [0, 0], sizes = [13, 256], strides = [1, 1]} : vector<15x256xf32> to vector<13x256xf32>
    %789 = vector.extract_strided_slice %787 {offsets = [13, 0], sizes = [1, 256], strides = [1, 1]} : vector<15x256xf32> to vector<1x256xf32>
    %c0_339 = arith.constant 0 : index
    %c0_340 = arith.constant 0 : index
    %790 = vector.load %arg2[%c0_339, %c0_340] : memref<7x256xf32, #tpu.memory_space<vmem>>, vector<1x256xf32>
    %791 = arith.mulf %789, %790 : vector<1x256xf32>
    %792 = vector.extract_strided_slice %787 {offsets = [14, 0], sizes = [1, 256], strides = [1, 1]} : vector<15x256xf32> to vector<1x256xf32>
    %793 = arith.mulf %215, %788 : vector<13x256xf32>
    %cst_341 = arith.constant dense<0.000000e+00> : vector<256xf32>
    %794 = vector.multi_reduction <add>, %793, %cst_341 [0] : vector<13x256xf32> to vector<256xf32>
    %795 = vector.shape_cast %794 : vector<256xf32> to vector<1x256xf32>
    %796 = arith.addf %207, %792 : vector<1x256xf32>
    %cst_342 = arith.constant 2.000000e+00 : f32
    %797 = vector.broadcast %cst_342 : f32 to vector<1x256xf32>
    %798 = arith.mulf %797, %795 : vector<1x256xf32>
    %799 = arith.subf %796, %798 : vector<1x256xf32>
    %c21 = arith.constant 21 : index
    %800 = memref.load %arg10[%c21] : memref<49xf32, #tpu.memory_space<smem>>
    %801 = vector.broadcast %800 : f32 to vector<1x256xf32>
    %802 = arith.addf %799, %801 : vector<1x256xf32>
    %cst_343 = arith.constant 0.000000e+00 : f32
    %803 = vector.broadcast %cst_343 : f32 to vector<1x256xf32>
    %804 = arith.subf %803, %802 : vector<1x256xf32>
    %805 = math.exp %804 : vector<1x256xf32>
    %806 = arith.mulf %805, %791 : vector<1x256xf32>
    %807 = vector.extract_strided_slice %788 {offsets = [0, 0], sizes = [4, 256], strides = [1, 1]} : vector<13x256xf32> to vector<4x256xf32>
    %808 = vector.broadcast %806 : vector<1x256xf32> to vector<4x256xf32>
    %809 = arith.mulf %808, %807 : vector<4x256xf32>
    %810 = arith.addf %783, %809 : vector<4x256xf32>
    %811 = arith.addf %784, %806 : vector<1x256xf32>
    %c0_344 = arith.constant 0 : index
    %c0_345 = arith.constant 0 : index
    %812 = vector.load %arg13[%c0_344, %c0_345] : memref<15x384xf32, #tpu.memory_space<vmem>>, vector<15x384xf32>
    %c2_i32 = arith.constant 2 : i32
    %813 = tpu.dynamic_rotate %812 by %c2_i32 dim 1 : vector<15x384xf32>, i32 -> vector<15x384xf32>
    %814 = vector.extract_strided_slice %813 {offsets = [0, 0], sizes = [15, 256], strides = [1, 1]} : vector<15x384xf32> to vector<15x256xf32>
    %815 = vector.extract_strided_slice %814 {offsets = [0, 0], sizes = [13, 256], strides = [1, 1]} : vector<15x256xf32> to vector<13x256xf32>
    %816 = vector.extract_strided_slice %814 {offsets = [13, 0], sizes = [1, 256], strides = [1, 1]} : vector<15x256xf32> to vector<1x256xf32>
    %c1_346 = arith.constant 1 : index
    %c0_347 = arith.constant 0 : index
    %817 = vector.load %arg2[%c1_346, %c0_347] : memref<7x256xf32, #tpu.memory_space<vmem>>, vector<1x256xf32>
    %818 = arith.mulf %816, %817 : vector<1x256xf32>
    %819 = vector.extract_strided_slice %814 {offsets = [14, 0], sizes = [1, 256], strides = [1, 1]} : vector<15x256xf32> to vector<1x256xf32>
    %820 = arith.mulf %215, %815 : vector<13x256xf32>
    %cst_348 = arith.constant dense<0.000000e+00> : vector<256xf32>
    %821 = vector.multi_reduction <add>, %820, %cst_348 [0] : vector<13x256xf32> to vector<256xf32>
    %822 = vector.shape_cast %821 : vector<256xf32> to vector<1x256xf32>
    %823 = arith.addf %207, %819 : vector<1x256xf32>
    %cst_349 = arith.constant 2.000000e+00 : f32
    %824 = vector.broadcast %cst_349 : f32 to vector<1x256xf32>
    %825 = arith.mulf %824, %822 : vector<1x256xf32>
    %826 = arith.subf %823, %825 : vector<1x256xf32>
    %c22 = arith.constant 22 : index
    %827 = memref.load %arg10[%c22] : memref<49xf32, #tpu.memory_space<smem>>
    %828 = vector.broadcast %827 : f32 to vector<1x256xf32>
    %829 = arith.addf %826, %828 : vector<1x256xf32>
    %cst_350 = arith.constant 0.000000e+00 : f32
    %830 = vector.broadcast %cst_350 : f32 to vector<1x256xf32>
    %831 = arith.subf %830, %829 : vector<1x256xf32>
    %832 = math.exp %831 : vector<1x256xf32>
    %833 = arith.mulf %832, %818 : vector<1x256xf32>
    %834 = vector.extract_strided_slice %815 {offsets = [0, 0], sizes = [4, 256], strides = [1, 1]} : vector<13x256xf32> to vector<4x256xf32>
    %835 = vector.broadcast %833 : vector<1x256xf32> to vector<4x256xf32>
    %836 = arith.mulf %835, %834 : vector<4x256xf32>
    %837 = arith.addf %810, %836 : vector<4x256xf32>
    %838 = arith.addf %811, %833 : vector<1x256xf32>
    %c0_351 = arith.constant 0 : index
    %c0_352 = arith.constant 0 : index
    %839 = vector.load %arg13[%c0_351, %c0_352] : memref<15x384xf32, #tpu.memory_space<vmem>>, vector<15x384xf32>
    %c1_i32_353 = arith.constant 1 : i32
    %840 = tpu.dynamic_rotate %839 by %c1_i32_353 dim 1 : vector<15x384xf32>, i32 -> vector<15x384xf32>
    %841 = vector.extract_strided_slice %840 {offsets = [0, 0], sizes = [15, 256], strides = [1, 1]} : vector<15x384xf32> to vector<15x256xf32>
    %842 = vector.extract_strided_slice %841 {offsets = [0, 0], sizes = [13, 256], strides = [1, 1]} : vector<15x256xf32> to vector<13x256xf32>
    %843 = vector.extract_strided_slice %841 {offsets = [13, 0], sizes = [1, 256], strides = [1, 1]} : vector<15x256xf32> to vector<1x256xf32>
    %c2_354 = arith.constant 2 : index
    %c0_355 = arith.constant 0 : index
    %844 = vector.load %arg2[%c2_354, %c0_355] : memref<7x256xf32, #tpu.memory_space<vmem>>, vector<1x256xf32>
    %845 = arith.mulf %843, %844 : vector<1x256xf32>
    %846 = vector.extract_strided_slice %841 {offsets = [14, 0], sizes = [1, 256], strides = [1, 1]} : vector<15x256xf32> to vector<1x256xf32>
    %847 = arith.mulf %215, %842 : vector<13x256xf32>
    %cst_356 = arith.constant dense<0.000000e+00> : vector<256xf32>
    %848 = vector.multi_reduction <add>, %847, %cst_356 [0] : vector<13x256xf32> to vector<256xf32>
    %849 = vector.shape_cast %848 : vector<256xf32> to vector<1x256xf32>
    %850 = arith.addf %207, %846 : vector<1x256xf32>
    %cst_357 = arith.constant 2.000000e+00 : f32
    %851 = vector.broadcast %cst_357 : f32 to vector<1x256xf32>
    %852 = arith.mulf %851, %849 : vector<1x256xf32>
    %853 = arith.subf %850, %852 : vector<1x256xf32>
    %c23 = arith.constant 23 : index
    %854 = memref.load %arg10[%c23] : memref<49xf32, #tpu.memory_space<smem>>
    %855 = vector.broadcast %854 : f32 to vector<1x256xf32>
    %856 = arith.addf %853, %855 : vector<1x256xf32>
    %cst_358 = arith.constant 0.000000e+00 : f32
    %857 = vector.broadcast %cst_358 : f32 to vector<1x256xf32>
    %858 = arith.subf %857, %856 : vector<1x256xf32>
    %859 = math.exp %858 : vector<1x256xf32>
    %860 = arith.mulf %859, %845 : vector<1x256xf32>
    %861 = vector.extract_strided_slice %842 {offsets = [0, 0], sizes = [4, 256], strides = [1, 1]} : vector<13x256xf32> to vector<4x256xf32>
    %862 = vector.broadcast %860 : vector<1x256xf32> to vector<4x256xf32>
    %863 = arith.mulf %862, %861 : vector<4x256xf32>
    %864 = arith.addf %837, %863 : vector<4x256xf32>
    %865 = arith.addf %838, %860 : vector<1x256xf32>
    %c0_359 = arith.constant 0 : index
    %c0_360 = arith.constant 0 : index
    %866 = vector.load %arg13[%c0_359, %c0_360] : memref<15x384xf32, #tpu.memory_space<vmem>>, vector<15x384xf32>
    %867 = vector.extract_strided_slice %866 {offsets = [0, 0], sizes = [15, 256], strides = [1, 1]} : vector<15x384xf32> to vector<15x256xf32>
    %868 = vector.extract_strided_slice %867 {offsets = [0, 0], sizes = [13, 256], strides = [1, 1]} : vector<15x256xf32> to vector<13x256xf32>
    %869 = vector.extract_strided_slice %867 {offsets = [13, 0], sizes = [1, 256], strides = [1, 1]} : vector<15x256xf32> to vector<1x256xf32>
    %c3_361 = arith.constant 3 : index
    %c0_362 = arith.constant 0 : index
    %870 = vector.load %arg2[%c3_361, %c0_362] : memref<7x256xf32, #tpu.memory_space<vmem>>, vector<1x256xf32>
    %871 = arith.mulf %869, %870 : vector<1x256xf32>
    %872 = vector.extract_strided_slice %867 {offsets = [14, 0], sizes = [1, 256], strides = [1, 1]} : vector<15x256xf32> to vector<1x256xf32>
    %873 = arith.mulf %215, %868 : vector<13x256xf32>
    %cst_363 = arith.constant dense<0.000000e+00> : vector<256xf32>
    %874 = vector.multi_reduction <add>, %873, %cst_363 [0] : vector<13x256xf32> to vector<256xf32>
    %875 = vector.shape_cast %874 : vector<256xf32> to vector<1x256xf32>
    %876 = arith.addf %207, %872 : vector<1x256xf32>
    %cst_364 = arith.constant 2.000000e+00 : f32
    %877 = vector.broadcast %cst_364 : f32 to vector<1x256xf32>
    %878 = arith.mulf %877, %875 : vector<1x256xf32>
    %879 = arith.subf %876, %878 : vector<1x256xf32>
    %c24 = arith.constant 24 : index
    %880 = memref.load %arg10[%c24] : memref<49xf32, #tpu.memory_space<smem>>
    %881 = vector.broadcast %880 : f32 to vector<1x256xf32>
    %882 = arith.addf %879, %881 : vector<1x256xf32>
    %cst_365 = arith.constant 0.000000e+00 : f32
    %883 = vector.broadcast %cst_365 : f32 to vector<1x256xf32>
    %884 = arith.subf %883, %882 : vector<1x256xf32>
    %885 = math.exp %884 : vector<1x256xf32>
    %886 = arith.mulf %885, %871 : vector<1x256xf32>
    %887 = vector.extract_strided_slice %868 {offsets = [0, 0], sizes = [4, 256], strides = [1, 1]} : vector<13x256xf32> to vector<4x256xf32>
    %888 = vector.broadcast %886 : vector<1x256xf32> to vector<4x256xf32>
    %889 = arith.mulf %888, %887 : vector<4x256xf32>
    %890 = arith.addf %864, %889 : vector<4x256xf32>
    %891 = arith.addf %865, %886 : vector<1x256xf32>
    %c0_366 = arith.constant 0 : index
    %c0_367 = arith.constant 0 : index
    %892 = vector.load %arg13[%c0_366, %c0_367] : memref<15x384xf32, #tpu.memory_space<vmem>>, vector<15x384xf32>
    %c383_i32_368 = arith.constant 383 : i32
    %893 = tpu.dynamic_rotate %892 by %c383_i32_368 dim 1 : vector<15x384xf32>, i32 -> vector<15x384xf32>
    %894 = vector.extract_strided_slice %893 {offsets = [0, 0], sizes = [15, 256], strides = [1, 1]} : vector<15x384xf32> to vector<15x256xf32>
    %895 = vector.extract_strided_slice %894 {offsets = [0, 0], sizes = [13, 256], strides = [1, 1]} : vector<15x256xf32> to vector<13x256xf32>
    %896 = vector.extract_strided_slice %894 {offsets = [13, 0], sizes = [1, 256], strides = [1, 1]} : vector<15x256xf32> to vector<1x256xf32>
    %c4_369 = arith.constant 4 : index
    %c0_370 = arith.constant 0 : index
    %897 = vector.load %arg2[%c4_369, %c0_370] : memref<7x256xf32, #tpu.memory_space<vmem>>, vector<1x256xf32>
    %898 = arith.mulf %896, %897 : vector<1x256xf32>
    %899 = vector.extract_strided_slice %894 {offsets = [14, 0], sizes = [1, 256], strides = [1, 1]} : vector<15x256xf32> to vector<1x256xf32>
    %900 = arith.mulf %215, %895 : vector<13x256xf32>
    %cst_371 = arith.constant dense<0.000000e+00> : vector<256xf32>
    %901 = vector.multi_reduction <add>, %900, %cst_371 [0] : vector<13x256xf32> to vector<256xf32>
    %902 = vector.shape_cast %901 : vector<256xf32> to vector<1x256xf32>
    %903 = arith.addf %207, %899 : vector<1x256xf32>
    %cst_372 = arith.constant 2.000000e+00 : f32
    %904 = vector.broadcast %cst_372 : f32 to vector<1x256xf32>
    %905 = arith.mulf %904, %902 : vector<1x256xf32>
    %906 = arith.subf %903, %905 : vector<1x256xf32>
    %c25 = arith.constant 25 : index
    %907 = memref.load %arg10[%c25] : memref<49xf32, #tpu.memory_space<smem>>
    %908 = vector.broadcast %907 : f32 to vector<1x256xf32>
    %909 = arith.addf %906, %908 : vector<1x256xf32>
    %cst_373 = arith.constant 0.000000e+00 : f32
    %910 = vector.broadcast %cst_373 : f32 to vector<1x256xf32>
    %911 = arith.subf %910, %909 : vector<1x256xf32>
    %912 = math.exp %911 : vector<1x256xf32>
    %913 = arith.mulf %912, %898 : vector<1x256xf32>
    %914 = vector.extract_strided_slice %895 {offsets = [0, 0], sizes = [4, 256], strides = [1, 1]} : vector<13x256xf32> to vector<4x256xf32>
    %915 = vector.broadcast %913 : vector<1x256xf32> to vector<4x256xf32>
    %916 = arith.mulf %915, %914 : vector<4x256xf32>
    %917 = arith.addf %890, %916 : vector<4x256xf32>
    %918 = arith.addf %891, %913 : vector<1x256xf32>
    %c0_374 = arith.constant 0 : index
    %c0_375 = arith.constant 0 : index
    %919 = vector.load %arg13[%c0_374, %c0_375] : memref<15x384xf32, #tpu.memory_space<vmem>>, vector<15x384xf32>
    %c382_i32 = arith.constant 382 : i32
    %920 = tpu.dynamic_rotate %919 by %c382_i32 dim 1 : vector<15x384xf32>, i32 -> vector<15x384xf32>
    %921 = vector.extract_strided_slice %920 {offsets = [0, 0], sizes = [15, 256], strides = [1, 1]} : vector<15x384xf32> to vector<15x256xf32>
    %922 = vector.extract_strided_slice %921 {offsets = [0, 0], sizes = [13, 256], strides = [1, 1]} : vector<15x256xf32> to vector<13x256xf32>
    %923 = vector.extract_strided_slice %921 {offsets = [13, 0], sizes = [1, 256], strides = [1, 1]} : vector<15x256xf32> to vector<1x256xf32>
    %c5_376 = arith.constant 5 : index
    %c0_377 = arith.constant 0 : index
    %924 = vector.load %arg2[%c5_376, %c0_377] : memref<7x256xf32, #tpu.memory_space<vmem>>, vector<1x256xf32>
    %925 = arith.mulf %923, %924 : vector<1x256xf32>
    %926 = vector.extract_strided_slice %921 {offsets = [14, 0], sizes = [1, 256], strides = [1, 1]} : vector<15x256xf32> to vector<1x256xf32>
    %927 = arith.mulf %215, %922 : vector<13x256xf32>
    %cst_378 = arith.constant dense<0.000000e+00> : vector<256xf32>
    %928 = vector.multi_reduction <add>, %927, %cst_378 [0] : vector<13x256xf32> to vector<256xf32>
    %929 = vector.shape_cast %928 : vector<256xf32> to vector<1x256xf32>
    %930 = arith.addf %207, %926 : vector<1x256xf32>
    %cst_379 = arith.constant 2.000000e+00 : f32
    %931 = vector.broadcast %cst_379 : f32 to vector<1x256xf32>
    %932 = arith.mulf %931, %929 : vector<1x256xf32>
    %933 = arith.subf %930, %932 : vector<1x256xf32>
    %c26 = arith.constant 26 : index
    %934 = memref.load %arg10[%c26] : memref<49xf32, #tpu.memory_space<smem>>
    %935 = vector.broadcast %934 : f32 to vector<1x256xf32>
    %936 = arith.addf %933, %935 : vector<1x256xf32>
    %cst_380 = arith.constant 0.000000e+00 : f32
    %937 = vector.broadcast %cst_380 : f32 to vector<1x256xf32>
    %938 = arith.subf %937, %936 : vector<1x256xf32>
    %939 = math.exp %938 : vector<1x256xf32>
    %940 = arith.mulf %939, %925 : vector<1x256xf32>
    %941 = vector.extract_strided_slice %922 {offsets = [0, 0], sizes = [4, 256], strides = [1, 1]} : vector<13x256xf32> to vector<4x256xf32>
    %942 = vector.broadcast %940 : vector<1x256xf32> to vector<4x256xf32>
    %943 = arith.mulf %942, %941 : vector<4x256xf32>
    %944 = arith.addf %917, %943 : vector<4x256xf32>
    %945 = arith.addf %918, %940 : vector<1x256xf32>
    %c0_381 = arith.constant 0 : index
    %c0_382 = arith.constant 0 : index
    %946 = vector.load %arg13[%c0_381, %c0_382] : memref<15x384xf32, #tpu.memory_space<vmem>>, vector<15x384xf32>
    %c381_i32 = arith.constant 381 : i32
    %947 = tpu.dynamic_rotate %946 by %c381_i32 dim 1 : vector<15x384xf32>, i32 -> vector<15x384xf32>
    %948 = vector.extract_strided_slice %947 {offsets = [0, 0], sizes = [15, 256], strides = [1, 1]} : vector<15x384xf32> to vector<15x256xf32>
    %949 = vector.extract_strided_slice %948 {offsets = [0, 0], sizes = [13, 256], strides = [1, 1]} : vector<15x256xf32> to vector<13x256xf32>
    %950 = vector.extract_strided_slice %948 {offsets = [13, 0], sizes = [1, 256], strides = [1, 1]} : vector<15x256xf32> to vector<1x256xf32>
    %c6_383 = arith.constant 6 : index
    %c0_384 = arith.constant 0 : index
    %951 = vector.load %arg2[%c6_383, %c0_384] : memref<7x256xf32, #tpu.memory_space<vmem>>, vector<1x256xf32>
    %952 = arith.mulf %950, %951 : vector<1x256xf32>
    %953 = vector.extract_strided_slice %948 {offsets = [14, 0], sizes = [1, 256], strides = [1, 1]} : vector<15x256xf32> to vector<1x256xf32>
    %954 = arith.mulf %215, %949 : vector<13x256xf32>
    %cst_385 = arith.constant dense<0.000000e+00> : vector<256xf32>
    %955 = vector.multi_reduction <add>, %954, %cst_385 [0] : vector<13x256xf32> to vector<256xf32>
    %956 = vector.shape_cast %955 : vector<256xf32> to vector<1x256xf32>
    %957 = arith.addf %207, %953 : vector<1x256xf32>
    %cst_386 = arith.constant 2.000000e+00 : f32
    %958 = vector.broadcast %cst_386 : f32 to vector<1x256xf32>
    %959 = arith.mulf %958, %956 : vector<1x256xf32>
    %960 = arith.subf %957, %959 : vector<1x256xf32>
    %c27 = arith.constant 27 : index
    %961 = memref.load %arg10[%c27] : memref<49xf32, #tpu.memory_space<smem>>
    %962 = vector.broadcast %961 : f32 to vector<1x256xf32>
    %963 = arith.addf %960, %962 : vector<1x256xf32>
    %cst_387 = arith.constant 0.000000e+00 : f32
    %964 = vector.broadcast %cst_387 : f32 to vector<1x256xf32>
    %965 = arith.subf %964, %963 : vector<1x256xf32>
    %966 = math.exp %965 : vector<1x256xf32>
    %967 = arith.mulf %966, %952 : vector<1x256xf32>
    %968 = vector.extract_strided_slice %949 {offsets = [0, 0], sizes = [4, 256], strides = [1, 1]} : vector<13x256xf32> to vector<4x256xf32>
    %969 = vector.broadcast %967 : vector<1x256xf32> to vector<4x256xf32>
    %970 = arith.mulf %969, %968 : vector<4x256xf32>
    %971 = arith.addf %944, %970 : vector<4x256xf32>
    %972 = arith.addf %945, %967 : vector<1x256xf32>
    %c0_388 = arith.constant 0 : index
    %c0_389 = arith.constant 0 : index
    %973 = vector.load %arg13[%c0_388, %c0_389] : memref<15x384xf32, #tpu.memory_space<vmem>>, vector<15x384xf32>
    %c371_i32 = arith.constant 371 : i32
    %974 = tpu.dynamic_rotate %973 by %c371_i32 dim 1 : vector<15x384xf32>, i32 -> vector<15x384xf32>
    %975 = vector.extract_strided_slice %974 {offsets = [0, 0], sizes = [15, 256], strides = [1, 1]} : vector<15x384xf32> to vector<15x256xf32>
    %976 = vector.extract_strided_slice %975 {offsets = [0, 0], sizes = [13, 256], strides = [1, 1]} : vector<15x256xf32> to vector<13x256xf32>
    %977 = vector.extract_strided_slice %975 {offsets = [13, 0], sizes = [1, 256], strides = [1, 1]} : vector<15x256xf32> to vector<1x256xf32>
    %c0_390 = arith.constant 0 : index
    %c0_391 = arith.constant 0 : index
    %978 = vector.load %arg2[%c0_390, %c0_391] : memref<7x256xf32, #tpu.memory_space<vmem>>, vector<1x256xf32>
    %979 = arith.mulf %977, %978 : vector<1x256xf32>
    %980 = vector.extract_strided_slice %975 {offsets = [14, 0], sizes = [1, 256], strides = [1, 1]} : vector<15x256xf32> to vector<1x256xf32>
    %981 = arith.mulf %215, %976 : vector<13x256xf32>
    %cst_392 = arith.constant dense<0.000000e+00> : vector<256xf32>
    %982 = vector.multi_reduction <add>, %981, %cst_392 [0] : vector<13x256xf32> to vector<256xf32>
    %983 = vector.shape_cast %982 : vector<256xf32> to vector<1x256xf32>
    %984 = arith.addf %207, %980 : vector<1x256xf32>
    %cst_393 = arith.constant 2.000000e+00 : f32
    %985 = vector.broadcast %cst_393 : f32 to vector<1x256xf32>
    %986 = arith.mulf %985, %983 : vector<1x256xf32>
    %987 = arith.subf %984, %986 : vector<1x256xf32>
    %c28 = arith.constant 28 : index
    %988 = memref.load %arg10[%c28] : memref<49xf32, #tpu.memory_space<smem>>
    %989 = vector.broadcast %988 : f32 to vector<1x256xf32>
    %990 = arith.addf %987, %989 : vector<1x256xf32>
    %cst_394 = arith.constant 0.000000e+00 : f32
    %991 = vector.broadcast %cst_394 : f32 to vector<1x256xf32>
    %992 = arith.subf %991, %990 : vector<1x256xf32>
    %993 = math.exp %992 : vector<1x256xf32>
    %994 = arith.mulf %993, %979 : vector<1x256xf32>
    %995 = vector.extract_strided_slice %976 {offsets = [0, 0], sizes = [4, 256], strides = [1, 1]} : vector<13x256xf32> to vector<4x256xf32>
    %996 = vector.broadcast %994 : vector<1x256xf32> to vector<4x256xf32>
    %997 = arith.mulf %996, %995 : vector<4x256xf32>
    %998 = arith.addf %971, %997 : vector<4x256xf32>
    %999 = arith.addf %972, %994 : vector<1x256xf32>
    %c0_395 = arith.constant 0 : index
    %c0_396 = arith.constant 0 : index
    %1000 = vector.load %arg13[%c0_395, %c0_396] : memref<15x384xf32, #tpu.memory_space<vmem>>, vector<15x384xf32>
    %c370_i32 = arith.constant 370 : i32
    %1001 = tpu.dynamic_rotate %1000 by %c370_i32 dim 1 : vector<15x384xf32>, i32 -> vector<15x384xf32>
    %1002 = vector.extract_strided_slice %1001 {offsets = [0, 0], sizes = [15, 256], strides = [1, 1]} : vector<15x384xf32> to vector<15x256xf32>
    %1003 = vector.extract_strided_slice %1002 {offsets = [0, 0], sizes = [13, 256], strides = [1, 1]} : vector<15x256xf32> to vector<13x256xf32>
    %1004 = vector.extract_strided_slice %1002 {offsets = [13, 0], sizes = [1, 256], strides = [1, 1]} : vector<15x256xf32> to vector<1x256xf32>
    %c1_397 = arith.constant 1 : index
    %c0_398 = arith.constant 0 : index
    %1005 = vector.load %arg2[%c1_397, %c0_398] : memref<7x256xf32, #tpu.memory_space<vmem>>, vector<1x256xf32>
    %1006 = arith.mulf %1004, %1005 : vector<1x256xf32>
    %1007 = vector.extract_strided_slice %1002 {offsets = [14, 0], sizes = [1, 256], strides = [1, 1]} : vector<15x256xf32> to vector<1x256xf32>
    %1008 = arith.mulf %215, %1003 : vector<13x256xf32>
    %cst_399 = arith.constant dense<0.000000e+00> : vector<256xf32>
    %1009 = vector.multi_reduction <add>, %1008, %cst_399 [0] : vector<13x256xf32> to vector<256xf32>
    %1010 = vector.shape_cast %1009 : vector<256xf32> to vector<1x256xf32>
    %1011 = arith.addf %207, %1007 : vector<1x256xf32>
    %cst_400 = arith.constant 2.000000e+00 : f32
    %1012 = vector.broadcast %cst_400 : f32 to vector<1x256xf32>
    %1013 = arith.mulf %1012, %1010 : vector<1x256xf32>
    %1014 = arith.subf %1011, %1013 : vector<1x256xf32>
    %c29 = arith.constant 29 : index
    %1015 = memref.load %arg10[%c29] : memref<49xf32, #tpu.memory_space<smem>>
    %1016 = vector.broadcast %1015 : f32 to vector<1x256xf32>
    %1017 = arith.addf %1014, %1016 : vector<1x256xf32>
    %cst_401 = arith.constant 0.000000e+00 : f32
    %1018 = vector.broadcast %cst_401 : f32 to vector<1x256xf32>
    %1019 = arith.subf %1018, %1017 : vector<1x256xf32>
    %1020 = math.exp %1019 : vector<1x256xf32>
    %1021 = arith.mulf %1020, %1006 : vector<1x256xf32>
    %1022 = vector.extract_strided_slice %1003 {offsets = [0, 0], sizes = [4, 256], strides = [1, 1]} : vector<13x256xf32> to vector<4x256xf32>
    %1023 = vector.broadcast %1021 : vector<1x256xf32> to vector<4x256xf32>
    %1024 = arith.mulf %1023, %1022 : vector<4x256xf32>
    %1025 = arith.addf %998, %1024 : vector<4x256xf32>
    %1026 = arith.addf %999, %1021 : vector<1x256xf32>
    %c0_402 = arith.constant 0 : index
    %c0_403 = arith.constant 0 : index
    %1027 = vector.load %arg13[%c0_402, %c0_403] : memref<15x384xf32, #tpu.memory_space<vmem>>, vector<15x384xf32>
    %c369_i32_404 = arith.constant 369 : i32
    %1028 = tpu.dynamic_rotate %1027 by %c369_i32_404 dim 1 : vector<15x384xf32>, i32 -> vector<15x384xf32>
    %1029 = vector.extract_strided_slice %1028 {offsets = [0, 0], sizes = [15, 256], strides = [1, 1]} : vector<15x384xf32> to vector<15x256xf32>
    %1030 = vector.extract_strided_slice %1029 {offsets = [0, 0], sizes = [13, 256], strides = [1, 1]} : vector<15x256xf32> to vector<13x256xf32>
    %1031 = vector.extract_strided_slice %1029 {offsets = [13, 0], sizes = [1, 256], strides = [1, 1]} : vector<15x256xf32> to vector<1x256xf32>
    %c2_405 = arith.constant 2 : index
    %c0_406 = arith.constant 0 : index
    %1032 = vector.load %arg2[%c2_405, %c0_406] : memref<7x256xf32, #tpu.memory_space<vmem>>, vector<1x256xf32>
    %1033 = arith.mulf %1031, %1032 : vector<1x256xf32>
    %1034 = vector.extract_strided_slice %1029 {offsets = [14, 0], sizes = [1, 256], strides = [1, 1]} : vector<15x256xf32> to vector<1x256xf32>
    %1035 = arith.mulf %215, %1030 : vector<13x256xf32>
    %cst_407 = arith.constant dense<0.000000e+00> : vector<256xf32>
    %1036 = vector.multi_reduction <add>, %1035, %cst_407 [0] : vector<13x256xf32> to vector<256xf32>
    %1037 = vector.shape_cast %1036 : vector<256xf32> to vector<1x256xf32>
    %1038 = arith.addf %207, %1034 : vector<1x256xf32>
    %cst_408 = arith.constant 2.000000e+00 : f32
    %1039 = vector.broadcast %cst_408 : f32 to vector<1x256xf32>
    %1040 = arith.mulf %1039, %1037 : vector<1x256xf32>
    %1041 = arith.subf %1038, %1040 : vector<1x256xf32>
    %c30 = arith.constant 30 : index
    %1042 = memref.load %arg10[%c30] : memref<49xf32, #tpu.memory_space<smem>>
    %1043 = vector.broadcast %1042 : f32 to vector<1x256xf32>
    %1044 = arith.addf %1041, %1043 : vector<1x256xf32>
    %cst_409 = arith.constant 0.000000e+00 : f32
    %1045 = vector.broadcast %cst_409 : f32 to vector<1x256xf32>
    %1046 = arith.subf %1045, %1044 : vector<1x256xf32>
    %1047 = math.exp %1046 : vector<1x256xf32>
    %1048 = arith.mulf %1047, %1033 : vector<1x256xf32>
    %1049 = vector.extract_strided_slice %1030 {offsets = [0, 0], sizes = [4, 256], strides = [1, 1]} : vector<13x256xf32> to vector<4x256xf32>
    %1050 = vector.broadcast %1048 : vector<1x256xf32> to vector<4x256xf32>
    %1051 = arith.mulf %1050, %1049 : vector<4x256xf32>
    %1052 = arith.addf %1025, %1051 : vector<4x256xf32>
    %1053 = arith.addf %1026, %1048 : vector<1x256xf32>
    %c0_410 = arith.constant 0 : index
    %c0_411 = arith.constant 0 : index
    %1054 = vector.load %arg13[%c0_410, %c0_411] : memref<15x384xf32, #tpu.memory_space<vmem>>, vector<15x384xf32>
    %c368_i32_412 = arith.constant 368 : i32
    %1055 = tpu.dynamic_rotate %1054 by %c368_i32_412 dim 1 : vector<15x384xf32>, i32 -> vector<15x384xf32>
    %1056 = vector.extract_strided_slice %1055 {offsets = [0, 0], sizes = [15, 256], strides = [1, 1]} : vector<15x384xf32> to vector<15x256xf32>
    %1057 = vector.extract_strided_slice %1056 {offsets = [0, 0], sizes = [13, 256], strides = [1, 1]} : vector<15x256xf32> to vector<13x256xf32>
    %1058 = vector.extract_strided_slice %1056 {offsets = [13, 0], sizes = [1, 256], strides = [1, 1]} : vector<15x256xf32> to vector<1x256xf32>
    %c3_413 = arith.constant 3 : index
    %c0_414 = arith.constant 0 : index
    %1059 = vector.load %arg2[%c3_413, %c0_414] : memref<7x256xf32, #tpu.memory_space<vmem>>, vector<1x256xf32>
    %1060 = arith.mulf %1058, %1059 : vector<1x256xf32>
    %1061 = vector.extract_strided_slice %1056 {offsets = [14, 0], sizes = [1, 256], strides = [1, 1]} : vector<15x256xf32> to vector<1x256xf32>
    %1062 = arith.mulf %215, %1057 : vector<13x256xf32>
    %cst_415 = arith.constant dense<0.000000e+00> : vector<256xf32>
    %1063 = vector.multi_reduction <add>, %1062, %cst_415 [0] : vector<13x256xf32> to vector<256xf32>
    %1064 = vector.shape_cast %1063 : vector<256xf32> to vector<1x256xf32>
    %1065 = arith.addf %207, %1061 : vector<1x256xf32>
    %cst_416 = arith.constant 2.000000e+00 : f32
    %1066 = vector.broadcast %cst_416 : f32 to vector<1x256xf32>
    %1067 = arith.mulf %1066, %1064 : vector<1x256xf32>
    %1068 = arith.subf %1065, %1067 : vector<1x256xf32>
    %c31 = arith.constant 31 : index
    %1069 = memref.load %arg10[%c31] : memref<49xf32, #tpu.memory_space<smem>>
    %1070 = vector.broadcast %1069 : f32 to vector<1x256xf32>
    %1071 = arith.addf %1068, %1070 : vector<1x256xf32>
    %cst_417 = arith.constant 0.000000e+00 : f32
    %1072 = vector.broadcast %cst_417 : f32 to vector<1x256xf32>
    %1073 = arith.subf %1072, %1071 : vector<1x256xf32>
    %1074 = math.exp %1073 : vector<1x256xf32>
    %1075 = arith.mulf %1074, %1060 : vector<1x256xf32>
    %1076 = vector.extract_strided_slice %1057 {offsets = [0, 0], sizes = [4, 256], strides = [1, 1]} : vector<13x256xf32> to vector<4x256xf32>
    %1077 = vector.broadcast %1075 : vector<1x256xf32> to vector<4x256xf32>
    %1078 = arith.mulf %1077, %1076 : vector<4x256xf32>
    %1079 = arith.addf %1052, %1078 : vector<4x256xf32>
    %1080 = arith.addf %1053, %1075 : vector<1x256xf32>
    %c0_418 = arith.constant 0 : index
    %c0_419 = arith.constant 0 : index
    %1081 = vector.load %arg13[%c0_418, %c0_419] : memref<15x384xf32, #tpu.memory_space<vmem>>, vector<15x384xf32>
    %c367_i32_420 = arith.constant 367 : i32
    %1082 = tpu.dynamic_rotate %1081 by %c367_i32_420 dim 1 : vector<15x384xf32>, i32 -> vector<15x384xf32>
    %1083 = vector.extract_strided_slice %1082 {offsets = [0, 0], sizes = [15, 256], strides = [1, 1]} : vector<15x384xf32> to vector<15x256xf32>
    %1084 = vector.extract_strided_slice %1083 {offsets = [0, 0], sizes = [13, 256], strides = [1, 1]} : vector<15x256xf32> to vector<13x256xf32>
    %1085 = vector.extract_strided_slice %1083 {offsets = [13, 0], sizes = [1, 256], strides = [1, 1]} : vector<15x256xf32> to vector<1x256xf32>
    %c4_421 = arith.constant 4 : index
    %c0_422 = arith.constant 0 : index
    %1086 = vector.load %arg2[%c4_421, %c0_422] : memref<7x256xf32, #tpu.memory_space<vmem>>, vector<1x256xf32>
    %1087 = arith.mulf %1085, %1086 : vector<1x256xf32>
    %1088 = vector.extract_strided_slice %1083 {offsets = [14, 0], sizes = [1, 256], strides = [1, 1]} : vector<15x256xf32> to vector<1x256xf32>
    %1089 = arith.mulf %215, %1084 : vector<13x256xf32>
    %cst_423 = arith.constant dense<0.000000e+00> : vector<256xf32>
    %1090 = vector.multi_reduction <add>, %1089, %cst_423 [0] : vector<13x256xf32> to vector<256xf32>
    %1091 = vector.shape_cast %1090 : vector<256xf32> to vector<1x256xf32>
    %1092 = arith.addf %207, %1088 : vector<1x256xf32>
    %cst_424 = arith.constant 2.000000e+00 : f32
    %1093 = vector.broadcast %cst_424 : f32 to vector<1x256xf32>
    %1094 = arith.mulf %1093, %1091 : vector<1x256xf32>
    %1095 = arith.subf %1092, %1094 : vector<1x256xf32>
    %c32 = arith.constant 32 : index
    %1096 = memref.load %arg10[%c32] : memref<49xf32, #tpu.memory_space<smem>>
    %1097 = vector.broadcast %1096 : f32 to vector<1x256xf32>
    %1098 = arith.addf %1095, %1097 : vector<1x256xf32>
    %cst_425 = arith.constant 0.000000e+00 : f32
    %1099 = vector.broadcast %cst_425 : f32 to vector<1x256xf32>
    %1100 = arith.subf %1099, %1098 : vector<1x256xf32>
    %1101 = math.exp %1100 : vector<1x256xf32>
    %1102 = arith.mulf %1101, %1087 : vector<1x256xf32>
    %1103 = vector.extract_strided_slice %1084 {offsets = [0, 0], sizes = [4, 256], strides = [1, 1]} : vector<13x256xf32> to vector<4x256xf32>
    %1104 = vector.broadcast %1102 : vector<1x256xf32> to vector<4x256xf32>
    %1105 = arith.mulf %1104, %1103 : vector<4x256xf32>
    %1106 = arith.addf %1079, %1105 : vector<4x256xf32>
    %1107 = arith.addf %1080, %1102 : vector<1x256xf32>
    %c0_426 = arith.constant 0 : index
    %c0_427 = arith.constant 0 : index
    %1108 = vector.load %arg13[%c0_426, %c0_427] : memref<15x384xf32, #tpu.memory_space<vmem>>, vector<15x384xf32>
    %c366_i32 = arith.constant 366 : i32
    %1109 = tpu.dynamic_rotate %1108 by %c366_i32 dim 1 : vector<15x384xf32>, i32 -> vector<15x384xf32>
    %1110 = vector.extract_strided_slice %1109 {offsets = [0, 0], sizes = [15, 256], strides = [1, 1]} : vector<15x384xf32> to vector<15x256xf32>
    %1111 = vector.extract_strided_slice %1110 {offsets = [0, 0], sizes = [13, 256], strides = [1, 1]} : vector<15x256xf32> to vector<13x256xf32>
    %1112 = vector.extract_strided_slice %1110 {offsets = [13, 0], sizes = [1, 256], strides = [1, 1]} : vector<15x256xf32> to vector<1x256xf32>
    %c5_428 = arith.constant 5 : index
    %c0_429 = arith.constant 0 : index
    %1113 = vector.load %arg2[%c5_428, %c0_429] : memref<7x256xf32, #tpu.memory_space<vmem>>, vector<1x256xf32>
    %1114 = arith.mulf %1112, %1113 : vector<1x256xf32>
    %1115 = vector.extract_strided_slice %1110 {offsets = [14, 0], sizes = [1, 256], strides = [1, 1]} : vector<15x256xf32> to vector<1x256xf32>
    %1116 = arith.mulf %215, %1111 : vector<13x256xf32>
    %cst_430 = arith.constant dense<0.000000e+00> : vector<256xf32>
    %1117 = vector.multi_reduction <add>, %1116, %cst_430 [0] : vector<13x256xf32> to vector<256xf32>
    %1118 = vector.shape_cast %1117 : vector<256xf32> to vector<1x256xf32>
    %1119 = arith.addf %207, %1115 : vector<1x256xf32>
    %cst_431 = arith.constant 2.000000e+00 : f32
    %1120 = vector.broadcast %cst_431 : f32 to vector<1x256xf32>
    %1121 = arith.mulf %1120, %1118 : vector<1x256xf32>
    %1122 = arith.subf %1119, %1121 : vector<1x256xf32>
    %c33 = arith.constant 33 : index
    %1123 = memref.load %arg10[%c33] : memref<49xf32, #tpu.memory_space<smem>>
    %1124 = vector.broadcast %1123 : f32 to vector<1x256xf32>
    %1125 = arith.addf %1122, %1124 : vector<1x256xf32>
    %cst_432 = arith.constant 0.000000e+00 : f32
    %1126 = vector.broadcast %cst_432 : f32 to vector<1x256xf32>
    %1127 = arith.subf %1126, %1125 : vector<1x256xf32>
    %1128 = math.exp %1127 : vector<1x256xf32>
    %1129 = arith.mulf %1128, %1114 : vector<1x256xf32>
    %1130 = vector.extract_strided_slice %1111 {offsets = [0, 0], sizes = [4, 256], strides = [1, 1]} : vector<13x256xf32> to vector<4x256xf32>
    %1131 = vector.broadcast %1129 : vector<1x256xf32> to vector<4x256xf32>
    %1132 = arith.mulf %1131, %1130 : vector<4x256xf32>
    %1133 = arith.addf %1106, %1132 : vector<4x256xf32>
    %1134 = arith.addf %1107, %1129 : vector<1x256xf32>
    %c0_433 = arith.constant 0 : index
    %c0_434 = arith.constant 0 : index
    %1135 = vector.load %arg13[%c0_433, %c0_434] : memref<15x384xf32, #tpu.memory_space<vmem>>, vector<15x384xf32>
    %c365_i32 = arith.constant 365 : i32
    %1136 = tpu.dynamic_rotate %1135 by %c365_i32 dim 1 : vector<15x384xf32>, i32 -> vector<15x384xf32>
    %1137 = vector.extract_strided_slice %1136 {offsets = [0, 0], sizes = [15, 256], strides = [1, 1]} : vector<15x384xf32> to vector<15x256xf32>
    %1138 = vector.extract_strided_slice %1137 {offsets = [0, 0], sizes = [13, 256], strides = [1, 1]} : vector<15x256xf32> to vector<13x256xf32>
    %1139 = vector.extract_strided_slice %1137 {offsets = [13, 0], sizes = [1, 256], strides = [1, 1]} : vector<15x256xf32> to vector<1x256xf32>
    %c6_435 = arith.constant 6 : index
    %c0_436 = arith.constant 0 : index
    %1140 = vector.load %arg2[%c6_435, %c0_436] : memref<7x256xf32, #tpu.memory_space<vmem>>, vector<1x256xf32>
    %1141 = arith.mulf %1139, %1140 : vector<1x256xf32>
    %1142 = vector.extract_strided_slice %1137 {offsets = [14, 0], sizes = [1, 256], strides = [1, 1]} : vector<15x256xf32> to vector<1x256xf32>
    %1143 = arith.mulf %215, %1138 : vector<13x256xf32>
    %cst_437 = arith.constant dense<0.000000e+00> : vector<256xf32>
    %1144 = vector.multi_reduction <add>, %1143, %cst_437 [0] : vector<13x256xf32> to vector<256xf32>
    %1145 = vector.shape_cast %1144 : vector<256xf32> to vector<1x256xf32>
    %1146 = arith.addf %207, %1142 : vector<1x256xf32>
    %cst_438 = arith.constant 2.000000e+00 : f32
    %1147 = vector.broadcast %cst_438 : f32 to vector<1x256xf32>
    %1148 = arith.mulf %1147, %1145 : vector<1x256xf32>
    %1149 = arith.subf %1146, %1148 : vector<1x256xf32>
    %c34 = arith.constant 34 : index
    %1150 = memref.load %arg10[%c34] : memref<49xf32, #tpu.memory_space<smem>>
    %1151 = vector.broadcast %1150 : f32 to vector<1x256xf32>
    %1152 = arith.addf %1149, %1151 : vector<1x256xf32>
    %cst_439 = arith.constant 0.000000e+00 : f32
    %1153 = vector.broadcast %cst_439 : f32 to vector<1x256xf32>
    %1154 = arith.subf %1153, %1152 : vector<1x256xf32>
    %1155 = math.exp %1154 : vector<1x256xf32>
    %1156 = arith.mulf %1155, %1141 : vector<1x256xf32>
    %1157 = vector.extract_strided_slice %1138 {offsets = [0, 0], sizes = [4, 256], strides = [1, 1]} : vector<13x256xf32> to vector<4x256xf32>
    %1158 = vector.broadcast %1156 : vector<1x256xf32> to vector<4x256xf32>
    %1159 = arith.mulf %1158, %1157 : vector<4x256xf32>
    %1160 = arith.addf %1133, %1159 : vector<4x256xf32>
    %1161 = arith.addf %1134, %1156 : vector<1x256xf32>
    %c0_440 = arith.constant 0 : index
    %c0_441 = arith.constant 0 : index
    %1162 = vector.load %arg13[%c0_440, %c0_441] : memref<15x384xf32, #tpu.memory_space<vmem>>, vector<15x384xf32>
    %c355_i32 = arith.constant 355 : i32
    %1163 = tpu.dynamic_rotate %1162 by %c355_i32 dim 1 : vector<15x384xf32>, i32 -> vector<15x384xf32>
    %1164 = vector.extract_strided_slice %1163 {offsets = [0, 0], sizes = [15, 256], strides = [1, 1]} : vector<15x384xf32> to vector<15x256xf32>
    %1165 = vector.extract_strided_slice %1164 {offsets = [0, 0], sizes = [13, 256], strides = [1, 1]} : vector<15x256xf32> to vector<13x256xf32>
    %1166 = vector.extract_strided_slice %1164 {offsets = [13, 0], sizes = [1, 256], strides = [1, 1]} : vector<15x256xf32> to vector<1x256xf32>
    %c0_442 = arith.constant 0 : index
    %c0_443 = arith.constant 0 : index
    %1167 = vector.load %arg2[%c0_442, %c0_443] : memref<7x256xf32, #tpu.memory_space<vmem>>, vector<1x256xf32>
    %1168 = arith.mulf %1166, %1167 : vector<1x256xf32>
    %1169 = vector.extract_strided_slice %1164 {offsets = [14, 0], sizes = [1, 256], strides = [1, 1]} : vector<15x256xf32> to vector<1x256xf32>
    %1170 = arith.mulf %215, %1165 : vector<13x256xf32>
    %cst_444 = arith.constant dense<0.000000e+00> : vector<256xf32>
    %1171 = vector.multi_reduction <add>, %1170, %cst_444 [0] : vector<13x256xf32> to vector<256xf32>
    %1172 = vector.shape_cast %1171 : vector<256xf32> to vector<1x256xf32>
    %1173 = arith.addf %207, %1169 : vector<1x256xf32>
    %cst_445 = arith.constant 2.000000e+00 : f32
    %1174 = vector.broadcast %cst_445 : f32 to vector<1x256xf32>
    %1175 = arith.mulf %1174, %1172 : vector<1x256xf32>
    %1176 = arith.subf %1173, %1175 : vector<1x256xf32>
    %c35 = arith.constant 35 : index
    %1177 = memref.load %arg10[%c35] : memref<49xf32, #tpu.memory_space<smem>>
    %1178 = vector.broadcast %1177 : f32 to vector<1x256xf32>
    %1179 = arith.addf %1176, %1178 : vector<1x256xf32>
    %cst_446 = arith.constant 0.000000e+00 : f32
    %1180 = vector.broadcast %cst_446 : f32 to vector<1x256xf32>
    %1181 = arith.subf %1180, %1179 : vector<1x256xf32>
    %1182 = math.exp %1181 : vector<1x256xf32>
    %1183 = arith.mulf %1182, %1168 : vector<1x256xf32>
    %1184 = vector.extract_strided_slice %1165 {offsets = [0, 0], sizes = [4, 256], strides = [1, 1]} : vector<13x256xf32> to vector<4x256xf32>
    %1185 = vector.broadcast %1183 : vector<1x256xf32> to vector<4x256xf32>
    %1186 = arith.mulf %1185, %1184 : vector<4x256xf32>
    %1187 = arith.addf %1160, %1186 : vector<4x256xf32>
    %1188 = arith.addf %1161, %1183 : vector<1x256xf32>
    %c0_447 = arith.constant 0 : index
    %c0_448 = arith.constant 0 : index
    %1189 = vector.load %arg13[%c0_447, %c0_448] : memref<15x384xf32, #tpu.memory_space<vmem>>, vector<15x384xf32>
    %c354_i32 = arith.constant 354 : i32
    %1190 = tpu.dynamic_rotate %1189 by %c354_i32 dim 1 : vector<15x384xf32>, i32 -> vector<15x384xf32>
    %1191 = vector.extract_strided_slice %1190 {offsets = [0, 0], sizes = [15, 256], strides = [1, 1]} : vector<15x384xf32> to vector<15x256xf32>
    %1192 = vector.extract_strided_slice %1191 {offsets = [0, 0], sizes = [13, 256], strides = [1, 1]} : vector<15x256xf32> to vector<13x256xf32>
    %1193 = vector.extract_strided_slice %1191 {offsets = [13, 0], sizes = [1, 256], strides = [1, 1]} : vector<15x256xf32> to vector<1x256xf32>
    %c1_449 = arith.constant 1 : index
    %c0_450 = arith.constant 0 : index
    %1194 = vector.load %arg2[%c1_449, %c0_450] : memref<7x256xf32, #tpu.memory_space<vmem>>, vector<1x256xf32>
    %1195 = arith.mulf %1193, %1194 : vector<1x256xf32>
    %1196 = vector.extract_strided_slice %1191 {offsets = [14, 0], sizes = [1, 256], strides = [1, 1]} : vector<15x256xf32> to vector<1x256xf32>
    %1197 = arith.mulf %215, %1192 : vector<13x256xf32>
    %cst_451 = arith.constant dense<0.000000e+00> : vector<256xf32>
    %1198 = vector.multi_reduction <add>, %1197, %cst_451 [0] : vector<13x256xf32> to vector<256xf32>
    %1199 = vector.shape_cast %1198 : vector<256xf32> to vector<1x256xf32>
    %1200 = arith.addf %207, %1196 : vector<1x256xf32>
    %cst_452 = arith.constant 2.000000e+00 : f32
    %1201 = vector.broadcast %cst_452 : f32 to vector<1x256xf32>
    %1202 = arith.mulf %1201, %1199 : vector<1x256xf32>
    %1203 = arith.subf %1200, %1202 : vector<1x256xf32>
    %c36 = arith.constant 36 : index
    %1204 = memref.load %arg10[%c36] : memref<49xf32, #tpu.memory_space<smem>>
    %1205 = vector.broadcast %1204 : f32 to vector<1x256xf32>
    %1206 = arith.addf %1203, %1205 : vector<1x256xf32>
    %cst_453 = arith.constant 0.000000e+00 : f32
    %1207 = vector.broadcast %cst_453 : f32 to vector<1x256xf32>
    %1208 = arith.subf %1207, %1206 : vector<1x256xf32>
    %1209 = math.exp %1208 : vector<1x256xf32>
    %1210 = arith.mulf %1209, %1195 : vector<1x256xf32>
    %1211 = vector.extract_strided_slice %1192 {offsets = [0, 0], sizes = [4, 256], strides = [1, 1]} : vector<13x256xf32> to vector<4x256xf32>
    %1212 = vector.broadcast %1210 : vector<1x256xf32> to vector<4x256xf32>
    %1213 = arith.mulf %1212, %1211 : vector<4x256xf32>
    %1214 = arith.addf %1187, %1213 : vector<4x256xf32>
    %1215 = arith.addf %1188, %1210 : vector<1x256xf32>
    %c0_454 = arith.constant 0 : index
    %c0_455 = arith.constant 0 : index
    %1216 = vector.load %arg13[%c0_454, %c0_455] : memref<15x384xf32, #tpu.memory_space<vmem>>, vector<15x384xf32>
    %c353_i32 = arith.constant 353 : i32
    %1217 = tpu.dynamic_rotate %1216 by %c353_i32 dim 1 : vector<15x384xf32>, i32 -> vector<15x384xf32>
    %1218 = vector.extract_strided_slice %1217 {offsets = [0, 0], sizes = [15, 256], strides = [1, 1]} : vector<15x384xf32> to vector<15x256xf32>
    %1219 = vector.extract_strided_slice %1218 {offsets = [0, 0], sizes = [13, 256], strides = [1, 1]} : vector<15x256xf32> to vector<13x256xf32>
    %1220 = vector.extract_strided_slice %1218 {offsets = [13, 0], sizes = [1, 256], strides = [1, 1]} : vector<15x256xf32> to vector<1x256xf32>
    %c2_456 = arith.constant 2 : index
    %c0_457 = arith.constant 0 : index
    %1221 = vector.load %arg2[%c2_456, %c0_457] : memref<7x256xf32, #tpu.memory_space<vmem>>, vector<1x256xf32>
    %1222 = arith.mulf %1220, %1221 : vector<1x256xf32>
    %1223 = vector.extract_strided_slice %1218 {offsets = [14, 0], sizes = [1, 256], strides = [1, 1]} : vector<15x256xf32> to vector<1x256xf32>
    %1224 = arith.mulf %215, %1219 : vector<13x256xf32>
    %cst_458 = arith.constant dense<0.000000e+00> : vector<256xf32>
    %1225 = vector.multi_reduction <add>, %1224, %cst_458 [0] : vector<13x256xf32> to vector<256xf32>
    %1226 = vector.shape_cast %1225 : vector<256xf32> to vector<1x256xf32>
    %1227 = arith.addf %207, %1223 : vector<1x256xf32>
    %cst_459 = arith.constant 2.000000e+00 : f32
    %1228 = vector.broadcast %cst_459 : f32 to vector<1x256xf32>
    %1229 = arith.mulf %1228, %1226 : vector<1x256xf32>
    %1230 = arith.subf %1227, %1229 : vector<1x256xf32>
    %c37 = arith.constant 37 : index
    %1231 = memref.load %arg10[%c37] : memref<49xf32, #tpu.memory_space<smem>>
    %1232 = vector.broadcast %1231 : f32 to vector<1x256xf32>
    %1233 = arith.addf %1230, %1232 : vector<1x256xf32>
    %cst_460 = arith.constant 0.000000e+00 : f32
    %1234 = vector.broadcast %cst_460 : f32 to vector<1x256xf32>
    %1235 = arith.subf %1234, %1233 : vector<1x256xf32>
    %1236 = math.exp %1235 : vector<1x256xf32>
    %1237 = arith.mulf %1236, %1222 : vector<1x256xf32>
    %1238 = vector.extract_strided_slice %1219 {offsets = [0, 0], sizes = [4, 256], strides = [1, 1]} : vector<13x256xf32> to vector<4x256xf32>
    %1239 = vector.broadcast %1237 : vector<1x256xf32> to vector<4x256xf32>
    %1240 = arith.mulf %1239, %1238 : vector<4x256xf32>
    %1241 = arith.addf %1214, %1240 : vector<4x256xf32>
    %1242 = arith.addf %1215, %1237 : vector<1x256xf32>
    %c0_461 = arith.constant 0 : index
    %c0_462 = arith.constant 0 : index
    %1243 = vector.load %arg13[%c0_461, %c0_462] : memref<15x384xf32, #tpu.memory_space<vmem>>, vector<15x384xf32>
    %c352_i32 = arith.constant 352 : i32
    %1244 = tpu.dynamic_rotate %1243 by %c352_i32 dim 1 : vector<15x384xf32>, i32 -> vector<15x384xf32>
    %1245 = vector.extract_strided_slice %1244 {offsets = [0, 0], sizes = [15, 256], strides = [1, 1]} : vector<15x384xf32> to vector<15x256xf32>
    %1246 = vector.extract_strided_slice %1245 {offsets = [0, 0], sizes = [13, 256], strides = [1, 1]} : vector<15x256xf32> to vector<13x256xf32>
    %1247 = vector.extract_strided_slice %1245 {offsets = [13, 0], sizes = [1, 256], strides = [1, 1]} : vector<15x256xf32> to vector<1x256xf32>
    %c3_463 = arith.constant 3 : index
    %c0_464 = arith.constant 0 : index
    %1248 = vector.load %arg2[%c3_463, %c0_464] : memref<7x256xf32, #tpu.memory_space<vmem>>, vector<1x256xf32>
    %1249 = arith.mulf %1247, %1248 : vector<1x256xf32>
    %1250 = vector.extract_strided_slice %1245 {offsets = [14, 0], sizes = [1, 256], strides = [1, 1]} : vector<15x256xf32> to vector<1x256xf32>
    %1251 = arith.mulf %215, %1246 : vector<13x256xf32>
    %cst_465 = arith.constant dense<0.000000e+00> : vector<256xf32>
    %1252 = vector.multi_reduction <add>, %1251, %cst_465 [0] : vector<13x256xf32> to vector<256xf32>
    %1253 = vector.shape_cast %1252 : vector<256xf32> to vector<1x256xf32>
    %1254 = arith.addf %207, %1250 : vector<1x256xf32>
    %cst_466 = arith.constant 2.000000e+00 : f32
    %1255 = vector.broadcast %cst_466 : f32 to vector<1x256xf32>
    %1256 = arith.mulf %1255, %1253 : vector<1x256xf32>
    %1257 = arith.subf %1254, %1256 : vector<1x256xf32>
    %c38 = arith.constant 38 : index
    %1258 = memref.load %arg10[%c38] : memref<49xf32, #tpu.memory_space<smem>>
    %1259 = vector.broadcast %1258 : f32 to vector<1x256xf32>
    %1260 = arith.addf %1257, %1259 : vector<1x256xf32>
    %cst_467 = arith.constant 0.000000e+00 : f32
    %1261 = vector.broadcast %cst_467 : f32 to vector<1x256xf32>
    %1262 = arith.subf %1261, %1260 : vector<1x256xf32>
    %1263 = math.exp %1262 : vector<1x256xf32>
    %1264 = arith.mulf %1263, %1249 : vector<1x256xf32>
    %1265 = vector.extract_strided_slice %1246 {offsets = [0, 0], sizes = [4, 256], strides = [1, 1]} : vector<13x256xf32> to vector<4x256xf32>
    %1266 = vector.broadcast %1264 : vector<1x256xf32> to vector<4x256xf32>
    %1267 = arith.mulf %1266, %1265 : vector<4x256xf32>
    %1268 = arith.addf %1241, %1267 : vector<4x256xf32>
    %1269 = arith.addf %1242, %1264 : vector<1x256xf32>
    %c0_468 = arith.constant 0 : index
    %c0_469 = arith.constant 0 : index
    %1270 = vector.load %arg13[%c0_468, %c0_469] : memref<15x384xf32, #tpu.memory_space<vmem>>, vector<15x384xf32>
    %c351_i32 = arith.constant 351 : i32
    %1271 = tpu.dynamic_rotate %1270 by %c351_i32 dim 1 : vector<15x384xf32>, i32 -> vector<15x384xf32>
    %1272 = vector.extract_strided_slice %1271 {offsets = [0, 0], sizes = [15, 256], strides = [1, 1]} : vector<15x384xf32> to vector<15x256xf32>
    %1273 = vector.extract_strided_slice %1272 {offsets = [0, 0], sizes = [13, 256], strides = [1, 1]} : vector<15x256xf32> to vector<13x256xf32>
    %1274 = vector.extract_strided_slice %1272 {offsets = [13, 0], sizes = [1, 256], strides = [1, 1]} : vector<15x256xf32> to vector<1x256xf32>
    %c4_470 = arith.constant 4 : index
    %c0_471 = arith.constant 0 : index
    %1275 = vector.load %arg2[%c4_470, %c0_471] : memref<7x256xf32, #tpu.memory_space<vmem>>, vector<1x256xf32>
    %1276 = arith.mulf %1274, %1275 : vector<1x256xf32>
    %1277 = vector.extract_strided_slice %1272 {offsets = [14, 0], sizes = [1, 256], strides = [1, 1]} : vector<15x256xf32> to vector<1x256xf32>
    %1278 = arith.mulf %215, %1273 : vector<13x256xf32>
    %cst_472 = arith.constant dense<0.000000e+00> : vector<256xf32>
    %1279 = vector.multi_reduction <add>, %1278, %cst_472 [0] : vector<13x256xf32> to vector<256xf32>
    %1280 = vector.shape_cast %1279 : vector<256xf32> to vector<1x256xf32>
    %1281 = arith.addf %207, %1277 : vector<1x256xf32>
    %cst_473 = arith.constant 2.000000e+00 : f32
    %1282 = vector.broadcast %cst_473 : f32 to vector<1x256xf32>
    %1283 = arith.mulf %1282, %1280 : vector<1x256xf32>
    %1284 = arith.subf %1281, %1283 : vector<1x256xf32>
    %c39 = arith.constant 39 : index
    %1285 = memref.load %arg10[%c39] : memref<49xf32, #tpu.memory_space<smem>>
    %1286 = vector.broadcast %1285 : f32 to vector<1x256xf32>
    %1287 = arith.addf %1284, %1286 : vector<1x256xf32>
    %cst_474 = arith.constant 0.000000e+00 : f32
    %1288 = vector.broadcast %cst_474 : f32 to vector<1x256xf32>
    %1289 = arith.subf %1288, %1287 : vector<1x256xf32>
    %1290 = math.exp %1289 : vector<1x256xf32>
    %1291 = arith.mulf %1290, %1276 : vector<1x256xf32>
    %1292 = vector.extract_strided_slice %1273 {offsets = [0, 0], sizes = [4, 256], strides = [1, 1]} : vector<13x256xf32> to vector<4x256xf32>
    %1293 = vector.broadcast %1291 : vector<1x256xf32> to vector<4x256xf32>
    %1294 = arith.mulf %1293, %1292 : vector<4x256xf32>
    %1295 = arith.addf %1268, %1294 : vector<4x256xf32>
    %1296 = arith.addf %1269, %1291 : vector<1x256xf32>
    %c0_475 = arith.constant 0 : index
    %c0_476 = arith.constant 0 : index
    %1297 = vector.load %arg13[%c0_475, %c0_476] : memref<15x384xf32, #tpu.memory_space<vmem>>, vector<15x384xf32>
    %c350_i32 = arith.constant 350 : i32
    %1298 = tpu.dynamic_rotate %1297 by %c350_i32 dim 1 : vector<15x384xf32>, i32 -> vector<15x384xf32>
    %1299 = vector.extract_strided_slice %1298 {offsets = [0, 0], sizes = [15, 256], strides = [1, 1]} : vector<15x384xf32> to vector<15x256xf32>
    %1300 = vector.extract_strided_slice %1299 {offsets = [0, 0], sizes = [13, 256], strides = [1, 1]} : vector<15x256xf32> to vector<13x256xf32>
    %1301 = vector.extract_strided_slice %1299 {offsets = [13, 0], sizes = [1, 256], strides = [1, 1]} : vector<15x256xf32> to vector<1x256xf32>
    %c5_477 = arith.constant 5 : index
    %c0_478 = arith.constant 0 : index
    %1302 = vector.load %arg2[%c5_477, %c0_478] : memref<7x256xf32, #tpu.memory_space<vmem>>, vector<1x256xf32>
    %1303 = arith.mulf %1301, %1302 : vector<1x256xf32>
    %1304 = vector.extract_strided_slice %1299 {offsets = [14, 0], sizes = [1, 256], strides = [1, 1]} : vector<15x256xf32> to vector<1x256xf32>
    %1305 = arith.mulf %215, %1300 : vector<13x256xf32>
    %cst_479 = arith.constant dense<0.000000e+00> : vector<256xf32>
    %1306 = vector.multi_reduction <add>, %1305, %cst_479 [0] : vector<13x256xf32> to vector<256xf32>
    %1307 = vector.shape_cast %1306 : vector<256xf32> to vector<1x256xf32>
    %1308 = arith.addf %207, %1304 : vector<1x256xf32>
    %cst_480 = arith.constant 2.000000e+00 : f32
    %1309 = vector.broadcast %cst_480 : f32 to vector<1x256xf32>
    %1310 = arith.mulf %1309, %1307 : vector<1x256xf32>
    %1311 = arith.subf %1308, %1310 : vector<1x256xf32>
    %c40 = arith.constant 40 : index
    %1312 = memref.load %arg10[%c40] : memref<49xf32, #tpu.memory_space<smem>>
    %1313 = vector.broadcast %1312 : f32 to vector<1x256xf32>
    %1314 = arith.addf %1311, %1313 : vector<1x256xf32>
    %cst_481 = arith.constant 0.000000e+00 : f32
    %1315 = vector.broadcast %cst_481 : f32 to vector<1x256xf32>
    %1316 = arith.subf %1315, %1314 : vector<1x256xf32>
    %1317 = math.exp %1316 : vector<1x256xf32>
    %1318 = arith.mulf %1317, %1303 : vector<1x256xf32>
    %1319 = vector.extract_strided_slice %1300 {offsets = [0, 0], sizes = [4, 256], strides = [1, 1]} : vector<13x256xf32> to vector<4x256xf32>
    %1320 = vector.broadcast %1318 : vector<1x256xf32> to vector<4x256xf32>
    %1321 = arith.mulf %1320, %1319 : vector<4x256xf32>
    %1322 = arith.addf %1295, %1321 : vector<4x256xf32>
    %1323 = arith.addf %1296, %1318 : vector<1x256xf32>
    %c0_482 = arith.constant 0 : index
    %c0_483 = arith.constant 0 : index
    %1324 = vector.load %arg13[%c0_482, %c0_483] : memref<15x384xf32, #tpu.memory_space<vmem>>, vector<15x384xf32>
    %c349_i32 = arith.constant 349 : i32
    %1325 = tpu.dynamic_rotate %1324 by %c349_i32 dim 1 : vector<15x384xf32>, i32 -> vector<15x384xf32>
    %1326 = vector.extract_strided_slice %1325 {offsets = [0, 0], sizes = [15, 256], strides = [1, 1]} : vector<15x384xf32> to vector<15x256xf32>
    %1327 = vector.extract_strided_slice %1326 {offsets = [0, 0], sizes = [13, 256], strides = [1, 1]} : vector<15x256xf32> to vector<13x256xf32>
    %1328 = vector.extract_strided_slice %1326 {offsets = [13, 0], sizes = [1, 256], strides = [1, 1]} : vector<15x256xf32> to vector<1x256xf32>
    %c6_484 = arith.constant 6 : index
    %c0_485 = arith.constant 0 : index
    %1329 = vector.load %arg2[%c6_484, %c0_485] : memref<7x256xf32, #tpu.memory_space<vmem>>, vector<1x256xf32>
    %1330 = arith.mulf %1328, %1329 : vector<1x256xf32>
    %1331 = vector.extract_strided_slice %1326 {offsets = [14, 0], sizes = [1, 256], strides = [1, 1]} : vector<15x256xf32> to vector<1x256xf32>
    %1332 = arith.mulf %215, %1327 : vector<13x256xf32>
    %cst_486 = arith.constant dense<0.000000e+00> : vector<256xf32>
    %1333 = vector.multi_reduction <add>, %1332, %cst_486 [0] : vector<13x256xf32> to vector<256xf32>
    %1334 = vector.shape_cast %1333 : vector<256xf32> to vector<1x256xf32>
    %1335 = arith.addf %207, %1331 : vector<1x256xf32>
    %cst_487 = arith.constant 2.000000e+00 : f32
    %1336 = vector.broadcast %cst_487 : f32 to vector<1x256xf32>
    %1337 = arith.mulf %1336, %1334 : vector<1x256xf32>
    %1338 = arith.subf %1335, %1337 : vector<1x256xf32>
    %c41 = arith.constant 41 : index
    %1339 = memref.load %arg10[%c41] : memref<49xf32, #tpu.memory_space<smem>>
    %1340 = vector.broadcast %1339 : f32 to vector<1x256xf32>
    %1341 = arith.addf %1338, %1340 : vector<1x256xf32>
    %cst_488 = arith.constant 0.000000e+00 : f32
    %1342 = vector.broadcast %cst_488 : f32 to vector<1x256xf32>
    %1343 = arith.subf %1342, %1341 : vector<1x256xf32>
    %1344 = math.exp %1343 : vector<1x256xf32>
    %1345 = arith.mulf %1344, %1330 : vector<1x256xf32>
    %1346 = vector.extract_strided_slice %1327 {offsets = [0, 0], sizes = [4, 256], strides = [1, 1]} : vector<13x256xf32> to vector<4x256xf32>
    %1347 = vector.broadcast %1345 : vector<1x256xf32> to vector<4x256xf32>
    %1348 = arith.mulf %1347, %1346 : vector<4x256xf32>
    %1349 = arith.addf %1322, %1348 : vector<4x256xf32>
    %1350 = arith.addf %1323, %1345 : vector<1x256xf32>
    %c0_489 = arith.constant 0 : index
    %c0_490 = arith.constant 0 : index
    %1351 = vector.load %arg13[%c0_489, %c0_490] : memref<15x384xf32, #tpu.memory_space<vmem>>, vector<15x384xf32>
    %c339_i32 = arith.constant 339 : i32
    %1352 = tpu.dynamic_rotate %1351 by %c339_i32 dim 1 : vector<15x384xf32>, i32 -> vector<15x384xf32>
    %1353 = vector.extract_strided_slice %1352 {offsets = [0, 0], sizes = [15, 256], strides = [1, 1]} : vector<15x384xf32> to vector<15x256xf32>
    %1354 = vector.extract_strided_slice %1353 {offsets = [0, 0], sizes = [13, 256], strides = [1, 1]} : vector<15x256xf32> to vector<13x256xf32>
    %1355 = vector.extract_strided_slice %1353 {offsets = [13, 0], sizes = [1, 256], strides = [1, 1]} : vector<15x256xf32> to vector<1x256xf32>
    %c0_491 = arith.constant 0 : index
    %c0_492 = arith.constant 0 : index
    %1356 = vector.load %arg2[%c0_491, %c0_492] : memref<7x256xf32, #tpu.memory_space<vmem>>, vector<1x256xf32>
    %1357 = arith.mulf %1355, %1356 : vector<1x256xf32>
    %1358 = vector.extract_strided_slice %1353 {offsets = [14, 0], sizes = [1, 256], strides = [1, 1]} : vector<15x256xf32> to vector<1x256xf32>
    %1359 = arith.mulf %215, %1354 : vector<13x256xf32>
    %cst_493 = arith.constant dense<0.000000e+00> : vector<256xf32>
    %1360 = vector.multi_reduction <add>, %1359, %cst_493 [0] : vector<13x256xf32> to vector<256xf32>
    %1361 = vector.shape_cast %1360 : vector<256xf32> to vector<1x256xf32>
    %1362 = arith.addf %207, %1358 : vector<1x256xf32>
    %cst_494 = arith.constant 2.000000e+00 : f32
    %1363 = vector.broadcast %cst_494 : f32 to vector<1x256xf32>
    %1364 = arith.mulf %1363, %1361 : vector<1x256xf32>
    %1365 = arith.subf %1362, %1364 : vector<1x256xf32>
    %c42 = arith.constant 42 : index
    %1366 = memref.load %arg10[%c42] : memref<49xf32, #tpu.memory_space<smem>>
    %1367 = vector.broadcast %1366 : f32 to vector<1x256xf32>
    %1368 = arith.addf %1365, %1367 : vector<1x256xf32>
    %cst_495 = arith.constant 0.000000e+00 : f32
    %1369 = vector.broadcast %cst_495 : f32 to vector<1x256xf32>
    %1370 = arith.subf %1369, %1368 : vector<1x256xf32>
    %1371 = math.exp %1370 : vector<1x256xf32>
    %1372 = arith.mulf %1371, %1357 : vector<1x256xf32>
    %1373 = vector.extract_strided_slice %1354 {offsets = [0, 0], sizes = [4, 256], strides = [1, 1]} : vector<13x256xf32> to vector<4x256xf32>
    %1374 = vector.broadcast %1372 : vector<1x256xf32> to vector<4x256xf32>
    %1375 = arith.mulf %1374, %1373 : vector<4x256xf32>
    %1376 = arith.addf %1349, %1375 : vector<4x256xf32>
    %1377 = arith.addf %1350, %1372 : vector<1x256xf32>
    %c0_496 = arith.constant 0 : index
    %c0_497 = arith.constant 0 : index
    %1378 = vector.load %arg13[%c0_496, %c0_497] : memref<15x384xf32, #tpu.memory_space<vmem>>, vector<15x384xf32>
    %c338_i32 = arith.constant 338 : i32
    %1379 = tpu.dynamic_rotate %1378 by %c338_i32 dim 1 : vector<15x384xf32>, i32 -> vector<15x384xf32>
    %1380 = vector.extract_strided_slice %1379 {offsets = [0, 0], sizes = [15, 256], strides = [1, 1]} : vector<15x384xf32> to vector<15x256xf32>
    %1381 = vector.extract_strided_slice %1380 {offsets = [0, 0], sizes = [13, 256], strides = [1, 1]} : vector<15x256xf32> to vector<13x256xf32>
    %1382 = vector.extract_strided_slice %1380 {offsets = [13, 0], sizes = [1, 256], strides = [1, 1]} : vector<15x256xf32> to vector<1x256xf32>
    %c1_498 = arith.constant 1 : index
    %c0_499 = arith.constant 0 : index
    %1383 = vector.load %arg2[%c1_498, %c0_499] : memref<7x256xf32, #tpu.memory_space<vmem>>, vector<1x256xf32>
    %1384 = arith.mulf %1382, %1383 : vector<1x256xf32>
    %1385 = vector.extract_strided_slice %1380 {offsets = [14, 0], sizes = [1, 256], strides = [1, 1]} : vector<15x256xf32> to vector<1x256xf32>
    %1386 = arith.mulf %215, %1381 : vector<13x256xf32>
    %cst_500 = arith.constant dense<0.000000e+00> : vector<256xf32>
    %1387 = vector.multi_reduction <add>, %1386, %cst_500 [0] : vector<13x256xf32> to vector<256xf32>
    %1388 = vector.shape_cast %1387 : vector<256xf32> to vector<1x256xf32>
    %1389 = arith.addf %207, %1385 : vector<1x256xf32>
    %cst_501 = arith.constant 2.000000e+00 : f32
    %1390 = vector.broadcast %cst_501 : f32 to vector<1x256xf32>
    %1391 = arith.mulf %1390, %1388 : vector<1x256xf32>
    %1392 = arith.subf %1389, %1391 : vector<1x256xf32>
    %c43 = arith.constant 43 : index
    %1393 = memref.load %arg10[%c43] : memref<49xf32, #tpu.memory_space<smem>>
    %1394 = vector.broadcast %1393 : f32 to vector<1x256xf32>
    %1395 = arith.addf %1392, %1394 : vector<1x256xf32>
    %cst_502 = arith.constant 0.000000e+00 : f32
    %1396 = vector.broadcast %cst_502 : f32 to vector<1x256xf32>
    %1397 = arith.subf %1396, %1395 : vector<1x256xf32>
    %1398 = math.exp %1397 : vector<1x256xf32>
    %1399 = arith.mulf %1398, %1384 : vector<1x256xf32>
    %1400 = vector.extract_strided_slice %1381 {offsets = [0, 0], sizes = [4, 256], strides = [1, 1]} : vector<13x256xf32> to vector<4x256xf32>
    %1401 = vector.broadcast %1399 : vector<1x256xf32> to vector<4x256xf32>
    %1402 = arith.mulf %1401, %1400 : vector<4x256xf32>
    %1403 = arith.addf %1376, %1402 : vector<4x256xf32>
    %1404 = arith.addf %1377, %1399 : vector<1x256xf32>
    %c0_503 = arith.constant 0 : index
    %c0_504 = arith.constant 0 : index
    %1405 = vector.load %arg13[%c0_503, %c0_504] : memref<15x384xf32, #tpu.memory_space<vmem>>, vector<15x384xf32>
    %c337_i32 = arith.constant 337 : i32
    %1406 = tpu.dynamic_rotate %1405 by %c337_i32 dim 1 : vector<15x384xf32>, i32 -> vector<15x384xf32>
    %1407 = vector.extract_strided_slice %1406 {offsets = [0, 0], sizes = [15, 256], strides = [1, 1]} : vector<15x384xf32> to vector<15x256xf32>
    %1408 = vector.extract_strided_slice %1407 {offsets = [0, 0], sizes = [13, 256], strides = [1, 1]} : vector<15x256xf32> to vector<13x256xf32>
    %1409 = vector.extract_strided_slice %1407 {offsets = [13, 0], sizes = [1, 256], strides = [1, 1]} : vector<15x256xf32> to vector<1x256xf32>
    %c2_505 = arith.constant 2 : index
    %c0_506 = arith.constant 0 : index
    %1410 = vector.load %arg2[%c2_505, %c0_506] : memref<7x256xf32, #tpu.memory_space<vmem>>, vector<1x256xf32>
    %1411 = arith.mulf %1409, %1410 : vector<1x256xf32>
    %1412 = vector.extract_strided_slice %1407 {offsets = [14, 0], sizes = [1, 256], strides = [1, 1]} : vector<15x256xf32> to vector<1x256xf32>
    %1413 = arith.mulf %215, %1408 : vector<13x256xf32>
    %cst_507 = arith.constant dense<0.000000e+00> : vector<256xf32>
    %1414 = vector.multi_reduction <add>, %1413, %cst_507 [0] : vector<13x256xf32> to vector<256xf32>
    %1415 = vector.shape_cast %1414 : vector<256xf32> to vector<1x256xf32>
    %1416 = arith.addf %207, %1412 : vector<1x256xf32>
    %cst_508 = arith.constant 2.000000e+00 : f32
    %1417 = vector.broadcast %cst_508 : f32 to vector<1x256xf32>
    %1418 = arith.mulf %1417, %1415 : vector<1x256xf32>
    %1419 = arith.subf %1416, %1418 : vector<1x256xf32>
    %c44 = arith.constant 44 : index
    %1420 = memref.load %arg10[%c44] : memref<49xf32, #tpu.memory_space<smem>>
    %1421 = vector.broadcast %1420 : f32 to vector<1x256xf32>
    %1422 = arith.addf %1419, %1421 : vector<1x256xf32>
    %cst_509 = arith.constant 0.000000e+00 : f32
    %1423 = vector.broadcast %cst_509 : f32 to vector<1x256xf32>
    %1424 = arith.subf %1423, %1422 : vector<1x256xf32>
    %1425 = math.exp %1424 : vector<1x256xf32>
    %1426 = arith.mulf %1425, %1411 : vector<1x256xf32>
    %1427 = vector.extract_strided_slice %1408 {offsets = [0, 0], sizes = [4, 256], strides = [1, 1]} : vector<13x256xf32> to vector<4x256xf32>
    %1428 = vector.broadcast %1426 : vector<1x256xf32> to vector<4x256xf32>
    %1429 = arith.mulf %1428, %1427 : vector<4x256xf32>
    %1430 = arith.addf %1403, %1429 : vector<4x256xf32>
    %1431 = arith.addf %1404, %1426 : vector<1x256xf32>
    %c0_510 = arith.constant 0 : index
    %c0_511 = arith.constant 0 : index
    %1432 = vector.load %arg13[%c0_510, %c0_511] : memref<15x384xf32, #tpu.memory_space<vmem>>, vector<15x384xf32>
    %c336_i32 = arith.constant 336 : i32
    %1433 = tpu.dynamic_rotate %1432 by %c336_i32 dim 1 : vector<15x384xf32>, i32 -> vector<15x384xf32>
    %1434 = vector.extract_strided_slice %1433 {offsets = [0, 0], sizes = [15, 256], strides = [1, 1]} : vector<15x384xf32> to vector<15x256xf32>
    %1435 = vector.extract_strided_slice %1434 {offsets = [0, 0], sizes = [13, 256], strides = [1, 1]} : vector<15x256xf32> to vector<13x256xf32>
    %1436 = vector.extract_strided_slice %1434 {offsets = [13, 0], sizes = [1, 256], strides = [1, 1]} : vector<15x256xf32> to vector<1x256xf32>
    %c3_512 = arith.constant 3 : index
    %c0_513 = arith.constant 0 : index
    %1437 = vector.load %arg2[%c3_512, %c0_513] : memref<7x256xf32, #tpu.memory_space<vmem>>, vector<1x256xf32>
    %1438 = arith.mulf %1436, %1437 : vector<1x256xf32>
    %1439 = vector.extract_strided_slice %1434 {offsets = [14, 0], sizes = [1, 256], strides = [1, 1]} : vector<15x256xf32> to vector<1x256xf32>
    %1440 = arith.mulf %215, %1435 : vector<13x256xf32>
    %cst_514 = arith.constant dense<0.000000e+00> : vector<256xf32>
    %1441 = vector.multi_reduction <add>, %1440, %cst_514 [0] : vector<13x256xf32> to vector<256xf32>
    %1442 = vector.shape_cast %1441 : vector<256xf32> to vector<1x256xf32>
    %1443 = arith.addf %207, %1439 : vector<1x256xf32>
    %cst_515 = arith.constant 2.000000e+00 : f32
    %1444 = vector.broadcast %cst_515 : f32 to vector<1x256xf32>
    %1445 = arith.mulf %1444, %1442 : vector<1x256xf32>
    %1446 = arith.subf %1443, %1445 : vector<1x256xf32>
    %c45 = arith.constant 45 : index
    %1447 = memref.load %arg10[%c45] : memref<49xf32, #tpu.memory_space<smem>>
    %1448 = vector.broadcast %1447 : f32 to vector<1x256xf32>
    %1449 = arith.addf %1446, %1448 : vector<1x256xf32>
    %cst_516 = arith.constant 0.000000e+00 : f32
    %1450 = vector.broadcast %cst_516 : f32 to vector<1x256xf32>
    %1451 = arith.subf %1450, %1449 : vector<1x256xf32>
    %1452 = math.exp %1451 : vector<1x256xf32>
    %1453 = arith.mulf %1452, %1438 : vector<1x256xf32>
    %1454 = vector.extract_strided_slice %1435 {offsets = [0, 0], sizes = [4, 256], strides = [1, 1]} : vector<13x256xf32> to vector<4x256xf32>
    %1455 = vector.broadcast %1453 : vector<1x256xf32> to vector<4x256xf32>
    %1456 = arith.mulf %1455, %1454 : vector<4x256xf32>
    %1457 = arith.addf %1430, %1456 : vector<4x256xf32>
    %1458 = arith.addf %1431, %1453 : vector<1x256xf32>
    %c0_517 = arith.constant 0 : index
    %c0_518 = arith.constant 0 : index
    %1459 = vector.load %arg13[%c0_517, %c0_518] : memref<15x384xf32, #tpu.memory_space<vmem>>, vector<15x384xf32>
    %c335_i32 = arith.constant 335 : i32
    %1460 = tpu.dynamic_rotate %1459 by %c335_i32 dim 1 : vector<15x384xf32>, i32 -> vector<15x384xf32>
    %1461 = vector.extract_strided_slice %1460 {offsets = [0, 0], sizes = [15, 256], strides = [1, 1]} : vector<15x384xf32> to vector<15x256xf32>
    %1462 = vector.extract_strided_slice %1461 {offsets = [0, 0], sizes = [13, 256], strides = [1, 1]} : vector<15x256xf32> to vector<13x256xf32>
    %1463 = vector.extract_strided_slice %1461 {offsets = [13, 0], sizes = [1, 256], strides = [1, 1]} : vector<15x256xf32> to vector<1x256xf32>
    %c4_519 = arith.constant 4 : index
    %c0_520 = arith.constant 0 : index
    %1464 = vector.load %arg2[%c4_519, %c0_520] : memref<7x256xf32, #tpu.memory_space<vmem>>, vector<1x256xf32>
    %1465 = arith.mulf %1463, %1464 : vector<1x256xf32>
    %1466 = vector.extract_strided_slice %1461 {offsets = [14, 0], sizes = [1, 256], strides = [1, 1]} : vector<15x256xf32> to vector<1x256xf32>
    %1467 = arith.mulf %215, %1462 : vector<13x256xf32>
    %cst_521 = arith.constant dense<0.000000e+00> : vector<256xf32>
    %1468 = vector.multi_reduction <add>, %1467, %cst_521 [0] : vector<13x256xf32> to vector<256xf32>
    %1469 = vector.shape_cast %1468 : vector<256xf32> to vector<1x256xf32>
    %1470 = arith.addf %207, %1466 : vector<1x256xf32>
    %cst_522 = arith.constant 2.000000e+00 : f32
    %1471 = vector.broadcast %cst_522 : f32 to vector<1x256xf32>
    %1472 = arith.mulf %1471, %1469 : vector<1x256xf32>
    %1473 = arith.subf %1470, %1472 : vector<1x256xf32>
    %c46 = arith.constant 46 : index
    %1474 = memref.load %arg10[%c46] : memref<49xf32, #tpu.memory_space<smem>>
    %1475 = vector.broadcast %1474 : f32 to vector<1x256xf32>
    %1476 = arith.addf %1473, %1475 : vector<1x256xf32>
    %cst_523 = arith.constant 0.000000e+00 : f32
    %1477 = vector.broadcast %cst_523 : f32 to vector<1x256xf32>
    %1478 = arith.subf %1477, %1476 : vector<1x256xf32>
    %1479 = math.exp %1478 : vector<1x256xf32>
    %1480 = arith.mulf %1479, %1465 : vector<1x256xf32>
    %1481 = vector.extract_strided_slice %1462 {offsets = [0, 0], sizes = [4, 256], strides = [1, 1]} : vector<13x256xf32> to vector<4x256xf32>
    %1482 = vector.broadcast %1480 : vector<1x256xf32> to vector<4x256xf32>
    %1483 = arith.mulf %1482, %1481 : vector<4x256xf32>
    %1484 = arith.addf %1457, %1483 : vector<4x256xf32>
    %1485 = arith.addf %1458, %1480 : vector<1x256xf32>
    %c0_524 = arith.constant 0 : index
    %c0_525 = arith.constant 0 : index
    %1486 = vector.load %arg13[%c0_524, %c0_525] : memref<15x384xf32, #tpu.memory_space<vmem>>, vector<15x384xf32>
    %c334_i32 = arith.constant 334 : i32
    %1487 = tpu.dynamic_rotate %1486 by %c334_i32 dim 1 : vector<15x384xf32>, i32 -> vector<15x384xf32>
    %1488 = vector.extract_strided_slice %1487 {offsets = [0, 0], sizes = [15, 256], strides = [1, 1]} : vector<15x384xf32> to vector<15x256xf32>
    %1489 = vector.extract_strided_slice %1488 {offsets = [0, 0], sizes = [13, 256], strides = [1, 1]} : vector<15x256xf32> to vector<13x256xf32>
    %1490 = vector.extract_strided_slice %1488 {offsets = [13, 0], sizes = [1, 256], strides = [1, 1]} : vector<15x256xf32> to vector<1x256xf32>
    %c5_526 = arith.constant 5 : index
    %c0_527 = arith.constant 0 : index
    %1491 = vector.load %arg2[%c5_526, %c0_527] : memref<7x256xf32, #tpu.memory_space<vmem>>, vector<1x256xf32>
    %1492 = arith.mulf %1490, %1491 : vector<1x256xf32>
    %1493 = vector.extract_strided_slice %1488 {offsets = [14, 0], sizes = [1, 256], strides = [1, 1]} : vector<15x256xf32> to vector<1x256xf32>
    %1494 = arith.mulf %215, %1489 : vector<13x256xf32>
    %cst_528 = arith.constant dense<0.000000e+00> : vector<256xf32>
    %1495 = vector.multi_reduction <add>, %1494, %cst_528 [0] : vector<13x256xf32> to vector<256xf32>
    %1496 = vector.shape_cast %1495 : vector<256xf32> to vector<1x256xf32>
    %1497 = arith.addf %207, %1493 : vector<1x256xf32>
    %cst_529 = arith.constant 2.000000e+00 : f32
    %1498 = vector.broadcast %cst_529 : f32 to vector<1x256xf32>
    %1499 = arith.mulf %1498, %1496 : vector<1x256xf32>
    %1500 = arith.subf %1497, %1499 : vector<1x256xf32>
    %c47 = arith.constant 47 : index
    %1501 = memref.load %arg10[%c47] : memref<49xf32, #tpu.memory_space<smem>>
    %1502 = vector.broadcast %1501 : f32 to vector<1x256xf32>
    %1503 = arith.addf %1500, %1502 : vector<1x256xf32>
    %cst_530 = arith.constant 0.000000e+00 : f32
    %1504 = vector.broadcast %cst_530 : f32 to vector<1x256xf32>
    %1505 = arith.subf %1504, %1503 : vector<1x256xf32>
    %1506 = math.exp %1505 : vector<1x256xf32>
    %1507 = arith.mulf %1506, %1492 : vector<1x256xf32>
    %1508 = vector.extract_strided_slice %1489 {offsets = [0, 0], sizes = [4, 256], strides = [1, 1]} : vector<13x256xf32> to vector<4x256xf32>
    %1509 = vector.broadcast %1507 : vector<1x256xf32> to vector<4x256xf32>
    %1510 = arith.mulf %1509, %1508 : vector<4x256xf32>
    %1511 = arith.addf %1484, %1510 : vector<4x256xf32>
    %1512 = arith.addf %1485, %1507 : vector<1x256xf32>
    %c0_531 = arith.constant 0 : index
    %c0_532 = arith.constant 0 : index
    %1513 = vector.load %arg13[%c0_531, %c0_532] : memref<15x384xf32, #tpu.memory_space<vmem>>, vector<15x384xf32>
    %c333_i32 = arith.constant 333 : i32
    %1514 = tpu.dynamic_rotate %1513 by %c333_i32 dim 1 : vector<15x384xf32>, i32 -> vector<15x384xf32>
    %1515 = vector.extract_strided_slice %1514 {offsets = [0, 0], sizes = [15, 256], strides = [1, 1]} : vector<15x384xf32> to vector<15x256xf32>
    %1516 = vector.extract_strided_slice %1515 {offsets = [0, 0], sizes = [13, 256], strides = [1, 1]} : vector<15x256xf32> to vector<13x256xf32>
    %1517 = vector.extract_strided_slice %1515 {offsets = [13, 0], sizes = [1, 256], strides = [1, 1]} : vector<15x256xf32> to vector<1x256xf32>
    %c6_533 = arith.constant 6 : index
    %c0_534 = arith.constant 0 : index
    %1518 = vector.load %arg2[%c6_533, %c0_534] : memref<7x256xf32, #tpu.memory_space<vmem>>, vector<1x256xf32>
    %1519 = arith.mulf %1517, %1518 : vector<1x256xf32>
    %1520 = vector.extract_strided_slice %1515 {offsets = [14, 0], sizes = [1, 256], strides = [1, 1]} : vector<15x256xf32> to vector<1x256xf32>
    %1521 = arith.mulf %215, %1516 : vector<13x256xf32>
    %cst_535 = arith.constant dense<0.000000e+00> : vector<256xf32>
    %1522 = vector.multi_reduction <add>, %1521, %cst_535 [0] : vector<13x256xf32> to vector<256xf32>
    %1523 = vector.shape_cast %1522 : vector<256xf32> to vector<1x256xf32>
    %1524 = arith.addf %207, %1520 : vector<1x256xf32>
    %cst_536 = arith.constant 2.000000e+00 : f32
    %1525 = vector.broadcast %cst_536 : f32 to vector<1x256xf32>
    %1526 = arith.mulf %1525, %1523 : vector<1x256xf32>
    %1527 = arith.subf %1524, %1526 : vector<1x256xf32>
    %c48 = arith.constant 48 : index
    %1528 = memref.load %arg10[%c48] : memref<49xf32, #tpu.memory_space<smem>>
    %1529 = vector.broadcast %1528 : f32 to vector<1x256xf32>
    %1530 = arith.addf %1527, %1529 : vector<1x256xf32>
    %cst_537 = arith.constant 0.000000e+00 : f32
    %1531 = vector.broadcast %cst_537 : f32 to vector<1x256xf32>
    %1532 = arith.subf %1531, %1530 : vector<1x256xf32>
    %1533 = math.exp %1532 : vector<1x256xf32>
    %1534 = arith.mulf %1533, %1519 : vector<1x256xf32>
    %1535 = vector.extract_strided_slice %1516 {offsets = [0, 0], sizes = [4, 256], strides = [1, 1]} : vector<13x256xf32> to vector<4x256xf32>
    %1536 = vector.broadcast %1534 : vector<1x256xf32> to vector<4x256xf32>
    %1537 = arith.mulf %1536, %1535 : vector<4x256xf32>
    %1538 = arith.addf %1511, %1537 : vector<4x256xf32>
    %1539 = arith.addf %1512, %1534 : vector<1x256xf32>
    %1540 = tpu.reciprocal %1539 {approx = true} : vector<1x256xf32> -> vector<1x256xf32>
    %1541 = vector.broadcast %1540 : vector<1x256xf32> to vector<4x256xf32>
    %1542 = arith.mulf %1538, %1541 : vector<4x256xf32>
    %c0_538 = arith.constant 0 : index
    %c0_539 = arith.constant 0 : index
    %1543 = vector.load %arg13[%c0_538, %c0_539] : memref<15x384xf32, #tpu.memory_space<vmem>>, vector<4x256xf32>
    tpu.vector_store %arg13[%c0_538, %c0_539], %1542 {strides = array<i32>} : memref<15x384xf32, #tpu.memory_space<vmem>>, vector<4x256xf32>,
    %cst_540 = arith.constant 0.000000e+00 : f32
    %1544 = vector.broadcast %cst_540 : f32 to vector<3x256xf32>
    %c0_541 = arith.constant 0 : index
    %c0_542 = arith.constant 0 : index
    %1545 = vector.load %arg13[%c0_541, %c0_542] : memref<15x384xf32, #tpu.memory_space<vmem>>, vector<15x384xf32>
    %c17_i32_543 = arith.constant 17 : i32
    %1546 = tpu.dynamic_rotate %1545 by %c17_i32_543 dim 1 : vector<15x384xf32>, i32 -> vector<15x384xf32>
    %1547 = vector.extract_strided_slice %1546 {offsets = [0, 0], sizes = [15, 256], strides = [1, 1]} : vector<15x384xf32> to vector<15x256xf32>
    %c2_544 = arith.constant 2 : index
    %c0_545 = arith.constant 0 : index
    %1548 = vector.load %arg2[%c2_544, %c0_545] : memref<7x256xf32, #tpu.memory_space<vmem>>, vector<1x256xf32>
    %1549 = vector.broadcast %1548 : vector<1x256xf32> to vector<15x256xf32>
    %1550 = arith.mulf %1547, %1549 : vector<15x256xf32>
    %c0_546 = arith.constant 0 : index
    %c0_547 = arith.constant 0 : index
    %c0_548 = arith.constant 0 : index
    %1551 = vector.load %arg7[%c0_546, %c0_547, %c0_548] : memref<9x3x15xf32, #tpu.memory_space<vmem>>, vector<1x3x15xf32>
    %1552 = vector.shape_cast %1551 : vector<1x3x15xf32> to vector<3x15xf32>
    %cst_549 = arith.constant dense<0.000000e+00> : vector<3x256xf32>
    %1553 = tpu.matmul %1552, %1550, %cst_549 {dimension_numbers = #tpu.dot_dimension_numbers<[1], [0], [0], [1], [0, 0, 1, 1], [], []>} : vector<3x15xf32>, vector<15x256xf32>, vector<3x256xf32> -> vector<3x256xf32>
    %1554 = arith.addf %1544, %1553 : vector<3x256xf32>
    %c0_550 = arith.constant 0 : index
    %c0_551 = arith.constant 0 : index
    %1555 = vector.load %arg13[%c0_550, %c0_551] : memref<15x384xf32, #tpu.memory_space<vmem>>, vector<15x384xf32>
    %c16_i32_552 = arith.constant 16 : i32
    %1556 = tpu.dynamic_rotate %1555 by %c16_i32_552 dim 1 : vector<15x384xf32>, i32 -> vector<15x384xf32>
    %1557 = vector.extract_strided_slice %1556 {offsets = [0, 0], sizes = [15, 256], strides = [1, 1]} : vector<15x384xf32> to vector<15x256xf32>
    %c3_553 = arith.constant 3 : index
    %c0_554 = arith.constant 0 : index
    %1558 = vector.load %arg2[%c3_553, %c0_554] : memref<7x256xf32, #tpu.memory_space<vmem>>, vector<1x256xf32>
    %1559 = vector.broadcast %1558 : vector<1x256xf32> to vector<15x256xf32>
    %1560 = arith.mulf %1557, %1559 : vector<15x256xf32>
    %c1_555 = arith.constant 1 : index
    %c0_556 = arith.constant 0 : index
    %c0_557 = arith.constant 0 : index
    %1561 = vector.load %arg7[%c1_555, %c0_556, %c0_557] : memref<9x3x15xf32, #tpu.memory_space<vmem>>, vector<1x3x15xf32>
    %1562 = vector.shape_cast %1561 : vector<1x3x15xf32> to vector<3x15xf32>
    %cst_558 = arith.constant dense<0.000000e+00> : vector<3x256xf32>
    %1563 = tpu.matmul %1562, %1560, %cst_558 {dimension_numbers = #tpu.dot_dimension_numbers<[1], [0], [0], [1], [0, 0, 1, 1], [], []>} : vector<3x15xf32>, vector<15x256xf32>, vector<3x256xf32> -> vector<3x256xf32>
    %1564 = arith.addf %1554, %1563 : vector<3x256xf32>
    %c0_559 = arith.constant 0 : index
    %c0_560 = arith.constant 0 : index
    %1565 = vector.load %arg13[%c0_559, %c0_560] : memref<15x384xf32, #tpu.memory_space<vmem>>, vector<15x384xf32>
    %c15_i32_561 = arith.constant 15 : i32
    %1566 = tpu.dynamic_rotate %1565 by %c15_i32_561 dim 1 : vector<15x384xf32>, i32 -> vector<15x384xf32>
    %1567 = vector.extract_strided_slice %1566 {offsets = [0, 0], sizes = [15, 256], strides = [1, 1]} : vector<15x384xf32> to vector<15x256xf32>
    %c4_562 = arith.constant 4 : index
    %c0_563 = arith.constant 0 : index
    %1568 = vector.load %arg2[%c4_562, %c0_563] : memref<7x256xf32, #tpu.memory_space<vmem>>, vector<1x256xf32>
    %1569 = vector.broadcast %1568 : vector<1x256xf32> to vector<15x256xf32>
    %1570 = arith.mulf %1567, %1569 : vector<15x256xf32>
    %c2_564 = arith.constant 2 : index
    %c0_565 = arith.constant 0 : index
    %c0_566 = arith.constant 0 : index
    %1571 = vector.load %arg7[%c2_564, %c0_565, %c0_566] : memref<9x3x15xf32, #tpu.memory_space<vmem>>, vector<1x3x15xf32>
    %1572 = vector.shape_cast %1571 : vector<1x3x15xf32> to vector<3x15xf32>
    %cst_567 = arith.constant dense<0.000000e+00> : vector<3x256xf32>
    %1573 = tpu.matmul %1572, %1570, %cst_567 {dimension_numbers = #tpu.dot_dimension_numbers<[1], [0], [0], [1], [0, 0, 1, 1], [], []>} : vector<3x15xf32>, vector<15x256xf32>, vector<3x256xf32> -> vector<3x256xf32>
    %1574 = arith.addf %1564, %1573 : vector<3x256xf32>
    %c0_568 = arith.constant 0 : index
    %c0_569 = arith.constant 0 : index
    %1575 = vector.load %arg13[%c0_568, %c0_569] : memref<15x384xf32, #tpu.memory_space<vmem>>, vector<15x384xf32>
    %c1_i32_570 = arith.constant 1 : i32
    %1576 = tpu.dynamic_rotate %1575 by %c1_i32_570 dim 1 : vector<15x384xf32>, i32 -> vector<15x384xf32>
    %1577 = vector.extract_strided_slice %1576 {offsets = [0, 0], sizes = [15, 256], strides = [1, 1]} : vector<15x384xf32> to vector<15x256xf32>
    %c2_571 = arith.constant 2 : index
    %c0_572 = arith.constant 0 : index
    %1578 = vector.load %arg2[%c2_571, %c0_572] : memref<7x256xf32, #tpu.memory_space<vmem>>, vector<1x256xf32>
    %1579 = vector.broadcast %1578 : vector<1x256xf32> to vector<15x256xf32>
    %1580 = arith.mulf %1577, %1579 : vector<15x256xf32>
    %c3_573 = arith.constant 3 : index
    %c0_574 = arith.constant 0 : index
    %c0_575 = arith.constant 0 : index
    %1581 = vector.load %arg7[%c3_573, %c0_574, %c0_575] : memref<9x3x15xf32, #tpu.memory_space<vmem>>, vector<1x3x15xf32>
    %1582 = vector.shape_cast %1581 : vector<1x3x15xf32> to vector<3x15xf32>
    %cst_576 = arith.constant dense<0.000000e+00> : vector<3x256xf32>
    %1583 = tpu.matmul %1582, %1580, %cst_576 {dimension_numbers = #tpu.dot_dimension_numbers<[1], [0], [0], [1], [0, 0, 1, 1], [], []>} : vector<3x15xf32>, vector<15x256xf32>, vector<3x256xf32> -> vector<3x256xf32>
    %1584 = arith.addf %1574, %1583 : vector<3x256xf32>
    %c0_577 = arith.constant 0 : index
    %c0_578 = arith.constant 0 : index
    %1585 = vector.load %arg13[%c0_577, %c0_578] : memref<15x384xf32, #tpu.memory_space<vmem>>, vector<15x384xf32>
    %1586 = vector.extract_strided_slice %1585 {offsets = [0, 0], sizes = [15, 256], strides = [1, 1]} : vector<15x384xf32> to vector<15x256xf32>
    %c3_579 = arith.constant 3 : index
    %c0_580 = arith.constant 0 : index
    %1587 = vector.load %arg2[%c3_579, %c0_580] : memref<7x256xf32, #tpu.memory_space<vmem>>, vector<1x256xf32>
    %1588 = vector.broadcast %1587 : vector<1x256xf32> to vector<15x256xf32>
    %1589 = arith.mulf %1586, %1588 : vector<15x256xf32>
    %c4_581 = arith.constant 4 : index
    %c0_582 = arith.constant 0 : index
    %c0_583 = arith.constant 0 : index
    %1590 = vector.load %arg7[%c4_581, %c0_582, %c0_583] : memref<9x3x15xf32, #tpu.memory_space<vmem>>, vector<1x3x15xf32>
    %1591 = vector.shape_cast %1590 : vector<1x3x15xf32> to vector<3x15xf32>
    %cst_584 = arith.constant dense<0.000000e+00> : vector<3x256xf32>
    %1592 = tpu.matmul %1591, %1589, %cst_584 {dimension_numbers = #tpu.dot_dimension_numbers<[1], [0], [0], [1], [0, 0, 1, 1], [], []>} : vector<3x15xf32>, vector<15x256xf32>, vector<3x256xf32> -> vector<3x256xf32>
    %1593 = arith.addf %1584, %1592 : vector<3x256xf32>
    %c0_585 = arith.constant 0 : index
    %c0_586 = arith.constant 0 : index
    %1594 = vector.load %arg13[%c0_585, %c0_586] : memref<15x384xf32, #tpu.memory_space<vmem>>, vector<15x384xf32>
    %c383_i32_587 = arith.constant 383 : i32
    %1595 = tpu.dynamic_rotate %1594 by %c383_i32_587 dim 1 : vector<15x384xf32>, i32 -> vector<15x384xf32>
    %1596 = vector.extract_strided_slice %1595 {offsets = [0, 0], sizes = [15, 256], strides = [1, 1]} : vector<15x384xf32> to vector<15x256xf32>
    %c4_588 = arith.constant 4 : index
    %c0_589 = arith.constant 0 : index
    %1597 = vector.load %arg2[%c4_588, %c0_589] : memref<7x256xf32, #tpu.memory_space<vmem>>, vector<1x256xf32>
    %1598 = vector.broadcast %1597 : vector<1x256xf32> to vector<15x256xf32>
    %1599 = arith.mulf %1596, %1598 : vector<15x256xf32>
    %c5_590 = arith.constant 5 : index
    %c0_591 = arith.constant 0 : index
    %c0_592 = arith.constant 0 : index
    %1600 = vector.load %arg7[%c5_590, %c0_591, %c0_592] : memref<9x3x15xf32, #tpu.memory_space<vmem>>, vector<1x3x15xf32>
    %1601 = vector.shape_cast %1600 : vector<1x3x15xf32> to vector<3x15xf32>
    %cst_593 = arith.constant dense<0.000000e+00> : vector<3x256xf32>
    %1602 = tpu.matmul %1601, %1599, %cst_593 {dimension_numbers = #tpu.dot_dimension_numbers<[1], [0], [0], [1], [0, 0, 1, 1], [], []>} : vector<3x15xf32>, vector<15x256xf32>, vector<3x256xf32> -> vector<3x256xf32>
    %1603 = arith.addf %1593, %1602 : vector<3x256xf32>
    %c0_594 = arith.constant 0 : index
    %c0_595 = arith.constant 0 : index
    %1604 = vector.load %arg13[%c0_594, %c0_595] : memref<15x384xf32, #tpu.memory_space<vmem>>, vector<15x384xf32>
    %c369_i32_596 = arith.constant 369 : i32
    %1605 = tpu.dynamic_rotate %1604 by %c369_i32_596 dim 1 : vector<15x384xf32>, i32 -> vector<15x384xf32>
    %1606 = vector.extract_strided_slice %1605 {offsets = [0, 0], sizes = [15, 256], strides = [1, 1]} : vector<15x384xf32> to vector<15x256xf32>
    %c2_597 = arith.constant 2 : index
    %c0_598 = arith.constant 0 : index
    %1607 = vector.load %arg2[%c2_597, %c0_598] : memref<7x256xf32, #tpu.memory_space<vmem>>, vector<1x256xf32>
    %1608 = vector.broadcast %1607 : vector<1x256xf32> to vector<15x256xf32>
    %1609 = arith.mulf %1606, %1608 : vector<15x256xf32>
    %c6_599 = arith.constant 6 : index
    %c0_600 = arith.constant 0 : index
    %c0_601 = arith.constant 0 : index
    %1610 = vector.load %arg7[%c6_599, %c0_600, %c0_601] : memref<9x3x15xf32, #tpu.memory_space<vmem>>, vector<1x3x15xf32>
    %1611 = vector.shape_cast %1610 : vector<1x3x15xf32> to vector<3x15xf32>
    %cst_602 = arith.constant dense<0.000000e+00> : vector<3x256xf32>
    %1612 = tpu.matmul %1611, %1609, %cst_602 {dimension_numbers = #tpu.dot_dimension_numbers<[1], [0], [0], [1], [0, 0, 1, 1], [], []>} : vector<3x15xf32>, vector<15x256xf32>, vector<3x256xf32> -> vector<3x256xf32>
    %1613 = arith.addf %1603, %1612 : vector<3x256xf32>
    %c0_603 = arith.constant 0 : index
    %c0_604 = arith.constant 0 : index
    %1614 = vector.load %arg13[%c0_603, %c0_604] : memref<15x384xf32, #tpu.memory_space<vmem>>, vector<15x384xf32>
    %c368_i32_605 = arith.constant 368 : i32
    %1615 = tpu.dynamic_rotate %1614 by %c368_i32_605 dim 1 : vector<15x384xf32>, i32 -> vector<15x384xf32>
    %1616 = vector.extract_strided_slice %1615 {offsets = [0, 0], sizes = [15, 256], strides = [1, 1]} : vector<15x384xf32> to vector<15x256xf32>
    %c3_606 = arith.constant 3 : index
    %c0_607 = arith.constant 0 : index
    %1617 = vector.load %arg2[%c3_606, %c0_607] : memref<7x256xf32, #tpu.memory_space<vmem>>, vector<1x256xf32>
    %1618 = vector.broadcast %1617 : vector<1x256xf32> to vector<15x256xf32>
    %1619 = arith.mulf %1616, %1618 : vector<15x256xf32>
    %c7_608 = arith.constant 7 : index
    %c0_609 = arith.constant 0 : index
    %c0_610 = arith.constant 0 : index
    %1620 = vector.load %arg7[%c7_608, %c0_609, %c0_610] : memref<9x3x15xf32, #tpu.memory_space<vmem>>, vector<1x3x15xf32>
    %1621 = vector.shape_cast %1620 : vector<1x3x15xf32> to vector<3x15xf32>
    %cst_611 = arith.constant dense<0.000000e+00> : vector<3x256xf32>
    %1622 = tpu.matmul %1621, %1619, %cst_611 {dimension_numbers = #tpu.dot_dimension_numbers<[1], [0], [0], [1], [0, 0, 1, 1], [], []>} : vector<3x15xf32>, vector<15x256xf32>, vector<3x256xf32> -> vector<3x256xf32>
    %1623 = arith.addf %1613, %1622 : vector<3x256xf32>
    %c0_612 = arith.constant 0 : index
    %c0_613 = arith.constant 0 : index
    %1624 = vector.load %arg13[%c0_612, %c0_613] : memref<15x384xf32, #tpu.memory_space<vmem>>, vector<15x384xf32>
    %c367_i32_614 = arith.constant 367 : i32
    %1625 = tpu.dynamic_rotate %1624 by %c367_i32_614 dim 1 : vector<15x384xf32>, i32 -> vector<15x384xf32>
    %1626 = vector.extract_strided_slice %1625 {offsets = [0, 0], sizes = [15, 256], strides = [1, 1]} : vector<15x384xf32> to vector<15x256xf32>
    %c4_615 = arith.constant 4 : index
    %c0_616 = arith.constant 0 : index
    %1627 = vector.load %arg2[%c4_615, %c0_616] : memref<7x256xf32, #tpu.memory_space<vmem>>, vector<1x256xf32>
    %1628 = vector.broadcast %1627 : vector<1x256xf32> to vector<15x256xf32>
    %1629 = arith.mulf %1626, %1628 : vector<15x256xf32>
    %c8_617 = arith.constant 8 : index
    %c0_618 = arith.constant 0 : index
    %c0_619 = arith.constant 0 : index
    %1630 = vector.load %arg7[%c8_617, %c0_618, %c0_619] : memref<9x3x15xf32, #tpu.memory_space<vmem>>, vector<1x3x15xf32>
    %1631 = vector.shape_cast %1630 : vector<1x3x15xf32> to vector<3x15xf32>
    %cst_620 = arith.constant dense<0.000000e+00> : vector<3x256xf32>
    %1632 = tpu.matmul %1631, %1629, %cst_620 {dimension_numbers = #tpu.dot_dimension_numbers<[1], [0], [0], [1], [0, 0, 1, 1], [], []>} : vector<3x15xf32>, vector<15x256xf32>, vector<3x256xf32> -> vector<3x256xf32>
    %1633 = arith.addf %1623, %1632 : vector<3x256xf32>
    %c0_621 = arith.constant 0 : index
    %c0_622 = arith.constant 0 : index
    %1634 = vector.load %arg8[%c0_621, %c0_622] : memref<3x1xf32, #tpu.memory_space<vmem>>, vector<3x1xf32>
    %1635 = vector.broadcast %1634 : vector<3x1xf32> to vector<3x256xf32>
    %1636 = arith.addf %1633, %1635 : vector<3x256xf32>
    %c0_623 = arith.constant 0 : index
    %c3_624 = arith.constant 3 : index
    %c0_625 = arith.constant 0 : index
    %1637 = vector.load %arg1[%c0_623, %c3_624, %c0_625] : memref<1x12x384xf32, #tpu.memory_space<vmem>>, vector<1x3x256xf32>
    %1638 = vector.shape_cast %1637 : vector<1x3x256xf32> to vector<3x256xf32>
    %1639 = arith.mulf %1638, %1636 : vector<3x256xf32>
    %c0_626 = arith.constant 0 : index
    %c0_627 = arith.constant 0 : index
    %c0_628 = arith.constant 0 : index
    %1640 = vector.load %arg11[%c0_626, %c0_627, %c0_628] : memref<1x3x256xf32, #tpu.memory_space<vmem>>, vector<1x3x256xf32>
    %1641 = vector.shape_cast %1640 : vector<1x3x256xf32> to vector<3x256xf32>
    %1642 = vector.shape_cast %1639 : vector<3x256xf32> to vector<1x3x256xf32>
    tpu.vector_store %arg11[%c0_626, %c0_627, %c0_628], %1642 {strides = array<i32>} : memref<1x3x256xf32, #tpu.memory_space<vmem>>, vector<1x3x256xf32>,
    return
  }
  func.func @transform_0(%arg0: i32) -> (i32, i32, i32) {
    %c0_i32 = arith.constant 0 : i32
    %c0_i32_0 = arith.constant 0 : i32
    %c0_i32_1 = arith.constant 0 : i32
    return %arg0, %c0_i32, %c0_i32_0 : i32, i32, i32
  }
  func.func @transform_1(%arg0: i32) -> (i32, i32) {
    %c0_i32 = arith.constant 0 : i32
    %c0_i32_0 = arith.constant 0 : i32
    %c0_i32_1 = arith.constant 0 : i32
    return %c0_i32, %c0_i32_0 : i32, i32
  }
  func.func @transform_2(%arg0: i32) -> (i32, i32, i32) {
    %c0_i32 = arith.constant 0 : i32
    %c0_i32_0 = arith.constant 0 : i32
    %c0_i32_1 = arith.constant 0 : i32
    %c0_i32_2 = arith.constant 0 : i32
    return %c0_i32, %c0_i32_0, %c0_i32_1 : i32, i32, i32
  }
  func.func @transform_3(%arg0: i32) -> (i32, i32) {
    %c0_i32 = arith.constant 0 : i32
    %c0_i32_0 = arith.constant 0 : i32
    %c0_i32_1 = arith.constant 0 : i32
    return %c0_i32, %c0_i32_0 : i32, i32
  }
  func.func @transform_4(%arg0: i32) -> (i32, i32, i32) {
    %c0_i32 = arith.constant 0 : i32
    %c0_i32_0 = arith.constant 0 : i32
    %c0_i32_1 = arith.constant 0 : i32
    %c0_i32_2 = arith.constant 0 : i32
    return %c0_i32, %c0_i32_0, %c0_i32_1 : i32, i32, i32
  }
  func.func @transform_5(%arg0: i32) -> (i32, i32) {
    %c0_i32 = arith.constant 0 : i32
    %c0_i32_0 = arith.constant 0 : i32
    %c0_i32_1 = arith.constant 0 : i32
    return %c0_i32, %c0_i32_0 : i32, i32
  }
  func.func @transform_6(%arg0: i32) -> (i32, i32, i32) {
    %c0_i32 = arith.constant 0 : i32
    %c0_i32_0 = arith.constant 0 : i32
    %c0_i32_1 = arith.constant 0 : i32
    %c0_i32_2 = arith.constant 0 : i32
    return %c0_i32, %c0_i32_0, %c0_i32_1 : i32, i32, i32
  }
  func.func @transform_7(%arg0: i32) -> (i32, i32) {
    %c0_i32 = arith.constant 0 : i32
    %c0_i32_0 = arith.constant 0 : i32
    %c0_i32_1 = arith.constant 0 : i32
    return %c0_i32, %c0_i32_0 : i32, i32
  }
  func.func @transform_8(%arg0: i32) -> (i32, i32) {
    %c0_i32 = arith.constant 0 : i32
    %c0_i32_0 = arith.constant 0 : i32
    %c0_i32_1 = arith.constant 0 : i32
    return %c0_i32, %c0_i32_0 : i32, i32
  }
  func.func @transform_9(%arg0: i32) -> i32 {
    %c0_i32 = arith.constant 0 : i32
    %c0_i32_0 = arith.constant 0 : i32
    return %c0_i32 : i32
  }
  func.func @transform_10(%arg0: i32) -> (i32, i32, i32) {
    %c0_i32 = arith.constant 0 : i32
    %c0_i32_0 = arith.constant 0 : i32
    %c0_i32_1 = arith.constant 0 : i32
    return %arg0, %c0_i32, %c0_i32_0 : i32, i32, i32
  }
}

</mosaic_0001>

<llo_original>
// kernel: forward.1
$region0: #{forward.1}
  #allocation0 [shape = 'u32[]', space=smem, size = 0x4, offset = 0x4, fixed_abs, tag = 'smem constant byte address 0x4 - core index']
  #allocation1 [shape = 'u32[144,128]{1,0:T(1,128)}', space=vmem, size = 0x12000, scoped, tag = 'internal scratch']
  #allocation2 [shape = 'f32[26,384]{1,0:T(8,128)}', space=vmem, size = 0xc000, scoped, tag = 'scratch operand']
  #allocation3 [shape = 'f32[15,384]{1,0:T(8,128)}', space=vmem, size = 0x6000, scoped, tag = 'scratch operand']
  %s0 = inlined_call_operand.vmem [shape: f32[4,12,384], index: 0, kind: input, shape index: {}]
  %s1 = inlined_call_operand.vmem [shape: f32[7,256], index: 1, kind: input, shape index: {}]
  %s2 = inlined_call_operand.vmem [shape: f32[9,26,12], index: 2, kind: input, shape index: {}]
  %s3 = inlined_call_operand.vmem [shape: f32[26,1], index: 3, kind: input, shape index: {}]
  %s4 = inlined_call_operand.vmem [shape: f32[9,13,26], index: 4, kind: input, shape index: {}]
  %s5 = inlined_call_operand.vmem [shape: f32[13,1], index: 5, kind: input, shape index: {}]
  %s6 = inlined_call_operand.vmem [shape: f32[9,3,15], index: 6, kind: input, shape index: {}]
  %s7 = inlined_call_operand.vmem [shape: f32[3,1], index: 7, kind: input, shape index: {}]
  %s8 = inlined_call_operand.vmem [shape: f32[13,1], index: 8, kind: input, shape index: {}]
  %s9 = inlined_call_operand.vmem [shape: f32[49], index: 9, kind: input, shape index: {}]
  %s10 = inlined_call_operand.vmem [shape: f32[4,3,256], index: 10, kind: output, shape index: {}]
  %s11 = sld [smem:[#allocation0]]
  $region77: #{forward.1} parent=0
    _
  %s13 = ssub.s32 1, %s11
  %s14 = scalar_select 0, %s13, %s11
  $region1: #{forward.1} parent=0
    #allocation4 [shape = 'u8[512]{0}', space=smem, size = 0x200, scoped, tag = 'input window, operand 9, single buffered']
    #allocation5 [shape = 's32[2]{0}', space=sflag, size = 0x8, scoped, tag = 'scoped memory for forward.1']
    %15 = vsyncpa [#allocation5], 0
    loop: start=0, step=1, limit=6
    $region2: #{forward.1} parent=1 // loop_pre_header
      _
    $region3: #{forward.1} parent=1 // loop_header
      %s17 = sphi 0, %s21
      %p18 = scmp.ge.s32.totalorder %s17, 6
      %s27 = sphi 0, %s29
      %s30 = sphi 0, %s27
      %s31 = sphi 0, %s30
      %s47 = sphi 0, %s31
      %s51 = sphi 0, %s51
      %s53 = sphi 0, %s51
      %s54 = sphi 0, %s53
      %s68 = sphi 0, %s54
      %s72 = sphi 0, %s72
      %s74 = sphi 0, %s72
      %s75 = sphi 0, %s74
      %s89 = sphi 0, %s75
      %s93 = sphi 0, %s93
      %s95 = sphi 0, %s93
      %s96 = sphi 0, %s95
      %s110 = sphi 0, %s96
      %s114 = sphi 0, %s114
      %s116 = sphi 0, %s114
      %s117 = sphi 0, %s116
      %s131 = sphi 0, %s117
      %s135 = sphi 0, %s135
      %s137 = sphi 0, %s135
      %s138 = sphi 0, %s137
      %s152 = sphi 0, %s138
      %s156 = sphi 0, %s156
      %s158 = sphi 0, %s156
      %s159 = sphi 0, %s158
      %s173 = sphi 0, %s159
      %s177 = sphi 0, %s177
      %s179 = sphi 0, %s177
      %s180 = sphi 0, %s179
      %s194 = sphi 0, %s180
      %s198 = sphi 0, %s198
      %s200 = sphi 0, %s198
      %s201 = sphi 0, %s200
      %s215 = sphi 0, %s201
      %s219 = sphi 0, %s219
      %s221 = sphi 0, %s219
      %s222 = sphi 0, %s221
      %s236 = sphi 0, %s222
      %s242 = sphi 0, %s244
      %s245 = sphi 0, %s242
      %s246 = sphi 0, %s245
      %s262 = sphi 0, %s246
    $region4: #{forward.1} parent=1 // loop_header_branch
      %20 = sbr.rel (%p18) target = $region8
    $region5: #{forward.1} parent=1 // loop_body
      %s22 = ssub.s32 %s17, 1
      %s23 = ssub.s32 %s17, 2
      %s24 = sadd.s32 %s17, 1
      %s25 = ssub.s32 %s17, %s24
      %p26 = scmp.eq.s32.totalorder %s25, 0
      %s28 = sadd.s32 %s27, 1
      %s29 = scalar_select %p26, %s27, %s28
      %p32 = pneg %p26
      %p33 = scmp.eq.s32.totalorder %s17, 3
      %p34 = por %p32, %p33
      %p35 = scmp.ne.s32.totalorder %s27, %s30
      %p36 = scmp.eq.s32.totalorder %s17, 0
      %p37 = por %p35, %p36
      %p38 = scmp.ne.s32.totalorder %s27, %s30
      %p39 = scmp.eq.s32.totalorder %s22, 3
      %p40 = por %p38, %p39
      %p41 = scmp.ne.s32.totalorder %s30, %s31
      %p42 = scmp.eq.s32.totalorder %s22, 0
      %p43 = por %p41, %p42
      %p44 = scmp.ne.s32.totalorder %s30, %s31
      %p45 = scmp.eq.s32.totalorder %s23, 3
      %p46 = por %p44, %p45
      %p48 = scmp.ne.s32.totalorder %s31, %s47
      %p49 = scmp.eq.s32.totalorder %s23, 0
      %p50 = por %p48, %p49
      %s52 = sadd.s32 %s51, 1
      %p55 = scmp.eq.s32.totalorder %s17, 3
      %p56 = scmp.ne.s32.totalorder %s51, %s53
      %p57 = scmp.eq.s32.totalorder %s17, 0
      %p58 = por %p56, %p57
      %p59 = scmp.ne.s32.totalorder %s51, %s53
      %p60 = scmp.eq.s32.totalorder %s22, 3
      %p61 = por %p59, %p60
      %p62 = scmp.ne.s32.totalorder %s53, %s54
      %p63 = scmp.eq.s32.totalorder %s22, 0
      %p64 = por %p62, %p63
      %p65 = scmp.ne.s32.totalorder %s53, %s54
      %p66 = scmp.eq.s32.totalorder %s23, 3
      %p67 = por %p65, %p66
      %p69 = scmp.ne.s32.totalorder %s54, %s68
      %p70 = scmp.eq.s32.totalorder %s23, 0
      %p71 = por %p69, %p70
      %s73 = sadd.s32 %s72, 1
      %p76 = scmp.eq.s32.totalorder %s17, 3
      %p77 = scmp.ne.s32.totalorder %s72, %s74
      %p78 = scmp.eq.s32.totalorder %s17, 0
      %p79 = por %p77, %p78
      %p80 = scmp.ne.s32.totalorder %s72, %s74
      %p81 = scmp.eq.s32.totalorder %s22, 3
      %p82 = por %p80, %p81
      %p83 = scmp.ne.s32.totalorder %s74, %s75
      %p84 = scmp.eq.s32.totalorder %s22, 0
      %p85 = por %p83, %p84
      %p86 = scmp.ne.s32.totalorder %s74, %s75
      %p87 = scmp.eq.s32.totalorder %s23, 3
      %p88 = por %p86, %p87
      %p90 = scmp.ne.s32.totalorder %s75, %s89
      %p91 = scmp.eq.s32.totalorder %s23, 0
      %p92 = por %p90, %p91
      %s94 = sadd.s32 %s93, 1
      %p97 = scmp.eq.s32.totalorder %s17, 3
      %p98 = scmp.ne.s32.totalorder %s93, %s95
      %p99 = scmp.eq.s32.totalorder %s17, 0
      %p100 = por %p98, %p99
      %p101 = scmp.ne.s32.totalorder %s93, %s95
      %p102 = scmp.eq.s32.totalorder %s22, 3
      %p103 = por %p101, %p102
      %p104 = scmp.ne.s32.totalorder %s95, %s96
      %p105 = scmp.eq.s32.totalorder %s22, 0
      %p106 = por %p104, %p105
      %p107 = scmp.ne.s32.totalorder %s95, %s96
      %p108 = scmp.eq.s32.totalorder %s23, 3
      %p109 = por %p107, %p108
      %p111 = scmp.ne.s32.totalorder %s96, %s110
      %p112 = scmp.eq.s32.totalorder %s23, 0
      %p113 = por %p111, %p112
      %s115 = sadd.s32 %s114, 1
      %p118 = scmp.eq.s32.totalorder %s17, 3
      %p119 = scmp.ne.s32.totalorder %s114, %s116
      %p120 = scmp.eq.s32.totalorder %s17, 0
      %p121 = por %p119, %p120
      %p122 = scmp.ne.s32.totalorder %s114, %s116
      %p123 = scmp.eq.s32.totalorder %s22, 3
      %p124 = por %p122, %p123
      %p125 = scmp.ne.s32.totalorder %s116, %s117
      %p126 = scmp.eq.s32.totalorder %s22, 0
      %p127 = por %p125, %p126
      %p128 = scmp.ne.s32.totalorder %s116, %s117
      %p129 = scmp.eq.s32.totalorder %s23, 3
      %p130 = por %p128, %p129
      %p132 = scmp.ne.s32.totalorder %s117, %s131
      %p133 = scmp.eq.s32.totalorder %s23, 0
      %p134 = por %p132, %p133
      %s136 = sadd.s32 %s135, 1
      %p139 = scmp.eq.s32.totalorder %s17, 3
      %p140 = scmp.ne.s32.totalorder %s135, %s137
      %p141 = scmp.eq.s32.totalorder %s17, 0
      %p142 = por %p140, %p141
      %p143 = scmp.ne.s32.totalorder %s135, %s137
      %p144 = scmp.eq.s32.totalorder %s22, 3
      %p145 = por %p143, %p144
      %p146 = scmp.ne.s32.totalorder %s137, %s138
      %p147 = scmp.eq.s32.totalorder %s22, 0
      %p148 = por %p146, %p147
      %p149 = scmp.ne.s32.totalorder %s137, %s138
      %p150 = scmp.eq.s32.totalorder %s23, 3
      %p151 = por %p149, %p150
      %p153 = scmp.ne.s32.totalorder %s138, %s152
      %p154 = scmp.eq.s32.totalorder %s23, 0
      %p155 = por %p153, %p154
      %s157 = sadd.s32 %s156, 1
      %p160 = scmp.eq.s32.totalorder %s17, 3
      %p161 = scmp.ne.s32.totalorder %s156, %s158
      %p162 = scmp.eq.s32.totalorder %s17, 0
      %p163 = por %p161, %p162
      %p164 = scmp.ne.s32.totalorder %s156, %s158
      %p165 = scmp.eq.s32.totalorder %s22, 3
      %p166 = por %p164, %p165
      %p167 = scmp.ne.s32.totalorder %s158, %s159
      %p168 = scmp.eq.s32.totalorder %s22, 0
      %p169 = por %p167, %p168
      %p170 = scmp.ne.s32.totalorder %s158, %s159
      %p171 = scmp.eq.s32.totalorder %s23, 3
      %p172 = por %p170, %p171
      %p174 = scmp.ne.s32.totalorder %s159, %s173
      %p175 = scmp.eq.s32.totalorder %s23, 0
      %p176 = por %p174, %p175
      %s178 = sadd.s32 %s177, 1
      %p181 = scmp.eq.s32.totalorder %s17, 3
      %p182 = scmp.ne.s32.totalorder %s177, %s179
      %p183 = scmp.eq.s32.totalorder %s17, 0
      %p184 = por %p182, %p183
      %p185 = scmp.ne.s32.totalorder %s177, %s179
      %p186 = scmp.eq.s32.totalorder %s22, 3
      %p187 = por %p185, %p186
      %p188 = scmp.ne.s32.totalorder %s179, %s180
      %p189 = scmp.eq.s32.totalorder %s22, 0
      %p190 = por %p188, %p189
      %p191 = scmp.ne.s32.totalorder %s179, %s180
      %p192 = scmp.eq.s32.totalorder %s23, 3
      %p193 = por %p191, %p192
      %p195 = scmp.ne.s32.totalorder %s180, %s194
      %p196 = scmp.eq.s32.totalorder %s23, 0
      %p197 = por %p195, %p196
      %s199 = sadd.s32 %s198, 1
      %p202 = scmp.eq.s32.totalorder %s17, 3
      %p203 = scmp.ne.s32.totalorder %s198, %s200
      %p204 = scmp.eq.s32.totalorder %s17, 0
      %p205 = por %p203, %p204
      %p206 = scmp.ne.s32.totalorder %s198, %s200
      %p207 = scmp.eq.s32.totalorder %s22, 3
      %p208 = por %p206, %p207
      %p209 = scmp.ne.s32.totalorder %s200, %s201
      %p210 = scmp.eq.s32.totalorder %s22, 0
      %p211 = por %p209, %p210
      %p212 = scmp.ne.s32.totalorder %s200, %s201
      %p213 = scmp.eq.s32.totalorder %s23, 3
      %p214 = por %p212, %p213
      %p216 = scmp.ne.s32.totalorder %s201, %s215
      %p217 = scmp.eq.s32.totalorder %s23, 0
      %p218 = por %p216, %p217
      %s220 = sadd.s32 %s219, 1
      %p223 = scmp.eq.s32.totalorder %s17, 3
      %p224 = scmp.ne.s32.totalorder %s219, %s221
      %p225 = scmp.eq.s32.totalorder %s17, 0
      %p226 = por %p224, %p225
      %p227 = scmp.ne.s32.totalorder %s219, %s221
      %p228 = scmp.eq.s32.totalorder %s22, 3
      %p229 = por %p227, %p228
      %p230 = scmp.ne.s32.totalorder %s221, %s222
      %p231 = scmp.eq.s32.totalorder %s22, 0
      %p232 = por %p230, %p231
      %p233 = scmp.ne.s32.totalorder %s221, %s222
      %p234 = scmp.eq.s32.totalorder %s23, 3
      %p235 = por %p233, %p234
      %p237 = scmp.ne.s32.totalorder %s222, %s236
      %p238 = scmp.eq.s32.totalorder %s23, 0
      %p239 = por %p237, %p238
      %s240 = ssub.s32 %s17, %s24
      %p241 = scmp.eq.s32.totalorder %s240, 0
      %s243 = sadd.s32 %s242, 1
      %s244 = scalar_select %p241, %s242, %s243
      %p247 = pneg %p241
      %p248 = scmp.eq.s32.totalorder %s17, 3
      %p249 = por %p247, %p248
      %p250 = scmp.ne.s32.totalorder %s242, %s245
      %p251 = scmp.eq.s32.totalorder %s17, 0
      %p252 = por %p250, %p251
      %p253 = scmp.ne.s32.totalorder %s242, %s245
      %p254 = scmp.eq.s32.totalorder %s22, 3
      %p255 = por %p253, %p254
      %p256 = scmp.ne.s32.totalorder %s245, %s246
      %p257 = scmp.eq.s32.totalorder %s22, 0
      %p258 = por %p256, %p257
      %p259 = scmp.ne.s32.totalorder %s245, %s246
      %p260 = scmp.eq.s32.totalorder %s23, 3
      %p261 = por %p259, %p260
      %p263 = scmp.ne.s32.totalorder %s246, %s262
      %p264 = scmp.eq.s32.totalorder %s23, 0
      %p265 = por %p263, %p264
      %p266 = scmp.le.s32.totalorder 1, %s17
      %p267 = scmp.lt.s32.totalorder %s17, 5
      %p268 = pnand %p266, %p267
      %p269 = pneg %p268
      // Predicated region
      $region9: #{forward.1} parent=5 // pred_check
        _
      $region10: #{forward.1} parent=5 // pred_check_branch
        %271 = sbr.rel (%p268) target = $region12
      $region11: #{forward.1} parent=5 // pred_region
        %s272 = ssub.s32 %s17, 1
        // Predicated region
        $region13: #{forward.1} parent=11 // pred_check
          %p273 = pneg %p64
        $region14: #{forward.1} parent=11 // pred_check_branch
          %275 = sbr.rel (%p273) target = $region16
        $region15: #{forward.1} parent=11 // pred_region
          _
        $region16: #{forward.1} parent=11 // pred_fallthru
          _
        // Predicated region
        $region17: #{forward.1} parent=11 // pred_check
          %p276 = pneg %p85
        $region18: #{forward.1} parent=11 // pred_check_branch
          %278 = sbr.rel (%p276) target = $region20
        $region19: #{forward.1} parent=11 // pred_region
          _
        $region20: #{forward.1} parent=11 // pred_fallthru
          _
        // Predicated region
        $region21: #{forward.1} parent=11 // pred_check
          %p279 = pneg %p106
        $region22: #{forward.1} parent=11 // pred_check_branch
          %281 = sbr.rel (%p279) target = $region24
        $region23: #{forward.1} parent=11 // pred_region
          _
        $region24: #{forward.1} parent=11 // pred_fallthru
          _
        // Predicated region
        $region25: #{forward.1} parent=11 // pred_check
          %p282 = pneg %p127
        $region26: #{forward.1} parent=11 // pred_check_branch
          %284 = sbr.rel (%p282) target = $region28
        $region27: #{forward.1} parent=11 // pred_region
          _
        $region28: #{forward.1} parent=11 // pred_fallthru
          _
        // Predicated region
        $region29: #{forward.1} parent=11 // pred_check
          %p285 = pneg %p148
        $region30: #{forward.1} parent=11 // pred_check_branch
          %287 = sbr.rel (%p285) target = $region32
        $region31: #{forward.1} parent=11 // pred_region
          _
        $region32: #{forward.1} parent=11 // pred_fallthru
          _
        // Predicated region
        $region33: #{forward.1} parent=11 // pred_check
          %p288 = pneg %p169
        $region34: #{forward.1} parent=11 // pred_check_branch
          %290 = sbr.rel (%p288) target = $region36
        $region35: #{forward.1} parent=11 // pred_region
          _
        $region36: #{forward.1} parent=11 // pred_fallthru
          _
        // Predicated region
        $region37: #{forward.1} parent=11 // pred_check
          %p291 = pneg %p190
        $region38: #{forward.1} parent=11 // pred_check_branch
          %293 = sbr.rel (%p291) target = $region40
        $region39: #{forward.1} parent=11 // pred_region
          _
        $region40: #{forward.1} parent=11 // pred_fallthru
          _
        // Predicated region
        $region41: #{forward.1} parent=11 // pred_check
          %p294 = pneg %p211
        $region42: #{forward.1} parent=11 // pred_check_branch
          %296 = sbr.rel (%p294) target = $region44
        $region43: #{forward.1} parent=11 // pred_region
          _
        $region44: #{forward.1} parent=11 // pred_fallthru
          _
        // Predicated region
        $region45: #{forward.1} parent=11 // pred_check
          %p297 = pneg %p232
        $region46: #{forward.1} parent=11 // pred_check_branch
          %299 = sbr.rel (%p297) target = $region48
        $region47: #{forward.1} parent=11 // pred_region
          %s301 = ssub.s32 16, 16
          %302 = vsyncadd [#allocation5], %s301
          %s304 = sshll.u32 %s9, 4
          %s305 = int_to_ptr.vmem [resolvable:$true] %s304
          %307 = dma.vmem_to_smem %s305, 16, [#allocation4], [#allocation5]
        $region48: #{forward.1} parent=11 // pred_fallthru
          _
      $region12: #{forward.1} parent=5 // pred_fallthru
        _
      %p308 = scmp.lt.s32.totalorder %s17, 4
      // Predicated region
      $region49: #{forward.1} parent=5 // pred_check
        %p309 = pneg %p308
      $region50: #{forward.1} parent=5 // pred_check_branch
        %311 = sbr.rel (%p309) target = $region52
      $region51: #{forward.1} parent=5 // pred_region
        // Predicated region
        $region53: #{forward.1} parent=51 // pred_check
          %p312 = pneg %p37
        $region54: #{forward.1} parent=51 // pred_check_branch
          %314 = sbr.rel (%p312) target = $region56
        $region55: #{forward.1} parent=51 // pred_region
          %p315 = scmp.lt.s32.totalorder %s17, 3
          %s316 = scalar_select %p315, %s17, 3
          %s317 = smul.addr %s316, 6
          %s318 = smul.addr %s317, 8
          %s319 = scalar_lea.vmem %s0, %s318
        $region56: #{forward.1} parent=51 // pred_fallthru
          _
      $region52: #{forward.1} parent=5 // pred_fallthru
        _
      %p320 = scmp.le.s32.totalorder 1, %s17
      %p321 = scmp.lt.s32.totalorder %s17, 5
      %p322 = pnand %p320, %p321
      %p323 = pneg %p322
      // Predicated region
      $region57: #{forward.1} parent=5 // pred_check
        _
      $region58: #{forward.1} parent=5 // pred_check_branch
        %325 = sbr.rel (%p322) target = $region60
      $region59: #{forward.1} parent=5 // pred_region
        %s326 = ssub.s32 %s17, 1
        // Predicated region
        $region61: #{forward.1} parent=59 // pred_check
          %p327 = pneg %p232
        $region62: #{forward.1} parent=59 // pred_check_branch
          %329 = sbr.rel (%p327) target = $region64
        $region63: #{forward.1} parent=59 // pred_region
          %330 = dma.done [#allocation5], 16
        $region64: #{forward.1} parent=59 // pred_fallthru
          _
        %331 = sfence
        %p332 = scmp.lt.s32.totalorder %s22, 3
        %s333 = scalar_select %p332, %s22, 3
        %s334 = smul.addr %s333, 6
        %s335 = smul.addr %s334, 8
        %s336 = scalar_lea.vmem %s0, %s335
        %p337 = pneg %p43
        %p338 = pneg %p40
        %p339 = pneg %p64
        %p340 = pneg %p61
        %p341 = pneg %p85
        %p342 = pneg %p82
        %p343 = pneg %p106
        %p344 = pneg %p103
        %p345 = pneg %p127
        %p346 = pneg %p124
        %p347 = pneg %p148
        %p348 = pneg %p145
        %p349 = pneg %p169
        %p350 = pneg %p166
        %p351 = pneg %p190
        %p352 = pneg %p187
        %p353 = pneg %p211
        %p354 = pneg %p208
        %p355 = pneg %p232
        %p356 = pneg %p229
        %p357 = pneg %p258
        %p358 = pneg %p255
        %p359 = scmp.lt.s32.totalorder %s22, 3
        %s360 = scalar_select %p359, %s22, 3
        %s361 = smul.addr %s360, 2
        %s362 = smul.addr %s361, 4
        %s363 = scalar_lea.vmem %s10, %s362
        %p364 = scmp.lt.s32.totalorder %s22, 3
        %s365 = scalar_select %p364, %s22, 3
        %s366 = smul.addr %s365, 6
        %s367 = smul.addr %s366, 8
        %s368 = scalar_lea.vmem %s0, %s367
        %p369 = scmp.lt.s32.totalorder %s22, 3
        %s370 = scalar_select %p369, %s22, 3
        %s371 = smul.addr %s370, 2
        %s372 = smul.addr %s371, 4
        %s373 = scalar_lea.vmem %s10, %s372
        %v374 = vld [vmem:[%s368] sm:$0xff]
        %v375 = vld [vmem:[%s368 + $0x8] sm:$0xff]
        %v376 = vld [vmem:[%s368 + $0x10] sm:$0xff]
        %v377 = vld [vmem:[%s368 + $0x18] sm:$0xf]
        %v378 = vld [vmem:[%s368 + $0x20] sm:$0xf]
        %v379 = vld [vmem:[%s368 + $0x28] sm:$0xf]
        %380 = vrot.lane.b32.xlu0 %v374, 17
        %v381 = vpop.permute.xlu0 %380
        %382 = vrot.lane.b32.xlu0 %v377, 17
        %v383 = vpop.permute.xlu0 %382
        %384 = vrot.lane.b32.xlu0 %v375, 17
        %v385 = vpop.permute.xlu0 %384
        %386 = vrot.lane.b32.xlu0 %v378, 17
        %v387 = vpop.permute.xlu0 %386
        %388 = vrot.lane.b32.xlu0 %v376, 17
        %v389 = vpop.permute.xlu0 %388
        %390 = vrot.lane.b32.xlu0 %v379, 17
        %v391 = vpop.permute.xlu0 %390
        %v392 = vlaneseq
        %v393 = vand.u32 %v392, 127
        %vm394 = vcmp.lt.s32.totalorder %v393, 17
        %v395 = vsel %vm394, %v381, %v385
        %v396 = vsel %vm394, %v383, %v387
        %v397 = vsel %vm394, %v389, %v381
        %v398 = vsel %vm394, %v391, %v383
        %s399 = scalar_lea.vmem %s1, 2
        %v400 = vld [vmem:[%s399] ss:$8 sm:$0x3]
        %v402 = vlaneseq
        %v403 = vshrl.u32 %v402, 7
        %v404 = vsub.s32 0, %v403
        %v405 = vrot.slane %v400, %v404
        %v406 = vlaneseq
        %v407 = vshrl.u32 %v406, 7
        %v408 = vsub.s32 1, %v407
        %v409 = vrot.slane %v400, %v408
        %v412 = vmul.f32 %v397, %v405
        %v413 = vmul.f32 %v395, %v409
        %v414 = vmul.f32 %v398, %v405
        %v415 = vmul.f32 %v396, %v409
        %v416 = vld [vmem:[%s2] sm:$0xff]
        %v417 = vld [vmem:[%s2 + $0x8] sm:$0xff]
        %v418 = vld [vmem:[%s2 + $0x10] sm:$0xff]
        %v419 = vld [vmem:[%s2 + $0x18] sm:$0x3]
        %420 = vrot.lane.b32.xlu0 %v374, 16
        %v421 = vpop.permute.xlu0 %420
        %422 = vrot.lane.b32.xlu0 %v377, 16
        %v423 = vpop.permute.xlu0 %422
        %424 = vrot.lane.b32.xlu0 %v375, 16
        %v425 = vpop.permute.xlu0 %424
        %426 = vrot.lane.b32.xlu0 %v378, 16
        %v427 = vpop.permute.xlu0 %426
        %428 = vrot.lane.b32.xlu0 %v376, 16
        %v429 = vpop.permute.xlu0 %428
        %430 = vrot.lane.b32.xlu0 %v379, 16
        %v431 = vpop.permute.xlu0 %430
        %vm432 = vcmp.lt.s32.totalorder %v393, 16
        %v433 = vsel %vm432, %v421, %v425
        %v434 = vsel %vm432, %v423, %v427
        %v435 = vsel %vm432, %v429, %v421
        %v436 = vsel %vm432, %v431, %v423
        %s437 = scalar_lea.vmem %s1, 3
        %v438 = vld [vmem:[%s437] ss:$8 sm:$0x3]
        %v440 = vlaneseq
        %v441 = vshrl.u32 %v440, 7
        %v442 = vsub.s32 0, %v441
        %v443 = vrot.slane %v438, %v442
        %v444 = vlaneseq
        %v445 = vshrl.u32 %v444, 7
        %v446 = vsub.s32 1, %v445
        %v447 = vrot.slane %v438, %v446
        %v450 = vmul.f32 %v435, %v443
        %v451 = vmul.f32 %v433, %v447
        %v452 = vmul.f32 %v436, %v443
        %v453 = vmul.f32 %v434, %v447
        %s454 = scalar_lea.vmem %s2, 32
        %v455 = vld [vmem:[%s454] sm:$0xff]
        %v456 = vld [vmem:[%s454 + $0x8] sm:$0xff]
        %v457 = vld [vmem:[%s454 + $0x10] sm:$0xff]
        %v458 = vld [vmem:[%s454 + $0x18] sm:$0x3]
        %vm459 = vcmask 97280
        %v461 = vsel %vm459, %v455, 0
        %v464 = vsel %vm459, %v456, 0
        %v467 = vsel %vm459, %v457, 0
        %v470 = vsel %vm459, %v458, 0
        %vm472 = vcmask 1043456
        %v474 = vsel %vm472, %v452, 0
        %v477 = vsel %vm472, %v453, 0
        %479 = vmatprep.subr.mxu0 %v451
        %480 = vmatpush1.msra.mxu0 %v450
        %481 = vmatprep.subr.mxu0 %v477
        %482 = vmatpush1.msra.mxu0 %v474
        %483 = vmatprep.subr.mxu0 0.0
        %484 = vmatpush1.msra.mxu0 0.0
        %485 = vmatprep.subr.mxu0 0.0
        %486 = vmatpush1.msra.mxu0 0.0
        %487 = vmatprep.subr.mxu0 0.0
        %488 = vmatpush1.msra.mxu0 0.0
        %489 = vmatprep.subr.mxu0 0.0
        %490 = vmatpush1.msra.mxu0 0.0
        %491 = vmatprep.subr.mxu0 0.0
        %492 = vmatpush1.msra.mxu0 0.0
        %493 = vmatprep.subr.mxu0 0.0
        %494 = vmatpush1.msra.mxu0 0.0
        %495 = vmatprep.subr.mxu0 0.0
        %496 = vmatpush1.msra.mxu0 0.0
        %497 = vmatprep.subr.mxu0 0.0
        %498 = vmatpush1.msra.mxu0 0.0
        %499 = vmatprep.subr.mxu0 0.0
        %500 = vmatpush1.msra.mxu0 0.0
        %501 = vmatprep.subr.mxu0 0.0
        %502 = vmatpush1.msra.mxu0 0.0
        %503 = vmatprep.subr.mxu0 0.0
        %504 = vmatpush1.msra.mxu0 0.0
        %505 = vmatprep.subr.mxu0 0.0
        %506 = vmatpush1.msra.mxu0 0.0
        %507 = vmatprep.subr.mxu0 0.0
        %508 = vmatpush1.msra.mxu0 0.0
        %509 = vmatprep.subr.mxu0 0.0
        %510 = vmatpush1.msra.mxu0 0.0
        %511 = vmatprep.subr.mxu0 0.0
        %512 = vmatpush1.msra.mxu0 0.0
        %513 = vmatprep.subr.mxu0 0.0
        %514 = vmatpush1.msra.mxu0 0.0
        %515 = vmatprep.subr.mxu0 0.0
        %516 = vmatpush1.msra.mxu0 0.0
        %517 = vmatprep.subr.mxu0 0.0
        %518 = vmatpush1.msra.mxu0 0.0
        %519 = vmatprep.subr.mxu0 0.0
        %520 = vmatpush1.msra.mxu0 0.0
        %521 = vmatprep.subr.mxu0 0.0
        %522 = vmatpush1.msra.mxu0 0.0
        %523 = vmatprep.subr.mxu0 0.0
        %524 = vmatpush1.msra.mxu0 0.0
        %525 = vmatprep.subr.mxu0 0.0
        %526 = vmatpush1.msra.mxu0 0.0
        %527 = vmatprep.subr.mxu0 0.0
        %528 = vmatpush1.msra.mxu0 0.0
        %529 = vmatprep.subr.mxu0 0.0
        %530 = vmatpush1.msra.mxu0 0.0
        %531 = vmatprep.subr.mxu0 0.0
        %532 = vmatpush1.msra.mxu0 0.0
        %533 = vmatprep.subr.mxu0 0.0
        %534 = vmatpush1.msra.mxu0 0.0
        %535 = vmatprep.subr.mxu0 0.0
        %536 = vmatpush1.msra.mxu0 0.0
        %537 = vmatprep.subr.mxu0 0.0
        %538 = vmatpush1.msra.mxu0 0.0
        %539 = vmatprep.subr.mxu0 0.0
        %540 = vmatpush1.msra.mxu0 0.0
        %541 = vmatprep.subr.mxu0 0.0
        %542 = vmatpush1.msra.mxu0 0.0
        %543 = vmatprep.mubr.f32.mxu0 0.0
        %544 = vmatmul.mubr.f32.gmra.mrb[0].mxu0 %v461
        %v545 = vpop.f32.mrb[0].mxu0
        %v546 = vadd.f32 0.0, %v545
        %v547 = vpop.f32.mrb[0].mxu0
        %v548 = vadd.f32 0.0, %v547
        %549 = vmatprep.mubr.f32.mxu0 0.0
        %550 = vmatmul.mubr.f32.gmra.mrb[0].mxu0 %v464
        %v551 = vpop.f32.mrb[0].mxu0
        %v552 = vadd.f32 0.0, %v551
        %v553 = vpop.f32.mrb[0].mxu0
        %v554 = vadd.f32 0.0, %v553
        %555 = vmatprep.mubr.f32.mxu0 0.0
        %556 = vmatmul.mubr.f32.gmra.mrb[0].mxu0 %v467
        %v557 = vpop.f32.mrb[0].mxu0
        %v558 = vadd.f32 0.0, %v557
        %v559 = vpop.f32.mrb[0].mxu0
        %v560 = vadd.f32 0.0, %v559
        %561 = vmatprep.mubr.f32.mxu0 0.0
        %562 = vmatmul.mubr.f32.gmra.mrb[0].mxu0 %v470
        %v563 = vpop.f32.mrb[0].mxu0
        %v564 = vadd.f32 0.0, %v563
        %v565 = vpop.f32.mrb[0].mxu0
        %v566 = vadd.f32 0.0, %v565
        %567 = vdwg.mxu0
        %v569 = vsel %vm459, %v416, 0
        %v572 = vsel %vm459, %v417, 0
        %v575 = vsel %vm459, %v418, 0
        %v578 = vsel %vm459, %v419, 0
        %v581 = vsel %vm472, %v414, 0
        %v584 = vsel %vm472, %v415, 0
        %586 = vmatprep.subr.mxu0 %v413
        %587 = vmatpush1.msra.mxu0 %v412
        %588 = vmatprep.subr.mxu0 %v584
        %589 = vmatpush1.msra.mxu0 %v581
        %590 = vmatprep.subr.mxu0 0.0
        %591 = vmatpush1.msra.mxu0 0.0
        %592 = vmatprep.subr.mxu0 0.0
        %593 = vmatpush1.msra.mxu0 0.0
        %594 = vmatprep.subr.mxu0 0.0
        %595 = vmatpush1.msra.mxu0 0.0
        %596 = vmatprep.subr.mxu0 0.0
        %597 = vmatpush1.msra.mxu0 0.0
        %598 = vmatprep.subr.mxu0 0.0
        %599 = vmatpush1.msra.mxu0 0.0
        %600 = vmatprep.subr.mxu0 0.0
        %601 = vmatpush1.msra.mxu0 0.0
        %602 = vmatprep.subr.mxu0 0.0
        %603 = vmatpush1.msra.mxu0 0.0
        %604 = vmatprep.subr.mxu0 0.0
        %605 = vmatpush1.msra.mxu0 0.0
        %606 = vmatprep.subr.mxu0 0.0
        %607 = vmatpush1.msra.mxu0 0.0
        %608 = vmatprep.subr.mxu0 0.0
        %609 = vmatpush1.msra.mxu0 0.0
        %610 = vmatprep.subr.mxu0 0.0
        %611 = vmatpush1.msra.mxu0 0.0
        %612 = vmatprep.subr.mxu0 0.0
        %613 = vmatpush1.msra.mxu0 0.0
        %614 = vmatprep.subr.mxu0 0.0
        %615 = vmatpush1.msra.mxu0 0.0
        %616 = vmatprep.subr.mxu0 0.0
        %617 = vmatpush1.msra.mxu0 0.0
        %618 = vmatprep.subr.mxu0 0.0
        %619 = vmatpush1.msra.mxu0 0.0
        %620 = vmatprep.subr.mxu0 0.0
        %621 = vmatpush1.msra.mxu0 0.0
        %622 = vmatprep.subr.mxu0 0.0
        %623 = vmatpush1.msra.mxu0 0.0
        %624 = vmatprep.subr.mxu0 0.0
        %625 = vmatpush1.msra.mxu0 0.0
        %626 = vmatprep.subr.mxu0 0.0
        %627 = vmatpush1.msra.mxu0 0.0
        %628 = vmatprep.subr.mxu0 0.0
        %629 = vmatpush1.msra.mxu0 0.0
        %630 = vmatprep.subr.mxu0 0.0
        %631 = vmatpush1.msra.mxu0 0.0
        %632 = vmatprep.subr.mxu0 0.0
        %633 = vmatpush1.msra.mxu0 0.0
        %634 = vmatprep.subr.mxu0 0.0
        %635 = vmatpush1.msra.mxu0 0.0
        %636 = vmatprep.subr.mxu0 0.0
        %637 = vmatpush1.msra.mxu0 0.0
        %638 = vmatprep.subr.mxu0 0.0
        %639 = vmatpush1.msra.mxu0 0.0
        %640 = vmatprep.subr.mxu0 0.0
        %641 = vmatpush1.msra.mxu0 0.0
        %642 = vmatprep.subr.mxu0 0.0
        %643 = vmatpush1.msra.mxu0 0.0
        %644 = vmatprep.subr.mxu0 0.0
        %645 = vmatpush1.msra.mxu0 0.0
        %646 = vmatprep.subr.mxu0 0.0
        %647 = vmatpush1.msra.mxu0 0.0
        %648 = vmatprep.subr.mxu0 0.0
        %649 = vmatpush1.msra.mxu0 0.0
        %650 = vmatprep.mubr.f32.mxu0 0.0
        %651 = vmatmul.mubr.f32.gmra.mrb[0].mxu0 %v569
        %v652 = vpop.f32.mrb[0].mxu0
        %v653 = vadd.f32 %v546, %v652
        %v654 = vpop.f32.mrb[0].mxu0
        %v655 = vadd.f32 %v548, %v654
        %656 = vmatprep.mubr.f32.mxu0 0.0
        %657 = vmatmul.mubr.f32.gmra.mrb[0].mxu0 %v572
        %v658 = vpop.f32.mrb[0].mxu0
        %v659 = vadd.f32 %v552, %v658
        %v660 = vpop.f32.mrb[0].mxu0
        %v661 = vadd.f32 %v554, %v660
        %662 = vmatprep.mubr.f32.mxu0 0.0
        %663 = vmatmul.mubr.f32.gmra.mrb[0].mxu0 %v575
        %v664 = vpop.f32.mrb[0].mxu0
        %v665 = vadd.f32 %v558, %v664
        %v666 = vpop.f32.mrb[0].mxu0
        %v667 = vadd.f32 %v560, %v666
        %668 = vmatprep.mubr.f32.mxu0 0.0
        %669 = vmatmul.mubr.f32.gmra.mrb[0].mxu0 %v578
        %v670 = vpop.f32.mrb[0].mxu0
        %v671 = vadd.f32 %v564, %v670
        %v672 = vpop.f32.mrb[0].mxu0
        %v673 = vadd.f32 %v566, %v672
        %674 = vdwg.mxu0
        %675 = vrot.lane.b32.xlu0 %v374, 15
        %v676 = vpop.permute.xlu0 %675
        %677 = vrot.lane.b32.xlu0 %v377, 15
        %v678 = vpop.permute.xlu0 %677
        %679 = vrot.lane.b32.xlu0 %v375, 15
        %v680 = vpop.permute.xlu0 %679
        %681 = vrot.lane.b32.xlu0 %v378, 15
        %v682 = vpop.permute.xlu0 %681
        %683 = vrot.lane.b32.xlu0 %v376, 15
        %v684 = vpop.permute.xlu0 %683
        %685 = vrot.lane.b32.xlu0 %v379, 15
        %v686 = vpop.permute.xlu0 %685
        %vm687 = vcmp.lt.s32.totalorder %v393, 15
        %v688 = vsel %vm687, %v676, %v680
        %v689 = vsel %vm687, %v678, %v682
        %v690 = vsel %vm687, %v684, %v676
        %v691 = vsel %vm687, %v686, %v678
        %s692 = scalar_lea.vmem %s1, 4
        %v693 = vld [vmem:[%s692] ss:$8 sm:$0x3]
        %v695 = vlaneseq
        %v696 = vshrl.u32 %v695, 7
        %v697 = vsub.s32 0, %v696
        %v698 = vrot.slane %v693, %v697
        %v699 = vlaneseq
        %v700 = vshrl.u32 %v699, 7
        %v701 = vsub.s32 1, %v700
        %v702 = vrot.slane %v693, %v701
        %v705 = vmul.f32 %v690, %v698
        %v706 = vmul.f32 %v688, %v702
        %v707 = vmul.f32 %v691, %v698
        %v708 = vmul.f32 %v689, %v702
        %s709 = scalar_lea.vmem %s2, 64
        %v710 = vld [vmem:[%s709] sm:$0xff]
        %v711 = vld [vmem:[%s709 + $0x8] sm:$0xff]
        %v712 = vld [vmem:[%s709 + $0x10] sm:$0xff]
        %v713 = vld [vmem:[%s709 + $0x18] sm:$0x3]
        %v715 = vsel %vm459, %v710, 0
        %v718 = vsel %vm459, %v711, 0
        %v721 = vsel %vm459, %v712, 0
        %v724 = vsel %vm459, %v713, 0
        %v727 = vsel %vm472, %v707, 0
        %v730 = vsel %vm472, %v708, 0
        %732 = vmatprep.subr.mxu0 %v706
        %733 = vmatpush1.msra.mxu0 %v705
        %734 = vmatprep.subr.mxu0 %v730
        %735 = vmatpush1.msra.mxu0 %v727
        %736 = vmatprep.subr.mxu0 0.0
        %737 = vmatpush1.msra.mxu0 0.0
        %738 = vmatprep.subr.mxu0 0.0
        %739 = vmatpush1.msra.mxu0 0.0
        %740 = vmatprep.subr.mxu0 0.0
        %741 = vmatpush1.msra.mxu0 0.0
        %742 = vmatprep.subr.mxu0 0.0
        %743 = vmatpush1.msra.mxu0 0.0
        %744 = vmatprep.subr.mxu0 0.0
        %745 = vmatpush1.msra.mxu0 0.0
        %746 = vmatprep.subr.mxu0 0.0
        %747 = vmatpush1.msra.mxu0 0.0
        %748 = vmatprep.subr.mxu0 0.0
        %749 = vmatpush1.msra.mxu0 0.0
        %750 = vmatprep.subr.mxu0 0.0
        %751 = vmatpush1.msra.mxu0 0.0
        %752 = vmatprep.subr.mxu0 0.0
        %753 = vmatpush1.msra.mxu0 0.0
        %754 = vmatprep.subr.mxu0 0.0
        %755 = vmatpush1.msra.mxu0 0.0
        %756 = vmatprep.subr.mxu0 0.0
        %757 = vmatpush1.msra.mxu0 0.0
        %758 = vmatprep.subr.mxu0 0.0
        %759 = vmatpush1.msra.mxu0 0.0
        %760 = vmatprep.subr.mxu0 0.0
        %761 = vmatpush1.msra.mxu0 0.0
        %762 = vmatprep.subr.mxu0 0.0
        %763 = vmatpush1.msra.mxu0 0.0
        %764 = vmatprep.subr.mxu0 0.0
        %765 = vmatpush1.msra.mxu0 0.0
        %766 = vmatprep.subr.mxu0 0.0
        %767 = vmatpush1.msra.mxu0 0.0
        %768 = vmatprep.subr.mxu0 0.0
        %769 = vmatpush1.msra.mxu0 0.0
        %770 = vmatprep.subr.mxu0 0.0
        %771 = vmatpush1.msra.mxu0 0.0
        %772 = vmatprep.subr.mxu0 0.0
        %773 = vmatpush1.msra.mxu0 0.0
        %774 = vmatprep.subr.mxu0 0.0
        %775 = vmatpush1.msra.mxu0 0.0
        %776 = vmatprep.subr.mxu0 0.0
        %777 = vmatpush1.msra.mxu0 0.0
        %778 = vmatprep.subr.mxu0 0.0
        %779 = vmatpush1.msra.mxu0 0.0
        %780 = vmatprep.subr.mxu0 0.0
        %781 = vmatpush1.msra.mxu0 0.0
        %782 = vmatprep.subr.mxu0 0.0
        %783 = vmatpush1.msra.mxu0 0.0
        %784 = vmatprep.subr.mxu0 0.0
        %785 = vmatpush1.msra.mxu0 0.0
        %786 = vmatprep.subr.mxu0 0.0
        %787 = vmatpush1.msra.mxu0 0.0
        %788 = vmatprep.subr.mxu0 0.0
        %789 = vmatpush1.msra.mxu0 0.0
        %790 = vmatprep.subr.mxu0 0.0
        %791 = vmatpush1.msra.mxu0 0.0
        %792 = vmatprep.subr.mxu0 0.0
        %793 = vmatpush1.msra.mxu0 0.0
        %794 = vmatprep.subr.mxu0 0.0
        %795 = vmatpush1.msra.mxu0 0.0
        %796 = vmatprep.mubr.f32.mxu0 0.0
        %797 = vmatmul.mubr.f32.gmra.mrb[0].mxu0 %v715
        %v798 = vpop.f32.mrb[0].mxu0
        %v799 = vadd.f32 0.0, %v798
        %v800 = vpop.f32.mrb[0].mxu0
        %v801 = vadd.f32 0.0, %v800
        %802 = vmatprep.mubr.f32.mxu0 0.0
        %803 = vmatmul.mubr.f32.gmra.mrb[0].mxu0 %v718
        %v804 = vpop.f32.mrb[0].mxu0
        %v805 = vadd.f32 0.0, %v804
        %v806 = vpop.f32.mrb[0].mxu0
        %v807 = vadd.f32 0.0, %v806
        %808 = vmatprep.mubr.f32.mxu0 0.0
        %809 = vmatmul.mubr.f32.gmra.mrb[0].mxu0 %v721
        %v810 = vpop.f32.mrb[0].mxu0
        %v811 = vadd.f32 0.0, %v810
        %v812 = vpop.f32.mrb[0].mxu0
        %v813 = vadd.f32 0.0, %v812
        %814 = vmatprep.mubr.f32.mxu0 0.0
        %815 = vmatmul.mubr.f32.gmra.mrb[0].mxu0 %v724
        %v816 = vpop.f32.mrb[0].mxu0
        %v817 = vadd.f32 0.0, %v816
        %v818 = vpop.f32.mrb[0].mxu0
        %v819 = vadd.f32 0.0, %v818
        %820 = vdwg.mxu0
        %v821 = vadd.f32 %v653, %v799
        %v822 = vadd.f32 %v655, %v801
        %v823 = vadd.f32 %v659, %v805
        %v824 = vadd.f32 %v661, %v807
        %v825 = vadd.f32 %v665, %v811
        %v826 = vadd.f32 %v667, %v813
        %v827 = vadd.f32 %v671, %v817
        %v828 = vadd.f32 %v673, %v819
        %829 = vrot.lane.b32.xlu0 %v374, 1
        %v830 = vpop.permute.xlu0 %829
        %831 = vrot.lane.b32.xlu0 %v377, 1
        %v832 = vpop.permute.xlu0 %831
        %833 = vrot.lane.b32.xlu0 %v375, 1
        %v834 = vpop.permute.xlu0 %833
        %835 = vrot.lane.b32.xlu0 %v378, 1
        %v836 = vpop.permute.xlu0 %835
        %837 = vrot.lane.b32.xlu0 %v376, 1
        %v838 = vpop.permute.xlu0 %837
        %839 = vrot.lane.b32.xlu0 %v379, 1
        %v840 = vpop.permute.xlu0 %839
        %vm841 = vcmp.lt.s32.totalorder %v393, 1
        %v842 = vsel %vm841, %v830, %v834
        %v843 = vsel %vm841, %v832, %v836
        %v844 = vsel %vm841, %v838, %v830
        %v845 = vsel %vm841, %v840, %v832
        %v846 = vmul.f32 %v844, %v405
        %v847 = vmul.f32 %v842, %v409
        %v848 = vmul.f32 %v845, %v405
        %v849 = vmul.f32 %v843, %v409
        %s850 = scalar_lea.vmem %s2, 96
        %v851 = vld [vmem:[%s850] sm:$0xff]
        %v852 = vld [vmem:[%s850 + $0x8] sm:$0xff]
        %v853 = vld [vmem:[%s850 + $0x10] sm:$0xff]
        %v854 = vld [vmem:[%s850 + $0x18] sm:$0x3]
        %v856 = vsel %vm459, %v851, 0
        %v859 = vsel %vm459, %v852, 0
        %v862 = vsel %vm459, %v853, 0
        %v865 = vsel %vm459, %v854, 0
        %v868 = vsel %vm472, %v848, 0
        %v871 = vsel %vm472, %v849, 0
        %873 = vmatprep.subr.mxu0 %v847
        %874 = vmatpush1.msra.mxu0 %v846
        %875 = vmatprep.subr.mxu0 %v871
        %876 = vmatpush1.msra.mxu0 %v868
        %877 = vmatprep.subr.mxu0 0.0
        %878 = vmatpush1.msra.mxu0 0.0
        %879 = vmatprep.subr.mxu0 0.0
        %880 = vmatpush1.msra.mxu0 0.0
        %881 = vmatprep.subr.mxu0 0.0
        %882 = vmatpush1.msra.mxu0 0.0
        %883 = vmatprep.subr.mxu0 0.0
        %884 = vmatpush1.msra.mxu0 0.0
        %885 = vmatprep.subr.mxu0 0.0
        %886 = vmatpush1.msra.mxu0 0.0
        %887 = vmatprep.subr.mxu0 0.0
        %888 = vmatpush1.msra.mxu0 0.0
        %889 = vmatprep.subr.mxu0 0.0
        %890 = vmatpush1.msra.mxu0 0.0
        %891 = vmatprep.subr.mxu0 0.0
        %892 = vmatpush1.msra.mxu0 0.0
        %893 = vmatprep.subr.mxu0 0.0
        %894 = vmatpush1.msra.mxu0 0.0
        %895 = vmatprep.subr.mxu0 0.0
        %896 = vmatpush1.msra.mxu0 0.0
        %897 = vmatprep.subr.mxu0 0.0
        %898 = vmatpush1.msra.mxu0 0.0
        %899 = vmatprep.subr.mxu0 0.0
        %900 = vmatpush1.msra.mxu0 0.0
        %901 = vmatprep.subr.mxu0 0.0
        %902 = vmatpush1.msra.mxu0 0.0
        %903 = vmatprep.subr.mxu0 0.0
        %904 = vmatpush1.msra.mxu0 0.0
        %905 = vmatprep.subr.mxu0 0.0
        %906 = vmatpush1.msra.mxu0 0.0
        %907 = vmatprep.subr.mxu0 0.0
        %908 = vmatpush1.msra.mxu0 0.0
        %909 = vmatprep.subr.mxu0 0.0
        %910 = vmatpush1.msra.mxu0 0.0
        %911 = vmatprep.subr.mxu0 0.0
        %912 = vmatpush1.msra.mxu0 0.0
        %913 = vmatprep.subr.mxu0 0.0
        %914 = vmatpush1.msra.mxu0 0.0
        %915 = vmatprep.subr.mxu0 0.0
        %916 = vmatpush1.msra.mxu0 0.0
        %917 = vmatprep.subr.mxu0 0.0
        %918 = vmatpush1.msra.mxu0 0.0
        %919 = vmatprep.subr.mxu0 0.0
        %920 = vmatpush1.msra.mxu0 0.0
        %921 = vmatprep.subr.mxu0 0.0
        %922 = vmatpush1.msra.mxu0 0.0
        %923 = vmatprep.subr.mxu0 0.0
        %924 = vmatpush1.msra.mxu0 0.0
        %925 = vmatprep.subr.mxu0 0.0
        %926 = vmatpush1.msra.mxu0 0.0
        %927 = vmatprep.subr.mxu0 0.0
        %928 = vmatpush1.msra.mxu0 0.0
        %929 = vmatprep.subr.mxu0 0.0
        %930 = vmatpush1.msra.mxu0 0.0
        %931 = vmatprep.subr.mxu0 0.0
        %932 = vmatpush1.msra.mxu0 0.0
        %933 = vmatprep.subr.mxu0 0.0
        %934 = vmatpush1.msra.mxu0 0.0
        %935 = vmatprep.subr.mxu0 0.0
        %936 = vmatpush1.msra.mxu0 0.0
        %937 = vmatprep.mubr.f32.mxu0 0.0
        %938 = vmatmul.mubr.f32.gmra.mrb[0].mxu0 %v856
        %v939 = vpop.f32.mrb[0].mxu0
        %v940 = vadd.f32 0.0, %v939
        %v941 = vpop.f32.mrb[0].mxu0
        %v942 = vadd.f32 0.0, %v941
        %943 = vmatprep.mubr.f32.mxu0 0.0
        %944 = vmatmul.mubr.f32.gmra.mrb[0].mxu0 %v859
        %v945 = vpop.f32.mrb[0].mxu0
        %v946 = vadd.f32 0.0, %v945
        %v947 = vpop.f32.mrb[0].mxu0
        %v948 = vadd.f32 0.0, %v947
        %949 = vmatprep.mubr.f32.mxu0 0.0
        %950 = vmatmul.mubr.f32.gmra.mrb[0].mxu0 %v862
        %v951 = vpop.f32.mrb[0].mxu0
        %v952 = vadd.f32 0.0, %v951
        %v953 = vpop.f32.mrb[0].mxu0
        %v954 = vadd.f32 0.0, %v953
        %955 = vmatprep.mubr.f32.mxu0 0.0
        %956 = vmatmul.mubr.f32.gmra.mrb[0].mxu0 %v865
        %v957 = vpop.f32.mrb[0].mxu0
        %v958 = vadd.f32 0.0, %v957
        %v959 = vpop.f32.mrb[0].mxu0
        %v960 = vadd.f32 0.0, %v959
        %961 = vdwg.mxu0
        %v962 = vadd.f32 %v821, %v940
        %v963 = vadd.f32 %v822, %v942
        %v964 = vadd.f32 %v823, %v946
        %v965 = vadd.f32 %v824, %v948
        %v966 = vadd.f32 %v825, %v952
        %v967 = vadd.f32 %v826, %v954
        %v968 = vadd.f32 %v827, %v958
        %v969 = vadd.f32 %v828, %v960
        %v970 = vmul.f32 %v374, %v443
        %v971 = vmul.f32 %v375, %v447
        %v972 = vmul.f32 %v377, %v443
        %v973 = vmul.f32 %v378, %v447
        %s974 = scalar_lea.vmem %s2, 128
        %v975 = vld [vmem:[%s974] sm:$0xff]
        %v976 = vld [vmem:[%s974 + $0x8] sm:$0xff]
        %v977 = vld [vmem:[%s974 + $0x10] sm:$0xff]
        %v978 = vld [vmem:[%s974 + $0x18] sm:$0x3]
        %v980 = vsel %vm459, %v975, 0
        %v983 = vsel %vm459, %v976, 0
        %v986 = vsel %vm459, %v977, 0
        %v989 = vsel %vm459, %v978, 0
        %v992 = vsel %vm472, %v972, 0
        %v995 = vsel %vm472, %v973, 0
        %997 = vmatprep.subr.mxu0 %v971
        %998 = vmatpush1.msra.mxu0 %v970
        %999 = vmatprep.subr.mxu0 %v995
        %1000 = vmatpush1.msra.mxu0 %v992
        %1001 = vmatprep.subr.mxu0 0.0
        %1002 = vmatpush1.msra.mxu0 0.0
        %1003 = vmatprep.subr.mxu0 0.0
        %1004 = vmatpush1.msra.mxu0 0.0
        %1005 = vmatprep.subr.mxu0 0.0
        %1006 = vmatpush1.msra.mxu0 0.0
        %1007 = vmatprep.subr.mxu0 0.0
        %1008 = vmatpush1.msra.mxu0 0.0
        %1009 = vmatprep.subr.mxu0 0.0
        %1010 = vmatpush1.msra.mxu0 0.0
        %1011 = vmatprep.subr.mxu0 0.0
        %1012 = vmatpush1.msra.mxu0 0.0
        %1013 = vmatprep.subr.mxu0 0.0
        %1014 = vmatpush1.msra.mxu0 0.0
        %1015 = vmatprep.subr.mxu0 0.0
        %1016 = vmatpush1.msra.mxu0 0.0
        %1017 = vmatprep.subr.mxu0 0.0
        %1018 = vmatpush1.msra.mxu0 0.0
        %1019 = vmatprep.subr.mxu0 0.0
        %1020 = vmatpush1.msra.mxu0 0.0
        %1021 = vmatprep.subr.mxu0 0.0
        %1022 = vmatpush1.msra.mxu0 0.0
        %1023 = vmatprep.subr.mxu0 0.0
        %1024 = vmatpush1.msra.mxu0 0.0
        %1025 = vmatprep.subr.mxu0 0.0
        %1026 = vmatpush1.msra.mxu0 0.0
        %1027 = vmatprep.subr.mxu0 0.0
        %1028 = vmatpush1.msra.mxu0 0.0
        %1029 = vmatprep.subr.mxu0 0.0
        %1030 = vmatpush1.msra.mxu0 0.0
        %1031 = vmatprep.subr.mxu0 0.0
        %1032 = vmatpush1.msra.mxu0 0.0
        %1033 = vmatprep.subr.mxu0 0.0
        %1034 = vmatpush1.msra.mxu0 0.0
        %1035 = vmatprep.subr.mxu0 0.0
        %1036 = vmatpush1.msra.mxu0 0.0
        %1037 = vmatprep.subr.mxu0 0.0
        %1038 = vmatpush1.msra.mxu0 0.0
        %1039 = vmatprep.subr.mxu0 0.0
        %1040 = vmatpush1.msra.mxu0 0.0
        %1041 = vmatprep.subr.mxu0 0.0
        %1042 = vmatpush1.msra.mxu0 0.0
        %1043 = vmatprep.subr.mxu0 0.0
        %1044 = vmatpush1.msra.mxu0 0.0
        %1045 = vmatprep.subr.mxu0 0.0
        %1046 = vmatpush1.msra.mxu0 0.0
        %1047 = vmatprep.subr.mxu0 0.0
        %1048 = vmatpush1.msra.mxu0 0.0
        %1049 = vmatprep.subr.mxu0 0.0
        %1050 = vmatpush1.msra.mxu0 0.0
        %1051 = vmatprep.subr.mxu0 0.0
        %1052 = vmatpush1.msra.mxu0 0.0
        %1053 = vmatprep.subr.mxu0 0.0
        %1054 = vmatpush1.msra.mxu0 0.0
        %1055 = vmatprep.subr.mxu0 0.0
        %1056 = vmatpush1.msra.mxu0 0.0
        %1057 = vmatprep.subr.mxu0 0.0
        %1058 = vmatpush1.msra.mxu0 0.0
        %1059 = vmatprep.subr.mxu0 0.0
        %1060 = vmatpush1.msra.mxu0 0.0
        %1061 = vmatprep.mubr.f32.mxu0 0.0
        %1062 = vmatmul.mubr.f32.gmra.mrb[0].mxu0 %v980
        %v1063 = vpop.f32.mrb[0].mxu0
        %v1064 = vadd.f32 0.0, %v1063
        %v1065 = vpop.f32.mrb[0].mxu0
        %v1066 = vadd.f32 0.0, %v1065
        %1067 = vmatprep.mubr.f32.mxu0 0.0
        %1068 = vmatmul.mubr.f32.gmra.mrb[0].mxu0 %v983
        %v1069 = vpop.f32.mrb[0].mxu0
        %v1070 = vadd.f32 0.0, %v1069
        %v1071 = vpop.f32.mrb[0].mxu0
        %v1072 = vadd.f32 0.0, %v1071
        %1073 = vmatprep.mubr.f32.mxu0 0.0
        %1074 = vmatmul.mubr.f32.gmra.mrb[0].mxu0 %v986
        %v1075 = vpop.f32.mrb[0].mxu0
        %v1076 = vadd.f32 0.0, %v1075
        %v1077 = vpop.f32.mrb[0].mxu0
        %v1078 = vadd.f32 0.0, %v1077
        %1079 = vmatprep.mubr.f32.mxu0 0.0
        %1080 = vmatmul.mubr.f32.gmra.mrb[0].mxu0 %v989
        %v1081 = vpop.f32.mrb[0].mxu0
        %v1082 = vadd.f32 0.0, %v1081
        %v1083 = vpop.f32.mrb[0].mxu0
        %v1084 = vadd.f32 0.0, %v1083
        %1085 = vdwg.mxu0
        %v1086 = vadd.f32 %v962, %v1064
        %v1087 = vadd.f32 %v963, %v1066
        %v1088 = vadd.f32 %v964, %v1070
        %v1089 = vadd.f32 %v965, %v1072
        %v1090 = vadd.f32 %v966, %v1076
        %v1091 = vadd.f32 %v967, %v1078
        %v1092 = vadd.f32 %v968, %v1082
        %v1093 = vadd.f32 %v969, %v1084
        %1094 = vrot.lane.b32.xlu0 %v374, 127
        %v1095 = vpop.permute.xlu0 %1094
        %1096 = vrot.lane.b32.xlu0 %v377, 127
        %v1097 = vpop.permute.xlu0 %1096
        %1098 = vrot.lane.b32.xlu0 %v375, 127
        %v1099 = vpop.permute.xlu0 %1098
        %1100 = vrot.lane.b32.xlu0 %v378, 127
        %v1101 = vpop.permute.xlu0 %1100
        %1102 = vrot.lane.b32.xlu0 %v376, 127
        %v1103 = vpop.permute.xlu0 %1102
        %1104 = vrot.lane.b32.xlu0 %v379, 127
        %v1105 = vpop.permute.xlu0 %1104
        %vm1106 = vcmp.lt.s32.totalorder %v393, 127
        %v1107 = vsel %vm1106, %v1099, %v1103
        %v1108 = vsel %vm1106, %v1101, %v1105
        %v1109 = vsel %vm1106, %v1095, %v1099
        %v1110 = vsel %vm1106, %v1097, %v1101
        %v1111 = vmul.f32 %v1109, %v698
        %v1112 = vmul.f32 %v1107, %v702
        %v1113 = vmul.f32 %v1110, %v698
        %v1114 = vmul.f32 %v1108, %v702
        %s1115 = scalar_lea.vmem %s2, 160
        %v1116 = vld [vmem:[%s1115] sm:$0xff]
        %v1117 = vld [vmem:[%s1115 + $0x8] sm:$0xff]
        %v1118 = vld [vmem:[%s1115 + $0x10] sm:$0xff]
        %v1119 = vld [vmem:[%s1115 + $0x18] sm:$0x3]
        %v1121 = vsel %vm459, %v1116, 0
        %v1124 = vsel %vm459, %v1117, 0
        %v1127 = vsel %vm459, %v1118, 0
        %v1130 = vsel %vm459, %v1119, 0
        %v1133 = vsel %vm472, %v1113, 0
        %v1136 = vsel %vm472, %v1114, 0
        %1138 = vmatprep.subr.mxu0 %v1112
        %1139 = vmatpush1.msra.mxu0 %v1111
        %1140 = vmatprep.subr.mxu0 %v1136
        %1141 = vmatpush1.msra.mxu0 %v1133
        %1142 = vmatprep.subr.mxu0 0.0
        %1143 = vmatpush1.msra.mxu0 0.0
        %1144 = vmatprep.subr.mxu0 0.0
        %1145 = vmatpush1.msra.mxu0 0.0
        %1146 = vmatprep.subr.mxu0 0.0
        %1147 = vmatpush1.msra.mxu0 0.0
        %1148 = vmatprep.subr.mxu0 0.0
        %1149 = vmatpush1.msra.mxu0 0.0
        %1150 = vmatprep.subr.mxu0 0.0
        %1151 = vmatpush1.msra.mxu0 0.0
        %1152 = vmatprep.subr.mxu0 0.0
        %1153 = vmatpush1.msra.mxu0 0.0
        %1154 = vmatprep.subr.mxu0 0.0
        %1155 = vmatpush1.msra.mxu0 0.0
        %1156 = vmatprep.subr.mxu0 0.0
        %1157 = vmatpush1.msra.mxu0 0.0
        %1158 = vmatprep.subr.mxu0 0.0
        %1159 = vmatpush1.msra.mxu0 0.0
        %1160 = vmatprep.subr.mxu0 0.0
        %1161 = vmatpush1.msra.mxu0 0.0
        %1162 = vmatprep.subr.mxu0 0.0
        %1163 = vmatpush1.msra.mxu0 0.0
        %1164 = vmatprep.subr.mxu0 0.0
        %1165 = vmatpush1.msra.mxu0 0.0
        %1166 = vmatprep.subr.mxu0 0.0
        %1167 = vmatpush1.msra.mxu0 0.0
        %1168 = vmatprep.subr.mxu0 0.0
        %1169 = vmatpush1.msra.mxu0 0.0
        %1170 = vmatprep.subr.mxu0 0.0
        %1171 = vmatpush1.msra.mxu0 0.0
        %1172 = vmatprep.subr.mxu0 0.0
        %1173 = vmatpush1.msra.mxu0 0.0
        %1174 = vmatprep.subr.mxu0 0.0
        %1175 = vmatpush1.msra.mxu0 0.0
        %1176 = vmatprep.subr.mxu0 0.0
        %1177 = vmatpush1.msra.mxu0 0.0
        %1178 = vmatprep.subr.mxu0 0.0
        %1179 = vmatpush1.msra.mxu0 0.0
        %1180 = vmatprep.subr.mxu0 0.0
        %1181 = vmatpush1.msra.mxu0 0.0
        %1182 = vmatprep.subr.mxu0 0.0
        %1183 = vmatpush1.msra.mxu0 0.0
        %1184 = vmatprep.subr.mxu0 0.0
        %1185 = vmatpush1.msra.mxu0 0.0
        %1186 = vmatprep.subr.mxu0 0.0
        %1187 = vmatpush1.msra.mxu0 0.0
        %1188 = vmatprep.subr.mxu0 0.0
        %1189 = vmatpush1.msra.mxu0 0.0
        %1190 = vmatprep.subr.mxu0 0.0
        %1191 = vmatpush1.msra.mxu0 0.0
        %1192 = vmatprep.subr.mxu0 0.0
        %1193 = vmatpush1.msra.mxu0 0.0
        %1194 = vmatprep.subr.mxu0 0.0
        %1195 = vmatpush1.msra.mxu0 0.0
        %1196 = vmatprep.subr.mxu0 0.0
        %1197 = vmatpush1.msra.mxu0 0.0
        %1198 = vmatprep.subr.mxu0 0.0
        %1199 = vmatpush1.msra.mxu0 0.0
        %1200 = vmatprep.subr.mxu0 0.0
        %1201 = vmatpush1.msra.mxu0 0.0
        %1202 = vmatprep.mubr.f32.mxu0 0.0
        %1203 = vmatmul.mubr.f32.gmra.mrb[0].mxu0 %v1121
        %v1204 = vpop.f32.mrb[0].mxu0
        %v1205 = vadd.f32 0.0, %v1204
        %v1206 = vpop.f32.mrb[0].mxu0
        %v1207 = vadd.f32 0.0, %v1206
        %1208 = vmatprep.mubr.f32.mxu0 0.0
        %1209 = vmatmul.mubr.f32.gmra.mrb[0].mxu0 %v1124
        %v1210 = vpop.f32.mrb[0].mxu0
        %v1211 = vadd.f32 0.0, %v1210
        %v1212 = vpop.f32.mrb[0].mxu0
        %v1213 = vadd.f32 0.0, %v1212
        %1214 = vmatprep.mubr.f32.mxu0 0.0
        %1215 = vmatmul.mubr.f32.gmra.mrb[0].mxu0 %v1127
        %v1216 = vpop.f32.mrb[0].mxu0
        %v1217 = vadd.f32 0.0, %v1216
        %v1218 = vpop.f32.mrb[0].mxu0
        %v1219 = vadd.f32 0.0, %v1218
        %1220 = vmatprep.mubr.f32.mxu0 0.0
        %1221 = vmatmul.mubr.f32.gmra.mrb[0].mxu0 %v1130
        %v1222 = vpop.f32.mrb[0].mxu0
        %v1223 = vadd.f32 0.0, %v1222
        %v1224 = vpop.f32.mrb[0].mxu0
        %v1225 = vadd.f32 0.0, %v1224
        %1226 = vdwg.mxu0
        %v1227 = vadd.f32 %v1086, %v1205
        %v1228 = vadd.f32 %v1087, %v1207
        %v1229 = vadd.f32 %v1088, %v1211
        %v1230 = vadd.f32 %v1089, %v1213
        %v1231 = vadd.f32 %v1090, %v1217
        %v1232 = vadd.f32 %v1091, %v1219
        %v1233 = vadd.f32 %v1092, %v1223
        %v1234 = vadd.f32 %v1093, %v1225
        %1235 = vrot.lane.b32.xlu0 %v374, 113
        %v1236 = vpop.permute.xlu0 %1235
        %1237 = vrot.lane.b32.xlu0 %v377, 113
        %v1238 = vpop.permute.xlu0 %1237
        %1239 = vrot.lane.b32.xlu0 %v375, 113
        %v1240 = vpop.permute.xlu0 %1239
        %1241 = vrot.lane.b32.xlu0 %v378, 113
        %v1242 = vpop.permute.xlu0 %1241
        %1243 = vrot.lane.b32.xlu0 %v376, 113
        %v1244 = vpop.permute.xlu0 %1243
        %1245 = vrot.lane.b32.xlu0 %v379, 113
        %v1246 = vpop.permute.xlu0 %1245
        %vm1247 = vcmp.lt.s32.totalorder %v393, 113
        %v1248 = vsel %vm1247, %v1240, %v1244
        %v1249 = vsel %vm1247, %v1242, %v1246
        %v1250 = vsel %vm1247, %v1236, %v1240
        %v1251 = vsel %vm1247, %v1238, %v1242
        %v1252 = vmul.f32 %v1250, %v405
        %v1253 = vmul.f32 %v1248, %v409
        %v1254 = vmul.f32 %v1251, %v405
        %v1255 = vmul.f32 %v1249, %v409
        %s1256 = scalar_lea.vmem %s2, 192
        %v1257 = vld [vmem:[%s1256] sm:$0xff]
        %v1258 = vld [vmem:[%s1256 + $0x8] sm:$0xff]
        %v1259 = vld [vmem:[%s1256 + $0x10] sm:$0xff]
        %v1260 = vld [vmem:[%s1256 + $0x18] sm:$0x3]
        %v1262 = vsel %vm459, %v1257, 0
        %v1265 = vsel %vm459, %v1258, 0
        %v1268 = vsel %vm459, %v1259, 0
        %v1271 = vsel %vm459, %v1260, 0
        %v1274 = vsel %vm472, %v1254, 0
        %v1277 = vsel %vm472, %v1255, 0
        %1279 = vmatprep.subr.mxu0 %v1253
        %1280 = vmatpush1.msra.mxu0 %v1252
        %1281 = vmatprep.subr.mxu0 %v1277
        %1282 = vmatpush1.msra.mxu0 %v1274
        %1283 = vmatprep.subr.mxu0 0.0
        %1284 = vmatpush1.msra.mxu0 0.0
        %1285 = vmatprep.subr.mxu0 0.0
        %1286 = vmatpush1.msra.mxu0 0.0
        %1287 = vmatprep.subr.mxu0 0.0
        %1288 = vmatpush1.msra.mxu0 0.0
        %1289 = vmatprep.subr.mxu0 0.0
        %1290 = vmatpush1.msra.mxu0 0.0
        %1291 = vmatprep.subr.mxu0 0.0
        %1292 = vmatpush1.msra.mxu0 0.0
        %1293 = vmatprep.subr.mxu0 0.0
        %1294 = vmatpush1.msra.mxu0 0.0
        %1295 = vmatprep.subr.mxu0 0.0
        %1296 = vmatpush1.msra.mxu0 0.0
        %1297 = vmatprep.subr.mxu0 0.0
        %1298 = vmatpush1.msra.mxu0 0.0
        %1299 = vmatprep.subr.mxu0 0.0
        %1300 = vmatpush1.msra.mxu0 0.0
        %1301 = vmatprep.subr.mxu0 0.0
        %1302 = vmatpush1.msra.mxu0 0.0
        %1303 = vmatprep.subr.mxu0 0.0
        %1304 = vmatpush1.msra.mxu0 0.0
        %1305 = vmatprep.subr.mxu0 0.0
        %1306 = vmatpush1.msra.mxu0 0.0
        %1307 = vmatprep.subr.mxu0 0.0
        %1308 = vmatpush1.msra.mxu0 0.0
        %1309 = vmatprep.subr.mxu0 0.0
        %1310 = vmatpush1.msra.mxu0 0.0
        %1311 = vmatprep.subr.mxu0 0.0
        %1312 = vmatpush1.msra.mxu0 0.0
        %1313 = vmatprep.subr.mxu0 0.0
        %1314 = vmatpush1.msra.mxu0 0.0
        %1315 = vmatprep.subr.mxu0 0.0
        %1316 = vmatpush1.msra.mxu0 0.0
        %1317 = vmatprep.subr.mxu0 0.0
        %1318 = vmatpush1.msra.mxu0 0.0
        %1319 = vmatprep.subr.mxu0 0.0
        %1320 = vmatpush1.msra.mxu0 0.0
        %1321 = vmatprep.subr.mxu0 0.0
        %1322 = vmatpush1.msra.mxu0 0.0
        %1323 = vmatprep.subr.mxu0 0.0
        %1324 = vmatpush1.msra.mxu0 0.0
        %1325 = vmatprep.subr.mxu0 0.0
        %1326 = vmatpush1.msra.mxu0 0.0
        %1327 = vmatprep.subr.mxu0 0.0
        %1328 = vmatpush1.msra.mxu0 0.0
        %1329 = vmatprep.subr.mxu0 0.0
        %1330 = vmatpush1.msra.mxu0 0.0
        %1331 = vmatprep.subr.mxu0 0.0
        %1332 = vmatpush1.msra.mxu0 0.0
        %1333 = vmatprep.subr.mxu0 0.0
        %1334 = vmatpush1.msra.mxu0 0.0
        %1335 = vmatprep.subr.mxu0 0.0
        %1336 = vmatpush1.msra.mxu0 0.0
        %1337 = vmatprep.subr.mxu0 0.0
        %1338 = vmatpush1.msra.mxu0 0.0
        %1339 = vmatprep.subr.mxu0 0.0
        %1340 = vmatpush1.msra.mxu0 0.0
        %1341 = vmatprep.subr.mxu0 0.0
        %1342 = vmatpush1.msra.mxu0 0.0
        %1343 = vmatprep.mubr.f32.mxu0 0.0
        %1344 = vmatmul.mubr.f32.gmra.mrb[0].mxu0 %v1262
        %v1345 = vpop.f32.mrb[0].mxu0
        %v1346 = vadd.f32 0.0, %v1345
        %v1347 = vpop.f32.mrb[0].mxu0
        %v1348 = vadd.f32 0.0, %v1347
        %1349 = vmatprep.mubr.f32.mxu0 0.0
        %1350 = vmatmul.mubr.f32.gmra.mrb[0].mxu0 %v1265
        %v1351 = vpop.f32.mrb[0].mxu0
        %v1352 = vadd.f32 0.0, %v1351
        %v1353 = vpop.f32.mrb[0].mxu0
        %v1354 = vadd.f32 0.0, %v1353
        %1355 = vmatprep.mubr.f32.mxu0 0.0
        %1356 = vmatmul.mubr.f32.gmra.mrb[0].mxu0 %v1268
        %v1357 = vpop.f32.mrb[0].mxu0
        %v1358 = vadd.f32 0.0, %v1357
        %v1359 = vpop.f32.mrb[0].mxu0
        %v1360 = vadd.f32 0.0, %v1359
        %1361 = vmatprep.mubr.f32.mxu0 0.0
        %1362 = vmatmul.mubr.f32.gmra.mrb[0].mxu0 %v1271
        %v1363 = vpop.f32.mrb[0].mxu0
        %v1364 = vadd.f32 0.0, %v1363
        %v1365 = vpop.f32.mrb[0].mxu0
        %v1366 = vadd.f32 0.0, %v1365
        %1367 = vdwg.mxu0
        %v1368 = vadd.f32 %v1227, %v1346
        %v1369 = vadd.f32 %v1228, %v1348
        %v1370 = vadd.f32 %v1229, %v1352
        %v1371 = vadd.f32 %v1230, %v1354
        %v1372 = vadd.f32 %v1231, %v1358
        %v1373 = vadd.f32 %v1232, %v1360
        %v1374 = vadd.f32 %v1233, %v1364
        %v1375 = vadd.f32 %v1234, %v1366
        %1376 = vrot.lane.b32.xlu0 %v374, 112
        %v1377 = vpop.permute.xlu0 %1376
        %1378 = vrot.lane.b32.xlu0 %v377, 112
        %v1379 = vpop.permute.xlu0 %1378
        %1380 = vrot.lane.b32.xlu0 %v375, 112
        %v1381 = vpop.permute.xlu0 %1380
        %1382 = vrot.lane.b32.xlu0 %v378, 112
        %v1383 = vpop.permute.xlu0 %1382
        %1384 = vrot.lane.b32.xlu0 %v376, 112
        %v1385 = vpop.permute.xlu0 %1384
        %1386 = vrot.lane.b32.xlu0 %v379, 112
        %v1387 = vpop.permute.xlu0 %1386
        %vm1388 = vcmp.lt.s32.totalorder %v393, 112
        %v1389 = vsel %vm1388, %v1381, %v1385
        %v1390 = vsel %vm1388, %v1383, %v1387
        %v1391 = vsel %vm1388, %v1377, %v1381
        %v1392 = vsel %vm1388, %v1379, %v1383
        %v1393 = vmul.f32 %v1391, %v443
        %v1394 = vmul.f32 %v1389, %v447
        %v1395 = vmul.f32 %v1392, %v443
        %v1396 = vmul.f32 %v1390, %v447
        %s1397 = scalar_lea.vmem %s2, 224
        %v1398 = vld [vmem:[%s1397] sm:$0xff]
        %v1399 = vld [vmem:[%s1397 + $0x8] sm:$0xff]
        %v1400 = vld [vmem:[%s1397 + $0x10] sm:$0xff]
        %v1401 = vld [vmem:[%s1397 + $0x18] sm:$0x3]
        %v1403 = vsel %vm459, %v1398, 0
        %v1406 = vsel %vm459, %v1399, 0
        %v1409 = vsel %vm459, %v1400, 0
        %v1412 = vsel %vm459, %v1401, 0
        %v1415 = vsel %vm472, %v1395, 0
        %v1418 = vsel %vm472, %v1396, 0
        %1420 = vmatprep.subr.mxu0 %v1394
        %1421 = vmatpush1.msra.mxu0 %v1393
        %1422 = vmatprep.subr.mxu0 %v1418
        %1423 = vmatpush1.msra.mxu0 %v1415
        %1424 = vmatprep.subr.mxu0 0.0
        %1425 = vmatpush1.msra.mxu0 0.0
        %1426 = vmatprep.subr.mxu0 0.0
        %1427 = vmatpush1.msra.mxu0 0.0
        %1428 = vmatprep.subr.mxu0 0.0
        %1429 = vmatpush1.msra.mxu0 0.0
        %1430 = vmatprep.subr.mxu0 0.0
        %1431 = vmatpush1.msra.mxu0 0.0
        %1432 = vmatprep.subr.mxu0 0.0
        %1433 = vmatpush1.msra.mxu0 0.0
        %1434 = vmatprep.subr.mxu0 0.0
        %1435 = vmatpush1.msra.mxu0 0.0
        %1436 = vmatprep.subr.mxu0 0.0
        %1437 = vmatpush1.msra.mxu0 0.0
        %1438 = vmatprep.subr.mxu0 0.0
        %1439 = vmatpush1.msra.mxu0 0.0
        %1440 = vmatprep.subr.mxu0 0.0
        %1441 = vmatpush1.msra.mxu0 0.0
        %1442 = vmatprep.subr.mxu0 0.0
        %1443 = vmatpush1.msra.mxu0 0.0
        %1444 = vmatprep.subr.mxu0 0.0
        %1445 = vmatpush1.msra.mxu0 0.0
        %1446 = vmatprep.subr.mxu0 0.0
        %1447 = vmatpush1.msra.mxu0 0.0
        %1448 = vmatprep.subr.mxu0 0.0
        %1449 = vmatpush1.msra.mxu0 0.0
        %1450 = vmatprep.subr.mxu0 0.0
        %1451 = vmatpush1.msra.mxu0 0.0
        %1452 = vmatprep.subr.mxu0 0.0
        %1453 = vmatpush1.msra.mxu0 0.0
        %1454 = vmatprep.subr.mxu0 0.0
        %1455 = vmatpush1.msra.mxu0 0.0
        %1456 = vmatprep.subr.mxu0 0.0
        %1457 = vmatpush1.msra.mxu0 0.0
        %1458 = vmatprep.subr.mxu0 0.0
        %1459 = vmatpush1.msra.mxu0 0.0
        %1460 = vmatprep.subr.mxu0 0.0
        %1461 = vmatpush1.msra.mxu0 0.0
        %1462 = vmatprep.subr.mxu0 0.0
        %1463 = vmatpush1.msra.mxu0 0.0
        %1464 = vmatprep.subr.mxu0 0.0
        %1465 = vmatpush1.msra.mxu0 0.0
        %1466 = vmatprep.subr.mxu0 0.0
        %1467 = vmatpush1.msra.mxu0 0.0
        %1468 = vmatprep.subr.mxu0 0.0
        %1469 = vmatpush1.msra.mxu0 0.0
        %1470 = vmatprep.subr.mxu0 0.0
        %1471 = vmatpush1.msra.mxu0 0.0
        %1472 = vmatprep.subr.mxu0 0.0
        %1473 = vmatpush1.msra.mxu0 0.0
        %1474 = vmatprep.subr.mxu0 0.0
        %1475 = vmatpush1.msra.mxu0 0.0
        %1476 = vmatprep.subr.mxu0 0.0
        %1477 = vmatpush1.msra.mxu0 0.0
        %1478 = vmatprep.subr.mxu0 0.0
        %1479 = vmatpush1.msra.mxu0 0.0
        %1480 = vmatprep.subr.mxu0 0.0
        %1481 = vmatpush1.msra.mxu0 0.0
        %1482 = vmatprep.subr.mxu0 0.0
        %1483 = vmatpush1.msra.mxu0 0.0
        %1484 = vmatprep.mubr.f32.mxu0 0.0
        %1485 = vmatmul.mubr.f32.gmra.mrb[0].mxu0 %v1403
        %v1486 = vpop.f32.mrb[0].mxu0
        %v1487 = vadd.f32 0.0, %v1486
        %v1488 = vpop.f32.mrb[0].mxu0
        %v1489 = vadd.f32 0.0, %v1488
        %1490 = vmatprep.mubr.f32.mxu0 0.0
        %1491 = vmatmul.mubr.f32.gmra.mrb[0].mxu0 %v1406
        %v1492 = vpop.f32.mrb[0].mxu0
        %v1493 = vadd.f32 0.0, %v1492
        %v1494 = vpop.f32.mrb[0].mxu0
        %v1495 = vadd.f32 0.0, %v1494
        %1496 = vmatprep.mubr.f32.mxu0 0.0
        %1497 = vmatmul.mubr.f32.gmra.mrb[0].mxu0 %v1409
        %v1498 = vpop.f32.mrb[0].mxu0
        %v1499 = vadd.f32 0.0, %v1498
        %v1500 = vpop.f32.mrb[0].mxu0
        %v1501 = vadd.f32 0.0, %v1500
        %1502 = vmatprep.mubr.f32.mxu0 0.0
        %1503 = vmatmul.mubr.f32.gmra.mrb[0].mxu0 %v1412
        %v1504 = vpop.f32.mrb[0].mxu0
        %v1505 = vadd.f32 0.0, %v1504
        %v1506 = vpop.f32.mrb[0].mxu0
        %v1507 = vadd.f32 0.0, %v1506
        %1508 = vdwg.mxu0
        %v1509 = vadd.f32 %v1368, %v1487
        %v1510 = vadd.f32 %v1369, %v1489
        %v1511 = vadd.f32 %v1370, %v1493
        %v1512 = vadd.f32 %v1371, %v1495
        %v1513 = vadd.f32 %v1372, %v1499
        %v1514 = vadd.f32 %v1373, %v1501
        %v1515 = vadd.f32 %v1374, %v1505
        %v1516 = vadd.f32 %v1375, %v1507
        %1517 = vrot.lane.b32.xlu0 %v374, 111
        %v1518 = vpop.permute.xlu0 %1517
        %1519 = vrot.lane.b32.xlu0 %v377, 111
        %v1520 = vpop.permute.xlu0 %1519
        %1521 = vrot.lane.b32.xlu0 %v375, 111
        %v1522 = vpop.permute.xlu0 %1521
        %1523 = vrot.lane.b32.xlu0 %v378, 111
        %v1524 = vpop.permute.xlu0 %1523
        %1525 = vrot.lane.b32.xlu0 %v376, 111
        %v1526 = vpop.permute.xlu0 %1525
        %1527 = vrot.lane.b32.xlu0 %v379, 111
        %v1528 = vpop.permute.xlu0 %1527
        %vm1529 = vcmp.lt.s32.totalorder %v393, 111
        %v1530 = vsel %vm1529, %v1522, %v1526
        %v1531 = vsel %vm1529, %v1524, %v1528
        %v1532 = vsel %vm1529, %v1518, %v1522
        %v1533 = vsel %vm1529, %v1520, %v1524
        %v1534 = vmul.f32 %v1532, %v698
        %v1535 = vmul.f32 %v1530, %v702
        %v1536 = vmul.f32 %v1533, %v698
        %v1537 = vmul.f32 %v1531, %v702
        %s1538 = scalar_lea.vmem %s2, 256
        %v1539 = vld [vmem:[%s1538] sm:$0xff]
        %v1540 = vld [vmem:[%s1538 + $0x8] sm:$0xff]
        %v1541 = vld [vmem:[%s1538 + $0x10] sm:$0xff]
        %v1542 = vld [vmem:[%s1538 + $0x18] sm:$0x3]
        %v1544 = vsel %vm459, %v1539, 0
        %v1547 = vsel %vm459, %v1540, 0
        %v1550 = vsel %vm459, %v1541, 0
        %v1553 = vsel %vm459, %v1542, 0
        %v1556 = vsel %vm472, %v1536, 0
        %v1559 = vsel %vm472, %v1537, 0
        %1561 = vmatprep.subr.mxu0 %v1535
        %1562 = vmatpush1.msra.mxu0 %v1534
        %1563 = vmatprep.subr.mxu0 %v1559
        %1564 = vmatpush1.msra.mxu0 %v1556
        %1565 = vmatprep.subr.mxu0 0.0
        %1566 = vmatpush1.msra.mxu0 0.0
        %1567 = vmatprep.subr.mxu0 0.0
        %1568 = vmatpush1.msra.mxu0 0.0
        %1569 = vmatprep.subr.mxu0 0.0
        %1570 = vmatpush1.msra.mxu0 0.0
        %1571 = vmatprep.subr.mxu0 0.0
        %1572 = vmatpush1.msra.mxu0 0.0
        %1573 = vmatprep.subr.mxu0 0.0
        %1574 = vmatpush1.msra.mxu0 0.0
        %1575 = vmatprep.subr.mxu0 0.0
        %1576 = vmatpush1.msra.mxu0 0.0
        %1577 = vmatprep.subr.mxu0 0.0
        %1578 = vmatpush1.msra.mxu0 0.0
        %1579 = vmatprep.subr.mxu0 0.0
        %1580 = vmatpush1.msra.mxu0 0.0
        %1581 = vmatprep.subr.mxu0 0.0
        %1582 = vmatpush1.msra.mxu0 0.0
        %1583 = vmatprep.subr.mxu0 0.0
        %1584 = vmatpush1.msra.mxu0 0.0
        %1585 = vmatprep.subr.mxu0 0.0
        %1586 = vmatpush1.msra.mxu0 0.0
        %1587 = vmatprep.subr.mxu0 0.0
        %1588 = vmatpush1.msra.mxu0 0.0
        %1589 = vmatprep.subr.mxu0 0.0
        %1590 = vmatpush1.msra.mxu0 0.0
        %1591 = vmatprep.subr.mxu0 0.0
        %1592 = vmatpush1.msra.mxu0 0.0
        %1593 = vmatprep.subr.mxu0 0.0
        %1594 = vmatpush1.msra.mxu0 0.0
        %1595 = vmatprep.subr.mxu0 0.0
        %1596 = vmatpush1.msra.mxu0 0.0
        %1597 = vmatprep.subr.mxu0 0.0
        %1598 = vmatpush1.msra.mxu0 0.0
        %1599 = vmatprep.subr.mxu0 0.0
        %1600 = vmatpush1.msra.mxu0 0.0
        %1601 = vmatprep.subr.mxu0 0.0
        %1602 = vmatpush1.msra.mxu0 0.0
        %1603 = vmatprep.subr.mxu0 0.0
        %1604 = vmatpush1.msra.mxu0 0.0
        %1605 = vmatprep.subr.mxu0 0.0
        %1606 = vmatpush1.msra.mxu0 0.0
        %1607 = vmatprep.subr.mxu0 0.0
        %1608 = vmatpush1.msra.mxu0 0.0
        %1609 = vmatprep.subr.mxu0 0.0
        %1610 = vmatpush1.msra.mxu0 0.0
        %1611 = vmatprep.subr.mxu0 0.0
        %1612 = vmatpush1.msra.mxu0 0.0
        %1613 = vmatprep.subr.mxu0 0.0
        %1614 = vmatpush1.msra.mxu0 0.0
        %1615 = vmatprep.subr.mxu0 0.0
        %1616 = vmatpush1.msra.mxu0 0.0
        %1617 = vmatprep.subr.mxu0 0.0
        %1618 = vmatpush1.msra.mxu0 0.0
        %1619 = vmatprep.subr.mxu0 0.0
        %1620 = vmatpush1.msra.mxu0 0.0
        %1621 = vmatprep.subr.mxu0 0.0
        %1622 = vmatpush1.msra.mxu0 0.0
        %1623 = vmatprep.subr.mxu0 0.0
        %1624 = vmatpush1.msra.mxu0 0.0
        %1625 = vmatprep.mubr.f32.mxu0 0.0
        %1626 = vmatmul.mubr.f32.gmra.mrb[0].mxu0 %v1544
        %v1627 = vpop.f32.mrb[0].mxu0
        %v1628 = vadd.f32 0.0, %v1627
        %v1629 = vpop.f32.mrb[0].mxu0
        %v1630 = vadd.f32 0.0, %v1629
        %1631 = vmatprep.mubr.f32.mxu0 0.0
        %1632 = vmatmul.mubr.f32.gmra.mrb[0].mxu0 %v1547
        %v1633 = vpop.f32.mrb[0].mxu0
        %v1634 = vadd.f32 0.0, %v1633
        %v1635 = vpop.f32.mrb[0].mxu0
        %v1636 = vadd.f32 0.0, %v1635
        %1637 = vmatprep.mubr.f32.mxu0 0.0
        %1638 = vmatmul.mubr.f32.gmra.mrb[0].mxu0 %v1550
        %v1639 = vpop.f32.mrb[0].mxu0
        %v1640 = vadd.f32 0.0, %v1639
        %v1641 = vpop.f32.mrb[0].mxu0
        %v1642 = vadd.f32 0.0, %v1641
        %1643 = vmatprep.mubr.f32.mxu0 0.0
        %1644 = vmatmul.mubr.f32.gmra.mrb[0].mxu0 %v1553
        %v1645 = vpop.f32.mrb[0].mxu0
        %v1646 = vadd.f32 0.0, %v1645
        %v1647 = vpop.f32.mrb[0].mxu0
        %v1648 = vadd.f32 0.0, %v1647
        %1649 = vdwg.mxu0
        %v1650 = vadd.f32 %v1509, %v1628
        %v1651 = vadd.f32 %v1510, %v1630
        %v1652 = vadd.f32 %v1511, %v1634
        %v1653 = vadd.f32 %v1512, %v1636
        %v1654 = vadd.f32 %v1513, %v1640
        %v1655 = vadd.f32 %v1514, %v1642
        %v1656 = vadd.f32 %v1515, %v1646
        %v1657 = vadd.f32 %v1516, %v1648
        %v1658 = vld [vmem:[%s3] sm:$0xff]
        %v1659 = vld [vmem:[%s3 + $0x8] sm:$0xff]
        %v1660 = vld [vmem:[%s3 + $0x10] sm:$0xff]
        %v1661 = vld [vmem:[%s3 + $0x18] sm:$0x3]
        %1663 = vset.pattern.permute.xlu0 0
        %1664 = vperm.xlu0 %1663, %v1658
        %v1665 = vpop.permute.xlu0 %1664
        %1668 = vset.pattern.permute.xlu0 0
        %1669 = vperm.xlu0 %1668, %v1659
        %v1670 = vpop.permute.xlu0 %1669
        %1673 = vset.pattern.permute.xlu0 0
        %1674 = vperm.xlu0 %1673, %v1660
        %v1675 = vpop.permute.xlu0 %1674
        %1678 = vset.pattern.permute.xlu0 0
        %1679 = vperm.xlu0 %1678, %v1661
        %v1680 = vpop.permute.xlu0 %1679
        %v1682 = vadd.f32 %v1650, %v1665
        %v1683 = vadd.f32 %v1651, %v1665
        %v1684 = vadd.f32 %v1652, %v1670
        %v1685 = vadd.f32 %v1653, %v1670
        %v1686 = vadd.f32 %v1654, %v1675
        %v1687 = vadd.f32 %v1655, %v1675
        %v1688 = vadd.f32 %v1656, %v1680
        %v1689 = vadd.f32 %v1657, %v1680
        %v1690 = vmax.f32 %v1682, 0.0
        %v1691 = vmax.f32 %v1683, 0.0
        %v1692 = vmax.f32 %v1684, 0.0
        %v1693 = vmax.f32 %v1685, 0.0
        %v1694 = vmax.f32 %v1686, 0.0
        %v1695 = vmax.f32 %v1687, 0.0
        %v1696 = vmax.f32 %v1688, 0.0
        %v1697 = vmax.f32 %v1689, 0.0
        %1698 = vst [vmem:[#allocation2] sm:$0xff] %v1690
        %1699 = vst [vmem:[#allocation2 + $0x8] sm:$0xff] %v1691
        %1700 = vst [vmem:[#allocation2 + $0x18] sm:$0xff] %v1692
        %1701 = vst [vmem:[#allocation2 + $0x20] sm:$0xff] %v1693
        %1702 = vst [vmem:[#allocation2 + $0x30] sm:$0xff] %v1694
        %1703 = vst [vmem:[#allocation2 + $0x38] sm:$0xff] %v1695
        %1704 = vst [vmem:[#allocation2 + $0x48] sm:$0x3] %v1696
        %1705 = vst [vmem:[#allocation2 + $0x50] sm:$0x3] %v1697
        %1706 = vst [vmem:[#allocation2 + $0x10] sm:$0xff] 0.0
        %1707 = vst [vmem:[#allocation2 + $0x28] sm:$0xff] 0.0
        %1708 = vst [vmem:[#allocation2 + $0x40] sm:$0xff] 0.0
        %1709 = vst [vmem:[#allocation2 + $0x58] sm:$0x3] 0.0
        %v1710 = vld [vmem:[#allocation2] sm:$0xff]
        %v1711 = vld [vmem:[#allocation2 + $0x8] sm:$0xff]
        %v1712 = vld [vmem:[#allocation2 + $0x10] sm:$0xff]
        %v1713 = vld [vmem:[#allocation2 + $0x18] sm:$0xff]
        %v1714 = vld [vmem:[#allocation2 + $0x20] sm:$0xff]
        %v1715 = vld [vmem:[#allocation2 + $0x28] sm:$0xff]
        %v1716 = vld [vmem:[#allocation2 + $0x30] sm:$0xff]
        %v1717 = vld [vmem:[#allocation2 + $0x38] sm:$0xff]
        %v1718 = vld [vmem:[#allocation2 + $0x40] sm:$0xff]
        %v1719 = vld [vmem:[#allocation2 + $0x48] sm:$0x3]
        %v1720 = vld [vmem:[#allocation2 + $0x50] sm:$0x3]
        %v1721 = vld [vmem:[#allocation2 + $0x58] sm:$0x3]
        %1722 = vrot.lane.b32.xlu0 %v1710, 17
        %v1723 = vpop.permute.xlu0 %1722
        %1724 = vrot.lane.b32.xlu0 %v1713, 17
        %v1725 = vpop.permute.xlu0 %1724
        %1726 = vrot.lane.b32.xlu0 %v1716, 17
        %v1727 = vpop.permute.xlu0 %1726
        %1728 = vrot.lane.b32.xlu0 %v1719, 17
        %v1729 = vpop.permute.xlu0 %1728
        %1730 = vrot.lane.b32.xlu0 %v1711, 17
        %v1731 = vpop.permute.xlu0 %1730
        %1732 = vrot.lane.b32.xlu0 %v1714, 17
        %v1733 = vpop.permute.xlu0 %1732
        %1734 = vrot.lane.b32.xlu0 %v1717, 17
        %v1735 = vpop.permute.xlu0 %1734
        %1736 = vrot.lane.b32.xlu0 %v1720, 17
        %v1737 = vpop.permute.xlu0 %1736
        %1738 = vrot.lane.b32.xlu0 %v1712, 17
        %v1739 = vpop.permute.xlu0 %1738
        %1740 = vrot.lane.b32.xlu0 %v1715, 17
        %v1741 = vpop.permute.xlu0 %1740
        %1742 = vrot.lane.b32.xlu0 %v1718, 17
        %v1743 = vpop.permute.xlu0 %1742
        %1744 = vrot.lane.b32.xlu0 %v1721, 17
        %v1745 = vpop.permute.xlu0 %1744
        %v1746 = vsel %vm394, %v1723, %v1731
        %v1747 = vsel %vm394, %v1725, %v1733
        %v1748 = vsel %vm394, %v1727, %v1735
        %v1749 = vsel %vm394, %v1729, %v1737
        %v1750 = vsel %vm394, %v1739, %v1723
        %v1751 = vsel %vm394, %v1741, %v1725
        %v1752 = vsel %vm394, %v1743, %v1727
        %v1753 = vsel %vm394, %v1745, %v1729
        %v1754 = vld [vmem:[%s399] ss:$8 sm:$0x3]
        %v1756 = vlaneseq
        %v1757 = vshrl.u32 %v1756, 7
        %v1758 = vsub.s32 0, %v1757
        %v1759 = vrot.slane %v1754, %v1758
        %v1760 = vlaneseq
        %v1761 = vshrl.u32 %v1760, 7
        %v1762 = vsub.s32 1, %v1761
        %v1763 = vrot.slane %v1754, %v1762
        %v1766 = vmul.f32 %v1750, %v1759
        %v1767 = vmul.f32 %v1746, %v1763
        %v1768 = vmul.f32 %v1751, %v1759
        %v1769 = vmul.f32 %v1747, %v1763
        %v1770 = vmul.f32 %v1752, %v1759
        %v1771 = vmul.f32 %v1748, %v1763
        %v1772 = vmul.f32 %v1753, %v1759
        %v1773 = vmul.f32 %v1749, %v1763
        %v1774 = vld [vmem:[%s4] sm:$0xff]
        %v1775 = vld [vmem:[%s4 + $0x8] sm:$0x1f]
        %1776 = vrot.lane.b32.xlu0 %v1710, 16
        %v1777 = vpop.permute.xlu0 %1776
        %1778 = vrot.lane.b32.xlu0 %v1713, 16
        %v1779 = vpop.permute.xlu0 %1778
        %1780 = vrot.lane.b32.xlu0 %v1716, 16
        %v1781 = vpop.permute.xlu0 %1780
        %1782 = vrot.lane.b32.xlu0 %v1719, 16
        %v1783 = vpop.permute.xlu0 %1782
        %1784 = vrot.lane.b32.xlu0 %v1711, 16
        %v1785 = vpop.permute.xlu0 %1784
        %1786 = vrot.lane.b32.xlu0 %v1714, 16
        %v1787 = vpop.permute.xlu0 %1786
        %1788 = vrot.lane.b32.xlu0 %v1717, 16
        %v1789 = vpop.permute.xlu0 %1788
        %1790 = vrot.lane.b32.xlu0 %v1720, 16
        %v1791 = vpop.permute.xlu0 %1790
        %1792 = vrot.lane.b32.xlu0 %v1712, 16
        %v1793 = vpop.permute.xlu0 %1792
        %1794 = vrot.lane.b32.xlu0 %v1715, 16
        %v1795 = vpop.permute.xlu0 %1794
        %1796 = vrot.lane.b32.xlu0 %v1718, 16
        %v1797 = vpop.permute.xlu0 %1796
        %1798 = vrot.lane.b32.xlu0 %v1721, 16
        %v1799 = vpop.permute.xlu0 %1798
        %v1800 = vsel %vm432, %v1777, %v1785
        %v1801 = vsel %vm432, %v1779, %v1787
        %v1802 = vsel %vm432, %v1781, %v1789
        %v1803 = vsel %vm432, %v1783, %v1791
        %v1804 = vsel %vm432, %v1793, %v1777
        %v1805 = vsel %vm432, %v1795, %v1779
        %v1806 = vsel %vm432, %v1797, %v1781
        %v1807 = vsel %vm432, %v1799, %v1783
        %v1808 = vld [vmem:[%s437] ss:$8 sm:$0x3]
        %v1810 = vlaneseq
        %v1811 = vshrl.u32 %v1810, 7
        %v1812 = vsub.s32 0, %v1811
        %v1813 = vrot.slane %v1808, %v1812
        %v1814 = vlaneseq
        %v1815 = vshrl.u32 %v1814, 7
        %v1816 = vsub.s32 1, %v1815
        %v1817 = vrot.slane %v1808, %v1816
        %v1820 = vmul.f32 %v1804, %v1813
        %v1821 = vmul.f32 %v1800, %v1817
        %v1822 = vmul.f32 %v1805, %v1813
        %v1823 = vmul.f32 %v1801, %v1817
        %v1824 = vmul.f32 %v1806, %v1813
        %v1825 = vmul.f32 %v1802, %v1817
        %v1826 = vmul.f32 %v1807, %v1813
        %v1827 = vmul.f32 %v1803, %v1817
        %s1828 = scalar_lea.vmem %s4, 16
        %v1829 = vld [vmem:[%s1828] sm:$0xff]
        %v1830 = vld [vmem:[%s1828 + $0x8] sm:$0x1f]
        %vm1831 = vcmask 211968
        %v1833 = vsel %vm1831, %v1829, 0
        %v1836 = vsel %vm1831, %v1830, 0
        %vm1838 = vcmask 1041408
        %v1840 = vsel %vm1838, %v1826, 0
        %v1843 = vsel %vm1838, %v1827, 0
        %1845 = vmatprep.subr.mxu0 %v1821
        %1846 = vmatpush1.msra.mxu0 %v1820
        %1847 = vmatprep.subr.mxu0 %v1823
        %1848 = vmatpush1.msra.mxu0 %v1822
        %1849 = vmatprep.subr.mxu0 %v1825
        %1850 = vmatpush1.msra.mxu0 %v1824
        %1851 = vmatprep.subr.mxu0 %v1843
        %1852 = vmatpush1.msra.mxu0 %v1840
        %1853 = vmatprep.subr.mxu0 0.0
        %1854 = vmatpush1.msra.mxu0 0.0
        %1855 = vmatprep.subr.mxu0 0.0
        %1856 = vmatpush1.msra.mxu0 0.0
        %1857 = vmatprep.subr.mxu0 0.0
        %1858 = vmatpush1.msra.mxu0 0.0
        %1859 = vmatprep.subr.mxu0 0.0
        %1860 = vmatpush1.msra.mxu0 0.0
        %1861 = vmatprep.subr.mxu0 0.0
        %1862 = vmatpush1.msra.mxu0 0.0
        %1863 = vmatprep.subr.mxu0 0.0
        %1864 = vmatpush1.msra.mxu0 0.0
        %1865 = vmatprep.subr.mxu0 0.0
        %1866 = vmatpush1.msra.mxu0 0.0
        %1867 = vmatprep.subr.mxu0 0.0
        %1868 = vmatpush1.msra.mxu0 0.0
        %1869 = vmatprep.subr.mxu0 0.0
        %1870 = vmatpush1.msra.mxu0 0.0
        %1871 = vmatprep.subr.mxu0 0.0
        %1872 = vmatpush1.msra.mxu0 0.0
        %1873 = vmatprep.subr.mxu0 0.0
        %1874 = vmatpush1.msra.mxu0 0.0
        %1875 = vmatprep.subr.mxu0 0.0
        %1876 = vmatpush1.msra.mxu0 0.0
        %1877 = vmatprep.subr.mxu0 0.0
        %1878 = vmatpush1.msra.mxu0 0.0
        %1879 = vmatprep.subr.mxu0 0.0
        %1880 = vmatpush1.msra.mxu0 0.0
        %1881 = vmatprep.subr.mxu0 0.0
        %1882 = vmatpush1.msra.mxu0 0.0
        %1883 = vmatprep.subr.mxu0 0.0
        %1884 = vmatpush1.msra.mxu0 0.0
        %1885 = vmatprep.subr.mxu0 0.0
        %1886 = vmatpush1.msra.mxu0 0.0
        %1887 = vmatprep.subr.mxu0 0.0
        %1888 = vmatpush1.msra.mxu0 0.0
        %1889 = vmatprep.subr.mxu0 0.0
        %1890 = vmatpush1.msra.mxu0 0.0
        %1891 = vmatprep.subr.mxu0 0.0
        %1892 = vmatpush1.msra.mxu0 0.0
        %1893 = vmatprep.subr.mxu0 0.0
        %1894 = vmatpush1.msra.mxu0 0.0
        %1895 = vmatprep.subr.mxu0 0.0
        %1896 = vmatpush1.msra.mxu0 0.0
        %1897 = vmatprep.subr.mxu0 0.0
        %1898 = vmatpush1.msra.mxu0 0.0
        %1899 = vmatprep.subr.mxu0 0.0
        %1900 = vmatpush1.msra.mxu0 0.0
        %1901 = vmatprep.subr.mxu0 0.0
        %1902 = vmatpush1.msra.mxu0 0.0
        %1903 = vmatprep.subr.mxu0 0.0
        %1904 = vmatpush1.msra.mxu0 0.0
        %1905 = vmatprep.subr.mxu0 0.0
        %1906 = vmatpush1.msra.mxu0 0.0
        %1907 = vmatprep.subr.mxu0 0.0
        %1908 = vmatpush1.msra.mxu0 0.0
        %1909 = vmatprep.mubr.f32.mxu0 0.0
        %1910 = vmatmul.mubr.f32.gmra.mrb[0].mxu0 %v1833
        %v1911 = vpop.f32.mrb[0].mxu0
        %v1912 = vadd.f32 0.0, %v1911
        %v1913 = vpop.f32.mrb[0].mxu0
        %v1914 = vadd.f32 0.0, %v1913
        %1915 = vmatprep.mubr.f32.mxu0 0.0
        %1916 = vmatmul.mubr.f32.gmra.mrb[0].mxu0 %v1836
        %v1917 = vpop.f32.mrb[0].mxu0
        %v1918 = vadd.f32 0.0, %v1917
        %v1919 = vpop.f32.mrb[0].mxu0
        %v1920 = vadd.f32 0.0, %v1919
        %1921 = vdwg.mxu0
        %v1923 = vsel %vm1831, %v1774, 0
        %v1926 = vsel %vm1831, %v1775, 0
        %v1929 = vsel %vm1838, %v1772, 0
        %v1932 = vsel %vm1838, %v1773, 0
        %1934 = vmatprep.subr.mxu0 %v1767
        %1935 = vmatpush1.msra.mxu0 %v1766
        %1936 = vmatprep.subr.mxu0 %v1769
        %1937 = vmatpush1.msra.mxu0 %v1768
        %1938 = vmatprep.subr.mxu0 %v1771
        %1939 = vmatpush1.msra.mxu0 %v1770
        %1940 = vmatprep.subr.mxu0 %v1932
        %1941 = vmatpush1.msra.mxu0 %v1929
        %1942 = vmatprep.subr.mxu0 0.0
        %1943 = vmatpush1.msra.mxu0 0.0
        %1944 = vmatprep.subr.mxu0 0.0
        %1945 = vmatpush1.msra.mxu0 0.0
        %1946 = vmatprep.subr.mxu0 0.0
        %1947 = vmatpush1.msra.mxu0 0.0
        %1948 = vmatprep.subr.mxu0 0.0
        %1949 = vmatpush1.msra.mxu0 0.0
        %1950 = vmatprep.subr.mxu0 0.0
        %1951 = vmatpush1.msra.mxu0 0.0
        %1952 = vmatprep.subr.mxu0 0.0
        %1953 = vmatpush1.msra.mxu0 0.0
        %1954 = vmatprep.subr.mxu0 0.0
        %1955 = vmatpush1.msra.mxu0 0.0
        %1956 = vmatprep.subr.mxu0 0.0
        %1957 = vmatpush1.msra.mxu0 0.0
        %1958 = vmatprep.subr.mxu0 0.0
        %1959 = vmatpush1.msra.mxu0 0.0
        %1960 = vmatprep.subr.mxu0 0.0
        %1961 = vmatpush1.msra.mxu0 0.0
        %1962 = vmatprep.subr.mxu0 0.0
        %1963 = vmatpush1.msra.mxu0 0.0
        %1964 = vmatprep.subr.mxu0 0.0
        %1965 = vmatpush1.msra.mxu0 0.0
        %1966 = vmatprep.subr.mxu0 0.0
        %1967 = vmatpush1.msra.mxu0 0.0
        %1968 = vmatprep.subr.mxu0 0.0
        %1969 = vmatpush1.msra.mxu0 0.0
        %1970 = vmatprep.subr.mxu0 0.0
        %1971 = vmatpush1.msra.mxu0 0.0
        %1972 = vmatprep.subr.mxu0 0.0
        %1973 = vmatpush1.msra.mxu0 0.0
        %1974 = vmatprep.subr.mxu0 0.0
        %1975 = vmatpush1.msra.mxu0 0.0
        %1976 = vmatprep.subr.mxu0 0.0
        %1977 = vmatpush1.msra.mxu0 0.0
        %1978 = vmatprep.subr.mxu0 0.0
        %1979 = vmatpush1.msra.mxu0 0.0
        %1980 = vmatprep.subr.mxu0 0.0
        %1981 = vmatpush1.msra.mxu0 0.0
        %1982 = vmatprep.subr.mxu0 0.0
        %1983 = vmatpush1.msra.mxu0 0.0
        %1984 = vmatprep.subr.mxu0 0.0
        %1985 = vmatpush1.msra.mxu0 0.0
        %1986 = vmatprep.subr.mxu0 0.0
        %1987 = vmatpush1.msra.mxu0 0.0
        %1988 = vmatprep.subr.mxu0 0.0
        %1989 = vmatpush1.msra.mxu0 0.0
        %1990 = vmatprep.subr.mxu0 0.0
        %1991 = vmatpush1.msra.mxu0 0.0
        %1992 = vmatprep.subr.mxu0 0.0
        %1993 = vmatpush1.msra.mxu0 0.0
        %1994 = vmatprep.subr.mxu0 0.0
        %1995 = vmatpush1.msra.mxu0 0.0
        %1996 = vmatprep.subr.mxu0 0.0
        %1997 = vmatpush1.msra.mxu0 0.0
        %1998 = vmatprep.mubr.f32.mxu0 0.0
        %1999 = vmatmul.mubr.f32.gmra.mrb[0].mxu0 %v1923
        %v2000 = vpop.f32.mrb[0].mxu0
        %v2001 = vadd.f32 %v1912, %v2000
        %v2002 = vpop.f32.mrb[0].mxu0
        %v2003 = vadd.f32 %v1914, %v2002
        %2004 = vmatprep.mubr.f32.mxu0 0.0
        %2005 = vmatmul.mubr.f32.gmra.mrb[0].mxu0 %v1926
        %v2006 = vpop.f32.mrb[0].mxu0
        %v2007 = vadd.f32 %v1918, %v2006
        %v2008 = vpop.f32.mrb[0].mxu0
        %v2009 = vadd.f32 %v1920, %v2008
        %2010 = vdwg.mxu0
        %2011 = vrot.lane.b32.xlu0 %v1710, 15
        %v2012 = vpop.permute.xlu0 %2011
        %2013 = vrot.lane.b32.xlu0 %v1713, 15
        %v2014 = vpop.permute.xlu0 %2013
        %2015 = vrot.lane.b32.xlu0 %v1716, 15
        %v2016 = vpop.permute.xlu0 %2015
        %2017 = vrot.lane.b32.xlu0 %v1719, 15
        %v2018 = vpop.permute.xlu0 %2017
        %2019 = vrot.lane.b32.xlu0 %v1711, 15
        %v2020 = vpop.permute.xlu0 %2019
        %2021 = vrot.lane.b32.xlu0 %v1714, 15
        %v2022 = vpop.permute.xlu0 %2021
        %2023 = vrot.lane.b32.xlu0 %v1717, 15
        %v2024 = vpop.permute.xlu0 %2023
        %2025 = vrot.lane.b32.xlu0 %v1720, 15
        %v2026 = vpop.permute.xlu0 %2025
        %2027 = vrot.lane.b32.xlu0 %v1712, 15
        %v2028 = vpop.permute.xlu0 %2027
        %2029 = vrot.lane.b32.xlu0 %v1715, 15
        %v2030 = vpop.permute.xlu0 %2029
        %2031 = vrot.lane.b32.xlu0 %v1718, 15
        %v2032 = vpop.permute.xlu0 %2031
        %2033 = vrot.lane.b32.xlu0 %v1721, 15
        %v2034 = vpop.permute.xlu0 %2033
        %v2035 = vsel %vm687, %v2012, %v2020
        %v2036 = vsel %vm687, %v2014, %v2022
        %v2037 = vsel %vm687, %v2016, %v2024
        %v2038 = vsel %vm687, %v2018, %v2026
        %v2039 = vsel %vm687, %v2028, %v2012
        %v2040 = vsel %vm687, %v2030, %v2014
        %v2041 = vsel %vm687, %v2032, %v2016
        %v2042 = vsel %vm687, %v2034, %v2018
        %v2043 = vld [vmem:[%s692] ss:$8 sm:$0x3]
        %v2045 = vlaneseq
        %v2046 = vshrl.u32 %v2045, 7
        %v2047 = vsub.s32 0, %v2046
        %v2048 = vrot.slane %v2043, %v2047
        %v2049 = vlaneseq
        %v2050 = vshrl.u32 %v2049, 7
        %v2051 = vsub.s32 1, %v2050
        %v2052 = vrot.slane %v2043, %v2051
        %v2055 = vmul.f32 %v2039, %v2048
        %v2056 = vmul.f32 %v2035, %v2052
        %v2057 = vmul.f32 %v2040, %v2048
        %v2058 = vmul.f32 %v2036, %v2052
        %v2059 = vmul.f32 %v2041, %v2048
        %v2060 = vmul.f32 %v2037, %v2052
        %v2061 = vmul.f32 %v2042, %v2048
        %v2062 = vmul.f32 %v2038, %v2052
        %s2063 = scalar_lea.vmem %s4, 32
        %v2064 = vld [vmem:[%s2063] sm:$0xff]
        %v2065 = vld [vmem:[%s2063 + $0x8] sm:$0x1f]
        %v2067 = vsel %vm1831, %v2064, 0
        %v2070 = vsel %vm1831, %v2065, 0
        %v2073 = vsel %vm1838, %v2061, 0
        %v2076 = vsel %vm1838, %v2062, 0
        %2078 = vmatprep.subr.mxu0 %v2056
        %2079 = vmatpush1.msra.mxu0 %v2055
        %2080 = vmatprep.subr.mxu0 %v2058
        %2081 = vmatpush1.msra.mxu0 %v2057
        %2082 = vmatprep.subr.mxu0 %v2060
        %2083 = vmatpush1.msra.mxu0 %v2059
        %2084 = vmatprep.subr.mxu0 %v2076
        %2085 = vmatpush1.msra.mxu0 %v2073
        %2086 = vmatprep.subr.mxu0 0.0
        %2087 = vmatpush1.msra.mxu0 0.0
        %2088 = vmatprep.subr.mxu0 0.0
        %2089 = vmatpush1.msra.mxu0 0.0
        %2090 = vmatprep.subr.mxu0 0.0
        %2091 = vmatpush1.msra.mxu0 0.0
        %2092 = vmatprep.subr.mxu0 0.0
        %2093 = vmatpush1.msra.mxu0 0.0
        %2094 = vmatprep.subr.mxu0 0.0
        %2095 = vmatpush1.msra.mxu0 0.0
        %2096 = vmatprep.subr.mxu0 0.0
        %2097 = vmatpush1.msra.mxu0 0.0
        %2098 = vmatprep.subr.mxu0 0.0
        %2099 = vmatpush1.msra.mxu0 0.0
        %2100 = vmatprep.subr.mxu0 0.0
        %2101 = vmatpush1.msra.mxu0 0.0
        %2102 = vmatprep.subr.mxu0 0.0
        %2103 = vmatpush1.msra.mxu0 0.0
        %2104 = vmatprep.subr.mxu0 0.0
        %2105 = vmatpush1.msra.mxu0 0.0
        %2106 = vmatprep.subr.mxu0 0.0
        %2107 = vmatpush1.msra.mxu0 0.0
        %2108 = vmatprep.subr.mxu0 0.0
        %2109 = vmatpush1.msra.mxu0 0.0
        %2110 = vmatprep.subr.mxu0 0.0
        %2111 = vmatpush1.msra.mxu0 0.0
        %2112 = vmatprep.subr.mxu0 0.0
        %2113 = vmatpush1.msra.mxu0 0.0
        %2114 = vmatprep.subr.mxu0 0.0
        %2115 = vmatpush1.msra.mxu0 0.0
        %2116 = vmatprep.subr.mxu0 0.0
        %2117 = vmatpush1.msra.mxu0 0.0
        %2118 = vmatprep.subr.mxu0 0.0
        %2119 = vmatpush1.msra.mxu0 0.0
        %2120 = vmatprep.subr.mxu0 0.0
        %2121 = vmatpush1.msra.mxu0 0.0
        %2122 = vmatprep.subr.mxu0 0.0
        %2123 = vmatpush1.msra.mxu0 0.0
        %2124 = vmatprep.subr.mxu0 0.0
        %2125 = vmatpush1.msra.mxu0 0.0
        %2126 = vmatprep.subr.mxu0 0.0
        %2127 = vmatpush1.msra.mxu0 0.0
        %2128 = vmatprep.subr.mxu0 0.0
        %2129 = vmatpush1.msra.mxu0 0.0
        %2130 = vmatprep.subr.mxu0 0.0
        %2131 = vmatpush1.msra.mxu0 0.0
        %2132 = vmatprep.subr.mxu0 0.0
        %2133 = vmatpush1.msra.mxu0 0.0
        %2134 = vmatprep.subr.mxu0 0.0
        %2135 = vmatpush1.msra.mxu0 0.0
        %2136 = vmatprep.subr.mxu0 0.0
        %2137 = vmatpush1.msra.mxu0 0.0
        %2138 = vmatprep.subr.mxu0 0.0
        %2139 = vmatpush1.msra.mxu0 0.0
        %2140 = vmatprep.subr.mxu0 0.0
        %2141 = vmatpush1.msra.mxu0 0.0
        %2142 = vmatprep.mubr.f32.mxu0 0.0
        %2143 = vmatmul.mubr.f32.gmra.mrb[0].mxu0 %v2067
        %v2144 = vpop.f32.mrb[0].mxu0
        %v2145 = vadd.f32 0.0, %v2144
        %v2146 = vpop.f32.mrb[0].mxu0
        %v2147 = vadd.f32 0.0, %v2146
        %2148 = vmatprep.mubr.f32.mxu0 0.0
        %2149 = vmatmul.mubr.f32.gmra.mrb[0].mxu0 %v2070
        %v2150 = vpop.f32.mrb[0].mxu0
        %v2151 = vadd.f32 0.0, %v2150
        %v2152 = vpop.f32.mrb[0].mxu0
        %v2153 = vadd.f32 0.0, %v2152
        %2154 = vdwg.mxu0
        %v2155 = vadd.f32 %v2001, %v2145
        %v2156 = vadd.f32 %v2003, %v2147
        %v2157 = vadd.f32 %v2007, %v2151
        %v2158 = vadd.f32 %v2009, %v2153
        %2159 = vrot.lane.b32.xlu0 %v1710, 1
        %v2160 = vpop.permute.xlu0 %2159
        %2161 = vrot.lane.b32.xlu0 %v1713, 1
        %v2162 = vpop.permute.xlu0 %2161
        %2163 = vrot.lane.b32.xlu0 %v1716, 1
        %v2164 = vpop.permute.xlu0 %2163
        %2165 = vrot.lane.b32.xlu0 %v1719, 1
        %v2166 = vpop.permute.xlu0 %2165
        %2167 = vrot.lane.b32.xlu0 %v1711, 1
        %v2168 = vpop.permute.xlu0 %2167
        %2169 = vrot.lane.b32.xlu0 %v1714, 1
        %v2170 = vpop.permute.xlu0 %2169
        %2171 = vrot.lane.b32.xlu0 %v1717, 1
        %v2172 = vpop.permute.xlu0 %2171
        %2173 = vrot.lane.b32.xlu0 %v1720, 1
        %v2174 = vpop.permute.xlu0 %2173
        %2175 = vrot.lane.b32.xlu0 %v1712, 1
        %v2176 = vpop.permute.xlu0 %2175
        %2177 = vrot.lane.b32.xlu0 %v1715, 1
        %v2178 = vpop.permute.xlu0 %2177
        %2179 = vrot.lane.b32.xlu0 %v1718, 1
        %v2180 = vpop.permute.xlu0 %2179
        %2181 = vrot.lane.b32.xlu0 %v1721, 1
        %v2182 = vpop.permute.xlu0 %2181
        %v2183 = vsel %vm841, %v2160, %v2168
        %v2184 = vsel %vm841, %v2162, %v2170
        %v2185 = vsel %vm841, %v2164, %v2172
        %v2186 = vsel %vm841, %v2166, %v2174
        %v2187 = vsel %vm841, %v2176, %v2160
        %v2188 = vsel %vm841, %v2178, %v2162
        %v2189 = vsel %vm841, %v2180, %v2164
        %v2190 = vsel %vm841, %v2182, %v2166
        %v2191 = vmul.f32 %v2187, %v1759
        %v2192 = vmul.f32 %v2183, %v1763
        %v2193 = vmul.f32 %v2188, %v1759
        %v2194 = vmul.f32 %v2184, %v1763
        %v2195 = vmul.f32 %v2189, %v1759
        %v2196 = vmul.f32 %v2185, %v1763
        %v2197 = vmul.f32 %v2190, %v1759
        %v2198 = vmul.f32 %v2186, %v1763
        %s2199 = scalar_lea.vmem %s4, 48
        %v2200 = vld [vmem:[%s2199] sm:$0xff]
        %v2201 = vld [vmem:[%s2199 + $0x8] sm:$0x1f]
        %v2203 = vsel %vm1831, %v2200, 0
        %v2206 = vsel %vm1831, %v2201, 0
        %v2209 = vsel %vm1838, %v2197, 0
        %v2212 = vsel %vm1838, %v2198, 0
        %2214 = vmatprep.subr.mxu0 %v2192
        %2215 = vmatpush1.msra.mxu0 %v2191
        %2216 = vmatprep.subr.mxu0 %v2194
        %2217 = vmatpush1.msra.mxu0 %v2193
        %2218 = vmatprep.subr.mxu0 %v2196
        %2219 = vmatpush1.msra.mxu0 %v2195
        %2220 = vmatprep.subr.mxu0 %v2212
        %2221 = vmatpush1.msra.mxu0 %v2209
        %2222 = vmatprep.subr.mxu0 0.0
        %2223 = vmatpush1.msra.mxu0 0.0
        %2224 = vmatprep.subr.mxu0 0.0
        %2225 = vmatpush1.msra.mxu0 0.0
        %2226 = vmatprep.subr.mxu0 0.0
        %2227 = vmatpush1.msra.mxu0 0.0
        %2228 = vmatprep.subr.mxu0 0.0
        %2229 = vmatpush1.msra.mxu0 0.0
        %2230 = vmatprep.subr.mxu0 0.0
        %2231 = vmatpush1.msra.mxu0 0.0
        %2232 = vmatprep.subr.mxu0 0.0
        %2233 = vmatpush1.msra.mxu0 0.0
        %2234 = vmatprep.subr.mxu0 0.0
        %2235 = vmatpush1.msra.mxu0 0.0
        %2236 = vmatprep.subr.mxu0 0.0
        %2237 = vmatpush1.msra.mxu0 0.0
        %2238 = vmatprep.subr.mxu0 0.0
        %2239 = vmatpush1.msra.mxu0 0.0
        %2240 = vmatprep.subr.mxu0 0.0
        %2241 = vmatpush1.msra.mxu0 0.0
        %2242 = vmatprep.subr.mxu0 0.0
        %2243 = vmatpush1.msra.mxu0 0.0
        %2244 = vmatprep.subr.mxu0 0.0
        %2245 = vmatpush1.msra.mxu0 0.0
        %2246 = vmatprep.subr.mxu0 0.0
        %2247 = vmatpush1.msra.mxu0 0.0
        %2248 = vmatprep.subr.mxu0 0.0
        %2249 = vmatpush1.msra.mxu0 0.0
        %2250 = vmatprep.subr.mxu0 0.0
        %2251 = vmatpush1.msra.mxu0 0.0
        %2252 = vmatprep.subr.mxu0 0.0
        %2253 = vmatpush1.msra.mxu0 0.0
        %2254 = vmatprep.subr.mxu0 0.0
        %2255 = vmatpush1.msra.mxu0 0.0
        %2256 = vmatprep.subr.mxu0 0.0
        %2257 = vmatpush1.msra.mxu0 0.0
        %2258 = vmatprep.subr.mxu0 0.0
        %2259 = vmatpush1.msra.mxu0 0.0
        %2260 = vmatprep.subr.mxu0 0.0
        %2261 = vmatpush1.msra.mxu0 0.0
        %2262 = vmatprep.subr.mxu0 0.0
        %2263 = vmatpush1.msra.mxu0 0.0
        %2264 = vmatprep.subr.mxu0 0.0
        %2265 = vmatpush1.msra.mxu0 0.0
        %2266 = vmatprep.subr.mxu0 0.0
        %2267 = vmatpush1.msra.mxu0 0.0
        %2268 = vmatprep.subr.mxu0 0.0
        %2269 = vmatpush1.msra.mxu0 0.0
        %2270 = vmatprep.subr.mxu0 0.0
        %2271 = vmatpush1.msra.mxu0 0.0
        %2272 = vmatprep.subr.mxu0 0.0
        %2273 = vmatpush1.msra.mxu0 0.0
        %2274 = vmatprep.subr.mxu0 0.0
        %2275 = vmatpush1.msra.mxu0 0.0
        %2276 = vmatprep.subr.mxu0 0.0
        %2277 = vmatpush1.msra.mxu0 0.0
        %2278 = vmatprep.mubr.f32.mxu0 0.0
        %2279 = vmatmul.mubr.f32.gmra.mrb[0].mxu0 %v2203
        %v2280 = vpop.f32.mrb[0].mxu0
        %v2281 = vadd.f32 0.0, %v2280
        %v2282 = vpop.f32.mrb[0].mxu0
        %v2283 = vadd.f32 0.0, %v2282
        %2284 = vmatprep.mubr.f32.mxu0 0.0
        %2285 = vmatmul.mubr.f32.gmra.mrb[0].mxu0 %v2206
        %v2286 = vpop.f32.mrb[0].mxu0
        %v2287 = vadd.f32 0.0, %v2286
        %v2288 = vpop.f32.mrb[0].mxu0
        %v2289 = vadd.f32 0.0, %v2288
        %2290 = vdwg.mxu0
        %v2291 = vadd.f32 %v2155, %v2281
        %v2292 = vadd.f32 %v2156, %v2283
        %v2293 = vadd.f32 %v2157, %v2287
        %v2294 = vadd.f32 %v2158, %v2289
        %v2295 = vmul.f32 %v1710, %v1813
        %v2296 = vmul.f32 %v1711, %v1817
        %v2297 = vmul.f32 %v1713, %v1813
        %v2298 = vmul.f32 %v1714, %v1817
        %v2299 = vmul.f32 %v1716, %v1813
        %v2300 = vmul.f32 %v1717, %v1817
        %v2301 = vmul.f32 %v1719, %v1813
        %v2302 = vmul.f32 %v1720, %v1817
        %s2303 = scalar_lea.vmem %s4, 64
        %v2304 = vld [vmem:[%s2303] sm:$0xff]
        %v2305 = vld [vmem:[%s2303 + $0x8] sm:$0x1f]
        %v2307 = vsel %vm1831, %v2304, 0
        %v2310 = vsel %vm1831, %v2305, 0
        %v2313 = vsel %vm1838, %v2301, 0
        %v2316 = vsel %vm1838, %v2302, 0
        %2318 = vmatprep.subr.mxu0 %v2296
        %2319 = vmatpush1.msra.mxu0 %v2295
        %2320 = vmatprep.subr.mxu0 %v2298
        %2321 = vmatpush1.msra.mxu0 %v2297
        %2322 = vmatprep.subr.mxu0 %v2300
        %2323 = vmatpush1.msra.mxu0 %v2299
        %2324 = vmatprep.subr.mxu0 %v2316
        %2325 = vmatpush1.msra.mxu0 %v2313
        %2326 = vmatprep.subr.mxu0 0.0
        %2327 = vmatpush1.msra.mxu0 0.0
        %2328 = vmatprep.subr.mxu0 0.0
        %2329 = vmatpush1.msra.mxu0 0.0
        %2330 = vmatprep.subr.mxu0 0.0
        %2331 = vmatpush1.msra.mxu0 0.0
        %2332 = vmatprep.subr.mxu0 0.0
        %2333 = vmatpush1.msra.mxu0 0.0
        %2334 = vmatprep.subr.mxu0 0.0
        %2335 = vmatpush1.msra.mxu0 0.0
        %2336 = vmatprep.subr.mxu0 0.0
        %2337 = vmatpush1.msra.mxu0 0.0
        %2338 = vmatprep.subr.mxu0 0.0
        %2339 = vmatpush1.msra.mxu0 0.0
        %2340 = vmatprep.subr.mxu0 0.0
        %2341 = vmatpush1.msra.mxu0 0.0
        %2342 = vmatprep.subr.mxu0 0.0
        %2343 = vmatpush1.msra.mxu0 0.0
        %2344 = vmatprep.subr.mxu0 0.0
        %2345 = vmatpush1.msra.mxu0 0.0
        %2346 = vmatprep.subr.mxu0 0.0
        %2347 = vmatpush1.msra.mxu0 0.0
        %2348 = vmatprep.subr.mxu0 0.0
        %2349 = vmatpush1.msra.mxu0 0.0
        %2350 = vmatprep.subr.mxu0 0.0
        %2351 = vmatpush1.msra.mxu0 0.0
        %2352 = vmatprep.subr.mxu0 0.0
        %2353 = vmatpush1.msra.mxu0 0.0
        %2354 = vmatprep.subr.mxu0 0.0
        %2355 = vmatpush1.msra.mxu0 0.0
        %2356 = vmatprep.subr.mxu0 0.0
        %2357 = vmatpush1.msra.mxu0 0.0
        %2358 = vmatprep.subr.mxu0 0.0
        %2359 = vmatpush1.msra.mxu0 0.0
        %2360 = vmatprep.subr.mxu0 0.0
        %2361 = vmatpush1.msra.mxu0 0.0
        %2362 = vmatprep.subr.mxu0 0.0
        %2363 = vmatpush1.msra.mxu0 0.0
        %2364 = vmatprep.subr.mxu0 0.0
        %2365 = vmatpush1.msra.mxu0 0.0
        %2366 = vmatprep.subr.mxu0 0.0
        %2367 = vmatpush1.msra.mxu0 0.0
        %2368 = vmatprep.subr.mxu0 0.0
        %2369 = vmatpush1.msra.mxu0 0.0
        %2370 = vmatprep.subr.mxu0 0.0
        %2371 = vmatpush1.msra.mxu0 0.0
        %2372 = vmatprep.subr.mxu0 0.0
        %2373 = vmatpush1.msra.mxu0 0.0
        %2374 = vmatprep.subr.mxu0 0.0
        %2375 = vmatpush1.msra.mxu0 0.0
        %2376 = vmatprep.subr.mxu0 0.0
        %2377 = vmatpush1.msra.mxu0 0.0
        %2378 = vmatprep.subr.mxu0 0.0
        %2379 = vmatpush1.msra.mxu0 0.0
        %2380 = vmatprep.subr.mxu0 0.0
        %2381 = vmatpush1.msra.mxu0 0.0
        %2382 = vmatprep.mubr.f32.mxu0 0.0
        %2383 = vmatmul.mubr.f32.gmra.mrb[0].mxu0 %v2307
        %v2384 = vpop.f32.mrb[0].mxu0
        %v2385 = vadd.f32 0.0, %v2384
        %v2386 = vpop.f32.mrb[0].mxu0
        %v2387 = vadd.f32 0.0, %v2386
        %2388 = vmatprep.mubr.f32.mxu0 0.0
        %2389 = vmatmul.mubr.f32.gmra.mrb[0].mxu0 %v2310
        %v2390 = vpop.f32.mrb[0].mxu0
        %v2391 = vadd.f32 0.0, %v2390
        %v2392 = vpop.f32.mrb[0].mxu0
        %v2393 = vadd.f32 0.0, %v2392
        %2394 = vdwg.mxu0
        %v2395 = vadd.f32 %v2291, %v2385
        %v2396 = vadd.f32 %v2292, %v2387
        %v2397 = vadd.f32 %v2293, %v2391
        %v2398 = vadd.f32 %v2294, %v2393
        %2399 = vrot.lane.b32.xlu0 %v1710, 127
        %v2400 = vpop.permute.xlu0 %2399
        %2401 = vrot.lane.b32.xlu0 %v1713, 127
        %v2402 = vpop.permute.xlu0 %2401
        %2403 = vrot.lane.b32.xlu0 %v1716, 127
        %v2404 = vpop.permute.xlu0 %2403
        %2405 = vrot.lane.b32.xlu0 %v1719, 127
        %v2406 = vpop.permute.xlu0 %2405
        %2407 = vrot.lane.b32.xlu0 %v1711, 127
        %v2408 = vpop.permute.xlu0 %2407
        %2409 = vrot.lane.b32.xlu0 %v1714, 127
        %v2410 = vpop.permute.xlu0 %2409
        %2411 = vrot.lane.b32.xlu0 %v1717, 127
        %v2412 = vpop.permute.xlu0 %2411
        %2413 = vrot.lane.b32.xlu0 %v1720, 127
        %v2414 = vpop.permute.xlu0 %2413
        %2415 = vrot.lane.b32.xlu0 %v1712, 127
        %v2416 = vpop.permute.xlu0 %2415
        %2417 = vrot.lane.b32.xlu0 %v1715, 127
        %v2418 = vpop.permute.xlu0 %2417
        %2419 = vrot.lane.b32.xlu0 %v1718, 127
        %v2420 = vpop.permute.xlu0 %2419
        %2421 = vrot.lane.b32.xlu0 %v1721, 127
        %v2422 = vpop.permute.xlu0 %2421
        %v2423 = vsel %vm1106, %v2408, %v2416
        %v2424 = vsel %vm1106, %v2410, %v2418
        %v2425 = vsel %vm1106, %v2412, %v2420
        %v2426 = vsel %vm1106, %v2414, %v2422
        %v2427 = vsel %vm1106, %v2400, %v2408
        %v2428 = vsel %vm1106, %v2402, %v2410
        %v2429 = vsel %vm1106, %v2404, %v2412
        %v2430 = vsel %vm1106, %v2406, %v2414
        %v2431 = vmul.f32 %v2427, %v2048
        %v2432 = vmul.f32 %v2423, %v2052
        %v2433 = vmul.f32 %v2428, %v2048
        %v2434 = vmul.f32 %v2424, %v2052
        %v2435 = vmul.f32 %v2429, %v2048
        %v2436 = vmul.f32 %v2425, %v2052
        %v2437 = vmul.f32 %v2430, %v2048
        %v2438 = vmul.f32 %v2426, %v2052
        %s2439 = scalar_lea.vmem %s4, 80
        %v2440 = vld [vmem:[%s2439] sm:$0xff]
        %v2441 = vld [vmem:[%s2439 + $0x8] sm:$0x1f]
        %v2443 = vsel %vm1831, %v2440, 0
        %v2446 = vsel %vm1831, %v2441, 0
        %v2449 = vsel %vm1838, %v2437, 0
        %v2452 = vsel %vm1838, %v2438, 0
        %2454 = vmatprep.subr.mxu0 %v2432
        %2455 = vmatpush1.msra.mxu0 %v2431
        %2456 = vmatprep.subr.mxu0 %v2434
        %2457 = vmatpush1.msra.mxu0 %v2433
        %2458 = vmatprep.subr.mxu0 %v2436
        %2459 = vmatpush1.msra.mxu0 %v2435
        %2460 = vmatprep.subr.mxu0 %v2452
        %2461 = vmatpush1.msra.mxu0 %v2449
        %2462 = vmatprep.subr.mxu0 0.0
        %2463 = vmatpush1.msra.mxu0 0.0
        %2464 = vmatprep.subr.mxu0 0.0
        %2465 = vmatpush1.msra.mxu0 0.0
        %2466 = vmatprep.subr.mxu0 0.0
        %2467 = vmatpush1.msra.mxu0 0.0
        %2468 = vmatprep.subr.mxu0 0.0
        %2469 = vmatpush1.msra.mxu0 0.0
        %2470 = vmatprep.subr.mxu0 0.0
        %2471 = vmatpush1.msra.mxu0 0.0
        %2472 = vmatprep.subr.mxu0 0.0
        %2473 = vmatpush1.msra.mxu0 0.0
        %2474 = vmatprep.subr.mxu0 0.0
        %2475 = vmatpush1.msra.mxu0 0.0
        %2476 = vmatprep.subr.mxu0 0.0
        %2477 = vmatpush1.msra.mxu0 0.0
        %2478 = vmatprep.subr.mxu0 0.0
        %2479 = vmatpush1.msra.mxu0 0.0
        %2480 = vmatprep.subr.mxu0 0.0
        %2481 = vmatpush1.msra.mxu0 0.0
        %2482 = vmatprep.subr.mxu0 0.0
        %2483 = vmatpush1.msra.mxu0 0.0
        %2484 = vmatprep.subr.mxu0 0.0
        %2485 = vmatpush1.msra.mxu0 0.0
        %2486 = vmatprep.subr.mxu0 0.0
        %2487 = vmatpush1.msra.mxu0 0.0
        %2488 = vmatprep.subr.mxu0 0.0
        %2489 = vmatpush1.msra.mxu0 0.0
        %2490 = vmatprep.subr.mxu0 0.0
        %2491 = vmatpush1.msra.mxu0 0.0
        %2492 = vmatprep.subr.mxu0 0.0
        %2493 = vmatpush1.msra.mxu0 0.0
        %2494 = vmatprep.subr.mxu0 0.0
        %2495 = vmatpush1.msra.mxu0 0.0
        %2496 = vmatprep.subr.mxu0 0.0
        %2497 = vmatpush1.msra.mxu0 0.0
        %2498 = vmatprep.subr.mxu0 0.0
        %2499 = vmatpush1.msra.mxu0 0.0
        %2500 = vmatprep.subr.mxu0 0.0
        %2501 = vmatpush1.msra.mxu0 0.0
        %2502 = vmatprep.subr.mxu0 0.0
        %2503 = vmatpush1.msra.mxu0 0.0
        %2504 = vmatprep.subr.mxu0 0.0
        %2505 = vmatpush1.msra.mxu0 0.0
        %2506 = vmatprep.subr.mxu0 0.0
        %2507 = vmatpush1.msra.mxu0 0.0
        %2508 = vmatprep.subr.mxu0 0.0
        %2509 = vmatpush1.msra.mxu0 0.0
        %2510 = vmatprep.subr.mxu0 0.0
        %2511 = vmatpush1.msra.mxu0 0.0
        %2512 = vmatprep.subr.mxu0 0.0
        %2513 = vmatpush1.msra.mxu0 0.0
        %2514 = vmatprep.subr.mxu0 0.0
        %2515 = vmatpush1.msra.mxu0 0.0
        %2516 = vmatprep.subr.mxu0 0.0
        %2517 = vmatpush1.msra.mxu0 0.0
        %2518 = vmatprep.mubr.f32.mxu0 0.0
        %2519 = vmatmul.mubr.f32.gmra.mrb[0].mxu0 %v2443
        %v2520 = vpop.f32.mrb[0].mxu0
        %v2521 = vadd.f32 0.0, %v2520
        %v2522 = vpop.f32.mrb[0].mxu0
        %v2523 = vadd.f32 0.0, %v2522
        %2524 = vmatprep.mubr.f32.mxu0 0.0
        %2525 = vmatmul.mubr.f32.gmra.mrb[0].mxu0 %v2446
        %v2526 = vpop.f32.mrb[0].mxu0
        %v2527 = vadd.f32 0.0, %v2526
        %v2528 = vpop.f32.mrb[0].mxu0
        %v2529 = vadd.f32 0.0, %v2528
        %2530 = vdwg.mxu0
        %v2531 = vadd.f32 %v2395, %v2521
        %v2532 = vadd.f32 %v2396, %v2523
        %v2533 = vadd.f32 %v2397, %v2527
        %v2534 = vadd.f32 %v2398, %v2529
        %2535 = vrot.lane.b32.xlu0 %v1710, 113
        %v2536 = vpop.permute.xlu0 %2535
        %2537 = vrot.lane.b32.xlu0 %v1713, 113
        %v2538 = vpop.permute.xlu0 %2537
        %2539 = vrot.lane.b32.xlu0 %v1716, 113
        %v2540 = vpop.permute.xlu0 %2539
        %2541 = vrot.lane.b32.xlu0 %v1719, 113
        %v2542 = vpop.permute.xlu0 %2541
        %2543 = vrot.lane.b32.xlu0 %v1711, 113
        %v2544 = vpop.permute.xlu0 %2543
        %2545 = vrot.lane.b32.xlu0 %v1714, 113
        %v2546 = vpop.permute.xlu0 %2545
        %2547 = vrot.lane.b32.xlu0 %v1717, 113
        %v2548 = vpop.permute.xlu0 %2547
        %2549 = vrot.lane.b32.xlu0 %v1720, 113
        %v2550 = vpop.permute.xlu0 %2549
        %2551 = vrot.lane.b32.xlu0 %v1712, 113
        %v2552 = vpop.permute.xlu0 %2551
        %2553 = vrot.lane.b32.xlu0 %v1715, 113
        %v2554 = vpop.permute.xlu0 %2553
        %2555 = vrot.lane.b32.xlu0 %v1718, 113
        %v2556 = vpop.permute.xlu0 %2555
        %2557 = vrot.lane.b32.xlu0 %v1721, 113
        %v2558 = vpop.permute.xlu0 %2557
        %v2559 = vsel %vm1247, %v2544, %v2552
        %v2560 = vsel %vm1247, %v2546, %v2554
        %v2561 = vsel %vm1247, %v2548, %v2556
        %v2562 = vsel %vm1247, %v2550, %v2558
        %v2563 = vsel %vm1247, %v2536, %v2544
        %v2564 = vsel %vm1247, %v2538, %v2546
        %v2565 = vsel %vm1247, %v2540, %v2548
        %v2566 = vsel %vm1247, %v2542, %v2550
        %v2567 = vmul.f32 %v2563, %v1759
        %v2568 = vmul.f32 %v2559, %v1763
        %v2569 = vmul.f32 %v2564, %v1759
        %v2570 = vmul.f32 %v2560, %v1763
        %v2571 = vmul.f32 %v2565, %v1759
        %v2572 = vmul.f32 %v2561, %v1763
        %v2573 = vmul.f32 %v2566, %v1759
        %v2574 = vmul.f32 %v2562, %v1763
        %s2575 = scalar_lea.vmem %s4, 96
        %v2576 = vld [vmem:[%s2575] sm:$0xff]
        %v2577 = vld [vmem:[%s2575 + $0x8] sm:$0x1f]
        %v2579 = vsel %vm1831, %v2576, 0
        %v2582 = vsel %vm1831, %v2577, 0
        %v2585 = vsel %vm1838, %v2573, 0
        %v2588 = vsel %vm1838, %v2574, 0
        %2590 = vmatprep.subr.mxu0 %v2568
        %2591 = vmatpush1.msra.mxu0 %v2567
        %2592 = vmatprep.subr.mxu0 %v2570
        %2593 = vmatpush1.msra.mxu0 %v2569
        %2594 = vmatprep.subr.mxu0 %v2572
        %2595 = vmatpush1.msra.mxu0 %v2571
        %2596 = vmatprep.subr.mxu0 %v2588
        %2597 = vmatpush1.msra.mxu0 %v2585
        %2598 = vmatprep.subr.mxu0 0.0
        %2599 = vmatpush1.msra.mxu0 0.0
        %2600 = vmatprep.subr.mxu0 0.0
        %2601 = vmatpush1.msra.mxu0 0.0
        %2602 = vmatprep.subr.mxu0 0.0
        %2603 = vmatpush1.msra.mxu0 0.0
        %2604 = vmatprep.subr.mxu0 0.0
        %2605 = vmatpush1.msra.mxu0 0.0
        %2606 = vmatprep.subr.mxu0 0.0
        %2607 = vmatpush1.msra.mxu0 0.0
        %2608 = vmatprep.subr.mxu0 0.0
        %2609 = vmatpush1.msra.mxu0 0.0
        %2610 = vmatprep.subr.mxu0 0.0
        %2611 = vmatpush1.msra.mxu0 0.0
        %2612 = vmatprep.subr.mxu0 0.0
        %2613 = vmatpush1.msra.mxu0 0.0
        %2614 = vmatprep.subr.mxu0 0.0
        %2615 = vmatpush1.msra.mxu0 0.0
        %2616 = vmatprep.subr.mxu0 0.0
        %2617 = vmatpush1.msra.mxu0 0.0
        %2618 = vmatprep.subr.mxu0 0.0
        %2619 = vmatpush1.msra.mxu0 0.0
        %2620 = vmatprep.subr.mxu0 0.0
        %2621 = vmatpush1.msra.mxu0 0.0
        %2622 = vmatprep.subr.mxu0 0.0
        %2623 = vmatpush1.msra.mxu0 0.0
        %2624 = vmatprep.subr.mxu0 0.0
        %2625 = vmatpush1.msra.mxu0 0.0
        %2626 = vmatprep.subr.mxu0 0.0
        %2627 = vmatpush1.msra.mxu0 0.0
        %2628 = vmatprep.subr.mxu0 0.0
        %2629 = vmatpush1.msra.mxu0 0.0
        %2630 = vmatprep.subr.mxu0 0.0
        %2631 = vmatpush1.msra.mxu0 0.0
        %2632 = vmatprep.subr.mxu0 0.0
        %2633 = vmatpush1.msra.mxu0 0.0
        %2634 = vmatprep.subr.mxu0 0.0
        %2635 = vmatpush1.msra.mxu0 0.0
        %2636 = vmatprep.subr.mxu0 0.0
        %2637 = vmatpush1.msra.mxu0 0.0
        %2638 = vmatprep.subr.mxu0 0.0
        %2639 = vmatpush1.msra.mxu0 0.0
        %2640 = vmatprep.subr.mxu0 0.0
        %2641 = vmatpush1.msra.mxu0 0.0
        %2642 = vmatprep.subr.mxu0 0.0
        %2643 = vmatpush1.msra.mxu0 0.0
        %2644 = vmatprep.subr.mxu0 0.0
        %2645 = vmatpush1.msra.mxu0 0.0
        %2646 = vmatprep.subr.mxu0 0.0
        %2647 = vmatpush1.msra.mxu0 0.0
        %2648 = vmatprep.subr.mxu0 0.0
        %2649 = vmatpush1.msra.mxu0 0.0
        %2650 = vmatprep.subr.mxu0 0.0
        %2651 = vmatpush1.msra.mxu0 0.0
        %2652 = vmatprep.subr.mxu0 0.0
        %2653 = vmatpush1.msra.mxu0 0.0
        %2654 = vmatprep.mubr.f32.mxu0 0.0
        %2655 = vmatmul.mubr.f32.gmra.mrb[0].mxu0 %v2579
        %v2656 = vpop.f32.mrb[0].mxu0
        %v2657 = vadd.f32 0.0, %v2656
        %v2658 = vpop.f32.mrb[0].mxu0
        %v2659 = vadd.f32 0.0, %v2658
        %2660 = vmatprep.mubr.f32.mxu0 0.0
        %2661 = vmatmul.mubr.f32.gmra.mrb[0].mxu0 %v2582
        %v2662 = vpop.f32.mrb[0].mxu0
        %v2663 = vadd.f32 0.0, %v2662
        %v2664 = vpop.f32.mrb[0].mxu0
        %v2665 = vadd.f32 0.0, %v2664
        %2666 = vdwg.mxu0
        %v2667 = vadd.f32 %v2531, %v2657
        %v2668 = vadd.f32 %v2532, %v2659
        %v2669 = vadd.f32 %v2533, %v2663
        %v2670 = vadd.f32 %v2534, %v2665
        %2671 = vrot.lane.b32.xlu0 %v1710, 112
        %v2672 = vpop.permute.xlu0 %2671
        %2673 = vrot.lane.b32.xlu0 %v1713, 112
        %v2674 = vpop.permute.xlu0 %2673
        %2675 = vrot.lane.b32.xlu0 %v1716, 112
        %v2676 = vpop.permute.xlu0 %2675
        %2677 = vrot.lane.b32.xlu0 %v1719, 112
        %v2678 = vpop.permute.xlu0 %2677
        %2679 = vrot.lane.b32.xlu0 %v1711, 112
        %v2680 = vpop.permute.xlu0 %2679
        %2681 = vrot.lane.b32.xlu0 %v1714, 112
        %v2682 = vpop.permute.xlu0 %2681
        %2683 = vrot.lane.b32.xlu0 %v1717, 112
        %v2684 = vpop.permute.xlu0 %2683
        %2685 = vrot.lane.b32.xlu0 %v1720, 112
        %v2686 = vpop.permute.xlu0 %2685
        %2687 = vrot.lane.b32.xlu0 %v1712, 112
        %v2688 = vpop.permute.xlu0 %2687
        %2689 = vrot.lane.b32.xlu0 %v1715, 112
        %v2690 = vpop.permute.xlu0 %2689
        %2691 = vrot.lane.b32.xlu0 %v1718, 112
        %v2692 = vpop.permute.xlu0 %2691
        %2693 = vrot.lane.b32.xlu0 %v1721, 112
        %v2694 = vpop.permute.xlu0 %2693
        %v2695 = vsel %vm1388, %v2680, %v2688
        %v2696 = vsel %vm1388, %v2682, %v2690
        %v2697 = vsel %vm1388, %v2684, %v2692
        %v2698 = vsel %vm1388, %v2686, %v2694
        %v2699 = vsel %vm1388, %v2672, %v2680
        %v2700 = vsel %vm1388, %v2674, %v2682
        %v2701 = vsel %vm1388, %v2676, %v2684
        %v2702 = vsel %vm1388, %v2678, %v2686
        %v2703 = vmul.f32 %v2699, %v1813
        %v2704 = vmul.f32 %v2695, %v1817
        %v2705 = vmul.f32 %v2700, %v1813
        %v2706 = vmul.f32 %v2696, %v1817
        %v2707 = vmul.f32 %v2701, %v1813
        %v2708 = vmul.f32 %v2697, %v1817
        %v2709 = vmul.f32 %v2702, %v1813
        %v2710 = vmul.f32 %v2698, %v1817
        %s2711 = scalar_lea.vmem %s4, 112
        %v2712 = vld [vmem:[%s2711] sm:$0xff]
        %v2713 = vld [vmem:[%s2711 + $0x8] sm:$0x1f]
        %v2715 = vsel %vm1831, %v2712, 0
        %v2718 = vsel %vm1831, %v2713, 0
        %v2721 = vsel %vm1838, %v2709, 0
        %v2724 = vsel %vm1838, %v2710, 0
        %2726 = vmatprep.subr.mxu0 %v2704
        %2727 = vmatpush1.msra.mxu0 %v2703
        %2728 = vmatprep.subr.mxu0 %v2706
        %2729 = vmatpush1.msra.mxu0 %v2705
        %2730 = vmatprep.subr.mxu0 %v2708
        %2731 = vmatpush1.msra.mxu0 %v2707
        %2732 = vmatprep.subr.mxu0 %v2724
        %2733 = vmatpush1.msra.mxu0 %v2721
        %2734 = vmatprep.subr.mxu0 0.0
        %2735 = vmatpush1.msra.mxu0 0.0
        %2736 = vmatprep.subr.mxu0 0.0
        %2737 = vmatpush1.msra.mxu0 0.0
        %2738 = vmatprep.subr.mxu0 0.0
        %2739 = vmatpush1.msra.mxu0 0.0
        %2740 = vmatprep.subr.mxu0 0.0
        %2741 = vmatpush1.msra.mxu0 0.0
        %2742 = vmatprep.subr.mxu0 0.0
        %2743 = vmatpush1.msra.mxu0 0.0
        %2744 = vmatprep.subr.mxu0 0.0
        %2745 = vmatpush1.msra.mxu0 0.0
        %2746 = vmatprep.subr.mxu0 0.0
        %2747 = vmatpush1.msra.mxu0 0.0
        %2748 = vmatprep.subr.mxu0 0.0
        %2749 = vmatpush1.msra.mxu0 0.0
        %2750 = vmatprep.subr.mxu0 0.0
        %2751 = vmatpush1.msra.mxu0 0.0
        %2752 = vmatprep.subr.mxu0 0.0
        %2753 = vmatpush1.msra.mxu0 0.0
        %2754 = vmatprep.subr.mxu0 0.0
        %2755 = vmatpush1.msra.mxu0 0.0
        %2756 = vmatprep.subr.mxu0 0.0
        %2757 = vmatpush1.msra.mxu0 0.0
        %2758 = vmatprep.subr.mxu0 0.0
        %2759 = vmatpush1.msra.mxu0 0.0
        %2760 = vmatprep.subr.mxu0 0.0
        %2761 = vmatpush1.msra.mxu0 0.0
        %2762 = vmatprep.subr.mxu0 0.0
        %2763 = vmatpush1.msra.mxu0 0.0
        %2764 = vmatprep.subr.mxu0 0.0
        %2765 = vmatpush1.msra.mxu0 0.0
        %2766 = vmatprep.subr.mxu0 0.0
        %2767 = vmatpush1.msra.mxu0 0.0
        %2768 = vmatprep.subr.mxu0 0.0
        %2769 = vmatpush1.msra.mxu0 0.0
        %2770 = vmatprep.subr.mxu0 0.0
        %2771 = vmatpush1.msra.mxu0 0.0
        %2772 = vmatprep.subr.mxu0 0.0
        %2773 = vmatpush1.msra.mxu0 0.0
        %2774 = vmatprep.subr.mxu0 0.0
        %2775 = vmatpush1.msra.mxu0 0.0
        %2776 = vmatprep.subr.mxu0 0.0
        %2777 = vmatpush1.msra.mxu0 0.0
        %2778 = vmatprep.subr.mxu0 0.0
        %2779 = vmatpush1.msra.mxu0 0.0
        %2780 = vmatprep.subr.mxu0 0.0
        %2781 = vmatpush1.msra.mxu0 0.0
        %2782 = vmatprep.subr.mxu0 0.0
        %2783 = vmatpush1.msra.mxu0 0.0
        %2784 = vmatprep.subr.mxu0 0.0
        %2785 = vmatpush1.msra.mxu0 0.0
        %2786 = vmatprep.subr.mxu0 0.0
        %2787 = vmatpush1.msra.mxu0 0.0
        %2788 = vmatprep.subr.mxu0 0.0
        %2789 = vmatpush1.msra.mxu0 0.0
        %2790 = vmatprep.mubr.f32.mxu0 0.0
        %2791 = vmatmul.mubr.f32.gmra.mrb[0].mxu0 %v2715
        %v2792 = vpop.f32.mrb[0].mxu0
        %v2793 = vadd.f32 0.0, %v2792
        %v2794 = vpop.f32.mrb[0].mxu0
        %v2795 = vadd.f32 0.0, %v2794
        %2796 = vmatprep.mubr.f32.mxu0 0.0
        %2797 = vmatmul.mubr.f32.gmra.mrb[0].mxu0 %v2718
        %v2798 = vpop.f32.mrb[0].mxu0
        %v2799 = vadd.f32 0.0, %v2798
        %v2800 = vpop.f32.mrb[0].mxu0
        %v2801 = vadd.f32 0.0, %v2800
        %2802 = vdwg.mxu0
        %v2803 = vadd.f32 %v2667, %v2793
        %v2804 = vadd.f32 %v2668, %v2795
        %v2805 = vadd.f32 %v2669, %v2799
        %v2806 = vadd.f32 %v2670, %v2801
        %2807 = vrot.lane.b32.xlu0 %v1710, 111
        %v2808 = vpop.permute.xlu0 %2807
        %2809 = vrot.lane.b32.xlu0 %v1713, 111
        %v2810 = vpop.permute.xlu0 %2809
        %2811 = vrot.lane.b32.xlu0 %v1716, 111
        %v2812 = vpop.permute.xlu0 %2811
        %2813 = vrot.lane.b32.xlu0 %v1719, 111
        %v2814 = vpop.permute.xlu0 %2813
        %2815 = vrot.lane.b32.xlu0 %v1711, 111
        %v2816 = vpop.permute.xlu0 %2815
        %2817 = vrot.lane.b32.xlu0 %v1714, 111
        %v2818 = vpop.permute.xlu0 %2817
        %2819 = vrot.lane.b32.xlu0 %v1717, 111
        %v2820 = vpop.permute.xlu0 %2819
        %2821 = vrot.lane.b32.xlu0 %v1720, 111
        %v2822 = vpop.permute.xlu0 %2821
        %2823 = vrot.lane.b32.xlu0 %v1712, 111
        %v2824 = vpop.permute.xlu0 %2823
        %2825 = vrot.lane.b32.xlu0 %v1715, 111
        %v2826 = vpop.permute.xlu0 %2825
        %2827 = vrot.lane.b32.xlu0 %v1718, 111
        %v2828 = vpop.permute.xlu0 %2827
        %2829 = vrot.lane.b32.xlu0 %v1721, 111
        %v2830 = vpop.permute.xlu0 %2829
        %v2831 = vsel %vm1529, %v2816, %v2824
        %v2832 = vsel %vm1529, %v2818, %v2826
        %v2833 = vsel %vm1529, %v2820, %v2828
        %v2834 = vsel %vm1529, %v2822, %v2830
        %v2835 = vsel %vm1529, %v2808, %v2816
        %v2836 = vsel %vm1529, %v2810, %v2818
        %v2837 = vsel %vm1529, %v2812, %v2820
        %v2838 = vsel %vm1529, %v2814, %v2822
        %v2839 = vmul.f32 %v2835, %v2048
        %v2840 = vmul.f32 %v2831, %v2052
        %v2841 = vmul.f32 %v2836, %v2048
        %v2842 = vmul.f32 %v2832, %v2052
        %v2843 = vmul.f32 %v2837, %v2048
        %v2844 = vmul.f32 %v2833, %v2052
        %v2845 = vmul.f32 %v2838, %v2048
        %v2846 = vmul.f32 %v2834, %v2052
        %s2847 = scalar_lea.vmem %s4, 128
        %v2848 = vld [vmem:[%s2847] sm:$0xff]
        %v2849 = vld [vmem:[%s2847 + $0x8] sm:$0x1f]
        %v2851 = vsel %vm1831, %v2848, 0
        %v2854 = vsel %vm1831, %v2849, 0
        %v2857 = vsel %vm1838, %v2845, 0
        %v2860 = vsel %vm1838, %v2846, 0
        %2862 = vmatprep.subr.mxu0 %v2840
        %2863 = vmatpush1.msra.mxu0 %v2839
        %2864 = vmatprep.subr.mxu0 %v2842
        %2865 = vmatpush1.msra.mxu0 %v2841
        %2866 = vmatprep.subr.mxu0 %v2844
        %2867 = vmatpush1.msra.mxu0 %v2843
        %2868 = vmatprep.subr.mxu0 %v2860
        %2869 = vmatpush1.msra.mxu0 %v2857
        %2870 = vmatprep.subr.mxu0 0.0
        %2871 = vmatpush1.msra.mxu0 0.0
        %2872 = vmatprep.subr.mxu0 0.0
        %2873 = vmatpush1.msra.mxu0 0.0
        %2874 = vmatprep.subr.mxu0 0.0
        %2875 = vmatpush1.msra.mxu0 0.0
        %2876 = vmatprep.subr.mxu0 0.0
        %2877 = vmatpush1.msra.mxu0 0.0
        %2878 = vmatprep.subr.mxu0 0.0
        %2879 = vmatpush1.msra.mxu0 0.0
        %2880 = vmatprep.subr.mxu0 0.0
        %2881 = vmatpush1.msra.mxu0 0.0
        %2882 = vmatprep.subr.mxu0 0.0
        %2883 = vmatpush1.msra.mxu0 0.0
        %2884 = vmatprep.subr.mxu0 0.0
        %2885 = vmatpush1.msra.mxu0 0.0
        %2886 = vmatprep.subr.mxu0 0.0
        %2887 = vmatpush1.msra.mxu0 0.0
        %2888 = vmatprep.subr.mxu0 0.0
        %2889 = vmatpush1.msra.mxu0 0.0
        %2890 = vmatprep.subr.mxu0 0.0
        %2891 = vmatpush1.msra.mxu0 0.0
        %2892 = vmatprep.subr.mxu0 0.0
        %2893 = vmatpush1.msra.mxu0 0.0
        %2894 = vmatprep.subr.mxu0 0.0
        %2895 = vmatpush1.msra.mxu0 0.0
        %2896 = vmatprep.subr.mxu0 0.0
        %2897 = vmatpush1.msra.mxu0 0.0
        %2898 = vmatprep.subr.mxu0 0.0
        %2899 = vmatpush1.msra.mxu0 0.0
        %2900 = vmatprep.subr.mxu0 0.0
        %2901 = vmatpush1.msra.mxu0 0.0
        %2902 = vmatprep.subr.mxu0 0.0
        %2903 = vmatpush1.msra.mxu0 0.0
        %2904 = vmatprep.subr.mxu0 0.0
        %2905 = vmatpush1.msra.mxu0 0.0
        %2906 = vmatprep.subr.mxu0 0.0
        %2907 = vmatpush1.msra.mxu0 0.0
        %2908 = vmatprep.subr.mxu0 0.0
        %2909 = vmatpush1.msra.mxu0 0.0
        %2910 = vmatprep.subr.mxu0 0.0
        %2911 = vmatpush1.msra.mxu0 0.0
        %2912 = vmatprep.subr.mxu0 0.0
        %2913 = vmatpush1.msra.mxu0 0.0
        %2914 = vmatprep.subr.mxu0 0.0
        %2915 = vmatpush1.msra.mxu0 0.0
        %2916 = vmatprep.subr.mxu0 0.0
        %2917 = vmatpush1.msra.mxu0 0.0
        %2918 = vmatprep.subr.mxu0 0.0
        %2919 = vmatpush1.msra.mxu0 0.0
        %2920 = vmatprep.subr.mxu0 0.0
        %2921 = vmatpush1.msra.mxu0 0.0
        %2922 = vmatprep.subr.mxu0 0.0
        %2923 = vmatpush1.msra.mxu0 0.0
        %2924 = vmatprep.subr.mxu0 0.0
        %2925 = vmatpush1.msra.mxu0 0.0
        %2926 = vmatprep.mubr.f32.mxu0 0.0
        %2927 = vmatmul.mubr.f32.gmra.mrb[0].mxu0 %v2851
        %v2928 = vpop.f32.mrb[0].mxu0
        %v2929 = vadd.f32 0.0, %v2928
        %v2930 = vpop.f32.mrb[0].mxu0
        %v2931 = vadd.f32 0.0, %v2930
        %2932 = vmatprep.mubr.f32.mxu0 0.0
        %2933 = vmatmul.mubr.f32.gmra.mrb[0].mxu0 %v2854
        %v2934 = vpop.f32.mrb[0].mxu0
        %v2935 = vadd.f32 0.0, %v2934
        %v2936 = vpop.f32.mrb[0].mxu0
        %v2937 = vadd.f32 0.0, %v2936
        %2938 = vdwg.mxu0
        %v2939 = vadd.f32 %v2803, %v2929
        %v2940 = vadd.f32 %v2804, %v2931
        %v2941 = vadd.f32 %v2805, %v2935
        %v2942 = vadd.f32 %v2806, %v2937
        %v2943 = vld [vmem:[%s5] sm:$0xff]
        %v2944 = vld [vmem:[%s5 + $0x8] sm:$0x1f]
        %2946 = vset.pattern.permute.xlu0 0
        %2947 = vperm.xlu0 %2946, %v2943
        %v2948 = vpop.permute.xlu0 %2947
        %2951 = vset.pattern.permute.xlu0 0
        %2952 = vperm.xlu0 %2951, %v2944
        %v2953 = vpop.permute.xlu0 %2952
        %v2955 = vadd.f32 %v2939, %v2948
        %v2956 = vadd.f32 %v2940, %v2948
        %v2957 = vadd.f32 %v2941, %v2953
        %v2958 = vadd.f32 %v2942, %v2953
        %v2959 = vld [vmem:[%s8] sm:$0xff]
        %v2960 = vld [vmem:[%s8 + $0x8] sm:$0x1f]
        %v2961 = vmax.f32 %v2959, 0.0
        %v2962 = vmax.f32 %v2960, 0.0
        %2964 = vset.pattern.permute.xlu0 0
        %2965 = vperm.xlu0 %2964, %v2961
        %v2966 = vpop.permute.xlu0 %2965
        %2969 = vset.pattern.permute.xlu0 0
        %2970 = vperm.xlu0 %2969, %v2962
        %v2971 = vpop.permute.xlu0 %2970
        %v2973 = vmul.f32 %v2966, %v2955
        %v2974 = vmul.f32 %v2966, %v2956
        %v2975 = vmul.f32 %v2971, %v2957
        %v2976 = vmul.f32 %v2971, %v2958
        %v2977 = vmul.f32 %v2973, %v2955
        %v2978 = vmul.f32 %v2974, %v2956
        %v2979 = vmul.f32 %v2975, %v2957
        %v2980 = vmul.f32 %v2976, %v2958
        %vm2981 = vcmask 1044480
        %v2982 = vsel %vm2981, %v2979, 0.0
        %v2983 = vadd.f32 %v2977, %v2982
        %v2984 = vrot.slane %v2983, 4
        %v2985 = vadd.f32 %v2983, %v2984
        %v2986 = vrot.slane %v2985, 2
        %v2987 = vadd.f32 %v2985, %v2986
        %v2988 = vrot.slane %v2987, 1
        %v2989 = vadd.f32 %v2987, %v2988
        %v2990 = vsel %vm2981, %v2980, 0.0
        %v2991 = vadd.f32 %v2978, %v2990
        %v2992 = vrot.slane %v2991, 4
        %v2993 = vadd.f32 %v2991, %v2992
        %v2994 = vrot.slane %v2993, 2
        %v2995 = vadd.f32 %v2993, %v2994
        %v2996 = vrot.slane %v2995, 1
        %v2997 = vadd.f32 %v2995, %v2996
        %2998 = vst [vmem:[#allocation3] sm:$0xff] %v2955
        %2999 = vst [vmem:[#allocation3 + $0x8] sm:$0xff] %v2956
        %3000 = vst [vmem:[#allocation3 + $0x18] sm:$0x1f] %v2957
        %3001 = vst [vmem:[#allocation3 + $0x20] sm:$0x1f] %v2958
        %v3002 = vlaneseq
        %vm3003 = vcmp.ge.s32.totalorder %v3002, 0
        %vm3004 = vcmp.lt.s32.totalorder %v3002, 256
        %vm3005 = vmand %vm3003, %vm3004
        %s3006 = scalar_lea.vmem [#allocation3], 29
        %3007 = vst.msk [vmem:[%s3006] ss:$8 sm:$0x3] %vm3005, 1.0
        %3008 = vst.msk [vmem:[%s3006] ss:$8 sm:$0x0] %vm3005, 1.0
        %v3011 = vcombine.low %v2989, %v2997
        %v3013 = vunpack.c.l.s4 1966171168
        %v3014 = vunpack.c.0.s8 %v3013
        %v3015 = vlaneseq
        %v3016 = vshrl.u32 %v3015, 7
        %v3017 = vsub.s32 %v3014, %v3016
        %v3018 = vrot.slane %v3011, %v3017
        %v3020 = vunpack.c.l.s4 1966171168
        %v3021 = vunpack.c.0.s8 %v3020
        %v3022 = vlaneseq
        %v3023 = vshrl.u32 %v3022, 7
        %v3024 = vsub.s32 %v3021, %v3023
        %v3025 = vrot.slane %v3018, %v3024
        %s3027 = scalar_lea.vmem [#allocation3], 30
        %3028 = vst.msk [vmem:[%s3027] ss:$8 sm:$0x3] %vm3005, %v3025
        %3029 = vst.msk [vmem:[%s3027] ss:$8 sm:$0x0] %vm3005, %v3025
        %3030 = vst [vmem:[#allocation3 + $0x10] sm:$0xff] 0.0
        %3031 = vst [vmem:[#allocation3 + $0x28] sm:$0x7f] 0.0
        %v3032 = vld [vmem:[#allocation3] sm:$0xff]
        %v3033 = vld [vmem:[#allocation3 + $0x8] sm:$0xff]
        %v3034 = vld [vmem:[#allocation3 + $0x10] sm:$0xff]
        %v3035 = vld [vmem:[#allocation3 + $0x18] sm:$0x7f]
        %v3036 = vld [vmem:[#allocation3 + $0x20] sm:$0x7f]
        %v3037 = vld [vmem:[#allocation3 + $0x28] sm:$0x7f]
        %3038 = vrot.lane.b32.xlu0 %v3032, 51
        %v3039 = vpop.permute.xlu0 %3038
        %3040 = vrot.lane.b32.xlu0 %v3035, 51
        %v3041 = vpop.permute.xlu0 %3040
        %3042 = vrot.lane.b32.xlu0 %v3033, 51
        %v3043 = vpop.permute.xlu0 %3042
        %3044 = vrot.lane.b32.xlu0 %v3036, 51
        %v3045 = vpop.permute.xlu0 %3044
        %3046 = vrot.lane.b32.xlu0 %v3034, 51
        %v3047 = vpop.permute.xlu0 %3046
        %3048 = vrot.lane.b32.xlu0 %v3037, 51
        %v3049 = vpop.permute.xlu0 %3048
        %vm3050 = vcmp.lt.s32.totalorder %v393, 51
        %v3051 = vsel %vm3050, %v3039, %v3043
        %v3052 = vsel %vm3050, %v3041, %v3045
        %v3053 = vsel %vm3050, %v3047, %v3039
        %v3054 = vsel %vm3050, %v3049, %v3041
        %v3055 = vld [vmem:[%s1] ss:$8 sm:$0x3]
        %v3057 = vlaneseq
        %v3058 = vshrl.u32 %v3057, 7
        %v3059 = vsub.s32 0, %v3058
        %v3060 = vrot.slane %v3055, %v3059
        %v3061 = vlaneseq
        %v3062 = vshrl.u32 %v3061, 7
        %v3063 = vsub.s32 1, %v3062
        %v3064 = vrot.slane %v3055, %v3063
        %v3067 = vmul.f32 %v3054, %v3060
        %v3068 = vmul.f32 %v3052, %v3064
        %v3069 = vmul.f32 %v2973, %v3053
        %v3070 = vmul.f32 %v2974, %v3051
        %v3071 = vmul.f32 %v2975, %v3054
        %v3072 = vmul.f32 %v2976, %v3052
        %v3073 = vsel %vm2981, %v3071, 0.0
        %v3074 = vadd.f32 %v3069, %v3073
        %v3075 = vrot.slane %v3074, 4
        %v3076 = vadd.f32 %v3074, %v3075
        %v3077 = vrot.slane %v3076, 2
        %v3078 = vadd.f32 %v3076, %v3077
        %v3079 = vrot.slane %v3078, 1
        %v3080 = vadd.f32 %v3078, %v3079
        %v3081 = vsel %vm2981, %v3072, 0.0
        %v3082 = vadd.f32 %v3070, %v3081
        %v3083 = vrot.slane %v3082, 4
        %v3084 = vadd.f32 %v3082, %v3083
        %v3085 = vrot.slane %v3084, 2
        %v3086 = vadd.f32 %v3084, %v3085
        %v3087 = vrot.slane %v3086, 1
        %v3088 = vadd.f32 %v3086, %v3087
        %v3089 = vadd.f32 %v2989, %v3054
        %v3090 = vadd.f32 %v2997, %v3052
        %v3091 = vmul.f32 %v3080, 2.0
        %v3092 = vmul.f32 %v3088, 2.0
        %v3093 = vsub.f32 %v3089, %v3091
        %v3094 = vsub.f32 %v3090, %v3092
        %s3095 = sld [smem:[#allocation4]]
        %v3096 = vstv %s3095
        %v3097 = vadd.f32 %v3093, %v3096
        %v3098 = vadd.f32 %v3094, %v3096
        %v3099 = vsub.f32 0.0, %v3097
        %v3100 = vsub.f32 0.0, %v3098
        %v3101 = vmul.f32 %v3099, 1.442695
        %v3102 = vpow.pop %v3101
        %v3103 = vmul.f32 %v3100, 1.442695
        %v3104 = vpow.pop %v3103
        %v3107 = vrot.slane %v3067, 7
        %v3108 = vrot.slane %v3068, 7
        %v3111 = vmul.f32 %v3102, %v3107
        %v3112 = vmul.f32 %v3104, %v3108
        %v3113 = vlaneseq
        %v3114 = vshrl.u32 %v3113, 7
        %v3115 = vsub.s32 6, %v3114
        %v3116 = vrot.slane %v3111, %v3115
        %v3117 = vlaneseq
        %v3118 = vshrl.u32 %v3117, 7
        %v3119 = vsub.s32 6, %v3118
        %v3120 = vrot.slane %v3112, %v3119
        %v3121 = vmul.f32 %v3116, %v3053
        %v3122 = vmul.f32 %v3120, %v3051
        %v3123 = vadd.f32 %v3121, 0.0
        %v3124 = vadd.f32 %v3122, 0.0
        %v3125 = vadd.f32 %v3111, 0.0
        %v3126 = vadd.f32 %v3112, 0.0
        %3127 = vrot.lane.b32.xlu0 %v3032, 50
        %v3128 = vpop.permute.xlu0 %3127
        %3129 = vrot.lane.b32.xlu0 %v3035, 50
        %v3130 = vpop.permute.xlu0 %3129
        %3131 = vrot.lane.b32.xlu0 %v3033, 50
        %v3132 = vpop.permute.xlu0 %3131
        %3133 = vrot.lane.b32.xlu0 %v3036, 50
        %v3134 = vpop.permute.xlu0 %3133
        %3135 = vrot.lane.b32.xlu0 %v3034, 50
        %v3136 = vpop.permute.xlu0 %3135
        %3137 = vrot.lane.b32.xlu0 %v3037, 50
        %v3138 = vpop.permute.xlu0 %3137
        %vm3139 = vcmp.lt.s32.totalorder %v393, 50
        %v3140 = vsel %vm3139, %v3128, %v3132
        %v3141 = vsel %vm3139, %v3130, %v3134
        %v3142 = vsel %vm3139, %v3136, %v3128
        %v3143 = vsel %vm3139, %v3138, %v3130
        %s3144 = scalar_lea.vmem %s1, 1
        %v3145 = vld [vmem:[%s3144] ss:$8 sm:$0x3]
        %v3147 = vlaneseq
        %v3148 = vshrl.u32 %v3147, 7
        %v3149 = vsub.s32 0, %v3148
        %v3150 = vrot.slane %v3145, %v3149
        %v3151 = vlaneseq
        %v3152 = vshrl.u32 %v3151, 7
        %v3153 = vsub.s32 1, %v3152
        %v3154 = vrot.slane %v3145, %v3153
        %v3157 = vmul.f32 %v3143, %v3150
        %v3158 = vmul.f32 %v3141, %v3154
        %v3159 = vmul.f32 %v2973, %v3142
        %v3160 = vmul.f32 %v2974, %v3140
        %v3161 = vmul.f32 %v2975, %v3143
        %v3162 = vmul.f32 %v2976, %v3141
        %v3163 = vsel %vm2981, %v3161, 0.0
        %v3164 = vadd.f32 %v3159, %v3163
        %v3165 = vrot.slane %v3164, 4
        %v3166 = vadd.f32 %v3164, %v3165
        %v3167 = vrot.slane %v3166, 2
        %v3168 = vadd.f32 %v3166, %v3167
        %v3169 = vrot.slane %v3168, 1
        %v3170 = vadd.f32 %v3168, %v3169
        %v3171 = vsel %vm2981, %v3162, 0.0
        %v3172 = vadd.f32 %v3160, %v3171
        %v3173 = vrot.slane %v3172, 4
        %v3174 = vadd.f32 %v3172, %v3173
        %v3175 = vrot.slane %v3174, 2
        %v3176 = vadd.f32 %v3174, %v3175
        %v3177 = vrot.slane %v3176, 1
        %v3178 = vadd.f32 %v3176, %v3177
        %v3179 = vadd.f32 %v2989, %v3143
        %v3180 = vadd.f32 %v2997, %v3141
        %v3181 = vmul.f32 %v3170, 2.0
        %v3182 = vmul.f32 %v3178, 2.0
        %v3183 = vsub.f32 %v3179, %v3181
        %v3184 = vsub.f32 %v3180, %v3182
        %s3185 = sld [smem:[#allocation4 + $0x1]]
        %v3186 = vstv %s3185
        %v3187 = vadd.f32 %v3183, %v3186
        %v3188 = vadd.f32 %v3184, %v3186
        %v3189 = vsub.f32 0.0, %v3187
        %v3190 = vsub.f32 0.0, %v3188
        %v3191 = vmul.f32 %v3189, 1.442695
        %v3192 = vpow.pop %v3191
        %v3193 = vmul.f32 %v3190, 1.442695
        %v3194 = vpow.pop %v3193
        %v3197 = vrot.slane %v3157, 7
        %v3198 = vrot.slane %v3158, 7
        %v3201 = vmul.f32 %v3192, %v3197
        %v3202 = vmul.f32 %v3194, %v3198
        %v3203 = vlaneseq
        %v3204 = vshrl.u32 %v3203, 7
        %v3205 = vsub.s32 6, %v3204
        %v3206 = vrot.slane %v3201, %v3205
        %v3207 = vlaneseq
        %v3208 = vshrl.u32 %v3207, 7
        %v3209 = vsub.s32 6, %v3208
        %v3210 = vrot.slane %v3202, %v3209
        %v3211 = vmul.f32 %v3206, %v3142
        %v3212 = vmul.f32 %v3210, %v3140
        %v3213 = vadd.f32 %v3123, %v3211
        %v3214 = vadd.f32 %v3124, %v3212
        %v3215 = vadd.f32 %v3125, %v3201
        %v3216 = vadd.f32 %v3126, %v3202
        %3217 = vrot.lane.b32.xlu0 %v3032, 49
        %v3218 = vpop.permute.xlu0 %3217
        %3219 = vrot.lane.b32.xlu0 %v3035, 49
        %v3220 = vpop.permute.xlu0 %3219
        %3221 = vrot.lane.b32.xlu0 %v3033, 49
        %v3222 = vpop.permute.xlu0 %3221
        %3223 = vrot.lane.b32.xlu0 %v3036, 49
        %v3224 = vpop.permute.xlu0 %3223
        %3225 = vrot.lane.b32.xlu0 %v3034, 49
        %v3226 = vpop.permute.xlu0 %3225
        %3227 = vrot.lane.b32.xlu0 %v3037, 49
        %v3228 = vpop.permute.xlu0 %3227
        %vm3229 = vcmp.lt.s32.totalorder %v393, 49
        %v3230 = vsel %vm3229, %v3218, %v3222
        %v3231 = vsel %vm3229, %v3220, %v3224
        %v3232 = vsel %vm3229, %v3226, %v3218
        %v3233 = vsel %vm3229, %v3228, %v3220
        %v3234 = vld [vmem:[%s399] ss:$8 sm:$0x3]
        %v3236 = vlaneseq
        %v3237 = vshrl.u32 %v3236, 7
        %v3238 = vsub.s32 0, %v3237
        %v3239 = vrot.slane %v3234, %v3238
        %v3240 = vlaneseq
        %v3241 = vshrl.u32 %v3240, 7
        %v3242 = vsub.s32 1, %v3241
        %v3243 = vrot.slane %v3234, %v3242
        %v3246 = vmul.f32 %v3233, %v3239
        %v3247 = vmul.f32 %v3231, %v3243
        %v3248 = vmul.f32 %v2973, %v3232
        %v3249 = vmul.f32 %v2974, %v3230
        %v3250 = vmul.f32 %v2975, %v3233
        %v3251 = vmul.f32 %v2976, %v3231
        %v3252 = vsel %vm2981, %v3250, 0.0
        %v3253 = vadd.f32 %v3248, %v3252
        %v3254 = vrot.slane %v3253, 4
        %v3255 = vadd.f32 %v3253, %v3254
        %v3256 = vrot.slane %v3255, 2
        %v3257 = vadd.f32 %v3255, %v3256
        %v3258 = vrot.slane %v3257, 1
        %v3259 = vadd.f32 %v3257, %v3258
        %v3260 = vsel %vm2981, %v3251, 0.0
        %v3261 = vadd.f32 %v3249, %v3260
        %v3262 = vrot.slane %v3261, 4
        %v3263 = vadd.f32 %v3261, %v3262
        %v3264 = vrot.slane %v3263, 2
        %v3265 = vadd.f32 %v3263, %v3264
        %v3266 = vrot.slane %v3265, 1
        %v3267 = vadd.f32 %v3265, %v3266
        %v3268 = vadd.f32 %v2989, %v3233
        %v3269 = vadd.f32 %v2997, %v3231
        %v3270 = vmul.f32 %v3259, 2.0
        %v3271 = vmul.f32 %v3267, 2.0
        %v3272 = vsub.f32 %v3268, %v3270
        %v3273 = vsub.f32 %v3269, %v3271
        %s3274 = sld [smem:[#allocation4 + $0x2]]
        %v3275 = vstv %s3274
        %v3276 = vadd.f32 %v3272, %v3275
        %v3277 = vadd.f32 %v3273, %v3275
        %v3278 = vsub.f32 0.0, %v3276
        %v3279 = vsub.f32 0.0, %v3277
        %v3280 = vmul.f32 %v3278, 1.442695
        %v3281 = vpow.pop %v3280
        %v3282 = vmul.f32 %v3279, 1.442695
        %v3283 = vpow.pop %v3282
        %v3286 = vrot.slane %v3246, 7
        %v3287 = vrot.slane %v3247, 7
        %v3290 = vmul.f32 %v3281, %v3286
        %v3291 = vmul.f32 %v3283, %v3287
        %v3292 = vlaneseq
        %v3293 = vshrl.u32 %v3292, 7
        %v3294 = vsub.s32 6, %v3293
        %v3295 = vrot.slane %v3290, %v3294
        %v3296 = vlaneseq
        %v3297 = vshrl.u32 %v3296, 7
        %v3298 = vsub.s32 6, %v3297
        %v3299 = vrot.slane %v3291, %v3298
        %v3300 = vmul.f32 %v3295, %v3232
        %v3301 = vmul.f32 %v3299, %v3230
        %v3302 = vadd.f32 %v3213, %v3300
        %v3303 = vadd.f32 %v3214, %v3301
        %v3304 = vadd.f32 %v3215, %v3290
        %v3305 = vadd.f32 %v3216, %v3291
        %3306 = vrot.lane.b32.xlu0 %v3032, 48
        %v3307 = vpop.permute.xlu0 %3306
        %3308 = vrot.lane.b32.xlu0 %v3035, 48
        %v3309 = vpop.permute.xlu0 %3308
        %3310 = vrot.lane.b32.xlu0 %v3033, 48
        %v3311 = vpop.permute.xlu0 %3310
        %3312 = vrot.lane.b32.xlu0 %v3036, 48
        %v3313 = vpop.permute.xlu0 %3312
        %3314 = vrot.lane.b32.xlu0 %v3034, 48
        %v3315 = vpop.permute.xlu0 %3314
        %3316 = vrot.lane.b32.xlu0 %v3037, 48
        %v3317 = vpop.permute.xlu0 %3316
        %vm3318 = vcmp.lt.s32.totalorder %v393, 48
        %v3319 = vsel %vm3318, %v3307, %v3311
        %v3320 = vsel %vm3318, %v3309, %v3313
        %v3321 = vsel %vm3318, %v3315, %v3307
        %v3322 = vsel %vm3318, %v3317, %v3309
        %v3323 = vld [vmem:[%s437] ss:$8 sm:$0x3]
        %v3325 = vlaneseq
        %v3326 = vshrl.u32 %v3325, 7
        %v3327 = vsub.s32 0, %v3326
        %v3328 = vrot.slane %v3323, %v3327
        %v3329 = vlaneseq
        %v3330 = vshrl.u32 %v3329, 7
        %v3331 = vsub.s32 1, %v3330
        %v3332 = vrot.slane %v3323, %v3331
        %v3335 = vmul.f32 %v3322, %v3328
        %v3336 = vmul.f32 %v3320, %v3332
        %v3337 = vmul.f32 %v2973, %v3321
        %v3338 = vmul.f32 %v2974, %v3319
        %v3339 = vmul.f32 %v2975, %v3322
        %v3340 = vmul.f32 %v2976, %v3320
        %v3341 = vsel %vm2981, %v3339, 0.0
        %v3342 = vadd.f32 %v3337, %v3341
        %v3343 = vrot.slane %v3342, 4
        %v3344 = vadd.f32 %v3342, %v3343
        %v3345 = vrot.slane %v3344, 2
        %v3346 = vadd.f32 %v3344, %v3345
        %v3347 = vrot.slane %v3346, 1
        %v3348 = vadd.f32 %v3346, %v3347
        %v3349 = vsel %vm2981, %v3340, 0.0
        %v3350 = vadd.f32 %v3338, %v3349
        %v3351 = vrot.slane %v3350, 4
        %v3352 = vadd.f32 %v3350, %v3351
        %v3353 = vrot.slane %v3352, 2
        %v3354 = vadd.f32 %v3352, %v3353
        %v3355 = vrot.slane %v3354, 1
        %v3356 = vadd.f32 %v3354, %v3355
        %v3357 = vadd.f32 %v2989, %v3322
        %v3358 = vadd.f32 %v2997, %v3320
        %v3359 = vmul.f32 %v3348, 2.0
        %v3360 = vmul.f32 %v3356, 2.0
        %v3361 = vsub.f32 %v3357, %v3359
        %v3362 = vsub.f32 %v3358, %v3360
        %s3363 = sld [smem:[#allocation4 + $0x3]]
        %v3364 = vstv %s3363
        %v3365 = vadd.f32 %v3361, %v3364
        %v3366 = vadd.f32 %v3362, %v3364
        %v3367 = vsub.f32 0.0, %v3365
        %v3368 = vsub.f32 0.0, %v3366
        %v3369 = vmul.f32 %v3367, 1.442695
        %v3370 = vpow.pop %v3369
        %v3371 = vmul.f32 %v3368, 1.442695
        %v3372 = vpow.pop %v3371
        %v3375 = vrot.slane %v3335, 7
        %v3376 = vrot.slane %v3336, 7
        %v3379 = vmul.f32 %v3370, %v3375
        %v3380 = vmul.f32 %v3372, %v3376
        %v3381 = vlaneseq
        %v3382 = vshrl.u32 %v3381, 7
        %v3383 = vsub.s32 6, %v3382
        %v3384 = vrot.slane %v3379, %v3383
        %v3385 = vlaneseq
        %v3386 = vshrl.u32 %v3385, 7
        %v3387 = vsub.s32 6, %v3386
        %v3388 = vrot.slane %v3380, %v3387
        %v3389 = vmul.f32 %v3384, %v3321
        %v3390 = vmul.f32 %v3388, %v3319
        %v3391 = vadd.f32 %v3302, %v3389
        %v3392 = vadd.f32 %v3303, %v3390
        %v3393 = vadd.f32 %v3304, %v3379
        %v3394 = vadd.f32 %v3305, %v3380
        %3395 = vrot.lane.b32.xlu0 %v3032, 47
        %v3396 = vpop.permute.xlu0 %3395
        %3397 = vrot.lane.b32.xlu0 %v3035, 47
        %v3398 = vpop.permute.xlu0 %3397
        %3399 = vrot.lane.b32.xlu0 %v3033, 47
        %v3400 = vpop.permute.xlu0 %3399
        %3401 = vrot.lane.b32.xlu0 %v3036, 47
        %v3402 = vpop.permute.xlu0 %3401
        %3403 = vrot.lane.b32.xlu0 %v3034, 47
        %v3404 = vpop.permute.xlu0 %3403
        %3405 = vrot.lane.b32.xlu0 %v3037, 47
        %v3406 = vpop.permute.xlu0 %3405
        %vm3407 = vcmp.lt.s32.totalorder %v393, 47
        %v3408 = vsel %vm3407, %v3396, %v3400
        %v3409 = vsel %vm3407, %v3398, %v3402
        %v3410 = vsel %vm3407, %v3404, %v3396
        %v3411 = vsel %vm3407, %v3406, %v3398
        %v3412 = vld [vmem:[%s692] ss:$8 sm:$0x3]
        %v3414 = vlaneseq
        %v3415 = vshrl.u32 %v3414, 7
        %v3416 = vsub.s32 0, %v3415
        %v3417 = vrot.slane %v3412, %v3416
        %v3418 = vlaneseq
        %v3419 = vshrl.u32 %v3418, 7
        %v3420 = vsub.s32 1, %v3419
        %v3421 = vrot.slane %v3412, %v3420
        %v3424 = vmul.f32 %v3411, %v3417
        %v3425 = vmul.f32 %v3409, %v3421
        %v3426 = vmul.f32 %v2973, %v3410
        %v3427 = vmul.f32 %v2974, %v3408
        %v3428 = vmul.f32 %v2975, %v3411
        %v3429 = vmul.f32 %v2976, %v3409
        %v3430 = vsel %vm2981, %v3428, 0.0
        %v3431 = vadd.f32 %v3426, %v3430
        %v3432 = vrot.slane %v3431, 4
        %v3433 = vadd.f32 %v3431, %v3432
        %v3434 = vrot.slane %v3433, 2
        %v3435 = vadd.f32 %v3433, %v3434
        %v3436 = vrot.slane %v3435, 1
        %v3437 = vadd.f32 %v3435, %v3436
        %v3438 = vsel %vm2981, %v3429, 0.0
        %v3439 = vadd.f32 %v3427, %v3438
        %v3440 = vrot.slane %v3439, 4
        %v3441 = vadd.f32 %v3439, %v3440
        %v3442 = vrot.slane %v3441, 2
        %v3443 = vadd.f32 %v3441, %v3442
        %v3444 = vrot.slane %v3443, 1
        %v3445 = vadd.f32 %v3443, %v3444
        %v3446 = vadd.f32 %v2989, %v3411
        %v3447 = vadd.f32 %v2997, %v3409
        %v3448 = vmul.f32 %v3437, 2.0
        %v3449 = vmul.f32 %v3445, 2.0
        %v3450 = vsub.f32 %v3446, %v3448
        %v3451 = vsub.f32 %v3447, %v3449
        %s3452 = sld [smem:[#allocation4 + $0x4]]
        %v3453 = vstv %s3452
        %v3454 = vadd.f32 %v3450, %v3453
        %v3455 = vadd.f32 %v3451, %v3453
        %v3456 = vsub.f32 0.0, %v3454
        %v3457 = vsub.f32 0.0, %v3455
        %v3458 = vmul.f32 %v3456, 1.442695
        %v3459 = vpow.pop %v3458
        %v3460 = vmul.f32 %v3457, 1.442695
        %v3461 = vpow.pop %v3460
        %v3464 = vrot.slane %v3424, 7
        %v3465 = vrot.slane %v3425, 7
        %v3468 = vmul.f32 %v3459, %v3464
        %v3469 = vmul.f32 %v3461, %v3465
        %v3470 = vlaneseq
        %v3471 = vshrl.u32 %v3470, 7
        %v3472 = vsub.s32 6, %v3471
        %v3473 = vrot.slane %v3468, %v3472
        %v3474 = vlaneseq
        %v3475 = vshrl.u32 %v3474, 7
        %v3476 = vsub.s32 6, %v3475
        %v3477 = vrot.slane %v3469, %v3476
        %v3478 = vmul.f32 %v3473, %v3410
        %v3479 = vmul.f32 %v3477, %v3408
        %v3480 = vadd.f32 %v3391, %v3478
        %v3481 = vadd.f32 %v3392, %v3479
        %v3482 = vadd.f32 %v3393, %v3468
        %v3483 = vadd.f32 %v3394, %v3469
        %3484 = vrot.lane.b32.xlu0 %v3032, 46
        %v3485 = vpop.permute.xlu0 %3484
        %3486 = vrot.lane.b32.xlu0 %v3035, 46
        %v3487 = vpop.permute.xlu0 %3486
        %3488 = vrot.lane.b32.xlu0 %v3033, 46
        %v3489 = vpop.permute.xlu0 %3488
        %3490 = vrot.lane.b32.xlu0 %v3036, 46
        %v3491 = vpop.permute.xlu0 %3490
        %3492 = vrot.lane.b32.xlu0 %v3034, 46
        %v3493 = vpop.permute.xlu0 %3492
        %3494 = vrot.lane.b32.xlu0 %v3037, 46
        %v3495 = vpop.permute.xlu0 %3494
        %vm3496 = vcmp.lt.s32.totalorder %v393, 46
        %v3497 = vsel %vm3496, %v3485, %v3489
        %v3498 = vsel %vm3496, %v3487, %v3491
        %v3499 = vsel %vm3496, %v3493, %v3485
        %v3500 = vsel %vm3496, %v3495, %v3487
        %s3501 = scalar_lea.vmem %s1, 5
        %v3502 = vld [vmem:[%s3501] ss:$8 sm:$0x3]
        %v3504 = vlaneseq
        %v3505 = vshrl.u32 %v3504, 7
        %v3506 = vsub.s32 0, %v3505
        %v3507 = vrot.slane %v3502, %v3506
        %v3508 = vlaneseq
        %v3509 = vshrl.u32 %v3508, 7
        %v3510 = vsub.s32 1, %v3509
        %v3511 = vrot.slane %v3502, %v3510
        %v3514 = vmul.f32 %v3500, %v3507
        %v3515 = vmul.f32 %v3498, %v3511
        %v3516 = vmul.f32 %v2973, %v3499
        %v3517 = vmul.f32 %v2974, %v3497
        %v3518 = vmul.f32 %v2975, %v3500
        %v3519 = vmul.f32 %v2976, %v3498
        %v3520 = vsel %vm2981, %v3518, 0.0
        %v3521 = vadd.f32 %v3516, %v3520
        %v3522 = vrot.slane %v3521, 4
        %v3523 = vadd.f32 %v3521, %v3522
        %v3524 = vrot.slane %v3523, 2
        %v3525 = vadd.f32 %v3523, %v3524
        %v3526 = vrot.slane %v3525, 1
        %v3527 = vadd.f32 %v3525, %v3526
        %v3528 = vsel %vm2981, %v3519, 0.0
        %v3529 = vadd.f32 %v3517, %v3528
        %v3530 = vrot.slane %v3529, 4
        %v3531 = vadd.f32 %v3529, %v3530
        %v3532 = vrot.slane %v3531, 2
        %v3533 = vadd.f32 %v3531, %v3532
        %v3534 = vrot.slane %v3533, 1
        %v3535 = vadd.f32 %v3533, %v3534
        %v3536 = vadd.f32 %v2989, %v3500
        %v3537 = vadd.f32 %v2997, %v3498
        %v3538 = vmul.f32 %v3527, 2.0
        %v3539 = vmul.f32 %v3535, 2.0
        %v3540 = vsub.f32 %v3536, %v3538
        %v3541 = vsub.f32 %v3537, %v3539
        %s3542 = sld [smem:[#allocation4 + $0x5]]
        %v3543 = vstv %s3542
        %v3544 = vadd.f32 %v3540, %v3543
        %v3545 = vadd.f32 %v3541, %v3543
        %v3546 = vsub.f32 0.0, %v3544
        %v3547 = vsub.f32 0.0, %v3545
        %v3548 = vmul.f32 %v3546, 1.442695
        %v3549 = vpow.pop %v3548
        %v3550 = vmul.f32 %v3547, 1.442695
        %v3551 = vpow.pop %v3550
        %v3554 = vrot.slane %v3514, 7
        %v3555 = vrot.slane %v3515, 7
        %v3558 = vmul.f32 %v3549, %v3554
        %v3559 = vmul.f32 %v3551, %v3555
        %v3560 = vlaneseq
        %v3561 = vshrl.u32 %v3560, 7
        %v3562 = vsub.s32 6, %v3561
        %v3563 = vrot.slane %v3558, %v3562
        %v3564 = vlaneseq
        %v3565 = vshrl.u32 %v3564, 7
        %v3566 = vsub.s32 6, %v3565
        %v3567 = vrot.slane %v3559, %v3566
        %v3568 = vmul.f32 %v3563, %v3499
        %v3569 = vmul.f32 %v3567, %v3497
        %v3570 = vadd.f32 %v3480, %v3568
        %v3571 = vadd.f32 %v3481, %v3569
        %v3572 = vadd.f32 %v3482, %v3558
        %v3573 = vadd.f32 %v3483, %v3559
        %3574 = vrot.lane.b32.xlu0 %v3032, 45
        %v3575 = vpop.permute.xlu0 %3574
        %3576 = vrot.lane.b32.xlu0 %v3035, 45
        %v3577 = vpop.permute.xlu0 %3576
        %3578 = vrot.lane.b32.xlu0 %v3033, 45
        %v3579 = vpop.permute.xlu0 %3578
        %3580 = vrot.lane.b32.xlu0 %v3036, 45
        %v3581 = vpop.permute.xlu0 %3580
        %3582 = vrot.lane.b32.xlu0 %v3034, 45
        %v3583 = vpop.permute.xlu0 %3582
        %3584 = vrot.lane.b32.xlu0 %v3037, 45
        %v3585 = vpop.permute.xlu0 %3584
        %vm3586 = vcmp.lt.s32.totalorder %v393, 45
        %v3587 = vsel %vm3586, %v3575, %v3579
        %v3588 = vsel %vm3586, %v3577, %v3581
        %v3589 = vsel %vm3586, %v3583, %v3575
        %v3590 = vsel %vm3586, %v3585, %v3577
        %s3591 = scalar_lea.vmem %s1, 6
        %v3592 = vld [vmem:[%s3591] ss:$8 sm:$0x3]
        %v3594 = vlaneseq
        %v3595 = vshrl.u32 %v3594, 7
        %v3596 = vsub.s32 0, %v3595
        %v3597 = vrot.slane %v3592, %v3596
        %v3598 = vlaneseq
        %v3599 = vshrl.u32 %v3598, 7
        %v3600 = vsub.s32 1, %v3599
        %v3601 = vrot.slane %v3592, %v3600
        %v3604 = vmul.f32 %v3590, %v3597
        %v3605 = vmul.f32 %v3588, %v3601
        %v3606 = vmul.f32 %v2973, %v3589
        %v3607 = vmul.f32 %v2974, %v3587
        %v3608 = vmul.f32 %v2975, %v3590
        %v3609 = vmul.f32 %v2976, %v3588
        %v3610 = vsel %vm2981, %v3608, 0.0
        %v3611 = vadd.f32 %v3606, %v3610
        %v3612 = vrot.slane %v3611, 4
        %v3613 = vadd.f32 %v3611, %v3612
        %v3614 = vrot.slane %v3613, 2
        %v3615 = vadd.f32 %v3613, %v3614
        %v3616 = vrot.slane %v3615, 1
        %v3617 = vadd.f32 %v3615, %v3616
        %v3618 = vsel %vm2981, %v3609, 0.0
        %v3619 = vadd.f32 %v3607, %v3618
        %v3620 = vrot.slane %v3619, 4
        %v3621 = vadd.f32 %v3619, %v3620
        %v3622 = vrot.slane %v3621, 2
        %v3623 = vadd.f32 %v3621, %v3622
        %v3624 = vrot.slane %v3623, 1
        %v3625 = vadd.f32 %v3623, %v3624
        %v3626 = vadd.f32 %v2989, %v3590
        %v3627 = vadd.f32 %v2997, %v3588
        %v3628 = vmul.f32 %v3617, 2.0
        %v3629 = vmul.f32 %v3625, 2.0
        %v3630 = vsub.f32 %v3626, %v3628
        %v3631 = vsub.f32 %v3627, %v3629
        %s3632 = sld [smem:[#allocation4 + $0x6]]
        %v3633 = vstv %s3632
        %v3634 = vadd.f32 %v3630, %v3633
        %v3635 = vadd.f32 %v3631, %v3633
        %v3636 = vsub.f32 0.0, %v3634
        %v3637 = vsub.f32 0.0, %v3635
        %v3638 = vmul.f32 %v3636, 1.442695
        %v3639 = vpow.pop %v3638
        %v3640 = vmul.f32 %v3637, 1.442695
        %v3641 = vpow.pop %v3640
        %v3644 = vrot.slane %v3604, 7
        %v3645 = vrot.slane %v3605, 7
        %v3648 = vmul.f32 %v3639, %v3644
        %v3649 = vmul.f32 %v3641, %v3645
        %v3650 = vlaneseq
        %v3651 = vshrl.u32 %v3650, 7
        %v3652 = vsub.s32 6, %v3651
        %v3653 = vrot.slane %v3648, %v3652
        %v3654 = vlaneseq
        %v3655 = vshrl.u32 %v3654, 7
        %v3656 = vsub.s32 6, %v3655
        %v3657 = vrot.slane %v3649, %v3656
        %v3658 = vmul.f32 %v3653, %v3589
        %v3659 = vmul.f32 %v3657, %v3587
        %v3660 = vadd.f32 %v3570, %v3658
        %v3661 = vadd.f32 %v3571, %v3659
        %v3662 = vadd.f32 %v3572, %v3648
        %v3663 = vadd.f32 %v3573, %v3649
        %3664 = vrot.lane.b32.xlu0 %v3032, 35
        %v3665 = vpop.permute.xlu0 %3664
        %3666 = vrot.lane.b32.xlu0 %v3035, 35
        %v3667 = vpop.permute.xlu0 %3666
        %3668 = vrot.lane.b32.xlu0 %v3033, 35
        %v3669 = vpop.permute.xlu0 %3668
        %3670 = vrot.lane.b32.xlu0 %v3036, 35
        %v3671 = vpop.permute.xlu0 %3670
        %3672 = vrot.lane.b32.xlu0 %v3034, 35
        %v3673 = vpop.permute.xlu0 %3672
        %3674 = vrot.lane.b32.xlu0 %v3037, 35
        %v3675 = vpop.permute.xlu0 %3674
        %vm3676 = vcmp.lt.s32.totalorder %v393, 35
        %v3677 = vsel %vm3676, %v3665, %v3669
        %v3678 = vsel %vm3676, %v3667, %v3671
        %v3679 = vsel %vm3676, %v3673, %v3665
        %v3680 = vsel %vm3676, %v3675, %v3667
        %v3681 = vmul.f32 %v3680, %v3060
        %v3682 = vmul.f32 %v3678, %v3064
        %v3683 = vmul.f32 %v2973, %v3679
        %v3684 = vmul.f32 %v2974, %v3677
        %v3685 = vmul.f32 %v2975, %v3680
        %v3686 = vmul.f32 %v2976, %v3678
        %v3687 = vsel %vm2981, %v3685, 0.0
        %v3688 = vadd.f32 %v3683, %v3687
        %v3689 = vrot.slane %v3688, 4
        %v3690 = vadd.f32 %v3688, %v3689
        %v3691 = vrot.slane %v3690, 2
        %v3692 = vadd.f32 %v3690, %v3691
        %v3693 = vrot.slane %v3692, 1
        %v3694 = vadd.f32 %v3692, %v3693
        %v3695 = vsel %vm2981, %v3686, 0.0
        %v3696 = vadd.f32 %v3684, %v3695
        %v3697 = vrot.slane %v3696, 4
        %v3698 = vadd.f32 %v3696, %v3697
        %v3699 = vrot.slane %v3698, 2
        %v3700 = vadd.f32 %v3698, %v3699
        %v3701 = vrot.slane %v3700, 1
        %v3702 = vadd.f32 %v3700, %v3701
        %v3703 = vadd.f32 %v2989, %v3680
        %v3704 = vadd.f32 %v2997, %v3678
        %v3705 = vmul.f32 %v3694, 2.0
        %v3706 = vmul.f32 %v3702, 2.0
        %v3707 = vsub.f32 %v3703, %v3705
        %v3708 = vsub.f32 %v3704, %v3706
        %s3709 = sld [smem:[#allocation4 + $0x7]]
        %v3710 = vstv %s3709
        %v3711 = vadd.f32 %v3707, %v3710
        %v3712 = vadd.f32 %v3708, %v3710
        %v3713 = vsub.f32 0.0, %v3711
        %v3714 = vsub.f32 0.0, %v3712
        %v3715 = vmul.f32 %v3713, 1.442695
        %v3716 = vpow.pop %v3715
        %v3717 = vmul.f32 %v3714, 1.442695
        %v3718 = vpow.pop %v3717
        %v3721 = vrot.slane %v3681, 7
        %v3722 = vrot.slane %v3682, 7
        %v3725 = vmul.f32 %v3716, %v3721
        %v3726 = vmul.f32 %v3718, %v3722
        %v3727 = vlaneseq
        %v3728 = vshrl.u32 %v3727, 7
        %v3729 = vsub.s32 6, %v3728
        %v3730 = vrot.slane %v3725, %v3729
        %v3731 = vlaneseq
        %v3732 = vshrl.u32 %v3731, 7
        %v3733 = vsub.s32 6, %v3732
        %v3734 = vrot.slane %v3726, %v3733
        %v3735 = vmul.f32 %v3730, %v3679
        %v3736 = vmul.f32 %v3734, %v3677
        %v3737 = vadd.f32 %v3660, %v3735
        %v3738 = vadd.f32 %v3661, %v3736
        %v3739 = vadd.f32 %v3662, %v3725
        %v3740 = vadd.f32 %v3663, %v3726
        %3741 = vrot.lane.b32.xlu0 %v3032, 34
        %v3742 = vpop.permute.xlu0 %3741
        %3743 = vrot.lane.b32.xlu0 %v3035, 34
        %v3744 = vpop.permute.xlu0 %3743
        %3745 = vrot.lane.b32.xlu0 %v3033, 34
        %v3746 = vpop.permute.xlu0 %3745
        %3747 = vrot.lane.b32.xlu0 %v3036, 34
        %v3748 = vpop.permute.xlu0 %3747
        %3749 = vrot.lane.b32.xlu0 %v3034, 34
        %v3750 = vpop.permute.xlu0 %3749
        %3751 = vrot.lane.b32.xlu0 %v3037, 34
        %v3752 = vpop.permute.xlu0 %3751
        %vm3753 = vcmp.lt.s32.totalorder %v393, 34
        %v3754 = vsel %vm3753, %v3742, %v3746
        %v3755 = vsel %vm3753, %v3744, %v3748
        %v3756 = vsel %vm3753, %v3750, %v3742
        %v3757 = vsel %vm3753, %v3752, %v3744
        %v3758 = vmul.f32 %v3757, %v3150
        %v3759 = vmul.f32 %v3755, %v3154
        %v3760 = vmul.f32 %v2973, %v3756
        %v3761 = vmul.f32 %v2974, %v3754
        %v3762 = vmul.f32 %v2975, %v3757
        %v3763 = vmul.f32 %v2976, %v3755
        %v3764 = vsel %vm2981, %v3762, 0.0
        %v3765 = vadd.f32 %v3760, %v3764
        %v3766 = vrot.slane %v3765, 4
        %v3767 = vadd.f32 %v3765, %v3766
        %v3768 = vrot.slane %v3767, 2
        %v3769 = vadd.f32 %v3767, %v3768
        %v3770 = vrot.slane %v3769, 1
        %v3771 = vadd.f32 %v3769, %v3770
        %v3772 = vsel %vm2981, %v3763, 0.0
        %v3773 = vadd.f32 %v3761, %v3772
        %v3774 = vrot.slane %v3773, 4
        %v3775 = vadd.f32 %v3773, %v3774
        %v3776 = vrot.slane %v3775, 2
        %v3777 = vadd.f32 %v3775, %v3776
        %v3778 = vrot.slane %v3777, 1
        %v3779 = vadd.f32 %v3777, %v3778
        %v3780 = vadd.f32 %v2989, %v3757
        %v3781 = vadd.f32 %v2997, %v3755
        %v3782 = vmul.f32 %v3771, 2.0
        %v3783 = vmul.f32 %v3779, 2.0
        %v3784 = vsub.f32 %v3780, %v3782
        %v3785 = vsub.f32 %v3781, %v3783
        %s3786 = sld [smem:[#allocation4 + $0x8]]
        %v3787 = vstv %s3786
        %v3788 = vadd.f32 %v3784, %v3787
        %v3789 = vadd.f32 %v3785, %v3787
        %v3790 = vsub.f32 0.0, %v3788
        %v3791 = vsub.f32 0.0, %v3789
        %v3792 = vmul.f32 %v3790, 1.442695
        %v3793 = vpow.pop %v3792
        %v3794 = vmul.f32 %v3791, 1.442695
        %v3795 = vpow.pop %v3794
        %v3798 = vrot.slane %v3758, 7
        %v3799 = vrot.slane %v3759, 7
        %v3802 = vmul.f32 %v3793, %v3798
        %v3803 = vmul.f32 %v3795, %v3799
        %v3804 = vlaneseq
        %v3805 = vshrl.u32 %v3804, 7
        %v3806 = vsub.s32 6, %v3805
        %v3807 = vrot.slane %v3802, %v3806
        %v3808 = vlaneseq
        %v3809 = vshrl.u32 %v3808, 7
        %v3810 = vsub.s32 6, %v3809
        %v3811 = vrot.slane %v3803, %v3810
        %v3812 = vmul.f32 %v3807, %v3756
        %v3813 = vmul.f32 %v3811, %v3754
        %v3814 = vadd.f32 %v3737, %v3812
        %v3815 = vadd.f32 %v3738, %v3813
        %v3816 = vadd.f32 %v3739, %v3802
        %v3817 = vadd.f32 %v3740, %v3803
        %3818 = vrot.lane.b32.xlu0 %v3032, 33
        %v3819 = vpop.permute.xlu0 %3818
        %3820 = vrot.lane.b32.xlu0 %v3035, 33
        %v3821 = vpop.permute.xlu0 %3820
        %3822 = vrot.lane.b32.xlu0 %v3033, 33
        %v3823 = vpop.permute.xlu0 %3822
        %3824 = vrot.lane.b32.xlu0 %v3036, 33
        %v3825 = vpop.permute.xlu0 %3824
        %3826 = vrot.lane.b32.xlu0 %v3034, 33
        %v3827 = vpop.permute.xlu0 %3826
        %3828 = vrot.lane.b32.xlu0 %v3037, 33
        %v3829 = vpop.permute.xlu0 %3828
        %vm3830 = vcmp.lt.s32.totalorder %v393, 33
        %v3831 = vsel %vm3830, %v3819, %v3823
        %v3832 = vsel %vm3830, %v3821, %v3825
        %v3833 = vsel %vm3830, %v3827, %v3819
        %v3834 = vsel %vm3830, %v3829, %v3821
        %v3835 = vmul.f32 %v3834, %v3239
        %v3836 = vmul.f32 %v3832, %v3243
        %v3837 = vmul.f32 %v2973, %v3833
        %v3838 = vmul.f32 %v2974, %v3831
        %v3839 = vmul.f32 %v2975, %v3834
        %v3840 = vmul.f32 %v2976, %v3832
        %v3841 = vsel %vm2981, %v3839, 0.0
        %v3842 = vadd.f32 %v3837, %v3841
        %v3843 = vrot.slane %v3842, 4
        %v3844 = vadd.f32 %v3842, %v3843
        %v3845 = vrot.slane %v3844, 2
        %v3846 = vadd.f32 %v3844, %v3845
        %v3847 = vrot.slane %v3846, 1
        %v3848 = vadd.f32 %v3846, %v3847
        %v3849 = vsel %vm2981, %v3840, 0.0
        %v3850 = vadd.f32 %v3838, %v3849
        %v3851 = vrot.slane %v3850, 4
        %v3852 = vadd.f32 %v3850, %v3851
        %v3853 = vrot.slane %v3852, 2
        %v3854 = vadd.f32 %v3852, %v3853
        %v3855 = vrot.slane %v3854, 1
        %v3856 = vadd.f32 %v3854, %v3855
        %v3857 = vadd.f32 %v2989, %v3834
        %v3858 = vadd.f32 %v2997, %v3832
        %v3859 = vmul.f32 %v3848, 2.0
        %v3860 = vmul.f32 %v3856, 2.0
        %v3861 = vsub.f32 %v3857, %v3859
        %v3862 = vsub.f32 %v3858, %v3860
        %s3863 = sld [smem:[#allocation4 + $0x9]]
        %v3864 = vstv %s3863
        %v3865 = vadd.f32 %v3861, %v3864
        %v3866 = vadd.f32 %v3862, %v3864
        %v3867 = vsub.f32 0.0, %v3865
        %v3868 = vsub.f32 0.0, %v3866
        %v3869 = vmul.f32 %v3867, 1.442695
        %v3870 = vpow.pop %v3869
        %v3871 = vmul.f32 %v3868, 1.442695
        %v3872 = vpow.pop %v3871
        %v3875 = vrot.slane %v3835, 7
        %v3876 = vrot.slane %v3836, 7
        %v3879 = vmul.f32 %v3870, %v3875
        %v3880 = vmul.f32 %v3872, %v3876
        %v3881 = vlaneseq
        %v3882 = vshrl.u32 %v3881, 7
        %v3883 = vsub.s32 6, %v3882
        %v3884 = vrot.slane %v3879, %v3883
        %v3885 = vlaneseq
        %v3886 = vshrl.u32 %v3885, 7
        %v3887 = vsub.s32 6, %v3886
        %v3888 = vrot.slane %v3880, %v3887
        %v3889 = vmul.f32 %v3884, %v3833
        %v3890 = vmul.f32 %v3888, %v3831
        %v3891 = vadd.f32 %v3814, %v3889
        %v3892 = vadd.f32 %v3815, %v3890
        %v3893 = vadd.f32 %v3816, %v3879
        %v3894 = vadd.f32 %v3817, %v3880
        %3895 = vrot.lane.b32.xlu0 %v3032, 32
        %v3896 = vpop.permute.xlu0 %3895
        %3897 = vrot.lane.b32.xlu0 %v3035, 32
        %v3898 = vpop.permute.xlu0 %3897
        %3899 = vrot.lane.b32.xlu0 %v3033, 32
        %v3900 = vpop.permute.xlu0 %3899
        %3901 = vrot.lane.b32.xlu0 %v3036, 32
        %v3902 = vpop.permute.xlu0 %3901
        %3903 = vrot.lane.b32.xlu0 %v3034, 32
        %v3904 = vpop.permute.xlu0 %3903
        %3905 = vrot.lane.b32.xlu0 %v3037, 32
        %v3906 = vpop.permute.xlu0 %3905
        %vm3907 = vcmp.lt.s32.totalorder %v393, 32
        %v3908 = vsel %vm3907, %v3896, %v3900
        %v3909 = vsel %vm3907, %v3898, %v3902
        %v3910 = vsel %vm3907, %v3904, %v3896
        %v3911 = vsel %vm3907, %v3906, %v3898
        %v3912 = vmul.f32 %v3911, %v3328
        %v3913 = vmul.f32 %v3909, %v3332
        %v3914 = vmul.f32 %v2973, %v3910
        %v3915 = vmul.f32 %v2974, %v3908
        %v3916 = vmul.f32 %v2975, %v3911
        %v3917 = vmul.f32 %v2976, %v3909
        %v3918 = vsel %vm2981, %v3916, 0.0
        %v3919 = vadd.f32 %v3914, %v3918
        %v3920 = vrot.slane %v3919, 4
        %v3921 = vadd.f32 %v3919, %v3920
        %v3922 = vrot.slane %v3921, 2
        %v3923 = vadd.f32 %v3921, %v3922
        %v3924 = vrot.slane %v3923, 1
        %v3925 = vadd.f32 %v3923, %v3924
        %v3926 = vsel %vm2981, %v3917, 0.0
        %v3927 = vadd.f32 %v3915, %v3926
        %v3928 = vrot.slane %v3927, 4
        %v3929 = vadd.f32 %v3927, %v3928
        %v3930 = vrot.slane %v3929, 2
        %v3931 = vadd.f32 %v3929, %v3930
        %v3932 = vrot.slane %v3931, 1
        %v3933 = vadd.f32 %v3931, %v3932
        %v3934 = vadd.f32 %v2989, %v3911
        %v3935 = vadd.f32 %v2997, %v3909
        %v3936 = vmul.f32 %v3925, 2.0
        %v3937 = vmul.f32 %v3933, 2.0
        %v3938 = vsub.f32 %v3934, %v3936
        %v3939 = vsub.f32 %v3935, %v3937
        %s3940 = sld [smem:[#allocation4 + $0xa]]
        %v3941 = vstv %s3940
        %v3942 = vadd.f32 %v3938, %v3941
        %v3943 = vadd.f32 %v3939, %v3941
        %v3944 = vsub.f32 0.0, %v3942
        %v3945 = vsub.f32 0.0, %v3943
        %v3946 = vmul.f32 %v3944, 1.442695
        %v3947 = vpow.pop %v3946
        %v3948 = vmul.f32 %v3945, 1.442695
        %v3949 = vpow.pop %v3948
        %v3952 = vrot.slane %v3912, 7
        %v3953 = vrot.slane %v3913, 7
        %v3956 = vmul.f32 %v3947, %v3952
        %v3957 = vmul.f32 %v3949, %v3953
        %v3958 = vlaneseq
        %v3959 = vshrl.u32 %v3958, 7
        %v3960 = vsub.s32 6, %v3959
        %v3961 = vrot.slane %v3956, %v3960
        %v3962 = vlaneseq
        %v3963 = vshrl.u32 %v3962, 7
        %v3964 = vsub.s32 6, %v3963
        %v3965 = vrot.slane %v3957, %v3964
        %v3966 = vmul.f32 %v3961, %v3910
        %v3967 = vmul.f32 %v3965, %v3908
        %v3968 = vadd.f32 %v3891, %v3966
        %v3969 = vadd.f32 %v3892, %v3967
        %v3970 = vadd.f32 %v3893, %v3956
        %v3971 = vadd.f32 %v3894, %v3957
        %3972 = vrot.lane.b32.xlu0 %v3032, 31
        %v3973 = vpop.permute.xlu0 %3972
        %3974 = vrot.lane.b32.xlu0 %v3035, 31
        %v3975 = vpop.permute.xlu0 %3974
        %3976 = vrot.lane.b32.xlu0 %v3033, 31
        %v3977 = vpop.permute.xlu0 %3976
        %3978 = vrot.lane.b32.xlu0 %v3036, 31
        %v3979 = vpop.permute.xlu0 %3978
        %3980 = vrot.lane.b32.xlu0 %v3034, 31
        %v3981 = vpop.permute.xlu0 %3980
        %3982 = vrot.lane.b32.xlu0 %v3037, 31
        %v3983 = vpop.permute.xlu0 %3982
        %vm3984 = vcmp.lt.s32.totalorder %v393, 31
        %v3985 = vsel %vm3984, %v3973, %v3977
        %v3986 = vsel %vm3984, %v3975, %v3979
        %v3987 = vsel %vm3984, %v3981, %v3973
        %v3988 = vsel %vm3984, %v3983, %v3975
        %v3989 = vmul.f32 %v3988, %v3417
        %v3990 = vmul.f32 %v3986, %v3421
        %v3991 = vmul.f32 %v2973, %v3987
        %v3992 = vmul.f32 %v2974, %v3985
        %v3993 = vmul.f32 %v2975, %v3988
        %v3994 = vmul.f32 %v2976, %v3986
        %v3995 = vsel %vm2981, %v3993, 0.0
        %v3996 = vadd.f32 %v3991, %v3995
        %v3997 = vrot.slane %v3996, 4
        %v3998 = vadd.f32 %v3996, %v3997
        %v3999 = vrot.slane %v3998, 2
        %v4000 = vadd.f32 %v3998, %v3999
        %v4001 = vrot.slane %v4000, 1
        %v4002 = vadd.f32 %v4000, %v4001
        %v4003 = vsel %vm2981, %v3994, 0.0
        %v4004 = vadd.f32 %v3992, %v4003
        %v4005 = vrot.slane %v4004, 4
        %v4006 = vadd.f32 %v4004, %v4005
        %v4007 = vrot.slane %v4006, 2
        %v4008 = vadd.f32 %v4006, %v4007
        %v4009 = vrot.slane %v4008, 1
        %v4010 = vadd.f32 %v4008, %v4009
        %v4011 = vadd.f32 %v2989, %v3988
        %v4012 = vadd.f32 %v2997, %v3986
        %v4013 = vmul.f32 %v4002, 2.0
        %v4014 = vmul.f32 %v4010, 2.0
        %v4015 = vsub.f32 %v4011, %v4013
        %v4016 = vsub.f32 %v4012, %v4014
        %s4017 = sld [smem:[#allocation4 + $0xb]]
        %v4018 = vstv %s4017
        %v4019 = vadd.f32 %v4015, %v4018
        %v4020 = vadd.f32 %v4016, %v4018
        %v4021 = vsub.f32 0.0, %v4019
        %v4022 = vsub.f32 0.0, %v4020
        %v4023 = vmul.f32 %v4021, 1.442695
        %v4024 = vpow.pop %v4023
        %v4025 = vmul.f32 %v4022, 1.442695
        %v4026 = vpow.pop %v4025
        %v4029 = vrot.slane %v3989, 7
        %v4030 = vrot.slane %v3990, 7
        %v4033 = vmul.f32 %v4024, %v4029
        %v4034 = vmul.f32 %v4026, %v4030
        %v4035 = vlaneseq
        %v4036 = vshrl.u32 %v4035, 7
        %v4037 = vsub.s32 6, %v4036
        %v4038 = vrot.slane %v4033, %v4037
        %v4039 = vlaneseq
        %v4040 = vshrl.u32 %v4039, 7
        %v4041 = vsub.s32 6, %v4040
        %v4042 = vrot.slane %v4034, %v4041
        %v4043 = vmul.f32 %v4038, %v3987
        %v4044 = vmul.f32 %v4042, %v3985
        %v4045 = vadd.f32 %v3968, %v4043
        %v4046 = vadd.f32 %v3969, %v4044
        %v4047 = vadd.f32 %v3970, %v4033
        %v4048 = vadd.f32 %v3971, %v4034
        %4049 = vrot.lane.b32.xlu0 %v3032, 30
        %v4050 = vpop.permute.xlu0 %4049
        %4051 = vrot.lane.b32.xlu0 %v3035, 30
        %v4052 = vpop.permute.xlu0 %4051
        %4053 = vrot.lane.b32.xlu0 %v3033, 30
        %v4054 = vpop.permute.xlu0 %4053
        %4055 = vrot.lane.b32.xlu0 %v3036, 30
        %v4056 = vpop.permute.xlu0 %4055
        %4057 = vrot.lane.b32.xlu0 %v3034, 30
        %v4058 = vpop.permute.xlu0 %4057
        %4059 = vrot.lane.b32.xlu0 %v3037, 30
        %v4060 = vpop.permute.xlu0 %4059
        %vm4061 = vcmp.lt.s32.totalorder %v393, 30
        %v4062 = vsel %vm4061, %v4050, %v4054
        %v4063 = vsel %vm4061, %v4052, %v4056
        %v4064 = vsel %vm4061, %v4058, %v4050
        %v4065 = vsel %vm4061, %v4060, %v4052
        %v4066 = vmul.f32 %v4065, %v3507
        %v4067 = vmul.f32 %v4063, %v3511
        %v4068 = vmul.f32 %v2973, %v4064
        %v4069 = vmul.f32 %v2974, %v4062
        %v4070 = vmul.f32 %v2975, %v4065
        %v4071 = vmul.f32 %v2976, %v4063
        %v4072 = vsel %vm2981, %v4070, 0.0
        %v4073 = vadd.f32 %v4068, %v4072
        %v4074 = vrot.slane %v4073, 4
        %v4075 = vadd.f32 %v4073, %v4074
        %v4076 = vrot.slane %v4075, 2
        %v4077 = vadd.f32 %v4075, %v4076
        %v4078 = vrot.slane %v4077, 1
        %v4079 = vadd.f32 %v4077, %v4078
        %v4080 = vsel %vm2981, %v4071, 0.0
        %v4081 = vadd.f32 %v4069, %v4080
        %v4082 = vrot.slane %v4081, 4
        %v4083 = vadd.f32 %v4081, %v4082
        %v4084 = vrot.slane %v4083, 2
        %v4085 = vadd.f32 %v4083, %v4084
        %v4086 = vrot.slane %v4085, 1
        %v4087 = vadd.f32 %v4085, %v4086
        %v4088 = vadd.f32 %v2989, %v4065
        %v4089 = vadd.f32 %v2997, %v4063
        %v4090 = vmul.f32 %v4079, 2.0
        %v4091 = vmul.f32 %v4087, 2.0
        %v4092 = vsub.f32 %v4088, %v4090
        %v4093 = vsub.f32 %v4089, %v4091
        %s4094 = sld [smem:[#allocation4 + $0xc]]
        %v4095 = vstv %s4094
        %v4096 = vadd.f32 %v4092, %v4095
        %v4097 = vadd.f32 %v4093, %v4095
        %v4098 = vsub.f32 0.0, %v4096
        %v4099 = vsub.f32 0.0, %v4097
        %v4100 = vmul.f32 %v4098, 1.442695
        %v4101 = vpow.pop %v4100
        %v4102 = vmul.f32 %v4099, 1.442695
        %v4103 = vpow.pop %v4102
        %v4106 = vrot.slane %v4066, 7
        %v4107 = vrot.slane %v4067, 7
        %v4110 = vmul.f32 %v4101, %v4106
        %v4111 = vmul.f32 %v4103, %v4107
        %v4112 = vlaneseq
        %v4113 = vshrl.u32 %v4112, 7
        %v4114 = vsub.s32 6, %v4113
        %v4115 = vrot.slane %v4110, %v4114
        %v4116 = vlaneseq
        %v4117 = vshrl.u32 %v4116, 7
        %v4118 = vsub.s32 6, %v4117
        %v4119 = vrot.slane %v4111, %v4118
        %v4120 = vmul.f32 %v4115, %v4064
        %v4121 = vmul.f32 %v4119, %v4062
        %v4122 = vadd.f32 %v4045, %v4120
        %v4123 = vadd.f32 %v4046, %v4121
        %v4124 = vadd.f32 %v4047, %v4110
        %v4125 = vadd.f32 %v4048, %v4111
        %4126 = vrot.lane.b32.xlu0 %v3032, 29
        %v4127 = vpop.permute.xlu0 %4126
        %4128 = vrot.lane.b32.xlu0 %v3035, 29
        %v4129 = vpop.permute.xlu0 %4128
        %4130 = vrot.lane.b32.xlu0 %v3033, 29
        %v4131 = vpop.permute.xlu0 %4130
        %4132 = vrot.lane.b32.xlu0 %v3036, 29
        %v4133 = vpop.permute.xlu0 %4132
        %4134 = vrot.lane.b32.xlu0 %v3034, 29
        %v4135 = vpop.permute.xlu0 %4134
        %4136 = vrot.lane.b32.xlu0 %v3037, 29
        %v4137 = vpop.permute.xlu0 %4136
        %vm4138 = vcmp.lt.s32.totalorder %v393, 29
        %v4139 = vsel %vm4138, %v4127, %v4131
        %v4140 = vsel %vm4138, %v4129, %v4133
        %v4141 = vsel %vm4138, %v4135, %v4127
        %v4142 = vsel %vm4138, %v4137, %v4129
        %v4143 = vmul.f32 %v4142, %v3597
        %v4144 = vmul.f32 %v4140, %v3601
        %v4145 = vmul.f32 %v2973, %v4141
        %v4146 = vmul.f32 %v2974, %v4139
        %v4147 = vmul.f32 %v2975, %v4142
        %v4148 = vmul.f32 %v2976, %v4140
        %v4149 = vsel %vm2981, %v4147, 0.0
        %v4150 = vadd.f32 %v4145, %v4149
        %v4151 = vrot.slane %v4150, 4
        %v4152 = vadd.f32 %v4150, %v4151
        %v4153 = vrot.slane %v4152, 2
        %v4154 = vadd.f32 %v4152, %v4153
        %v4155 = vrot.slane %v4154, 1
        %v4156 = vadd.f32 %v4154, %v4155
        %v4157 = vsel %vm2981, %v4148, 0.0
        %v4158 = vadd.f32 %v4146, %v4157
        %v4159 = vrot.slane %v4158, 4
        %v4160 = vadd.f32 %v4158, %v4159
        %v4161 = vrot.slane %v4160, 2
        %v4162 = vadd.f32 %v4160, %v4161
        %v4163 = vrot.slane %v4162, 1
        %v4164 = vadd.f32 %v4162, %v4163
        %v4165 = vadd.f32 %v2989, %v4142
        %v4166 = vadd.f32 %v2997, %v4140
        %v4167 = vmul.f32 %v4156, 2.0
        %v4168 = vmul.f32 %v4164, 2.0
        %v4169 = vsub.f32 %v4165, %v4167
        %v4170 = vsub.f32 %v4166, %v4168
        %s4171 = sld [smem:[#allocation4 + $0xd]]
        %v4172 = vstv %s4171
        %v4173 = vadd.f32 %v4169, %v4172
        %v4174 = vadd.f32 %v4170, %v4172
        %v4175 = vsub.f32 0.0, %v4173
        %v4176 = vsub.f32 0.0, %v4174
        %v4177 = vmul.f32 %v4175, 1.442695
        %v4178 = vpow.pop %v4177
        %v4179 = vmul.f32 %v4176, 1.442695
        %v4180 = vpow.pop %v4179
        %v4183 = vrot.slane %v4143, 7
        %v4184 = vrot.slane %v4144, 7
        %v4187 = vmul.f32 %v4178, %v4183
        %v4188 = vmul.f32 %v4180, %v4184
        %v4189 = vlaneseq
        %v4190 = vshrl.u32 %v4189, 7
        %v4191 = vsub.s32 6, %v4190
        %v4192 = vrot.slane %v4187, %v4191
        %v4193 = vlaneseq
        %v4194 = vshrl.u32 %v4193, 7
        %v4195 = vsub.s32 6, %v4194
        %v4196 = vrot.slane %v4188, %v4195
        %v4197 = vmul.f32 %v4192, %v4141
        %v4198 = vmul.f32 %v4196, %v4139
        %v4199 = vadd.f32 %v4122, %v4197
        %v4200 = vadd.f32 %v4123, %v4198
        %v4201 = vadd.f32 %v4124, %v4187
        %v4202 = vadd.f32 %v4125, %v4188
        %4203 = vrot.lane.b32.xlu0 %v3032, 19
        %v4204 = vpop.permute.xlu0 %4203
        %4205 = vrot.lane.b32.xlu0 %v3035, 19
        %v4206 = vpop.permute.xlu0 %4205
        %4207 = vrot.lane.b32.xlu0 %v3033, 19
        %v4208 = vpop.permute.xlu0 %4207
        %4209 = vrot.lane.b32.xlu0 %v3036, 19
        %v4210 = vpop.permute.xlu0 %4209
        %4211 = vrot.lane.b32.xlu0 %v3034, 19
        %v4212 = vpop.permute.xlu0 %4211
        %4213 = vrot.lane.b32.xlu0 %v3037, 19
        %v4214 = vpop.permute.xlu0 %4213
        %vm4215 = vcmp.lt.s32.totalorder %v393, 19
        %v4216 = vsel %vm4215, %v4204, %v4208
        %v4217 = vsel %vm4215, %v4206, %v4210
        %v4218 = vsel %vm4215, %v4212, %v4204
        %v4219 = vsel %vm4215, %v4214, %v4206
        %v4220 = vmul.f32 %v4219, %v3060
        %v4221 = vmul.f32 %v4217, %v3064
        %v4222 = vmul.f32 %v2973, %v4218
        %v4223 = vmul.f32 %v2974, %v4216
        %v4224 = vmul.f32 %v2975, %v4219
        %v4225 = vmul.f32 %v2976, %v4217
        %v4226 = vsel %vm2981, %v4224, 0.0
        %v4227 = vadd.f32 %v4222, %v4226
        %v4228 = vrot.slane %v4227, 4
        %v4229 = vadd.f32 %v4227, %v4228
        %v4230 = vrot.slane %v4229, 2
        %v4231 = vadd.f32 %v4229, %v4230
        %v4232 = vrot.slane %v4231, 1
        %v4233 = vadd.f32 %v4231, %v4232
        %v4234 = vsel %vm2981, %v4225, 0.0
        %v4235 = vadd.f32 %v4223, %v4234
        %v4236 = vrot.slane %v4235, 4
        %v4237 = vadd.f32 %v4235, %v4236
        %v4238 = vrot.slane %v4237, 2
        %v4239 = vadd.f32 %v4237, %v4238
        %v4240 = vrot.slane %v4239, 1
        %v4241 = vadd.f32 %v4239, %v4240
        %v4242 = vadd.f32 %v2989, %v4219
        %v4243 = vadd.f32 %v2997, %v4217
        %v4244 = vmul.f32 %v4233, 2.0
        %v4245 = vmul.f32 %v4241, 2.0
        %v4246 = vsub.f32 %v4242, %v4244
        %v4247 = vsub.f32 %v4243, %v4245
        %s4248 = sld [smem:[#allocation4 + $0xe]]
        %v4249 = vstv %s4248
        %v4250 = vadd.f32 %v4246, %v4249
        %v4251 = vadd.f32 %v4247, %v4249
        %v4252 = vsub.f32 0.0, %v4250
        %v4253 = vsub.f32 0.0, %v4251
        %v4254 = vmul.f32 %v4252, 1.442695
        %v4255 = vpow.pop %v4254
        %v4256 = vmul.f32 %v4253, 1.442695
        %v4257 = vpow.pop %v4256
        %v4260 = vrot.slane %v4220, 7
        %v4261 = vrot.slane %v4221, 7
        %v4264 = vmul.f32 %v4255, %v4260
        %v4265 = vmul.f32 %v4257, %v4261
        %v4266 = vlaneseq
        %v4267 = vshrl.u32 %v4266, 7
        %v4268 = vsub.s32 6, %v4267
        %v4269 = vrot.slane %v4264, %v4268
        %v4270 = vlaneseq
        %v4271 = vshrl.u32 %v4270, 7
        %v4272 = vsub.s32 6, %v4271
        %v4273 = vrot.slane %v4265, %v4272
        %v4274 = vmul.f32 %v4269, %v4218
        %v4275 = vmul.f32 %v4273, %v4216
        %v4276 = vadd.f32 %v4199, %v4274
        %v4277 = vadd.f32 %v4200, %v4275
        %v4278 = vadd.f32 %v4201, %v4264
        %v4279 = vadd.f32 %v4202, %v4265
        %4280 = vrot.lane.b32.xlu0 %v3032, 18
        %v4281 = vpop.permute.xlu0 %4280
        %4282 = vrot.lane.b32.xlu0 %v3035, 18
        %v4283 = vpop.permute.xlu0 %4282
        %4284 = vrot.lane.b32.xlu0 %v3033, 18
        %v4285 = vpop.permute.xlu0 %4284
        %4286 = vrot.lane.b32.xlu0 %v3036, 18
        %v4287 = vpop.permute.xlu0 %4286
        %4288 = vrot.lane.b32.xlu0 %v3034, 18
        %v4289 = vpop.permute.xlu0 %4288
        %4290 = vrot.lane.b32.xlu0 %v3037, 18
        %v4291 = vpop.permute.xlu0 %4290
        %vm4292 = vcmp.lt.s32.totalorder %v393, 18
        %v4293 = vsel %vm4292, %v4281, %v4285
        %v4294 = vsel %vm4292, %v4283, %v4287
        %v4295 = vsel %vm4292, %v4289, %v4281
        %v4296 = vsel %vm4292, %v4291, %v4283
        %v4297 = vmul.f32 %v4296, %v3150
        %v4298 = vmul.f32 %v4294, %v3154
        %v4299 = vmul.f32 %v2973, %v4295
        %v4300 = vmul.f32 %v2974, %v4293
        %v4301 = vmul.f32 %v2975, %v4296
        %v4302 = vmul.f32 %v2976, %v4294
        %v4303 = vsel %vm2981, %v4301, 0.0
        %v4304 = vadd.f32 %v4299, %v4303
        %v4305 = vrot.slane %v4304, 4
        %v4306 = vadd.f32 %v4304, %v4305
        %v4307 = vrot.slane %v4306, 2
        %v4308 = vadd.f32 %v4306, %v4307
        %v4309 = vrot.slane %v4308, 1
        %v4310 = vadd.f32 %v4308, %v4309
        %v4311 = vsel %vm2981, %v4302, 0.0
        %v4312 = vadd.f32 %v4300, %v4311
        %v4313 = vrot.slane %v4312, 4
        %v4314 = vadd.f32 %v4312, %v4313
        %v4315 = vrot.slane %v4314, 2
        %v4316 = vadd.f32 %v4314, %v4315
        %v4317 = vrot.slane %v4316, 1
        %v4318 = vadd.f32 %v4316, %v4317
        %v4319 = vadd.f32 %v2989, %v4296
        %v4320 = vadd.f32 %v2997, %v4294
        %v4321 = vmul.f32 %v4310, 2.0
        %v4322 = vmul.f32 %v4318, 2.0
        %v4323 = vsub.f32 %v4319, %v4321
        %v4324 = vsub.f32 %v4320, %v4322
        %s4325 = sld [smem:[#allocation4 + $0xf]]
        %v4326 = vstv %s4325
        %v4327 = vadd.f32 %v4323, %v4326
        %v4328 = vadd.f32 %v4324, %v4326
        %v4329 = vsub.f32 0.0, %v4327
        %v4330 = vsub.f32 0.0, %v4328
        %v4331 = vmul.f32 %v4329, 1.442695
        %v4332 = vpow.pop %v4331
        %v4333 = vmul.f32 %v4330, 1.442695
        %v4334 = vpow.pop %v4333
        %v4337 = vrot.slane %v4297, 7
        %v4338 = vrot.slane %v4298, 7
        %v4341 = vmul.f32 %v4332, %v4337
        %v4342 = vmul.f32 %v4334, %v4338
        %v4343 = vlaneseq
        %v4344 = vshrl.u32 %v4343, 7
        %v4345 = vsub.s32 6, %v4344
        %v4346 = vrot.slane %v4341, %v4345
        %v4347 = vlaneseq
        %v4348 = vshrl.u32 %v4347, 7
        %v4349 = vsub.s32 6, %v4348
        %v4350 = vrot.slane %v4342, %v4349
        %v4351 = vmul.f32 %v4346, %v4295
        %v4352 = vmul.f32 %v4350, %v4293
        %v4353 = vadd.f32 %v4276, %v4351
        %v4354 = vadd.f32 %v4277, %v4352
        %v4355 = vadd.f32 %v4278, %v4341
        %v4356 = vadd.f32 %v4279, %v4342
        %4357 = vrot.lane.b32.xlu0 %v3032, 17
        %v4358 = vpop.permute.xlu0 %4357
        %4359 = vrot.lane.b32.xlu0 %v3035, 17
        %v4360 = vpop.permute.xlu0 %4359
        %4361 = vrot.lane.b32.xlu0 %v3033, 17
        %v4362 = vpop.permute.xlu0 %4361
        %4363 = vrot.lane.b32.xlu0 %v3036, 17
        %v4364 = vpop.permute.xlu0 %4363
        %4365 = vrot.lane.b32.xlu0 %v3034, 17
        %v4366 = vpop.permute.xlu0 %4365
        %4367 = vrot.lane.b32.xlu0 %v3037, 17
        %v4368 = vpop.permute.xlu0 %4367
        %v4369 = vsel %vm394, %v4358, %v4362
        %v4370 = vsel %vm394, %v4360, %v4364
        %v4371 = vsel %vm394, %v4366, %v4358
        %v4372 = vsel %vm394, %v4368, %v4360
        %v4373 = vmul.f32 %v4372, %v3239
        %v4374 = vmul.f32 %v4370, %v3243
        %v4375 = vmul.f32 %v2973, %v4371
        %v4376 = vmul.f32 %v2974, %v4369
        %v4377 = vmul.f32 %v2975, %v4372
        %v4378 = vmul.f32 %v2976, %v4370
        %v4379 = vsel %vm2981, %v4377, 0.0
        %v4380 = vadd.f32 %v4375, %v4379
        %v4381 = vrot.slane %v4380, 4
        %v4382 = vadd.f32 %v4380, %v4381
        %v4383 = vrot.slane %v4382, 2
        %v4384 = vadd.f32 %v4382, %v4383
        %v4385 = vrot.slane %v4384, 1
        %v4386 = vadd.f32 %v4384, %v4385
        %v4387 = vsel %vm2981, %v4378, 0.0
        %v4388 = vadd.f32 %v4376, %v4387
        %v4389 = vrot.slane %v4388, 4
        %v4390 = vadd.f32 %v4388, %v4389
        %v4391 = vrot.slane %v4390, 2
        %v4392 = vadd.f32 %v4390, %v4391
        %v4393 = vrot.slane %v4392, 1
        %v4394 = vadd.f32 %v4392, %v4393
        %v4395 = vadd.f32 %v2989, %v4372
        %v4396 = vadd.f32 %v2997, %v4370
        %v4397 = vmul.f32 %v4386, 2.0
        %v4398 = vmul.f32 %v4394, 2.0
        %v4399 = vsub.f32 %v4395, %v4397
        %v4400 = vsub.f32 %v4396, %v4398
        %s4401 = sld [smem:[#allocation4 + $0x10]]
        %v4402 = vstv %s4401
        %v4403 = vadd.f32 %v4399, %v4402
        %v4404 = vadd.f32 %v4400, %v4402
        %v4405 = vsub.f32 0.0, %v4403
        %v4406 = vsub.f32 0.0, %v4404
        %v4407 = vmul.f32 %v4405, 1.442695
        %v4408 = vpow.pop %v4407
        %v4409 = vmul.f32 %v4406, 1.442695
        %v4410 = vpow.pop %v4409
        %v4413 = vrot.slane %v4373, 7
        %v4414 = vrot.slane %v4374, 7
        %v4417 = vmul.f32 %v4408, %v4413
        %v4418 = vmul.f32 %v4410, %v4414
        %v4419 = vlaneseq
        %v4420 = vshrl.u32 %v4419, 7
        %v4421 = vsub.s32 6, %v4420
        %v4422 = vrot.slane %v4417, %v4421
        %v4423 = vlaneseq
        %v4424 = vshrl.u32 %v4423, 7
        %v4425 = vsub.s32 6, %v4424
        %v4426 = vrot.slane %v4418, %v4425
        %v4427 = vmul.f32 %v4422, %v4371
        %v4428 = vmul.f32 %v4426, %v4369
        %v4429 = vadd.f32 %v4353, %v4427
        %v4430 = vadd.f32 %v4354, %v4428
        %v4431 = vadd.f32 %v4355, %v4417
        %v4432 = vadd.f32 %v4356, %v4418
        %4433 = vrot.lane.b32.xlu0 %v3032, 16
        %v4434 = vpop.permute.xlu0 %4433
        %4435 = vrot.lane.b32.xlu0 %v3035, 16
        %v4436 = vpop.permute.xlu0 %4435
        %4437 = vrot.lane.b32.xlu0 %v3033, 16
        %v4438 = vpop.permute.xlu0 %4437
        %4439 = vrot.lane.b32.xlu0 %v3036, 16
        %v4440 = vpop.permute.xlu0 %4439
        %4441 = vrot.lane.b32.xlu0 %v3034, 16
        %v4442 = vpop.permute.xlu0 %4441
        %4443 = vrot.lane.b32.xlu0 %v3037, 16
        %v4444 = vpop.permute.xlu0 %4443
        %v4445 = vsel %vm432, %v4434, %v4438
        %v4446 = vsel %vm432, %v4436, %v4440
        %v4447 = vsel %vm432, %v4442, %v4434
        %v4448 = vsel %vm432, %v4444, %v4436
        %v4449 = vmul.f32 %v4448, %v3328
        %v4450 = vmul.f32 %v4446, %v3332
        %v4451 = vmul.f32 %v2973, %v4447
        %v4452 = vmul.f32 %v2974, %v4445
        %v4453 = vmul.f32 %v2975, %v4448
        %v4454 = vmul.f32 %v2976, %v4446
        %v4455 = vsel %vm2981, %v4453, 0.0
        %v4456 = vadd.f32 %v4451, %v4455
        %v4457 = vrot.slane %v4456, 4
        %v4458 = vadd.f32 %v4456, %v4457
        %v4459 = vrot.slane %v4458, 2
        %v4460 = vadd.f32 %v4458, %v4459
        %v4461 = vrot.slane %v4460, 1
        %v4462 = vadd.f32 %v4460, %v4461
        %v4463 = vsel %vm2981, %v4454, 0.0
        %v4464 = vadd.f32 %v4452, %v4463
        %v4465 = vrot.slane %v4464, 4
        %v4466 = vadd.f32 %v4464, %v4465
        %v4467 = vrot.slane %v4466, 2
        %v4468 = vadd.f32 %v4466, %v4467
        %v4469 = vrot.slane %v4468, 1
        %v4470 = vadd.f32 %v4468, %v4469
        %v4471 = vadd.f32 %v2989, %v4448
        %v4472 = vadd.f32 %v2997, %v4446
        %v4473 = vmul.f32 %v4462, 2.0
        %v4474 = vmul.f32 %v4470, 2.0
        %v4475 = vsub.f32 %v4471, %v4473
        %v4476 = vsub.f32 %v4472, %v4474
        %s4477 = sld [smem:[#allocation4 + $0x11]]
        %v4478 = vstv %s4477
        %v4479 = vadd.f32 %v4475, %v4478
        %v4480 = vadd.f32 %v4476, %v4478
        %v4481 = vsub.f32 0.0, %v4479
        %v4482 = vsub.f32 0.0, %v4480
        %v4483 = vmul.f32 %v4481, 1.442695
        %v4484 = vpow.pop %v4483
        %v4485 = vmul.f32 %v4482, 1.442695
        %v4486 = vpow.pop %v4485
        %v4489 = vrot.slane %v4449, 7
        %v4490 = vrot.slane %v4450, 7
        %v4493 = vmul.f32 %v4484, %v4489
        %v4494 = vmul.f32 %v4486, %v4490
        %v4495 = vlaneseq
        %v4496 = vshrl.u32 %v4495, 7
        %v4497 = vsub.s32 6, %v4496
        %v4498 = vrot.slane %v4493, %v4497
        %v4499 = vlaneseq
        %v4500 = vshrl.u32 %v4499, 7
        %v4501 = vsub.s32 6, %v4500
        %v4502 = vrot.slane %v4494, %v4501
        %v4503 = vmul.f32 %v4498, %v4447
        %v4504 = vmul.f32 %v4502, %v4445
        %v4505 = vadd.f32 %v4429, %v4503
        %v4506 = vadd.f32 %v4430, %v4504
        %v4507 = vadd.f32 %v4431, %v4493
        %v4508 = vadd.f32 %v4432, %v4494
        %4509 = vrot.lane.b32.xlu0 %v3032, 15
        %v4510 = vpop.permute.xlu0 %4509
        %4511 = vrot.lane.b32.xlu0 %v3035, 15
        %v4512 = vpop.permute.xlu0 %4511
        %4513 = vrot.lane.b32.xlu0 %v3033, 15
        %v4514 = vpop.permute.xlu0 %4513
        %4515 = vrot.lane.b32.xlu0 %v3036, 15
        %v4516 = vpop.permute.xlu0 %4515
        %4517 = vrot.lane.b32.xlu0 %v3034, 15
        %v4518 = vpop.permute.xlu0 %4517
        %4519 = vrot.lane.b32.xlu0 %v3037, 15
        %v4520 = vpop.permute.xlu0 %4519
        %v4521 = vsel %vm687, %v4510, %v4514
        %v4522 = vsel %vm687, %v4512, %v4516
        %v4523 = vsel %vm687, %v4518, %v4510
        %v4524 = vsel %vm687, %v4520, %v4512
        %v4525 = vmul.f32 %v4524, %v3417
        %v4526 = vmul.f32 %v4522, %v3421
        %v4527 = vmul.f32 %v2973, %v4523
        %v4528 = vmul.f32 %v2974, %v4521
        %v4529 = vmul.f32 %v2975, %v4524
        %v4530 = vmul.f32 %v2976, %v4522
        %v4531 = vsel %vm2981, %v4529, 0.0
        %v4532 = vadd.f32 %v4527, %v4531
        %v4533 = vrot.slane %v4532, 4
        %v4534 = vadd.f32 %v4532, %v4533
        %v4535 = vrot.slane %v4534, 2
        %v4536 = vadd.f32 %v4534, %v4535
        %v4537 = vrot.slane %v4536, 1
        %v4538 = vadd.f32 %v4536, %v4537
        %v4539 = vsel %vm2981, %v4530, 0.0
        %v4540 = vadd.f32 %v4528, %v4539
        %v4541 = vrot.slane %v4540, 4
        %v4542 = vadd.f32 %v4540, %v4541
        %v4543 = vrot.slane %v4542, 2
        %v4544 = vadd.f32 %v4542, %v4543
        %v4545 = vrot.slane %v4544, 1
        %v4546 = vadd.f32 %v4544, %v4545
        %v4547 = vadd.f32 %v2989, %v4524
        %v4548 = vadd.f32 %v2997, %v4522
        %v4549 = vmul.f32 %v4538, 2.0
        %v4550 = vmul.f32 %v4546, 2.0
        %v4551 = vsub.f32 %v4547, %v4549
        %v4552 = vsub.f32 %v4548, %v4550
        %s4553 = sld [smem:[#allocation4 + $0x12]]
        %v4554 = vstv %s4553
        %v4555 = vadd.f32 %v4551, %v4554
        %v4556 = vadd.f32 %v4552, %v4554
        %v4557 = vsub.f32 0.0, %v4555
        %v4558 = vsub.f32 0.0, %v4556
        %v4559 = vmul.f32 %v4557, 1.442695
        %v4560 = vpow.pop %v4559
        %v4561 = vmul.f32 %v4558, 1.442695
        %v4562 = vpow.pop %v4561
        %v4565 = vrot.slane %v4525, 7
        %v4566 = vrot.slane %v4526, 7
        %v4569 = vmul.f32 %v4560, %v4565
        %v4570 = vmul.f32 %v4562, %v4566
        %v4571 = vlaneseq
        %v4572 = vshrl.u32 %v4571, 7
        %v4573 = vsub.s32 6, %v4572
        %v4574 = vrot.slane %v4569, %v4573
        %v4575 = vlaneseq
        %v4576 = vshrl.u32 %v4575, 7
        %v4577 = vsub.s32 6, %v4576
        %v4578 = vrot.slane %v4570, %v4577
        %v4579 = vmul.f32 %v4574, %v4523
        %v4580 = vmul.f32 %v4578, %v4521
        %v4581 = vadd.f32 %v4505, %v4579
        %v4582 = vadd.f32 %v4506, %v4580
        %v4583 = vadd.f32 %v4507, %v4569
        %v4584 = vadd.f32 %v4508, %v4570
        %4585 = vrot.lane.b32.xlu0 %v3032, 14
        %v4586 = vpop.permute.xlu0 %4585
        %4587 = vrot.lane.b32.xlu0 %v3035, 14
        %v4588 = vpop.permute.xlu0 %4587
        %4589 = vrot.lane.b32.xlu0 %v3033, 14
        %v4590 = vpop.permute.xlu0 %4589
        %4591 = vrot.lane.b32.xlu0 %v3036, 14
        %v4592 = vpop.permute.xlu0 %4591
        %4593 = vrot.lane.b32.xlu0 %v3034, 14
        %v4594 = vpop.permute.xlu0 %4593
        %4595 = vrot.lane.b32.xlu0 %v3037, 14
        %v4596 = vpop.permute.xlu0 %4595
        %vm4597 = vcmp.lt.s32.totalorder %v393, 14
        %v4598 = vsel %vm4597, %v4586, %v4590
        %v4599 = vsel %vm4597, %v4588, %v4592
        %v4600 = vsel %vm4597, %v4594, %v4586
        %v4601 = vsel %vm4597, %v4596, %v4588
        %v4602 = vmul.f32 %v4601, %v3507
        %v4603 = vmul.f32 %v4599, %v3511
        %v4604 = vmul.f32 %v2973, %v4600
        %v4605 = vmul.f32 %v2974, %v4598
        %v4606 = vmul.f32 %v2975, %v4601
        %v4607 = vmul.f32 %v2976, %v4599
        %v4608 = vsel %vm2981, %v4606, 0.0
        %v4609 = vadd.f32 %v4604, %v4608
        %v4610 = vrot.slane %v4609, 4
        %v4611 = vadd.f32 %v4609, %v4610
        %v4612 = vrot.slane %v4611, 2
        %v4613 = vadd.f32 %v4611, %v4612
        %v4614 = vrot.slane %v4613, 1
        %v4615 = vadd.f32 %v4613, %v4614
        %v4616 = vsel %vm2981, %v4607, 0.0
        %v4617 = vadd.f32 %v4605, %v4616
        %v4618 = vrot.slane %v4617, 4
        %v4619 = vadd.f32 %v4617, %v4618
        %v4620 = vrot.slane %v4619, 2
        %v4621 = vadd.f32 %v4619, %v4620
        %v4622 = vrot.slane %v4621, 1
        %v4623 = vadd.f32 %v4621, %v4622
        %v4624 = vadd.f32 %v2989, %v4601
        %v4625 = vadd.f32 %v2997, %v4599
        %v4626 = vmul.f32 %v4615, 2.0
        %v4627 = vmul.f32 %v4623, 2.0
        %v4628 = vsub.f32 %v4624, %v4626
        %v4629 = vsub.f32 %v4625, %v4627
        %s4630 = sld [smem:[#allocation4 + $0x13]]
        %v4631 = vstv %s4630
        %v4632 = vadd.f32 %v4628, %v4631
        %v4633 = vadd.f32 %v4629, %v4631
        %v4634 = vsub.f32 0.0, %v4632
        %v4635 = vsub.f32 0.0, %v4633
        %v4636 = vmul.f32 %v4634, 1.442695
        %v4637 = vpow.pop %v4636
        %v4638 = vmul.f32 %v4635, 1.442695
        %v4639 = vpow.pop %v4638
        %v4642 = vrot.slane %v4602, 7
        %v4643 = vrot.slane %v4603, 7
        %v4646 = vmul.f32 %v4637, %v4642
        %v4647 = vmul.f32 %v4639, %v4643
        %v4648 = vlaneseq
        %v4649 = vshrl.u32 %v4648, 7
        %v4650 = vsub.s32 6, %v4649
        %v4651 = vrot.slane %v4646, %v4650
        %v4652 = vlaneseq
        %v4653 = vshrl.u32 %v4652, 7
        %v4654 = vsub.s32 6, %v4653
        %v4655 = vrot.slane %v4647, %v4654
        %v4656 = vmul.f32 %v4651, %v4600
        %v4657 = vmul.f32 %v4655, %v4598
        %v4658 = vadd.f32 %v4581, %v4656
        %v4659 = vadd.f32 %v4582, %v4657
        %v4660 = vadd.f32 %v4583, %v4646
        %v4661 = vadd.f32 %v4584, %v4647
        %4662 = vrot.lane.b32.xlu0 %v3032, 13
        %v4663 = vpop.permute.xlu0 %4662
        %4664 = vrot.lane.b32.xlu0 %v3035, 13
        %v4665 = vpop.permute.xlu0 %4664
        %4666 = vrot.lane.b32.xlu0 %v3033, 13
        %v4667 = vpop.permute.xlu0 %4666
        %4668 = vrot.lane.b32.xlu0 %v3036, 13
        %v4669 = vpop.permute.xlu0 %4668
        %4670 = vrot.lane.b32.xlu0 %v3034, 13
        %v4671 = vpop.permute.xlu0 %4670
        %4672 = vrot.lane.b32.xlu0 %v3037, 13
        %v4673 = vpop.permute.xlu0 %4672
        %vm4674 = vcmp.lt.s32.totalorder %v393, 13
        %v4675 = vsel %vm4674, %v4663, %v4667
        %v4676 = vsel %vm4674, %v4665, %v4669
        %v4677 = vsel %vm4674, %v4671, %v4663
        %v4678 = vsel %vm4674, %v4673, %v4665
        %v4679 = vmul.f32 %v4678, %v3597
        %v4680 = vmul.f32 %v4676, %v3601
        %v4681 = vmul.f32 %v2973, %v4677
        %v4682 = vmul.f32 %v2974, %v4675
        %v4683 = vmul.f32 %v2975, %v4678
        %v4684 = vmul.f32 %v2976, %v4676
        %v4685 = vsel %vm2981, %v4683, 0.0
        %v4686 = vadd.f32 %v4681, %v4685
        %v4687 = vrot.slane %v4686, 4
        %v4688 = vadd.f32 %v4686, %v4687
        %v4689 = vrot.slane %v4688, 2
        %v4690 = vadd.f32 %v4688, %v4689
        %v4691 = vrot.slane %v4690, 1
        %v4692 = vadd.f32 %v4690, %v4691
        %v4693 = vsel %vm2981, %v4684, 0.0
        %v4694 = vadd.f32 %v4682, %v4693
        %v4695 = vrot.slane %v4694, 4
        %v4696 = vadd.f32 %v4694, %v4695
        %v4697 = vrot.slane %v4696, 2
        %v4698 = vadd.f32 %v4696, %v4697
        %v4699 = vrot.slane %v4698, 1
        %v4700 = vadd.f32 %v4698, %v4699
        %v4701 = vadd.f32 %v2989, %v4678
        %v4702 = vadd.f32 %v2997, %v4676
        %v4703 = vmul.f32 %v4692, 2.0
        %v4704 = vmul.f32 %v4700, 2.0
        %v4705 = vsub.f32 %v4701, %v4703
        %v4706 = vsub.f32 %v4702, %v4704
        %s4707 = sld [smem:[#allocation4 + $0x14]]
        %v4708 = vstv %s4707
        %v4709 = vadd.f32 %v4705, %v4708
        %v4710 = vadd.f32 %v4706, %v4708
        %v4711 = vsub.f32 0.0, %v4709
        %v4712 = vsub.f32 0.0, %v4710
        %v4713 = vmul.f32 %v4711, 1.442695
        %v4714 = vpow.pop %v4713
        %v4715 = vmul.f32 %v4712, 1.442695
        %v4716 = vpow.pop %v4715
        %v4719 = vrot.slane %v4679, 7
        %v4720 = vrot.slane %v4680, 7
        %v4723 = vmul.f32 %v4714, %v4719
        %v4724 = vmul.f32 %v4716, %v4720
        %v4725 = vlaneseq
        %v4726 = vshrl.u32 %v4725, 7
        %v4727 = vsub.s32 6, %v4726
        %v4728 = vrot.slane %v4723, %v4727
        %v4729 = vlaneseq
        %v4730 = vshrl.u32 %v4729, 7
        %v4731 = vsub.s32 6, %v4730
        %v4732 = vrot.slane %v4724, %v4731
        %v4733 = vmul.f32 %v4728, %v4677
        %v4734 = vmul.f32 %v4732, %v4675
        %v4735 = vadd.f32 %v4658, %v4733
        %v4736 = vadd.f32 %v4659, %v4734
        %v4737 = vadd.f32 %v4660, %v4723
        %v4738 = vadd.f32 %v4661, %v4724
        %4739 = vrot.lane.b32.xlu0 %v3032, 3
        %v4740 = vpop.permute.xlu0 %4739
        %4741 = vrot.lane.b32.xlu0 %v3035, 3
        %v4742 = vpop.permute.xlu0 %4741
        %4743 = vrot.lane.b32.xlu0 %v3033, 3
        %v4744 = vpop.permute.xlu0 %4743
        %4745 = vrot.lane.b32.xlu0 %v3036, 3
        %v4746 = vpop.permute.xlu0 %4745
        %4747 = vrot.lane.b32.xlu0 %v3034, 3
        %v4748 = vpop.permute.xlu0 %4747
        %4749 = vrot.lane.b32.xlu0 %v3037, 3
        %v4750 = vpop.permute.xlu0 %4749
        %vm4751 = vcmp.lt.s32.totalorder %v393, 3
        %v4752 = vsel %vm4751, %v4740, %v4744
        %v4753 = vsel %vm4751, %v4742, %v4746
        %v4754 = vsel %vm4751, %v4748, %v4740
        %v4755 = vsel %vm4751, %v4750, %v4742
        %v4756 = vmul.f32 %v4755, %v3060
        %v4757 = vmul.f32 %v4753, %v3064
        %v4758 = vmul.f32 %v2973, %v4754
        %v4759 = vmul.f32 %v2974, %v4752
        %v4760 = vmul.f32 %v2975, %v4755
        %v4761 = vmul.f32 %v2976, %v4753
        %v4762 = vsel %vm2981, %v4760, 0.0
        %v4763 = vadd.f32 %v4758, %v4762
        %v4764 = vrot.slane %v4763, 4
        %v4765 = vadd.f32 %v4763, %v4764
        %v4766 = vrot.slane %v4765, 2
        %v4767 = vadd.f32 %v4765, %v4766
        %v4768 = vrot.slane %v4767, 1
        %v4769 = vadd.f32 %v4767, %v4768
        %v4770 = vsel %vm2981, %v4761, 0.0
        %v4771 = vadd.f32 %v4759, %v4770
        %v4772 = vrot.slane %v4771, 4
        %v4773 = vadd.f32 %v4771, %v4772
        %v4774 = vrot.slane %v4773, 2
        %v4775 = vadd.f32 %v4773, %v4774
        %v4776 = vrot.slane %v4775, 1
        %v4777 = vadd.f32 %v4775, %v4776
        %v4778 = vadd.f32 %v2989, %v4755
        %v4779 = vadd.f32 %v2997, %v4753
        %v4780 = vmul.f32 %v4769, 2.0
        %v4781 = vmul.f32 %v4777, 2.0
        %v4782 = vsub.f32 %v4778, %v4780
        %v4783 = vsub.f32 %v4779, %v4781
        %s4784 = sld [smem:[#allocation4 + $0x15]]
        %v4785 = vstv %s4784
        %v4786 = vadd.f32 %v4782, %v4785
        %v4787 = vadd.f32 %v4783, %v4785
        %v4788 = vsub.f32 0.0, %v4786
        %v4789 = vsub.f32 0.0, %v4787
        %v4790 = vmul.f32 %v4788, 1.442695
        %v4791 = vpow.pop %v4790
        %v4792 = vmul.f32 %v4789, 1.442695
        %v4793 = vpow.pop %v4792
        %v4796 = vrot.slane %v4756, 7
        %v4797 = vrot.slane %v4757, 7
        %v4800 = vmul.f32 %v4791, %v4796
        %v4801 = vmul.f32 %v4793, %v4797
        %v4802 = vlaneseq
        %v4803 = vshrl.u32 %v4802, 7
        %v4804 = vsub.s32 6, %v4803
        %v4805 = vrot.slane %v4800, %v4804
        %v4806 = vlaneseq
        %v4807 = vshrl.u32 %v4806, 7
        %v4808 = vsub.s32 6, %v4807
        %v4809 = vrot.slane %v4801, %v4808
        %v4810 = vmul.f32 %v4805, %v4754
        %v4811 = vmul.f32 %v4809, %v4752
        %v4812 = vadd.f32 %v4735, %v4810
        %v4813 = vadd.f32 %v4736, %v4811
        %v4814 = vadd.f32 %v4737, %v4800
        %v4815 = vadd.f32 %v4738, %v4801
        %4816 = vrot.lane.b32.xlu0 %v3032, 2
        %v4817 = vpop.permute.xlu0 %4816
        %4818 = vrot.lane.b32.xlu0 %v3035, 2
        %v4819 = vpop.permute.xlu0 %4818
        %4820 = vrot.lane.b32.xlu0 %v3033, 2
        %v4821 = vpop.permute.xlu0 %4820
        %4822 = vrot.lane.b32.xlu0 %v3036, 2
        %v4823 = vpop.permute.xlu0 %4822
        %4824 = vrot.lane.b32.xlu0 %v3034, 2
        %v4825 = vpop.permute.xlu0 %4824
        %4826 = vrot.lane.b32.xlu0 %v3037, 2
        %v4827 = vpop.permute.xlu0 %4826
        %vm4828 = vcmp.lt.s32.totalorder %v393, 2
        %v4829 = vsel %vm4828, %v4817, %v4821
        %v4830 = vsel %vm4828, %v4819, %v4823
        %v4831 = vsel %vm4828, %v4825, %v4817
        %v4832 = vsel %vm4828, %v4827, %v4819
        %v4833 = vmul.f32 %v4832, %v3150
        %v4834 = vmul.f32 %v4830, %v3154
        %v4835 = vmul.f32 %v2973, %v4831
        %v4836 = vmul.f32 %v2974, %v4829
        %v4837 = vmul.f32 %v2975, %v4832
        %v4838 = vmul.f32 %v2976, %v4830
        %v4839 = vsel %vm2981, %v4837, 0.0
        %v4840 = vadd.f32 %v4835, %v4839
        %v4841 = vrot.slane %v4840, 4
        %v4842 = vadd.f32 %v4840, %v4841
        %v4843 = vrot.slane %v4842, 2
        %v4844 = vadd.f32 %v4842, %v4843
        %v4845 = vrot.slane %v4844, 1
        %v4846 = vadd.f32 %v4844, %v4845
        %v4847 = vsel %vm2981, %v4838, 0.0
        %v4848 = vadd.f32 %v4836, %v4847
        %v4849 = vrot.slane %v4848, 4
        %v4850 = vadd.f32 %v4848, %v4849
        %v4851 = vrot.slane %v4850, 2
        %v4852 = vadd.f32 %v4850, %v4851
        %v4853 = vrot.slane %v4852, 1
        %v4854 = vadd.f32 %v4852, %v4853
        %v4855 = vadd.f32 %v2989, %v4832
        %v4856 = vadd.f32 %v2997, %v4830
        %v4857 = vmul.f32 %v4846, 2.0
        %v4858 = vmul.f32 %v4854, 2.0
        %v4859 = vsub.f32 %v4855, %v4857
        %v4860 = vsub.f32 %v4856, %v4858
        %s4861 = sld [smem:[#allocation4 + $0x16]]
        %v4862 = vstv %s4861
        %v4863 = vadd.f32 %v4859, %v4862
        %v4864 = vadd.f32 %v4860, %v4862
        %v4865 = vsub.f32 0.0, %v4863
        %v4866 = vsub.f32 0.0, %v4864
        %v4867 = vmul.f32 %v4865, 1.442695
        %v4868 = vpow.pop %v4867
        %v4869 = vmul.f32 %v4866, 1.442695
        %v4870 = vpow.pop %v4869
        %v4873 = vrot.slane %v4833, 7
        %v4874 = vrot.slane %v4834, 7
        %v4877 = vmul.f32 %v4868, %v4873
        %v4878 = vmul.f32 %v4870, %v4874
        %v4879 = vlaneseq
        %v4880 = vshrl.u32 %v4879, 7
        %v4881 = vsub.s32 6, %v4880
        %v4882 = vrot.slane %v4877, %v4881
        %v4883 = vlaneseq
        %v4884 = vshrl.u32 %v4883, 7
        %v4885 = vsub.s32 6, %v4884
        %v4886 = vrot.slane %v4878, %v4885
        %v4887 = vmul.f32 %v4882, %v4831
        %v4888 = vmul.f32 %v4886, %v4829
        %v4889 = vadd.f32 %v4812, %v4887
        %v4890 = vadd.f32 %v4813, %v4888
        %v4891 = vadd.f32 %v4814, %v4877
        %v4892 = vadd.f32 %v4815, %v4878
        %4893 = vrot.lane.b32.xlu0 %v3032, 1
        %v4894 = vpop.permute.xlu0 %4893
        %4895 = vrot.lane.b32.xlu0 %v3035, 1
        %v4896 = vpop.permute.xlu0 %4895
        %4897 = vrot.lane.b32.xlu0 %v3033, 1
        %v4898 = vpop.permute.xlu0 %4897
        %4899 = vrot.lane.b32.xlu0 %v3036, 1
        %v4900 = vpop.permute.xlu0 %4899
        %4901 = vrot.lane.b32.xlu0 %v3034, 1
        %v4902 = vpop.permute.xlu0 %4901
        %4903 = vrot.lane.b32.xlu0 %v3037, 1
        %v4904 = vpop.permute.xlu0 %4903
        %v4905 = vsel %vm841, %v4894, %v4898
        %v4906 = vsel %vm841, %v4896, %v4900
        %v4907 = vsel %vm841, %v4902, %v4894
        %v4908 = vsel %vm841, %v4904, %v4896
        %v4909 = vmul.f32 %v4908, %v3239
        %v4910 = vmul.f32 %v4906, %v3243
        %v4911 = vmul.f32 %v2973, %v4907
        %v4912 = vmul.f32 %v2974, %v4905
        %v4913 = vmul.f32 %v2975, %v4908
        %v4914 = vmul.f32 %v2976, %v4906
        %v4915 = vsel %vm2981, %v4913, 0.0
        %v4916 = vadd.f32 %v4911, %v4915
        %v4917 = vrot.slane %v4916, 4
        %v4918 = vadd.f32 %v4916, %v4917
        %v4919 = vrot.slane %v4918, 2
        %v4920 = vadd.f32 %v4918, %v4919
        %v4921 = vrot.slane %v4920, 1
        %v4922 = vadd.f32 %v4920, %v4921
        %v4923 = vsel %vm2981, %v4914, 0.0
        %v4924 = vadd.f32 %v4912, %v4923
        %v4925 = vrot.slane %v4924, 4
        %v4926 = vadd.f32 %v4924, %v4925
        %v4927 = vrot.slane %v4926, 2
        %v4928 = vadd.f32 %v4926, %v4927
        %v4929 = vrot.slane %v4928, 1
        %v4930 = vadd.f32 %v4928, %v4929
        %v4931 = vadd.f32 %v2989, %v4908
        %v4932 = vadd.f32 %v2997, %v4906
        %v4933 = vmul.f32 %v4922, 2.0
        %v4934 = vmul.f32 %v4930, 2.0
        %v4935 = vsub.f32 %v4931, %v4933
        %v4936 = vsub.f32 %v4932, %v4934
        %s4937 = sld [smem:[#allocation4 + $0x17]]
        %v4938 = vstv %s4937
        %v4939 = vadd.f32 %v4935, %v4938
        %v4940 = vadd.f32 %v4936, %v4938
        %v4941 = vsub.f32 0.0, %v4939
        %v4942 = vsub.f32 0.0, %v4940
        %v4943 = vmul.f32 %v4941, 1.442695
        %v4944 = vpow.pop %v4943
        %v4945 = vmul.f32 %v4942, 1.442695
        %v4946 = vpow.pop %v4945
        %v4949 = vrot.slane %v4909, 7
        %v4950 = vrot.slane %v4910, 7
        %v4953 = vmul.f32 %v4944, %v4949
        %v4954 = vmul.f32 %v4946, %v4950
        %v4955 = vlaneseq
        %v4956 = vshrl.u32 %v4955, 7
        %v4957 = vsub.s32 6, %v4956
        %v4958 = vrot.slane %v4953, %v4957
        %v4959 = vlaneseq
        %v4960 = vshrl.u32 %v4959, 7
        %v4961 = vsub.s32 6, %v4960
        %v4962 = vrot.slane %v4954, %v4961
        %v4963 = vmul.f32 %v4958, %v4907
        %v4964 = vmul.f32 %v4962, %v4905
        %v4965 = vadd.f32 %v4889, %v4963
        %v4966 = vadd.f32 %v4890, %v4964
        %v4967 = vadd.f32 %v4891, %v4953
        %v4968 = vadd.f32 %v4892, %v4954
        %v4969 = vmul.f32 %v3035, %v3328
        %v4970 = vmul.f32 %v3036, %v3332
        %v4971 = vmul.f32 %v2973, %v3032
        %v4972 = vmul.f32 %v2974, %v3033
        %v4973 = vmul.f32 %v2975, %v3035
        %v4974 = vmul.f32 %v2976, %v3036
        %v4975 = vsel %vm2981, %v4973, 0.0
        %v4976 = vadd.f32 %v4971, %v4975
        %v4977 = vrot.slane %v4976, 4
        %v4978 = vadd.f32 %v4976, %v4977
        %v4979 = vrot.slane %v4978, 2
        %v4980 = vadd.f32 %v4978, %v4979
        %v4981 = vrot.slane %v4980, 1
        %v4982 = vadd.f32 %v4980, %v4981
        %v4983 = vsel %vm2981, %v4974, 0.0
        %v4984 = vadd.f32 %v4972, %v4983
        %v4985 = vrot.slane %v4984, 4
        %v4986 = vadd.f32 %v4984, %v4985
        %v4987 = vrot.slane %v4986, 2
        %v4988 = vadd.f32 %v4986, %v4987
        %v4989 = vrot.slane %v4988, 1
        %v4990 = vadd.f32 %v4988, %v4989
        %v4991 = vadd.f32 %v2989, %v3035
        %v4992 = vadd.f32 %v2997, %v3036
        %v4993 = vmul.f32 %v4982, 2.0
        %v4994 = vmul.f32 %v4990, 2.0
        %v4995 = vsub.f32 %v4991, %v4993
        %v4996 = vsub.f32 %v4992, %v4994
        %s4997 = sld [smem:[#allocation4 + $0x18]]
        %v4998 = vstv %s4997
        %v4999 = vadd.f32 %v4995, %v4998
        %v5000 = vadd.f32 %v4996, %v4998
        %v5001 = vsub.f32 0.0, %v4999
        %v5002 = vsub.f32 0.0, %v5000
        %v5003 = vmul.f32 %v5001, 1.442695
        %v5004 = vpow.pop %v5003
        %v5005 = vmul.f32 %v5002, 1.442695
        %v5006 = vpow.pop %v5005
        %v5009 = vrot.slane %v4969, 7
        %v5010 = vrot.slane %v4970, 7
        %v5013 = vmul.f32 %v5004, %v5009
        %v5014 = vmul.f32 %v5006, %v5010
        %v5015 = vlaneseq
        %v5016 = vshrl.u32 %v5015, 7
        %v5017 = vsub.s32 6, %v5016
        %v5018 = vrot.slane %v5013, %v5017
        %v5019 = vlaneseq
        %v5020 = vshrl.u32 %v5019, 7
        %v5021 = vsub.s32 6, %v5020
        %v5022 = vrot.slane %v5014, %v5021
        %v5023 = vmul.f32 %v5018, %v3032
        %v5024 = vmul.f32 %v5022, %v3033
        %v5025 = vadd.f32 %v4965, %v5023
        %v5026 = vadd.f32 %v4966, %v5024
        %v5027 = vadd.f32 %v4967, %v5013
        %v5028 = vadd.f32 %v4968, %v5014
        %5029 = vrot.lane.b32.xlu0 %v3032, 127
        %v5030 = vpop.permute.xlu0 %5029
        %5031 = vrot.lane.b32.xlu0 %v3035, 127
        %v5032 = vpop.permute.xlu0 %5031
        %5033 = vrot.lane.b32.xlu0 %v3033, 127
        %v5034 = vpop.permute.xlu0 %5033
        %5035 = vrot.lane.b32.xlu0 %v3036, 127
        %v5036 = vpop.permute.xlu0 %5035
        %5037 = vrot.lane.b32.xlu0 %v3034, 127
        %v5038 = vpop.permute.xlu0 %5037
        %5039 = vrot.lane.b32.xlu0 %v3037, 127
        %v5040 = vpop.permute.xlu0 %5039
        %v5041 = vsel %vm1106, %v5034, %v5038
        %v5042 = vsel %vm1106, %v5036, %v5040
        %v5043 = vsel %vm1106, %v5030, %v5034
        %v5044 = vsel %vm1106, %v5032, %v5036
        %v5045 = vmul.f32 %v5044, %v3417
        %v5046 = vmul.f32 %v5042, %v3421
        %v5047 = vmul.f32 %v2973, %v5043
        %v5048 = vmul.f32 %v2974, %v5041
        %v5049 = vmul.f32 %v2975, %v5044
        %v5050 = vmul.f32 %v2976, %v5042
        %v5051 = vsel %vm2981, %v5049, 0.0
        %v5052 = vadd.f32 %v5047, %v5051
        %v5053 = vrot.slane %v5052, 4
        %v5054 = vadd.f32 %v5052, %v5053
        %v5055 = vrot.slane %v5054, 2
        %v5056 = vadd.f32 %v5054, %v5055
        %v5057 = vrot.slane %v5056, 1
        %v5058 = vadd.f32 %v5056, %v5057
        %v5059 = vsel %vm2981, %v5050, 0.0
        %v5060 = vadd.f32 %v5048, %v5059
        %v5061 = vrot.slane %v5060, 4
        %v5062 = vadd.f32 %v5060, %v5061
        %v5063 = vrot.slane %v5062, 2
        %v5064 = vadd.f32 %v5062, %v5063
        %v5065 = vrot.slane %v5064, 1
        %v5066 = vadd.f32 %v5064, %v5065
        %v5067 = vadd.f32 %v2989, %v5044
        %v5068 = vadd.f32 %v2997, %v5042
        %v5069 = vmul.f32 %v5058, 2.0
        %v5070 = vmul.f32 %v5066, 2.0
        %v5071 = vsub.f32 %v5067, %v5069
        %v5072 = vsub.f32 %v5068, %v5070
        %s5073 = sld [smem:[#allocation4 + $0x19]]
        %v5074 = vstv %s5073
        %v5075 = vadd.f32 %v5071, %v5074
        %v5076 = vadd.f32 %v5072, %v5074
        %v5077 = vsub.f32 0.0, %v5075
        %v5078 = vsub.f32 0.0, %v5076
        %v5079 = vmul.f32 %v5077, 1.442695
        %v5080 = vpow.pop %v5079
        %v5081 = vmul.f32 %v5078, 1.442695
        %v5082 = vpow.pop %v5081
        %v5085 = vrot.slane %v5045, 7
        %v5086 = vrot.slane %v5046, 7
        %v5089 = vmul.f32 %v5080, %v5085
        %v5090 = vmul.f32 %v5082, %v5086
        %v5091 = vlaneseq
        %v5092 = vshrl.u32 %v5091, 7
        %v5093 = vsub.s32 6, %v5092
        %v5094 = vrot.slane %v5089, %v5093
        %v5095 = vlaneseq
        %v5096 = vshrl.u32 %v5095, 7
        %v5097 = vsub.s32 6, %v5096
        %v5098 = vrot.slane %v5090, %v5097
        %v5099 = vmul.f32 %v5094, %v5043
        %v5100 = vmul.f32 %v5098, %v5041
        %v5101 = vadd.f32 %v5025, %v5099
        %v5102 = vadd.f32 %v5026, %v5100
        %v5103 = vadd.f32 %v5027, %v5089
        %v5104 = vadd.f32 %v5028, %v5090
        %5105 = vrot.lane.b32.xlu0 %v3032, 126
        %v5106 = vpop.permute.xlu0 %5105
        %5107 = vrot.lane.b32.xlu0 %v3035, 126
        %v5108 = vpop.permute.xlu0 %5107
        %5109 = vrot.lane.b32.xlu0 %v3033, 126
        %v5110 = vpop.permute.xlu0 %5109
        %5111 = vrot.lane.b32.xlu0 %v3036, 126
        %v5112 = vpop.permute.xlu0 %5111
        %5113 = vrot.lane.b32.xlu0 %v3034, 126
        %v5114 = vpop.permute.xlu0 %5113
        %5115 = vrot.lane.b32.xlu0 %v3037, 126
        %v5116 = vpop.permute.xlu0 %5115
        %vm5117 = vcmp.lt.s32.totalorder %v393, 126
        %v5118 = vsel %vm5117, %v5110, %v5114
        %v5119 = vsel %vm5117, %v5112, %v5116
        %v5120 = vsel %vm5117, %v5106, %v5110
        %v5121 = vsel %vm5117, %v5108, %v5112
        %v5122 = vmul.f32 %v5121, %v3507
        %v5123 = vmul.f32 %v5119, %v3511
        %v5124 = vmul.f32 %v2973, %v5120
        %v5125 = vmul.f32 %v2974, %v5118
        %v5126 = vmul.f32 %v2975, %v5121
        %v5127 = vmul.f32 %v2976, %v5119
        %v5128 = vsel %vm2981, %v5126, 0.0
        %v5129 = vadd.f32 %v5124, %v5128
        %v5130 = vrot.slane %v5129, 4
        %v5131 = vadd.f32 %v5129, %v5130
        %v5132 = vrot.slane %v5131, 2
        %v5133 = vadd.f32 %v5131, %v5132
        %v5134 = vrot.slane %v5133, 1
        %v5135 = vadd.f32 %v5133, %v5134
        %v5136 = vsel %vm2981, %v5127, 0.0
        %v5137 = vadd.f32 %v5125, %v5136
        %v5138 = vrot.slane %v5137, 4
        %v5139 = vadd.f32 %v5137, %v5138
        %v5140 = vrot.slane %v5139, 2
        %v5141 = vadd.f32 %v5139, %v5140
        %v5142 = vrot.slane %v5141, 1
        %v5143 = vadd.f32 %v5141, %v5142
        %v5144 = vadd.f32 %v2989, %v5121
        %v5145 = vadd.f32 %v2997, %v5119
        %v5146 = vmul.f32 %v5135, 2.0
        %v5147 = vmul.f32 %v5143, 2.0
        %v5148 = vsub.f32 %v5144, %v5146
        %v5149 = vsub.f32 %v5145, %v5147
        %s5150 = sld [smem:[#allocation4 + $0x1a]]
        %v5151 = vstv %s5150
        %v5152 = vadd.f32 %v5148, %v5151
        %v5153 = vadd.f32 %v5149, %v5151
        %v5154 = vsub.f32 0.0, %v5152
        %v5155 = vsub.f32 0.0, %v5153
        %v5156 = vmul.f32 %v5154, 1.442695
        %v5157 = vpow.pop %v5156
        %v5158 = vmul.f32 %v5155, 1.442695
        %v5159 = vpow.pop %v5158
        %v5162 = vrot.slane %v5122, 7
        %v5163 = vrot.slane %v5123, 7
        %v5166 = vmul.f32 %v5157, %v5162
        %v5167 = vmul.f32 %v5159, %v5163
        %v5168 = vlaneseq
        %v5169 = vshrl.u32 %v5168, 7
        %v5170 = vsub.s32 6, %v5169
        %v5171 = vrot.slane %v5166, %v5170
        %v5172 = vlaneseq
        %v5173 = vshrl.u32 %v5172, 7
        %v5174 = vsub.s32 6, %v5173
        %v5175 = vrot.slane %v5167, %v5174
        %v5176 = vmul.f32 %v5171, %v5120
        %v5177 = vmul.f32 %v5175, %v5118
        %v5178 = vadd.f32 %v5101, %v5176
        %v5179 = vadd.f32 %v5102, %v5177
        %v5180 = vadd.f32 %v5103, %v5166
        %v5181 = vadd.f32 %v5104, %v5167
        %5182 = vrot.lane.b32.xlu0 %v3032, 125
        %v5183 = vpop.permute.xlu0 %5182
        %5184 = vrot.lane.b32.xlu0 %v3035, 125
        %v5185 = vpop.permute.xlu0 %5184
        %5186 = vrot.lane.b32.xlu0 %v3033, 125
        %v5187 = vpop.permute.xlu0 %5186
        %5188 = vrot.lane.b32.xlu0 %v3036, 125
        %v5189 = vpop.permute.xlu0 %5188
        %5190 = vrot.lane.b32.xlu0 %v3034, 125
        %v5191 = vpop.permute.xlu0 %5190
        %5192 = vrot.lane.b32.xlu0 %v3037, 125
        %v5193 = vpop.permute.xlu0 %5192
        %vm5194 = vcmp.lt.s32.totalorder %v393, 125
        %v5195 = vsel %vm5194, %v5187, %v5191
        %v5196 = vsel %vm5194, %v5189, %v5193
        %v5197 = vsel %vm5194, %v5183, %v5187
        %v5198 = vsel %vm5194, %v5185, %v5189
        %v5199 = vmul.f32 %v5198, %v3597
        %v5200 = vmul.f32 %v5196, %v3601
        %v5201 = vmul.f32 %v2973, %v5197
        %v5202 = vmul.f32 %v2974, %v5195
        %v5203 = vmul.f32 %v2975, %v5198
        %v5204 = vmul.f32 %v2976, %v5196
        %v5205 = vsel %vm2981, %v5203, 0.0
        %v5206 = vadd.f32 %v5201, %v5205
        %v5207 = vrot.slane %v5206, 4
        %v5208 = vadd.f32 %v5206, %v5207
        %v5209 = vrot.slane %v5208, 2
        %v5210 = vadd.f32 %v5208, %v5209
        %v5211 = vrot.slane %v5210, 1
        %v5212 = vadd.f32 %v5210, %v5211
        %v5213 = vsel %vm2981, %v5204, 0.0
        %v5214 = vadd.f32 %v5202, %v5213
        %v5215 = vrot.slane %v5214, 4
        %v5216 = vadd.f32 %v5214, %v5215
        %v5217 = vrot.slane %v5216, 2
        %v5218 = vadd.f32 %v5216, %v5217
        %v5219 = vrot.slane %v5218, 1
        %v5220 = vadd.f32 %v5218, %v5219
        %v5221 = vadd.f32 %v2989, %v5198
        %v5222 = vadd.f32 %v2997, %v5196
        %v5223 = vmul.f32 %v5212, 2.0
        %v5224 = vmul.f32 %v5220, 2.0
        %v5225 = vsub.f32 %v5221, %v5223
        %v5226 = vsub.f32 %v5222, %v5224
        %s5227 = sld [smem:[#allocation4 + $0x1b]]
        %v5228 = vstv %s5227
        %v5229 = vadd.f32 %v5225, %v5228
        %v5230 = vadd.f32 %v5226, %v5228
        %v5231 = vsub.f32 0.0, %v5229
        %v5232 = vsub.f32 0.0, %v5230
        %v5233 = vmul.f32 %v5231, 1.442695
        %v5234 = vpow.pop %v5233
        %v5235 = vmul.f32 %v5232, 1.442695
        %v5236 = vpow.pop %v5235
        %v5239 = vrot.slane %v5199, 7
        %v5240 = vrot.slane %v5200, 7
        %v5243 = vmul.f32 %v5234, %v5239
        %v5244 = vmul.f32 %v5236, %v5240
        %v5245 = vlaneseq
        %v5246 = vshrl.u32 %v5245, 7
        %v5247 = vsub.s32 6, %v5246
        %v5248 = vrot.slane %v5243, %v5247
        %v5249 = vlaneseq
        %v5250 = vshrl.u32 %v5249, 7
        %v5251 = vsub.s32 6, %v5250
        %v5252 = vrot.slane %v5244, %v5251
        %v5253 = vmul.f32 %v5248, %v5197
        %v5254 = vmul.f32 %v5252, %v5195
        %v5255 = vadd.f32 %v5178, %v5253
        %v5256 = vadd.f32 %v5179, %v5254
        %v5257 = vadd.f32 %v5180, %v5243
        %v5258 = vadd.f32 %v5181, %v5244
        %5259 = vrot.lane.b32.xlu0 %v3032, 115
        %v5260 = vpop.permute.xlu0 %5259
        %5261 = vrot.lane.b32.xlu0 %v3035, 115
        %v5262 = vpop.permute.xlu0 %5261
        %5263 = vrot.lane.b32.xlu0 %v3033, 115
        %v5264 = vpop.permute.xlu0 %5263
        %5265 = vrot.lane.b32.xlu0 %v3036, 115
        %v5266 = vpop.permute.xlu0 %5265
        %5267 = vrot.lane.b32.xlu0 %v3034, 115
        %v5268 = vpop.permute.xlu0 %5267
        %5269 = vrot.lane.b32.xlu0 %v3037, 115
        %v5270 = vpop.permute.xlu0 %5269
        %vm5271 = vcmp.lt.s32.totalorder %v393, 115
        %v5272 = vsel %vm5271, %v5264, %v5268
        %v5273 = vsel %vm5271, %v5266, %v5270
        %v5274 = vsel %vm5271, %v5260, %v5264
        %v5275 = vsel %vm5271, %v5262, %v5266
        %v5276 = vmul.f32 %v5275, %v3060
        %v5277 = vmul.f32 %v5273, %v3064
        %v5278 = vmul.f32 %v2973, %v5274
        %v5279 = vmul.f32 %v2974, %v5272
        %v5280 = vmul.f32 %v2975, %v5275
        %v5281 = vmul.f32 %v2976, %v5273
        %v5282 = vsel %vm2981, %v5280, 0.0
        %v5283 = vadd.f32 %v5278, %v5282
        %v5284 = vrot.slane %v5283, 4
        %v5285 = vadd.f32 %v5283, %v5284
        %v5286 = vrot.slane %v5285, 2
        %v5287 = vadd.f32 %v5285, %v5286
        %v5288 = vrot.slane %v5287, 1
        %v5289 = vadd.f32 %v5287, %v5288
        %v5290 = vsel %vm2981, %v5281, 0.0
        %v5291 = vadd.f32 %v5279, %v5290
        %v5292 = vrot.slane %v5291, 4
        %v5293 = vadd.f32 %v5291, %v5292
        %v5294 = vrot.slane %v5293, 2
        %v5295 = vadd.f32 %v5293, %v5294
        %v5296 = vrot.slane %v5295, 1
        %v5297 = vadd.f32 %v5295, %v5296
        %v5298 = vadd.f32 %v2989, %v5275
        %v5299 = vadd.f32 %v2997, %v5273
        %v5300 = vmul.f32 %v5289, 2.0
        %v5301 = vmul.f32 %v5297, 2.0
        %v5302 = vsub.f32 %v5298, %v5300
        %v5303 = vsub.f32 %v5299, %v5301
        %s5304 = sld [smem:[#allocation4 + $0x1c]]
        %v5305 = vstv %s5304
        %v5306 = vadd.f32 %v5302, %v5305
        %v5307 = vadd.f32 %v5303, %v5305
        %v5308 = vsub.f32 0.0, %v5306
        %v5309 = vsub.f32 0.0, %v5307
        %v5310 = vmul.f32 %v5308, 1.442695
        %v5311 = vpow.pop %v5310
        %v5312 = vmul.f32 %v5309, 1.442695
        %v5313 = vpow.pop %v5312
        %v5316 = vrot.slane %v5276, 7
        %v5317 = vrot.slane %v5277, 7
        %v5320 = vmul.f32 %v5311, %v5316
        %v5321 = vmul.f32 %v5313, %v5317
        %v5322 = vlaneseq
        %v5323 = vshrl.u32 %v5322, 7
        %v5324 = vsub.s32 6, %v5323
        %v5325 = vrot.slane %v5320, %v5324
        %v5326 = vlaneseq
        %v5327 = vshrl.u32 %v5326, 7
        %v5328 = vsub.s32 6, %v5327
        %v5329 = vrot.slane %v5321, %v5328
        %v5330 = vmul.f32 %v5325, %v5274
        %v5331 = vmul.f32 %v5329, %v5272
        %v5332 = vadd.f32 %v5255, %v5330
        %v5333 = vadd.f32 %v5256, %v5331
        %v5334 = vadd.f32 %v5257, %v5320
        %v5335 = vadd.f32 %v5258, %v5321
        %5336 = vrot.lane.b32.xlu0 %v3032, 114
        %v5337 = vpop.permute.xlu0 %5336
        %5338 = vrot.lane.b32.xlu0 %v3035, 114
        %v5339 = vpop.permute.xlu0 %5338
        %5340 = vrot.lane.b32.xlu0 %v3033, 114
        %v5341 = vpop.permute.xlu0 %5340
        %5342 = vrot.lane.b32.xlu0 %v3036, 114
        %v5343 = vpop.permute.xlu0 %5342
        %5344 = vrot.lane.b32.xlu0 %v3034, 114
        %v5345 = vpop.permute.xlu0 %5344
        %5346 = vrot.lane.b32.xlu0 %v3037, 114
        %v5347 = vpop.permute.xlu0 %5346
        %vm5348 = vcmp.lt.s32.totalorder %v393, 114
        %v5349 = vsel %vm5348, %v5341, %v5345
        %v5350 = vsel %vm5348, %v5343, %v5347
        %v5351 = vsel %vm5348, %v5337, %v5341
        %v5352 = vsel %vm5348, %v5339, %v5343
        %v5353 = vmul.f32 %v5352, %v3150
        %v5354 = vmul.f32 %v5350, %v3154
        %v5355 = vmul.f32 %v2973, %v5351
        %v5356 = vmul.f32 %v2974, %v5349
        %v5357 = vmul.f32 %v2975, %v5352
        %v5358 = vmul.f32 %v2976, %v5350
        %v5359 = vsel %vm2981, %v5357, 0.0
        %v5360 = vadd.f32 %v5355, %v5359
        %v5361 = vrot.slane %v5360, 4
        %v5362 = vadd.f32 %v5360, %v5361
        %v5363 = vrot.slane %v5362, 2
        %v5364 = vadd.f32 %v5362, %v5363
        %v5365 = vrot.slane %v5364, 1
        %v5366 = vadd.f32 %v5364, %v5365
        %v5367 = vsel %vm2981, %v5358, 0.0
        %v5368 = vadd.f32 %v5356, %v5367
        %v5369 = vrot.slane %v5368, 4
        %v5370 = vadd.f32 %v5368, %v5369
        %v5371 = vrot.slane %v5370, 2
        %v5372 = vadd.f32 %v5370, %v5371
        %v5373 = vrot.slane %v5372, 1
        %v5374 = vadd.f32 %v5372, %v5373
        %v5375 = vadd.f32 %v2989, %v5352
        %v5376 = vadd.f32 %v2997, %v5350
        %v5377 = vmul.f32 %v5366, 2.0
        %v5378 = vmul.f32 %v5374, 2.0
        %v5379 = vsub.f32 %v5375, %v5377
        %v5380 = vsub.f32 %v5376, %v5378
        %s5381 = sld [smem:[#allocation4 + $0x1d]]
        %v5382 = vstv %s5381
        %v5383 = vadd.f32 %v5379, %v5382
        %v5384 = vadd.f32 %v5380, %v5382
        %v5385 = vsub.f32 0.0, %v5383
        %v5386 = vsub.f32 0.0, %v5384
        %v5387 = vmul.f32 %v5385, 1.442695
        %v5388 = vpow.pop %v5387
        %v5389 = vmul.f32 %v5386, 1.442695
        %v5390 = vpow.pop %v5389
        %v5393 = vrot.slane %v5353, 7
        %v5394 = vrot.slane %v5354, 7
        %v5397 = vmul.f32 %v5388, %v5393
        %v5398 = vmul.f32 %v5390, %v5394
        %v5399 = vlaneseq
        %v5400 = vshrl.u32 %v5399, 7
        %v5401 = vsub.s32 6, %v5400
        %v5402 = vrot.slane %v5397, %v5401
        %v5403 = vlaneseq
        %v5404 = vshrl.u32 %v5403, 7
        %v5405 = vsub.s32 6, %v5404
        %v5406 = vrot.slane %v5398, %v5405
        %v5407 = vmul.f32 %v5402, %v5351
        %v5408 = vmul.f32 %v5406, %v5349
        %v5409 = vadd.f32 %v5332, %v5407
        %v5410 = vadd.f32 %v5333, %v5408
        %v5411 = vadd.f32 %v5334, %v5397
        %v5412 = vadd.f32 %v5335, %v5398
        %5413 = vrot.lane.b32.xlu0 %v3032, 113
        %v5414 = vpop.permute.xlu0 %5413
        %5415 = vrot.lane.b32.xlu0 %v3035, 113
        %v5416 = vpop.permute.xlu0 %5415
        %5417 = vrot.lane.b32.xlu0 %v3033, 113
        %v5418 = vpop.permute.xlu0 %5417
        %5419 = vrot.lane.b32.xlu0 %v3036, 113
        %v5420 = vpop.permute.xlu0 %5419
        %5421 = vrot.lane.b32.xlu0 %v3034, 113
        %v5422 = vpop.permute.xlu0 %5421
        %5423 = vrot.lane.b32.xlu0 %v3037, 113
        %v5424 = vpop.permute.xlu0 %5423
        %v5425 = vsel %vm1247, %v5418, %v5422
        %v5426 = vsel %vm1247, %v5420, %v5424
        %v5427 = vsel %vm1247, %v5414, %v5418
        %v5428 = vsel %vm1247, %v5416, %v5420
        %v5429 = vmul.f32 %v5428, %v3239
        %v5430 = vmul.f32 %v5426, %v3243
        %v5431 = vmul.f32 %v2973, %v5427
        %v5432 = vmul.f32 %v2974, %v5425
        %v5433 = vmul.f32 %v2975, %v5428
        %v5434 = vmul.f32 %v2976, %v5426
        %v5435 = vsel %vm2981, %v5433, 0.0
        %v5436 = vadd.f32 %v5431, %v5435
        %v5437 = vrot.slane %v5436, 4
        %v5438 = vadd.f32 %v5436, %v5437
        %v5439 = vrot.slane %v5438, 2
        %v5440 = vadd.f32 %v5438, %v5439
        %v5441 = vrot.slane %v5440, 1
        %v5442 = vadd.f32 %v5440, %v5441
        %v5443 = vsel %vm2981, %v5434, 0.0
        %v5444 = vadd.f32 %v5432, %v5443
        %v5445 = vrot.slane %v5444, 4
        %v5446 = vadd.f32 %v5444, %v5445
        %v5447 = vrot.slane %v5446, 2
        %v5448 = vadd.f32 %v5446, %v5447
        %v5449 = vrot.slane %v5448, 1
        %v5450 = vadd.f32 %v5448, %v5449
        %v5451 = vadd.f32 %v2989, %v5428
        %v5452 = vadd.f32 %v2997, %v5426
        %v5453 = vmul.f32 %v5442, 2.0
        %v5454 = vmul.f32 %v5450, 2.0
        %v5455 = vsub.f32 %v5451, %v5453
        %v5456 = vsub.f32 %v5452, %v5454
        %s5457 = sld [smem:[#allocation4 + $0x1e]]
        %v5458 = vstv %s5457
        %v5459 = vadd.f32 %v5455, %v5458
        %v5460 = vadd.f32 %v5456, %v5458
        %v5461 = vsub.f32 0.0, %v5459
        %v5462 = vsub.f32 0.0, %v5460
        %v5463 = vmul.f32 %v5461, 1.442695
        %v5464 = vpow.pop %v5463
        %v5465 = vmul.f32 %v5462, 1.442695
        %v5466 = vpow.pop %v5465
        %v5469 = vrot.slane %v5429, 7
        %v5470 = vrot.slane %v5430, 7
        %v5473 = vmul.f32 %v5464, %v5469
        %v5474 = vmul.f32 %v5466, %v5470
        %v5475 = vlaneseq
        %v5476 = vshrl.u32 %v5475, 7
        %v5477 = vsub.s32 6, %v5476
        %v5478 = vrot.slane %v5473, %v5477
        %v5479 = vlaneseq
        %v5480 = vshrl.u32 %v5479, 7
        %v5481 = vsub.s32 6, %v5480
        %v5482 = vrot.slane %v5474, %v5481
        %v5483 = vmul.f32 %v5478, %v5427
        %v5484 = vmul.f32 %v5482, %v5425
        %v5485 = vadd.f32 %v5409, %v5483
        %v5486 = vadd.f32 %v5410, %v5484
        %v5487 = vadd.f32 %v5411, %v5473
        %v5488 = vadd.f32 %v5412, %v5474
        %5489 = vrot.lane.b32.xlu0 %v3032, 112
        %v5490 = vpop.permute.xlu0 %5489
        %5491 = vrot.lane.b32.xlu0 %v3035, 112
        %v5492 = vpop.permute.xlu0 %5491
        %5493 = vrot.lane.b32.xlu0 %v3033, 112
        %v5494 = vpop.permute.xlu0 %5493
        %5495 = vrot.lane.b32.xlu0 %v3036, 112
        %v5496 = vpop.permute.xlu0 %5495
        %5497 = vrot.lane.b32.xlu0 %v3034, 112
        %v5498 = vpop.permute.xlu0 %5497
        %5499 = vrot.lane.b32.xlu0 %v3037, 112
        %v5500 = vpop.permute.xlu0 %5499
        %v5501 = vsel %vm1388, %v5494, %v5498
        %v5502 = vsel %vm1388, %v5496, %v5500
        %v5503 = vsel %vm1388, %v5490, %v5494
        %v5504 = vsel %vm1388, %v5492, %v5496
        %v5505 = vmul.f32 %v5504, %v3328
        %v5506 = vmul.f32 %v5502, %v3332
        %v5507 = vmul.f32 %v2973, %v5503
        %v5508 = vmul.f32 %v2974, %v5501
        %v5509 = vmul.f32 %v2975, %v5504
        %v5510 = vmul.f32 %v2976, %v5502
        %v5511 = vsel %vm2981, %v5509, 0.0
        %v5512 = vadd.f32 %v5507, %v5511
        %v5513 = vrot.slane %v5512, 4
        %v5514 = vadd.f32 %v5512, %v5513
        %v5515 = vrot.slane %v5514, 2
        %v5516 = vadd.f32 %v5514, %v5515
        %v5517 = vrot.slane %v5516, 1
        %v5518 = vadd.f32 %v5516, %v5517
        %v5519 = vsel %vm2981, %v5510, 0.0
        %v5520 = vadd.f32 %v5508, %v5519
        %v5521 = vrot.slane %v5520, 4
        %v5522 = vadd.f32 %v5520, %v5521
        %v5523 = vrot.slane %v5522, 2
        %v5524 = vadd.f32 %v5522, %v5523
        %v5525 = vrot.slane %v5524, 1
        %v5526 = vadd.f32 %v5524, %v5525
        %v5527 = vadd.f32 %v2989, %v5504
        %v5528 = vadd.f32 %v2997, %v5502
        %v5529 = vmul.f32 %v5518, 2.0
        %v5530 = vmul.f32 %v5526, 2.0
        %v5531 = vsub.f32 %v5527, %v5529
        %v5532 = vsub.f32 %v5528, %v5530
        %s5533 = sld [smem:[#allocation4 + $0x1f]]
        %v5534 = vstv %s5533
        %v5535 = vadd.f32 %v5531, %v5534
        %v5536 = vadd.f32 %v5532, %v5534
        %v5537 = vsub.f32 0.0, %v5535
        %v5538 = vsub.f32 0.0, %v5536
        %v5539 = vmul.f32 %v5537, 1.442695
        %v5540 = vpow.pop %v5539
        %v5541 = vmul.f32 %v5538, 1.442695
        %v5542 = vpow.pop %v5541
        %v5545 = vrot.slane %v5505, 7
        %v5546 = vrot.slane %v5506, 7
        %v5549 = vmul.f32 %v5540, %v5545
        %v5550 = vmul.f32 %v5542, %v5546
        %v5551 = vlaneseq
        %v5552 = vshrl.u32 %v5551, 7
        %v5553 = vsub.s32 6, %v5552
        %v5554 = vrot.slane %v5549, %v5553
        %v5555 = vlaneseq
        %v5556 = vshrl.u32 %v5555, 7
        %v5557 = vsub.s32 6, %v5556
        %v5558 = vrot.slane %v5550, %v5557
        %v5559 = vmul.f32 %v5554, %v5503
        %v5560 = vmul.f32 %v5558, %v5501
        %v5561 = vadd.f32 %v5485, %v5559
        %v5562 = vadd.f32 %v5486, %v5560
        %v5563 = vadd.f32 %v5487, %v5549
        %v5564 = vadd.f32 %v5488, %v5550
        %5565 = vrot.lane.b32.xlu0 %v3032, 111
        %v5566 = vpop.permute.xlu0 %5565
        %5567 = vrot.lane.b32.xlu0 %v3035, 111
        %v5568 = vpop.permute.xlu0 %5567
        %5569 = vrot.lane.b32.xlu0 %v3033, 111
        %v5570 = vpop.permute.xlu0 %5569
        %5571 = vrot.lane.b32.xlu0 %v3036, 111
        %v5572 = vpop.permute.xlu0 %5571
        %5573 = vrot.lane.b32.xlu0 %v3034, 111
        %v5574 = vpop.permute.xlu0 %5573
        %5575 = vrot.lane.b32.xlu0 %v3037, 111
        %v5576 = vpop.permute.xlu0 %5575
        %v5577 = vsel %vm1529, %v5570, %v5574
        %v5578 = vsel %vm1529, %v5572, %v5576
        %v5579 = vsel %vm1529, %v5566, %v5570
        %v5580 = vsel %vm1529, %v5568, %v5572
        %v5581 = vmul.f32 %v5580, %v3417
        %v5582 = vmul.f32 %v5578, %v3421
        %v5583 = vmul.f32 %v2973, %v5579
        %v5584 = vmul.f32 %v2974, %v5577
        %v5585 = vmul.f32 %v2975, %v5580
        %v5586 = vmul.f32 %v2976, %v5578
        %v5587 = vsel %vm2981, %v5585, 0.0
        %v5588 = vadd.f32 %v5583, %v5587
        %v5589 = vrot.slane %v5588, 4
        %v5590 = vadd.f32 %v5588, %v5589
        %v5591 = vrot.slane %v5590, 2
        %v5592 = vadd.f32 %v5590, %v5591
        %v5593 = vrot.slane %v5592, 1
        %v5594 = vadd.f32 %v5592, %v5593
        %v5595 = vsel %vm2981, %v5586, 0.0
        %v5596 = vadd.f32 %v5584, %v5595
        %v5597 = vrot.slane %v5596, 4
        %v5598 = vadd.f32 %v5596, %v5597
        %v5599 = vrot.slane %v5598, 2
        %v5600 = vadd.f32 %v5598, %v5599
        %v5601 = vrot.slane %v5600, 1
        %v5602 = vadd.f32 %v5600, %v5601
        %v5603 = vadd.f32 %v2989, %v5580
        %v5604 = vadd.f32 %v2997, %v5578
        %v5605 = vmul.f32 %v5594, 2.0
        %v5606 = vmul.f32 %v5602, 2.0
        %v5607 = vsub.f32 %v5603, %v5605
        %v5608 = vsub.f32 %v5604, %v5606
        %s5609 = sld [smem:[#allocation4 + $0x20]]
        %v5610 = vstv %s5609
        %v5611 = vadd.f32 %v5607, %v5610
        %v5612 = vadd.f32 %v5608, %v5610
        %v5613 = vsub.f32 0.0, %v5611
        %v5614 = vsub.f32 0.0, %v5612
        %v5615 = vmul.f32 %v5613, 1.442695
        %v5616 = vpow.pop %v5615
        %v5617 = vmul.f32 %v5614, 1.442695
        %v5618 = vpow.pop %v5617
        %v5621 = vrot.slane %v5581, 7
        %v5622 = vrot.slane %v5582, 7
        %v5625 = vmul.f32 %v5616, %v5621
        %v5626 = vmul.f32 %v5618, %v5622
        %v5627 = vlaneseq
        %v5628 = vshrl.u32 %v5627, 7
        %v5629 = vsub.s32 6, %v5628
        %v5630 = vrot.slane %v5625, %v5629
        %v5631 = vlaneseq
        %v5632 = vshrl.u32 %v5631, 7
        %v5633 = vsub.s32 6, %v5632
        %v5634 = vrot.slane %v5626, %v5633
        %v5635 = vmul.f32 %v5630, %v5579
        %v5636 = vmul.f32 %v5634, %v5577
        %v5637 = vadd.f32 %v5561, %v5635
        %v5638 = vadd.f32 %v5562, %v5636
        %v5639 = vadd.f32 %v5563, %v5625
        %v5640 = vadd.f32 %v5564, %v5626
        %5641 = vrot.lane.b32.xlu0 %v3032, 110
        %v5642 = vpop.permute.xlu0 %5641
        %5643 = vrot.lane.b32.xlu0 %v3035, 110
        %v5644 = vpop.permute.xlu0 %5643
        %5645 = vrot.lane.b32.xlu0 %v3033, 110
        %v5646 = vpop.permute.xlu0 %5645
        %5647 = vrot.lane.b32.xlu0 %v3036, 110
        %v5648 = vpop.permute.xlu0 %5647
        %5649 = vrot.lane.b32.xlu0 %v3034, 110
        %v5650 = vpop.permute.xlu0 %5649
        %5651 = vrot.lane.b32.xlu0 %v3037, 110
        %v5652 = vpop.permute.xlu0 %5651
        %vm5653 = vcmp.lt.s32.totalorder %v393, 110
        %v5654 = vsel %vm5653, %v5646, %v5650
        %v5655 = vsel %vm5653, %v5648, %v5652
        %v5656 = vsel %vm5653, %v5642, %v5646
        %v5657 = vsel %vm5653, %v5644, %v5648
        %v5658 = vmul.f32 %v5657, %v3507
        %v5659 = vmul.f32 %v5655, %v3511
        %v5660 = vmul.f32 %v2973, %v5656
        %v5661 = vmul.f32 %v2974, %v5654
        %v5662 = vmul.f32 %v2975, %v5657
        %v5663 = vmul.f32 %v2976, %v5655
        %v5664 = vsel %vm2981, %v5662, 0.0
        %v5665 = vadd.f32 %v5660, %v5664
        %v5666 = vrot.slane %v5665, 4
        %v5667 = vadd.f32 %v5665, %v5666
        %v5668 = vrot.slane %v5667, 2
        %v5669 = vadd.f32 %v5667, %v5668
        %v5670 = vrot.slane %v5669, 1
        %v5671 = vadd.f32 %v5669, %v5670
        %v5672 = vsel %vm2981, %v5663, 0.0
        %v5673 = vadd.f32 %v5661, %v5672
        %v5674 = vrot.slane %v5673, 4
        %v5675 = vadd.f32 %v5673, %v5674
        %v5676 = vrot.slane %v5675, 2
        %v5677 = vadd.f32 %v5675, %v5676
        %v5678 = vrot.slane %v5677, 1
        %v5679 = vadd.f32 %v5677, %v5678
        %v5680 = vadd.f32 %v2989, %v5657
        %v5681 = vadd.f32 %v2997, %v5655
        %v5682 = vmul.f32 %v5671, 2.0
        %v5683 = vmul.f32 %v5679, 2.0
        %v5684 = vsub.f32 %v5680, %v5682
        %v5685 = vsub.f32 %v5681, %v5683
        %s5686 = sld [smem:[#allocation4 + $0x21]]
        %v5687 = vstv %s5686
        %v5688 = vadd.f32 %v5684, %v5687
        %v5689 = vadd.f32 %v5685, %v5687
        %v5690 = vsub.f32 0.0, %v5688
        %v5691 = vsub.f32 0.0, %v5689
        %v5692 = vmul.f32 %v5690, 1.442695
        %v5693 = vpow.pop %v5692
        %v5694 = vmul.f32 %v5691, 1.442695
        %v5695 = vpow.pop %v5694
        %v5698 = vrot.slane %v5658, 7
        %v5699 = vrot.slane %v5659, 7
        %v5702 = vmul.f32 %v5693, %v5698
        %v5703 = vmul.f32 %v5695, %v5699
        %v5704 = vlaneseq
        %v5705 = vshrl.u32 %v5704, 7
        %v5706 = vsub.s32 6, %v5705
        %v5707 = vrot.slane %v5702, %v5706
        %v5708 = vlaneseq
        %v5709 = vshrl.u32 %v5708, 7
        %v5710 = vsub.s32 6, %v5709
        %v5711 = vrot.slane %v5703, %v5710
        %v5712 = vmul.f32 %v5707, %v5656
        %v5713 = vmul.f32 %v5711, %v5654
        %v5714 = vadd.f32 %v5637, %v5712
        %v5715 = vadd.f32 %v5638, %v5713
        %v5716 = vadd.f32 %v5639, %v5702
        %v5717 = vadd.f32 %v5640, %v5703
        %5718 = vrot.lane.b32.xlu0 %v3032, 109
        %v5719 = vpop.permute.xlu0 %5718
        %5720 = vrot.lane.b32.xlu0 %v3035, 109
        %v5721 = vpop.permute.xlu0 %5720
        %5722 = vrot.lane.b32.xlu0 %v3033, 109
        %v5723 = vpop.permute.xlu0 %5722
        %5724 = vrot.lane.b32.xlu0 %v3036, 109
        %v5725 = vpop.permute.xlu0 %5724
        %5726 = vrot.lane.b32.xlu0 %v3034, 109
        %v5727 = vpop.permute.xlu0 %5726
        %5728 = vrot.lane.b32.xlu0 %v3037, 109
        %v5729 = vpop.permute.xlu0 %5728
        %vm5730 = vcmp.lt.s32.totalorder %v393, 109
        %v5731 = vsel %vm5730, %v5723, %v5727
        %v5732 = vsel %vm5730, %v5725, %v5729
        %v5733 = vsel %vm5730, %v5719, %v5723
        %v5734 = vsel %vm5730, %v5721, %v5725
        %v5735 = vmul.f32 %v5734, %v3597
        %v5736 = vmul.f32 %v5732, %v3601
        %v5737 = vmul.f32 %v2973, %v5733
        %v5738 = vmul.f32 %v2974, %v5731
        %v5739 = vmul.f32 %v2975, %v5734
        %v5740 = vmul.f32 %v2976, %v5732
        %v5741 = vsel %vm2981, %v5739, 0.0
        %v5742 = vadd.f32 %v5737, %v5741
        %v5743 = vrot.slane %v5742, 4
        %v5744 = vadd.f32 %v5742, %v5743
        %v5745 = vrot.slane %v5744, 2
        %v5746 = vadd.f32 %v5744, %v5745
        %v5747 = vrot.slane %v5746, 1
        %v5748 = vadd.f32 %v5746, %v5747
        %v5749 = vsel %vm2981, %v5740, 0.0
        %v5750 = vadd.f32 %v5738, %v5749
        %v5751 = vrot.slane %v5750, 4
        %v5752 = vadd.f32 %v5750, %v5751
        %v5753 = vrot.slane %v5752, 2
        %v5754 = vadd.f32 %v5752, %v5753
        %v5755 = vrot.slane %v5754, 1
        %v5756 = vadd.f32 %v5754, %v5755
        %v5757 = vadd.f32 %v2989, %v5734
        %v5758 = vadd.f32 %v2997, %v5732
        %v5759 = vmul.f32 %v5748, 2.0
        %v5760 = vmul.f32 %v5756, 2.0
        %v5761 = vsub.f32 %v5757, %v5759
        %v5762 = vsub.f32 %v5758, %v5760
        %s5763 = sld [smem:[#allocation4 + $0x22]]
        %v5764 = vstv %s5763
        %v5765 = vadd.f32 %v5761, %v5764
        %v5766 = vadd.f32 %v5762, %v5764
        %v5767 = vsub.f32 0.0, %v5765
        %v5768 = vsub.f32 0.0, %v5766
        %v5769 = vmul.f32 %v5767, 1.442695
        %v5770 = vpow.pop %v5769
        %v5771 = vmul.f32 %v5768, 1.442695
        %v5772 = vpow.pop %v5771
        %v5775 = vrot.slane %v5735, 7
        %v5776 = vrot.slane %v5736, 7
        %v5779 = vmul.f32 %v5770, %v5775
        %v5780 = vmul.f32 %v5772, %v5776
        %v5781 = vlaneseq
        %v5782 = vshrl.u32 %v5781, 7
        %v5783 = vsub.s32 6, %v5782
        %v5784 = vrot.slane %v5779, %v5783
        %v5785 = vlaneseq
        %v5786 = vshrl.u32 %v5785, 7
        %v5787 = vsub.s32 6, %v5786
        %v5788 = vrot.slane %v5780, %v5787
        %v5789 = vmul.f32 %v5784, %v5733
        %v5790 = vmul.f32 %v5788, %v5731
        %v5791 = vadd.f32 %v5714, %v5789
        %v5792 = vadd.f32 %v5715, %v5790
        %v5793 = vadd.f32 %v5716, %v5779
        %v5794 = vadd.f32 %v5717, %v5780
        %5795 = vrot.lane.b32.xlu0 %v3032, 99
        %v5796 = vpop.permute.xlu0 %5795
        %5797 = vrot.lane.b32.xlu0 %v3035, 99
        %v5798 = vpop.permute.xlu0 %5797
        %5799 = vrot.lane.b32.xlu0 %v3033, 99
        %v5800 = vpop.permute.xlu0 %5799
        %5801 = vrot.lane.b32.xlu0 %v3036, 99
        %v5802 = vpop.permute.xlu0 %5801
        %5803 = vrot.lane.b32.xlu0 %v3034, 99
        %v5804 = vpop.permute.xlu0 %5803
        %5805 = vrot.lane.b32.xlu0 %v3037, 99
        %v5806 = vpop.permute.xlu0 %5805
        %vm5807 = vcmp.lt.s32.totalorder %v393, 99
        %v5808 = vsel %vm5807, %v5800, %v5804
        %v5809 = vsel %vm5807, %v5802, %v5806
        %v5810 = vsel %vm5807, %v5796, %v5800
        %v5811 = vsel %vm5807, %v5798, %v5802
        %v5812 = vmul.f32 %v5811, %v3060
        %v5813 = vmul.f32 %v5809, %v3064
        %v5814 = vmul.f32 %v2973, %v5810
        %v5815 = vmul.f32 %v2974, %v5808
        %v5816 = vmul.f32 %v2975, %v5811
        %v5817 = vmul.f32 %v2976, %v5809
        %v5818 = vsel %vm2981, %v5816, 0.0
        %v5819 = vadd.f32 %v5814, %v5818
        %v5820 = vrot.slane %v5819, 4
        %v5821 = vadd.f32 %v5819, %v5820
        %v5822 = vrot.slane %v5821, 2
        %v5823 = vadd.f32 %v5821, %v5822
        %v5824 = vrot.slane %v5823, 1
        %v5825 = vadd.f32 %v5823, %v5824
        %v5826 = vsel %vm2981, %v5817, 0.0
        %v5827 = vadd.f32 %v5815, %v5826
        %v5828 = vrot.slane %v5827, 4
        %v5829 = vadd.f32 %v5827, %v5828
        %v5830 = vrot.slane %v5829, 2
        %v5831 = vadd.f32 %v5829, %v5830
        %v5832 = vrot.slane %v5831, 1
        %v5833 = vadd.f32 %v5831, %v5832
        %v5834 = vadd.f32 %v2989, %v5811
        %v5835 = vadd.f32 %v2997, %v5809
        %v5836 = vmul.f32 %v5825, 2.0
        %v5837 = vmul.f32 %v5833, 2.0
        %v5838 = vsub.f32 %v5834, %v5836
        %v5839 = vsub.f32 %v5835, %v5837
        %s5840 = sld [smem:[#allocation4 + $0x23]]
        %v5841 = vstv %s5840
        %v5842 = vadd.f32 %v5838, %v5841
        %v5843 = vadd.f32 %v5839, %v5841
        %v5844 = vsub.f32 0.0, %v5842
        %v5845 = vsub.f32 0.0, %v5843
        %v5846 = vmul.f32 %v5844, 1.442695
        %v5847 = vpow.pop %v5846
        %v5848 = vmul.f32 %v5845, 1.442695
        %v5849 = vpow.pop %v5848
        %v5852 = vrot.slane %v5812, 7
        %v5853 = vrot.slane %v5813, 7
        %v5856 = vmul.f32 %v5847, %v5852
        %v5857 = vmul.f32 %v5849, %v5853
        %v5858 = vlaneseq
        %v5859 = vshrl.u32 %v5858, 7
        %v5860 = vsub.s32 6, %v5859
        %v5861 = vrot.slane %v5856, %v5860
        %v5862 = vlaneseq
        %v5863 = vshrl.u32 %v5862, 7
        %v5864 = vsub.s32 6, %v5863
        %v5865 = vrot.slane %v5857, %v5864
        %v5866 = vmul.f32 %v5861, %v5810
        %v5867 = vmul.f32 %v5865, %v5808
        %v5868 = vadd.f32 %v5791, %v5866
        %v5869 = vadd.f32 %v5792, %v5867
        %v5870 = vadd.f32 %v5793, %v5856
        %v5871 = vadd.f32 %v5794, %v5857
        %5872 = vrot.lane.b32.xlu0 %v3032, 98
        %v5873 = vpop.permute.xlu0 %5872
        %5874 = vrot.lane.b32.xlu0 %v3035, 98
        %v5875 = vpop.permute.xlu0 %5874
        %5876 = vrot.lane.b32.xlu0 %v3033, 98
        %v5877 = vpop.permute.xlu0 %5876
        %5878 = vrot.lane.b32.xlu0 %v3036, 98
        %v5879 = vpop.permute.xlu0 %5878
        %5880 = vrot.lane.b32.xlu0 %v3034, 98
        %v5881 = vpop.permute.xlu0 %5880
        %5882 = vrot.lane.b32.xlu0 %v3037, 98
        %v5883 = vpop.permute.xlu0 %5882
        %vm5884 = vcmp.lt.s32.totalorder %v393, 98
        %v5885 = vsel %vm5884, %v5877, %v5881
        %v5886 = vsel %vm5884, %v5879, %v5883
        %v5887 = vsel %vm5884, %v5873, %v5877
        %v5888 = vsel %vm5884, %v5875, %v5879
        %v5889 = vmul.f32 %v5888, %v3150
        %v5890 = vmul.f32 %v5886, %v3154
        %v5891 = vmul.f32 %v2973, %v5887
        %v5892 = vmul.f32 %v2974, %v5885
        %v5893 = vmul.f32 %v2975, %v5888
        %v5894 = vmul.f32 %v2976, %v5886
        %v5895 = vsel %vm2981, %v5893, 0.0
        %v5896 = vadd.f32 %v5891, %v5895
        %v5897 = vrot.slane %v5896, 4
        %v5898 = vadd.f32 %v5896, %v5897
        %v5899 = vrot.slane %v5898, 2
        %v5900 = vadd.f32 %v5898, %v5899
        %v5901 = vrot.slane %v5900, 1
        %v5902 = vadd.f32 %v5900, %v5901
        %v5903 = vsel %vm2981, %v5894, 0.0
        %v5904 = vadd.f32 %v5892, %v5903
        %v5905 = vrot.slane %v5904, 4
        %v5906 = vadd.f32 %v5904, %v5905
        %v5907 = vrot.slane %v5906, 2
        %v5908 = vadd.f32 %v5906, %v5907
        %v5909 = vrot.slane %v5908, 1
        %v5910 = vadd.f32 %v5908, %v5909
        %v5911 = vadd.f32 %v2989, %v5888
        %v5912 = vadd.f32 %v2997, %v5886
        %v5913 = vmul.f32 %v5902, 2.0
        %v5914 = vmul.f32 %v5910, 2.0
        %v5915 = vsub.f32 %v5911, %v5913
        %v5916 = vsub.f32 %v5912, %v5914
        %s5917 = sld [smem:[#allocation4 + $0x24]]
        %v5918 = vstv %s5917
        %v5919 = vadd.f32 %v5915, %v5918
        %v5920 = vadd.f32 %v5916, %v5918
        %v5921 = vsub.f32 0.0, %v5919
        %v5922 = vsub.f32 0.0, %v5920
        %v5923 = vmul.f32 %v5921, 1.442695
        %v5924 = vpow.pop %v5923
        %v5925 = vmul.f32 %v5922, 1.442695
        %v5926 = vpow.pop %v5925
        %v5929 = vrot.slane %v5889, 7
        %v5930 = vrot.slane %v5890, 7
        %v5933 = vmul.f32 %v5924, %v5929
        %v5934 = vmul.f32 %v5926, %v5930
        %v5935 = vlaneseq
        %v5936 = vshrl.u32 %v5935, 7
        %v5937 = vsub.s32 6, %v5936
        %v5938 = vrot.slane %v5933, %v5937
        %v5939 = vlaneseq
        %v5940 = vshrl.u32 %v5939, 7
        %v5941 = vsub.s32 6, %v5940
        %v5942 = vrot.slane %v5934, %v5941
        %v5943 = vmul.f32 %v5938, %v5887
        %v5944 = vmul.f32 %v5942, %v5885
        %v5945 = vadd.f32 %v5868, %v5943
        %v5946 = vadd.f32 %v5869, %v5944
        %v5947 = vadd.f32 %v5870, %v5933
        %v5948 = vadd.f32 %v5871, %v5934
        %5949 = vrot.lane.b32.xlu0 %v3032, 97
        %v5950 = vpop.permute.xlu0 %5949
        %5951 = vrot.lane.b32.xlu0 %v3035, 97
        %v5952 = vpop.permute.xlu0 %5951
        %5953 = vrot.lane.b32.xlu0 %v3033, 97
        %v5954 = vpop.permute.xlu0 %5953
        %5955 = vrot.lane.b32.xlu0 %v3036, 97
        %v5956 = vpop.permute.xlu0 %5955
        %5957 = vrot.lane.b32.xlu0 %v3034, 97
        %v5958 = vpop.permute.xlu0 %5957
        %5959 = vrot.lane.b32.xlu0 %v3037, 97
        %v5960 = vpop.permute.xlu0 %5959
        %vm5961 = vcmp.lt.s32.totalorder %v393, 97
        %v5962 = vsel %vm5961, %v5954, %v5958
        %v5963 = vsel %vm5961, %v5956, %v5960
        %v5964 = vsel %vm5961, %v5950, %v5954
        %v5965 = vsel %vm5961, %v5952, %v5956
        %v5966 = vmul.f32 %v5965, %v3239
        %v5967 = vmul.f32 %v5963, %v3243
        %v5968 = vmul.f32 %v2973, %v5964
        %v5969 = vmul.f32 %v2974, %v5962
        %v5970 = vmul.f32 %v2975, %v5965
        %v5971 = vmul.f32 %v2976, %v5963
        %v5972 = vsel %vm2981, %v5970, 0.0
        %v5973 = vadd.f32 %v5968, %v5972
        %v5974 = vrot.slane %v5973, 4
        %v5975 = vadd.f32 %v5973, %v5974
        %v5976 = vrot.slane %v5975, 2
        %v5977 = vadd.f32 %v5975, %v5976
        %v5978 = vrot.slane %v5977, 1
        %v5979 = vadd.f32 %v5977, %v5978
        %v5980 = vsel %vm2981, %v5971, 0.0
        %v5981 = vadd.f32 %v5969, %v5980
        %v5982 = vrot.slane %v5981, 4
        %v5983 = vadd.f32 %v5981, %v5982
        %v5984 = vrot.slane %v5983, 2
        %v5985 = vadd.f32 %v5983, %v5984
        %v5986 = vrot.slane %v5985, 1
        %v5987 = vadd.f32 %v5985, %v5986
        %v5988 = vadd.f32 %v2989, %v5965
        %v5989 = vadd.f32 %v2997, %v5963
        %v5990 = vmul.f32 %v5979, 2.0
        %v5991 = vmul.f32 %v5987, 2.0
        %v5992 = vsub.f32 %v5988, %v5990
        %v5993 = vsub.f32 %v5989, %v5991
        %s5994 = sld [smem:[#allocation4 + $0x25]]
        %v5995 = vstv %s5994
        %v5996 = vadd.f32 %v5992, %v5995
        %v5997 = vadd.f32 %v5993, %v5995
        %v5998 = vsub.f32 0.0, %v5996
        %v5999 = vsub.f32 0.0, %v5997
        %v6000 = vmul.f32 %v5998, 1.442695
        %v6001 = vpow.pop %v6000
        %v6002 = vmul.f32 %v5999, 1.442695
        %v6003 = vpow.pop %v6002
        %v6006 = vrot.slane %v5966, 7
        %v6007 = vrot.slane %v5967, 7
        %v6010 = vmul.f32 %v6001, %v6006
        %v6011 = vmul.f32 %v6003, %v6007
        %v6012 = vlaneseq
        %v6013 = vshrl.u32 %v6012, 7
        %v6014 = vsub.s32 6, %v6013
        %v6015 = vrot.slane %v6010, %v6014
        %v6016 = vlaneseq
        %v6017 = vshrl.u32 %v6016, 7
        %v6018 = vsub.s32 6, %v6017
        %v6019 = vrot.slane %v6011, %v6018
        %v6020 = vmul.f32 %v6015, %v5964
        %v6021 = vmul.f32 %v6019, %v5962
        %v6022 = vadd.f32 %v5945, %v6020
        %v6023 = vadd.f32 %v5946, %v6021
        %v6024 = vadd.f32 %v5947, %v6010
        %v6025 = vadd.f32 %v5948, %v6011
        %6026 = vrot.lane.b32.xlu0 %v3032, 96
        %v6027 = vpop.permute.xlu0 %6026
        %6028 = vrot.lane.b32.xlu0 %v3035, 96
        %v6029 = vpop.permute.xlu0 %6028
        %6030 = vrot.lane.b32.xlu0 %v3033, 96
        %v6031 = vpop.permute.xlu0 %6030
        %6032 = vrot.lane.b32.xlu0 %v3036, 96
        %v6033 = vpop.permute.xlu0 %6032
        %6034 = vrot.lane.b32.xlu0 %v3034, 96
        %v6035 = vpop.permute.xlu0 %6034
        %6036 = vrot.lane.b32.xlu0 %v3037, 96
        %v6037 = vpop.permute.xlu0 %6036
        %vm6038 = vcmp.lt.s32.totalorder %v393, 96
        %v6039 = vsel %vm6038, %v6031, %v6035
        %v6040 = vsel %vm6038, %v6033, %v6037
        %v6041 = vsel %vm6038, %v6027, %v6031
        %v6042 = vsel %vm6038, %v6029, %v6033
        %v6043 = vmul.f32 %v6042, %v3328
        %v6044 = vmul.f32 %v6040, %v3332
        %v6045 = vmul.f32 %v2973, %v6041
        %v6046 = vmul.f32 %v2974, %v6039
        %v6047 = vmul.f32 %v2975, %v6042
        %v6048 = vmul.f32 %v2976, %v6040
        %v6049 = vsel %vm2981, %v6047, 0.0
        %v6050 = vadd.f32 %v6045, %v6049
        %v6051 = vrot.slane %v6050, 4
        %v6052 = vadd.f32 %v6050, %v6051
        %v6053 = vrot.slane %v6052, 2
        %v6054 = vadd.f32 %v6052, %v6053
        %v6055 = vrot.slane %v6054, 1
        %v6056 = vadd.f32 %v6054, %v6055
        %v6057 = vsel %vm2981, %v6048, 0.0
        %v6058 = vadd.f32 %v6046, %v6057
        %v6059 = vrot.slane %v6058, 4
        %v6060 = vadd.f32 %v6058, %v6059
        %v6061 = vrot.slane %v6060, 2
        %v6062 = vadd.f32 %v6060, %v6061
        %v6063 = vrot.slane %v6062, 1
        %v6064 = vadd.f32 %v6062, %v6063
        %v6065 = vadd.f32 %v2989, %v6042
        %v6066 = vadd.f32 %v2997, %v6040
        %v6067 = vmul.f32 %v6056, 2.0
        %v6068 = vmul.f32 %v6064, 2.0
        %v6069 = vsub.f32 %v6065, %v6067
        %v6070 = vsub.f32 %v6066, %v6068
        %s6071 = sld [smem:[#allocation4 + $0x26]]
        %v6072 = vstv %s6071
        %v6073 = vadd.f32 %v6069, %v6072
        %v6074 = vadd.f32 %v6070, %v6072
        %v6075 = vsub.f32 0.0, %v6073
        %v6076 = vsub.f32 0.0, %v6074
        %v6077 = vmul.f32 %v6075, 1.442695
        %v6078 = vpow.pop %v6077
        %v6079 = vmul.f32 %v6076, 1.442695
        %v6080 = vpow.pop %v6079
        %v6083 = vrot.slane %v6043, 7
        %v6084 = vrot.slane %v6044, 7
        %v6087 = vmul.f32 %v6078, %v6083
        %v6088 = vmul.f32 %v6080, %v6084
        %v6089 = vlaneseq
        %v6090 = vshrl.u32 %v6089, 7
        %v6091 = vsub.s32 6, %v6090
        %v6092 = vrot.slane %v6087, %v6091
        %v6093 = vlaneseq
        %v6094 = vshrl.u32 %v6093, 7
        %v6095 = vsub.s32 6, %v6094
        %v6096 = vrot.slane %v6088, %v6095
        %v6097 = vmul.f32 %v6092, %v6041
        %v6098 = vmul.f32 %v6096, %v6039
        %v6099 = vadd.f32 %v6022, %v6097
        %v6100 = vadd.f32 %v6023, %v6098
        %v6101 = vadd.f32 %v6024, %v6087
        %v6102 = vadd.f32 %v6025, %v6088
        %6103 = vrot.lane.b32.xlu0 %v3032, 95
        %v6104 = vpop.permute.xlu0 %6103
        %6105 = vrot.lane.b32.xlu0 %v3035, 95
        %v6106 = vpop.permute.xlu0 %6105
        %6107 = vrot.lane.b32.xlu0 %v3033, 95
        %v6108 = vpop.permute.xlu0 %6107
        %6109 = vrot.lane.b32.xlu0 %v3036, 95
        %v6110 = vpop.permute.xlu0 %6109
        %6111 = vrot.lane.b32.xlu0 %v3034, 95
        %v6112 = vpop.permute.xlu0 %6111
        %6113 = vrot.lane.b32.xlu0 %v3037, 95
        %v6114 = vpop.permute.xlu0 %6113
        %vm6115 = vcmp.lt.s32.totalorder %v393, 95
        %v6116 = vsel %vm6115, %v6108, %v6112
        %v6117 = vsel %vm6115, %v6110, %v6114
        %v6118 = vsel %vm6115, %v6104, %v6108
        %v6119 = vsel %vm6115, %v6106, %v6110
        %v6120 = vmul.f32 %v6119, %v3417
        %v6121 = vmul.f32 %v6117, %v3421
        %v6122 = vmul.f32 %v2973, %v6118
        %v6123 = vmul.f32 %v2974, %v6116
        %v6124 = vmul.f32 %v2975, %v6119
        %v6125 = vmul.f32 %v2976, %v6117
        %v6126 = vsel %vm2981, %v6124, 0.0
        %v6127 = vadd.f32 %v6122, %v6126
        %v6128 = vrot.slane %v6127, 4
        %v6129 = vadd.f32 %v6127, %v6128
        %v6130 = vrot.slane %v6129, 2
        %v6131 = vadd.f32 %v6129, %v6130
        %v6132 = vrot.slane %v6131, 1
        %v6133 = vadd.f32 %v6131, %v6132
        %v6134 = vsel %vm2981, %v6125, 0.0
        %v6135 = vadd.f32 %v6123, %v6134
        %v6136 = vrot.slane %v6135, 4
        %v6137 = vadd.f32 %v6135, %v6136
        %v6138 = vrot.slane %v6137, 2
        %v6139 = vadd.f32 %v6137, %v6138
        %v6140 = vrot.slane %v6139, 1
        %v6141 = vadd.f32 %v6139, %v6140
        %v6142 = vadd.f32 %v2989, %v6119
        %v6143 = vadd.f32 %v2997, %v6117
        %v6144 = vmul.f32 %v6133, 2.0
        %v6145 = vmul.f32 %v6141, 2.0
        %v6146 = vsub.f32 %v6142, %v6144
        %v6147 = vsub.f32 %v6143, %v6145
        %s6148 = sld [smem:[#allocation4 + $0x27]]
        %v6149 = vstv %s6148
        %v6150 = vadd.f32 %v6146, %v6149
        %v6151 = vadd.f32 %v6147, %v6149
        %v6152 = vsub.f32 0.0, %v6150
        %v6153 = vsub.f32 0.0, %v6151
        %v6154 = vmul.f32 %v6152, 1.442695
        %v6155 = vpow.pop %v6154
        %v6156 = vmul.f32 %v6153, 1.442695
        %v6157 = vpow.pop %v6156
        %v6160 = vrot.slane %v6120, 7
        %v6161 = vrot.slane %v6121, 7
        %v6164 = vmul.f32 %v6155, %v6160
        %v6165 = vmul.f32 %v6157, %v6161
        %v6166 = vlaneseq
        %v6167 = vshrl.u32 %v6166, 7
        %v6168 = vsub.s32 6, %v6167
        %v6169 = vrot.slane %v6164, %v6168
        %v6170 = vlaneseq
        %v6171 = vshrl.u32 %v6170, 7
        %v6172 = vsub.s32 6, %v6171
        %v6173 = vrot.slane %v6165, %v6172
        %v6174 = vmul.f32 %v6169, %v6118
        %v6175 = vmul.f32 %v6173, %v6116
        %v6176 = vadd.f32 %v6099, %v6174
        %v6177 = vadd.f32 %v6100, %v6175
        %v6178 = vadd.f32 %v6101, %v6164
        %v6179 = vadd.f32 %v6102, %v6165
        %6180 = vrot.lane.b32.xlu0 %v3032, 94
        %v6181 = vpop.permute.xlu0 %6180
        %6182 = vrot.lane.b32.xlu0 %v3035, 94
        %v6183 = vpop.permute.xlu0 %6182
        %6184 = vrot.lane.b32.xlu0 %v3033, 94
        %v6185 = vpop.permute.xlu0 %6184
        %6186 = vrot.lane.b32.xlu0 %v3036, 94
        %v6187 = vpop.permute.xlu0 %6186
        %6188 = vrot.lane.b32.xlu0 %v3034, 94
        %v6189 = vpop.permute.xlu0 %6188
        %6190 = vrot.lane.b32.xlu0 %v3037, 94
        %v6191 = vpop.permute.xlu0 %6190
        %vm6192 = vcmp.lt.s32.totalorder %v393, 94
        %v6193 = vsel %vm6192, %v6185, %v6189
        %v6194 = vsel %vm6192, %v6187, %v6191
        %v6195 = vsel %vm6192, %v6181, %v6185
        %v6196 = vsel %vm6192, %v6183, %v6187
        %v6197 = vmul.f32 %v6196, %v3507
        %v6198 = vmul.f32 %v6194, %v3511
        %v6199 = vmul.f32 %v2973, %v6195
        %v6200 = vmul.f32 %v2974, %v6193
        %v6201 = vmul.f32 %v2975, %v6196
        %v6202 = vmul.f32 %v2976, %v6194
        %v6203 = vsel %vm2981, %v6201, 0.0
        %v6204 = vadd.f32 %v6199, %v6203
        %v6205 = vrot.slane %v6204, 4
        %v6206 = vadd.f32 %v6204, %v6205
        %v6207 = vrot.slane %v6206, 2
        %v6208 = vadd.f32 %v6206, %v6207
        %v6209 = vrot.slane %v6208, 1
        %v6210 = vadd.f32 %v6208, %v6209
        %v6211 = vsel %vm2981, %v6202, 0.0
        %v6212 = vadd.f32 %v6200, %v6211
        %v6213 = vrot.slane %v6212, 4
        %v6214 = vadd.f32 %v6212, %v6213
        %v6215 = vrot.slane %v6214, 2
        %v6216 = vadd.f32 %v6214, %v6215
        %v6217 = vrot.slane %v6216, 1
        %v6218 = vadd.f32 %v6216, %v6217
        %v6219 = vadd.f32 %v2989, %v6196
        %v6220 = vadd.f32 %v2997, %v6194
        %v6221 = vmul.f32 %v6210, 2.0
        %v6222 = vmul.f32 %v6218, 2.0
        %v6223 = vsub.f32 %v6219, %v6221
        %v6224 = vsub.f32 %v6220, %v6222
        %s6225 = sld [smem:[#allocation4 + $0x28]]
        %v6226 = vstv %s6225
        %v6227 = vadd.f32 %v6223, %v6226
        %v6228 = vadd.f32 %v6224, %v6226
        %v6229 = vsub.f32 0.0, %v6227
        %v6230 = vsub.f32 0.0, %v6228
        %v6231 = vmul.f32 %v6229, 1.442695
        %v6232 = vpow.pop %v6231
        %v6233 = vmul.f32 %v6230, 1.442695
        %v6234 = vpow.pop %v6233
        %v6237 = vrot.slane %v6197, 7
        %v6238 = vrot.slane %v6198, 7
        %v6241 = vmul.f32 %v6232, %v6237
        %v6242 = vmul.f32 %v6234, %v6238
        %v6243 = vlaneseq
        %v6244 = vshrl.u32 %v6243, 7
        %v6245 = vsub.s32 6, %v6244
        %v6246 = vrot.slane %v6241, %v6245
        %v6247 = vlaneseq
        %v6248 = vshrl.u32 %v6247, 7
        %v6249 = vsub.s32 6, %v6248
        %v6250 = vrot.slane %v6242, %v6249
        %v6251 = vmul.f32 %v6246, %v6195
        %v6252 = vmul.f32 %v6250, %v6193
        %v6253 = vadd.f32 %v6176, %v6251
        %v6254 = vadd.f32 %v6177, %v6252
        %v6255 = vadd.f32 %v6178, %v6241
        %v6256 = vadd.f32 %v6179, %v6242
        %6257 = vrot.lane.b32.xlu0 %v3032, 93
        %v6258 = vpop.permute.xlu0 %6257
        %6259 = vrot.lane.b32.xlu0 %v3035, 93
        %v6260 = vpop.permute.xlu0 %6259
        %6261 = vrot.lane.b32.xlu0 %v3033, 93
        %v6262 = vpop.permute.xlu0 %6261
        %6263 = vrot.lane.b32.xlu0 %v3036, 93
        %v6264 = vpop.permute.xlu0 %6263
        %6265 = vrot.lane.b32.xlu0 %v3034, 93
        %v6266 = vpop.permute.xlu0 %6265
        %6267 = vrot.lane.b32.xlu0 %v3037, 93
        %v6268 = vpop.permute.xlu0 %6267
        %vm6269 = vcmp.lt.s32.totalorder %v393, 93
        %v6270 = vsel %vm6269, %v6262, %v6266
        %v6271 = vsel %vm6269, %v6264, %v6268
        %v6272 = vsel %vm6269, %v6258, %v6262
        %v6273 = vsel %vm6269, %v6260, %v6264
        %v6274 = vmul.f32 %v6273, %v3597
        %v6275 = vmul.f32 %v6271, %v3601
        %v6276 = vmul.f32 %v2973, %v6272
        %v6277 = vmul.f32 %v2974, %v6270
        %v6278 = vmul.f32 %v2975, %v6273
        %v6279 = vmul.f32 %v2976, %v6271
        %v6280 = vsel %vm2981, %v6278, 0.0
        %v6281 = vadd.f32 %v6276, %v6280
        %v6282 = vrot.slane %v6281, 4
        %v6283 = vadd.f32 %v6281, %v6282
        %v6284 = vrot.slane %v6283, 2
        %v6285 = vadd.f32 %v6283, %v6284
        %v6286 = vrot.slane %v6285, 1
        %v6287 = vadd.f32 %v6285, %v6286
        %v6288 = vsel %vm2981, %v6279, 0.0
        %v6289 = vadd.f32 %v6277, %v6288
        %v6290 = vrot.slane %v6289, 4
        %v6291 = vadd.f32 %v6289, %v6290
        %v6292 = vrot.slane %v6291, 2
        %v6293 = vadd.f32 %v6291, %v6292
        %v6294 = vrot.slane %v6293, 1
        %v6295 = vadd.f32 %v6293, %v6294
        %v6296 = vadd.f32 %v2989, %v6273
        %v6297 = vadd.f32 %v2997, %v6271
        %v6298 = vmul.f32 %v6287, 2.0
        %v6299 = vmul.f32 %v6295, 2.0
        %v6300 = vsub.f32 %v6296, %v6298
        %v6301 = vsub.f32 %v6297, %v6299
        %s6302 = sld [smem:[#allocation4 + $0x29]]
        %v6303 = vstv %s6302
        %v6304 = vadd.f32 %v6300, %v6303
        %v6305 = vadd.f32 %v6301, %v6303
        %v6306 = vsub.f32 0.0, %v6304
        %v6307 = vsub.f32 0.0, %v6305
        %v6308 = vmul.f32 %v6306, 1.442695
        %v6309 = vpow.pop %v6308
        %v6310 = vmul.f32 %v6307, 1.442695
        %v6311 = vpow.pop %v6310
        %v6314 = vrot.slane %v6274, 7
        %v6315 = vrot.slane %v6275, 7
        %v6318 = vmul.f32 %v6309, %v6314
        %v6319 = vmul.f32 %v6311, %v6315
        %v6320 = vlaneseq
        %v6321 = vshrl.u32 %v6320, 7
        %v6322 = vsub.s32 6, %v6321
        %v6323 = vrot.slane %v6318, %v6322
        %v6324 = vlaneseq
        %v6325 = vshrl.u32 %v6324, 7
        %v6326 = vsub.s32 6, %v6325
        %v6327 = vrot.slane %v6319, %v6326
        %v6328 = vmul.f32 %v6323, %v6272
        %v6329 = vmul.f32 %v6327, %v6270
        %v6330 = vadd.f32 %v6253, %v6328
        %v6331 = vadd.f32 %v6254, %v6329
        %v6332 = vadd.f32 %v6255, %v6318
        %v6333 = vadd.f32 %v6256, %v6319
        %6334 = vrot.lane.b32.xlu0 %v3032, 83
        %v6335 = vpop.permute.xlu0 %6334
        %6336 = vrot.lane.b32.xlu0 %v3035, 83
        %v6337 = vpop.permute.xlu0 %6336
        %6338 = vrot.lane.b32.xlu0 %v3033, 83
        %v6339 = vpop.permute.xlu0 %6338
        %6340 = vrot.lane.b32.xlu0 %v3036, 83
        %v6341 = vpop.permute.xlu0 %6340
        %6342 = vrot.lane.b32.xlu0 %v3034, 83
        %v6343 = vpop.permute.xlu0 %6342
        %6344 = vrot.lane.b32.xlu0 %v3037, 83
        %v6345 = vpop.permute.xlu0 %6344
        %vm6346 = vcmp.lt.s32.totalorder %v393, 83
        %v6347 = vsel %vm6346, %v6339, %v6343
        %v6348 = vsel %vm6346, %v6341, %v6345
        %v6349 = vsel %vm6346, %v6335, %v6339
        %v6350 = vsel %vm6346, %v6337, %v6341
        %v6351 = vmul.f32 %v6350, %v3060
        %v6352 = vmul.f32 %v6348, %v3064
        %v6353 = vmul.f32 %v2973, %v6349
        %v6354 = vmul.f32 %v2974, %v6347
        %v6355 = vmul.f32 %v2975, %v6350
        %v6356 = vmul.f32 %v2976, %v6348
        %v6357 = vsel %vm2981, %v6355, 0.0
        %v6358 = vadd.f32 %v6353, %v6357
        %v6359 = vrot.slane %v6358, 4
        %v6360 = vadd.f32 %v6358, %v6359
        %v6361 = vrot.slane %v6360, 2
        %v6362 = vadd.f32 %v6360, %v6361
        %v6363 = vrot.slane %v6362, 1
        %v6364 = vadd.f32 %v6362, %v6363
        %v6365 = vsel %vm2981, %v6356, 0.0
        %v6366 = vadd.f32 %v6354, %v6365
        %v6367 = vrot.slane %v6366, 4
        %v6368 = vadd.f32 %v6366, %v6367
        %v6369 = vrot.slane %v6368, 2
        %v6370 = vadd.f32 %v6368, %v6369
        %v6371 = vrot.slane %v6370, 1
        %v6372 = vadd.f32 %v6370, %v6371
        %v6373 = vadd.f32 %v2989, %v6350
        %v6374 = vadd.f32 %v2997, %v6348
        %v6375 = vmul.f32 %v6364, 2.0
        %v6376 = vmul.f32 %v6372, 2.0
        %v6377 = vsub.f32 %v6373, %v6375
        %v6378 = vsub.f32 %v6374, %v6376
        %s6379 = sld [smem:[#allocation4 + $0x2a]]
        %v6380 = vstv %s6379
        %v6381 = vadd.f32 %v6377, %v6380
        %v6382 = vadd.f32 %v6378, %v6380
        %v6383 = vsub.f32 0.0, %v6381
        %v6384 = vsub.f32 0.0, %v6382
        %v6385 = vmul.f32 %v6383, 1.442695
        %v6386 = vpow.pop %v6385
        %v6387 = vmul.f32 %v6384, 1.442695
        %v6388 = vpow.pop %v6387
        %v6391 = vrot.slane %v6351, 7
        %v6392 = vrot.slane %v6352, 7
        %v6395 = vmul.f32 %v6386, %v6391
        %v6396 = vmul.f32 %v6388, %v6392
        %v6397 = vlaneseq
        %v6398 = vshrl.u32 %v6397, 7
        %v6399 = vsub.s32 6, %v6398
        %v6400 = vrot.slane %v6395, %v6399
        %v6401 = vlaneseq
        %v6402 = vshrl.u32 %v6401, 7
        %v6403 = vsub.s32 6, %v6402
        %v6404 = vrot.slane %v6396, %v6403
        %v6405 = vmul.f32 %v6400, %v6349
        %v6406 = vmul.f32 %v6404, %v6347
        %v6407 = vadd.f32 %v6330, %v6405
        %v6408 = vadd.f32 %v6331, %v6406
        %v6409 = vadd.f32 %v6332, %v6395
        %v6410 = vadd.f32 %v6333, %v6396
        %6411 = vrot.lane.b32.xlu0 %v3032, 82
        %v6412 = vpop.permute.xlu0 %6411
        %6413 = vrot.lane.b32.xlu0 %v3035, 82
        %v6414 = vpop.permute.xlu0 %6413
        %6415 = vrot.lane.b32.xlu0 %v3033, 82
        %v6416 = vpop.permute.xlu0 %6415
        %6417 = vrot.lane.b32.xlu0 %v3036, 82
        %v6418 = vpop.permute.xlu0 %6417
        %6419 = vrot.lane.b32.xlu0 %v3034, 82
        %v6420 = vpop.permute.xlu0 %6419
        %6421 = vrot.lane.b32.xlu0 %v3037, 82
        %v6422 = vpop.permute.xlu0 %6421
        %vm6423 = vcmp.lt.s32.totalorder %v393, 82
        %v6424 = vsel %vm6423, %v6416, %v6420
        %v6425 = vsel %vm6423, %v6418, %v6422
        %v6426 = vsel %vm6423, %v6412, %v6416
        %v6427 = vsel %vm6423, %v6414, %v6418
        %v6428 = vmul.f32 %v6427, %v3150
        %v6429 = vmul.f32 %v6425, %v3154
        %v6430 = vmul.f32 %v2973, %v6426
        %v6431 = vmul.f32 %v2974, %v6424
        %v6432 = vmul.f32 %v2975, %v6427
        %v6433 = vmul.f32 %v2976, %v6425
        %v6434 = vsel %vm2981, %v6432, 0.0
        %v6435 = vadd.f32 %v6430, %v6434
        %v6436 = vrot.slane %v6435, 4
        %v6437 = vadd.f32 %v6435, %v6436
        %v6438 = vrot.slane %v6437, 2
        %v6439 = vadd.f32 %v6437, %v6438
        %v6440 = vrot.slane %v6439, 1
        %v6441 = vadd.f32 %v6439, %v6440
        %v6442 = vsel %vm2981, %v6433, 0.0
        %v6443 = vadd.f32 %v6431, %v6442
        %v6444 = vrot.slane %v6443, 4
        %v6445 = vadd.f32 %v6443, %v6444
        %v6446 = vrot.slane %v6445, 2
        %v6447 = vadd.f32 %v6445, %v6446
        %v6448 = vrot.slane %v6447, 1
        %v6449 = vadd.f32 %v6447, %v6448
        %v6450 = vadd.f32 %v2989, %v6427
        %v6451 = vadd.f32 %v2997, %v6425
        %v6452 = vmul.f32 %v6441, 2.0
        %v6453 = vmul.f32 %v6449, 2.0
        %v6454 = vsub.f32 %v6450, %v6452
        %v6455 = vsub.f32 %v6451, %v6453
        %s6456 = sld [smem:[#allocation4 + $0x2b]]
        %v6457 = vstv %s6456
        %v6458 = vadd.f32 %v6454, %v6457
        %v6459 = vadd.f32 %v6455, %v6457
        %v6460 = vsub.f32 0.0, %v6458
        %v6461 = vsub.f32 0.0, %v6459
        %v6462 = vmul.f32 %v6460, 1.442695
        %v6463 = vpow.pop %v6462
        %v6464 = vmul.f32 %v6461, 1.442695
        %v6465 = vpow.pop %v6464
        %v6468 = vrot.slane %v6428, 7
        %v6469 = vrot.slane %v6429, 7
        %v6472 = vmul.f32 %v6463, %v6468
        %v6473 = vmul.f32 %v6465, %v6469
        %v6474 = vlaneseq
        %v6475 = vshrl.u32 %v6474, 7
        %v6476 = vsub.s32 6, %v6475
        %v6477 = vrot.slane %v6472, %v6476
        %v6478 = vlaneseq
        %v6479 = vshrl.u32 %v6478, 7
        %v6480 = vsub.s32 6, %v6479
        %v6481 = vrot.slane %v6473, %v6480
        %v6482 = vmul.f32 %v6477, %v6426
        %v6483 = vmul.f32 %v6481, %v6424
        %v6484 = vadd.f32 %v6407, %v6482
        %v6485 = vadd.f32 %v6408, %v6483
        %v6486 = vadd.f32 %v6409, %v6472
        %v6487 = vadd.f32 %v6410, %v6473
        %6488 = vrot.lane.b32.xlu0 %v3032, 81
        %v6489 = vpop.permute.xlu0 %6488
        %6490 = vrot.lane.b32.xlu0 %v3035, 81
        %v6491 = vpop.permute.xlu0 %6490
        %6492 = vrot.lane.b32.xlu0 %v3033, 81
        %v6493 = vpop.permute.xlu0 %6492
        %6494 = vrot.lane.b32.xlu0 %v3036, 81
        %v6495 = vpop.permute.xlu0 %6494
        %6496 = vrot.lane.b32.xlu0 %v3034, 81
        %v6497 = vpop.permute.xlu0 %6496
        %6498 = vrot.lane.b32.xlu0 %v3037, 81
        %v6499 = vpop.permute.xlu0 %6498
        %vm6500 = vcmp.lt.s32.totalorder %v393, 81
        %v6501 = vsel %vm6500, %v6493, %v6497
        %v6502 = vsel %vm6500, %v6495, %v6499
        %v6503 = vsel %vm6500, %v6489, %v6493
        %v6504 = vsel %vm6500, %v6491, %v6495
        %v6505 = vmul.f32 %v6504, %v3239
        %v6506 = vmul.f32 %v6502, %v3243
        %v6507 = vmul.f32 %v2973, %v6503
        %v6508 = vmul.f32 %v2974, %v6501
        %v6509 = vmul.f32 %v2975, %v6504
        %v6510 = vmul.f32 %v2976, %v6502
        %v6511 = vsel %vm2981, %v6509, 0.0
        %v6512 = vadd.f32 %v6507, %v6511
        %v6513 = vrot.slane %v6512, 4
        %v6514 = vadd.f32 %v6512, %v6513
        %v6515 = vrot.slane %v6514, 2
        %v6516 = vadd.f32 %v6514, %v6515
        %v6517 = vrot.slane %v6516, 1
        %v6518 = vadd.f32 %v6516, %v6517
        %v6519 = vsel %vm2981, %v6510, 0.0
        %v6520 = vadd.f32 %v6508, %v6519
        %v6521 = vrot.slane %v6520, 4
        %v6522 = vadd.f32 %v6520, %v6521
        %v6523 = vrot.slane %v6522, 2
        %v6524 = vadd.f32 %v6522, %v6523
        %v6525 = vrot.slane %v6524, 1
        %v6526 = vadd.f32 %v6524, %v6525
        %v6527 = vadd.f32 %v2989, %v6504
        %v6528 = vadd.f32 %v2997, %v6502
        %v6529 = vmul.f32 %v6518, 2.0
        %v6530 = vmul.f32 %v6526, 2.0
        %v6531 = vsub.f32 %v6527, %v6529
        %v6532 = vsub.f32 %v6528, %v6530
        %s6533 = sld [smem:[#allocation4 + $0x2c]]
        %v6534 = vstv %s6533
        %v6535 = vadd.f32 %v6531, %v6534
        %v6536 = vadd.f32 %v6532, %v6534
        %v6537 = vsub.f32 0.0, %v6535
        %v6538 = vsub.f32 0.0, %v6536
        %v6539 = vmul.f32 %v6537, 1.442695
        %v6540 = vpow.pop %v6539
        %v6541 = vmul.f32 %v6538, 1.442695
        %v6542 = vpow.pop %v6541
        %v6545 = vrot.slane %v6505, 7
        %v6546 = vrot.slane %v6506, 7
        %v6549 = vmul.f32 %v6540, %v6545
        %v6550 = vmul.f32 %v6542, %v6546
        %v6551 = vlaneseq
        %v6552 = vshrl.u32 %v6551, 7
        %v6553 = vsub.s32 6, %v6552
        %v6554 = vrot.slane %v6549, %v6553
        %v6555 = vlaneseq
        %v6556 = vshrl.u32 %v6555, 7
        %v6557 = vsub.s32 6, %v6556
        %v6558 = vrot.slane %v6550, %v6557
        %v6559 = vmul.f32 %v6554, %v6503
        %v6560 = vmul.f32 %v6558, %v6501
        %v6561 = vadd.f32 %v6484, %v6559
        %v6562 = vadd.f32 %v6485, %v6560
        %v6563 = vadd.f32 %v6486, %v6549
        %v6564 = vadd.f32 %v6487, %v6550
        %6565 = vrot.lane.b32.xlu0 %v3032, 80
        %v6566 = vpop.permute.xlu0 %6565
        %6567 = vrot.lane.b32.xlu0 %v3035, 80
        %v6568 = vpop.permute.xlu0 %6567
        %6569 = vrot.lane.b32.xlu0 %v3033, 80
        %v6570 = vpop.permute.xlu0 %6569
        %6571 = vrot.lane.b32.xlu0 %v3036, 80
        %v6572 = vpop.permute.xlu0 %6571
        %6573 = vrot.lane.b32.xlu0 %v3034, 80
        %v6574 = vpop.permute.xlu0 %6573
        %6575 = vrot.lane.b32.xlu0 %v3037, 80
        %v6576 = vpop.permute.xlu0 %6575
        %vm6577 = vcmp.lt.s32.totalorder %v393, 80
        %v6578 = vsel %vm6577, %v6570, %v6574
        %v6579 = vsel %vm6577, %v6572, %v6576
        %v6580 = vsel %vm6577, %v6566, %v6570
        %v6581 = vsel %vm6577, %v6568, %v6572
        %v6582 = vmul.f32 %v6581, %v3328
        %v6583 = vmul.f32 %v6579, %v3332
        %v6584 = vmul.f32 %v2973, %v6580
        %v6585 = vmul.f32 %v2974, %v6578
        %v6586 = vmul.f32 %v2975, %v6581
        %v6587 = vmul.f32 %v2976, %v6579
        %v6588 = vsel %vm2981, %v6586, 0.0
        %v6589 = vadd.f32 %v6584, %v6588
        %v6590 = vrot.slane %v6589, 4
        %v6591 = vadd.f32 %v6589, %v6590
        %v6592 = vrot.slane %v6591, 2
        %v6593 = vadd.f32 %v6591, %v6592
        %v6594 = vrot.slane %v6593, 1
        %v6595 = vadd.f32 %v6593, %v6594
        %v6596 = vsel %vm2981, %v6587, 0.0
        %v6597 = vadd.f32 %v6585, %v6596
        %v6598 = vrot.slane %v6597, 4
        %v6599 = vadd.f32 %v6597, %v6598
        %v6600 = vrot.slane %v6599, 2
        %v6601 = vadd.f32 %v6599, %v6600
        %v6602 = vrot.slane %v6601, 1
        %v6603 = vadd.f32 %v6601, %v6602
        %v6604 = vadd.f32 %v2989, %v6581
        %v6605 = vadd.f32 %v2997, %v6579
        %v6606 = vmul.f32 %v6595, 2.0
        %v6607 = vmul.f32 %v6603, 2.0
        %v6608 = vsub.f32 %v6604, %v6606
        %v6609 = vsub.f32 %v6605, %v6607
        %s6610 = sld [smem:[#allocation4 + $0x2d]]
        %v6611 = vstv %s6610
        %v6612 = vadd.f32 %v6608, %v6611
        %v6613 = vadd.f32 %v6609, %v6611
        %v6614 = vsub.f32 0.0, %v6612
        %v6615 = vsub.f32 0.0, %v6613
        %v6616 = vmul.f32 %v6614, 1.442695
        %v6617 = vpow.pop %v6616
        %v6618 = vmul.f32 %v6615, 1.442695
        %v6619 = vpow.pop %v6618
        %v6622 = vrot.slane %v6582, 7
        %v6623 = vrot.slane %v6583, 7
        %v6626 = vmul.f32 %v6617, %v6622
        %v6627 = vmul.f32 %v6619, %v6623
        %v6628 = vlaneseq
        %v6629 = vshrl.u32 %v6628, 7
        %v6630 = vsub.s32 6, %v6629
        %v6631 = vrot.slane %v6626, %v6630
        %v6632 = vlaneseq
        %v6633 = vshrl.u32 %v6632, 7
        %v6634 = vsub.s32 6, %v6633
        %v6635 = vrot.slane %v6627, %v6634
        %v6636 = vmul.f32 %v6631, %v6580
        %v6637 = vmul.f32 %v6635, %v6578
        %v6638 = vadd.f32 %v6561, %v6636
        %v6639 = vadd.f32 %v6562, %v6637
        %v6640 = vadd.f32 %v6563, %v6626
        %v6641 = vadd.f32 %v6564, %v6627
        %6642 = vrot.lane.b32.xlu0 %v3032, 79
        %v6643 = vpop.permute.xlu0 %6642
        %6644 = vrot.lane.b32.xlu0 %v3035, 79
        %v6645 = vpop.permute.xlu0 %6644
        %6646 = vrot.lane.b32.xlu0 %v3033, 79
        %v6647 = vpop.permute.xlu0 %6646
        %6648 = vrot.lane.b32.xlu0 %v3036, 79
        %v6649 = vpop.permute.xlu0 %6648
        %6650 = vrot.lane.b32.xlu0 %v3034, 79
        %v6651 = vpop.permute.xlu0 %6650
        %6652 = vrot.lane.b32.xlu0 %v3037, 79
        %v6653 = vpop.permute.xlu0 %6652
        %vm6654 = vcmp.lt.s32.totalorder %v393, 79
        %v6655 = vsel %vm6654, %v6647, %v6651
        %v6656 = vsel %vm6654, %v6649, %v6653
        %v6657 = vsel %vm6654, %v6643, %v6647
        %v6658 = vsel %vm6654, %v6645, %v6649
        %v6659 = vmul.f32 %v6658, %v3417
        %v6660 = vmul.f32 %v6656, %v3421
        %v6661 = vmul.f32 %v2973, %v6657
        %v6662 = vmul.f32 %v2974, %v6655
        %v6663 = vmul.f32 %v2975, %v6658
        %v6664 = vmul.f32 %v2976, %v6656
        %v6665 = vsel %vm2981, %v6663, 0.0
        %v6666 = vadd.f32 %v6661, %v6665
        %v6667 = vrot.slane %v6666, 4
        %v6668 = vadd.f32 %v6666, %v6667
        %v6669 = vrot.slane %v6668, 2
        %v6670 = vadd.f32 %v6668, %v6669
        %v6671 = vrot.slane %v6670, 1
        %v6672 = vadd.f32 %v6670, %v6671
        %v6673 = vsel %vm2981, %v6664, 0.0
        %v6674 = vadd.f32 %v6662, %v6673
        %v6675 = vrot.slane %v6674, 4
        %v6676 = vadd.f32 %v6674, %v6675
        %v6677 = vrot.slane %v6676, 2
        %v6678 = vadd.f32 %v6676, %v6677
        %v6679 = vrot.slane %v6678, 1
        %v6680 = vadd.f32 %v6678, %v6679
        %v6681 = vadd.f32 %v2989, %v6658
        %v6682 = vadd.f32 %v2997, %v6656
        %v6683 = vmul.f32 %v6672, 2.0
        %v6684 = vmul.f32 %v6680, 2.0
        %v6685 = vsub.f32 %v6681, %v6683
        %v6686 = vsub.f32 %v6682, %v6684
        %s6687 = sld [smem:[#allocation4 + $0x2e]]
        %v6688 = vstv %s6687
        %v6689 = vadd.f32 %v6685, %v6688
        %v6690 = vadd.f32 %v6686, %v6688
        %v6691 = vsub.f32 0.0, %v6689
        %v6692 = vsub.f32 0.0, %v6690
        %v6693 = vmul.f32 %v6691, 1.442695
        %v6694 = vpow.pop %v6693
        %v6695 = vmul.f32 %v6692, 1.442695
        %v6696 = vpow.pop %v6695
        %v6699 = vrot.slane %v6659, 7
        %v6700 = vrot.slane %v6660, 7
        %v6703 = vmul.f32 %v6694, %v6699
        %v6704 = vmul.f32 %v6696, %v6700
        %v6705 = vlaneseq
        %v6706 = vshrl.u32 %v6705, 7
        %v6707 = vsub.s32 6, %v6706
        %v6708 = vrot.slane %v6703, %v6707
        %v6709 = vlaneseq
        %v6710 = vshrl.u32 %v6709, 7
        %v6711 = vsub.s32 6, %v6710
        %v6712 = vrot.slane %v6704, %v6711
        %v6713 = vmul.f32 %v6708, %v6657
        %v6714 = vmul.f32 %v6712, %v6655
        %v6715 = vadd.f32 %v6638, %v6713
        %v6716 = vadd.f32 %v6639, %v6714
        %v6717 = vadd.f32 %v6640, %v6703
        %v6718 = vadd.f32 %v6641, %v6704
        %6719 = vrot.lane.b32.xlu0 %v3032, 78
        %v6720 = vpop.permute.xlu0 %6719
        %6721 = vrot.lane.b32.xlu0 %v3035, 78
        %v6722 = vpop.permute.xlu0 %6721
        %6723 = vrot.lane.b32.xlu0 %v3033, 78
        %v6724 = vpop.permute.xlu0 %6723
        %6725 = vrot.lane.b32.xlu0 %v3036, 78
        %v6726 = vpop.permute.xlu0 %6725
        %6727 = vrot.lane.b32.xlu0 %v3034, 78
        %v6728 = vpop.permute.xlu0 %6727
        %6729 = vrot.lane.b32.xlu0 %v3037, 78
        %v6730 = vpop.permute.xlu0 %6729
        %vm6731 = vcmp.lt.s32.totalorder %v393, 78
        %v6732 = vsel %vm6731, %v6724, %v6728
        %v6733 = vsel %vm6731, %v6726, %v6730
        %v6734 = vsel %vm6731, %v6720, %v6724
        %v6735 = vsel %vm6731, %v6722, %v6726
        %v6736 = vmul.f32 %v6735, %v3507
        %v6737 = vmul.f32 %v6733, %v3511
        %v6738 = vmul.f32 %v2973, %v6734
        %v6739 = vmul.f32 %v2974, %v6732
        %v6740 = vmul.f32 %v2975, %v6735
        %v6741 = vmul.f32 %v2976, %v6733
        %v6742 = vsel %vm2981, %v6740, 0.0
        %v6743 = vadd.f32 %v6738, %v6742
        %v6744 = vrot.slane %v6743, 4
        %v6745 = vadd.f32 %v6743, %v6744
        %v6746 = vrot.slane %v6745, 2
        %v6747 = vadd.f32 %v6745, %v6746
        %v6748 = vrot.slane %v6747, 1
        %v6749 = vadd.f32 %v6747, %v6748
        %v6750 = vsel %vm2981, %v6741, 0.0
        %v6751 = vadd.f32 %v6739, %v6750
        %v6752 = vrot.slane %v6751, 4
        %v6753 = vadd.f32 %v6751, %v6752
        %v6754 = vrot.slane %v6753, 2
        %v6755 = vadd.f32 %v6753, %v6754
        %v6756 = vrot.slane %v6755, 1
        %v6757 = vadd.f32 %v6755, %v6756
        %v6758 = vadd.f32 %v2989, %v6735
        %v6759 = vadd.f32 %v2997, %v6733
        %v6760 = vmul.f32 %v6749, 2.0
        %v6761 = vmul.f32 %v6757, 2.0
        %v6762 = vsub.f32 %v6758, %v6760
        %v6763 = vsub.f32 %v6759, %v6761
        %s6764 = sld [smem:[#allocation4 + $0x2f]]
        %v6765 = vstv %s6764
        %v6766 = vadd.f32 %v6762, %v6765
        %v6767 = vadd.f32 %v6763, %v6765
        %v6768 = vsub.f32 0.0, %v6766
        %v6769 = vsub.f32 0.0, %v6767
        %v6770 = vmul.f32 %v6768, 1.442695
        %v6771 = vpow.pop %v6770
        %v6772 = vmul.f32 %v6769, 1.442695
        %v6773 = vpow.pop %v6772
        %v6776 = vrot.slane %v6736, 7
        %v6777 = vrot.slane %v6737, 7
        %v6780 = vmul.f32 %v6771, %v6776
        %v6781 = vmul.f32 %v6773, %v6777
        %v6782 = vlaneseq
        %v6783 = vshrl.u32 %v6782, 7
        %v6784 = vsub.s32 6, %v6783
        %v6785 = vrot.slane %v6780, %v6784
        %v6786 = vlaneseq
        %v6787 = vshrl.u32 %v6786, 7
        %v6788 = vsub.s32 6, %v6787
        %v6789 = vrot.slane %v6781, %v6788
        %v6790 = vmul.f32 %v6785, %v6734
        %v6791 = vmul.f32 %v6789, %v6732
        %v6792 = vadd.f32 %v6715, %v6790
        %v6793 = vadd.f32 %v6716, %v6791
        %v6794 = vadd.f32 %v6717, %v6780
        %v6795 = vadd.f32 %v6718, %v6781
        %6796 = vrot.lane.b32.xlu0 %v3032, 77
        %v6797 = vpop.permute.xlu0 %6796
        %6798 = vrot.lane.b32.xlu0 %v3035, 77
        %v6799 = vpop.permute.xlu0 %6798
        %6800 = vrot.lane.b32.xlu0 %v3033, 77
        %v6801 = vpop.permute.xlu0 %6800
        %6802 = vrot.lane.b32.xlu0 %v3036, 77
        %v6803 = vpop.permute.xlu0 %6802
        %6804 = vrot.lane.b32.xlu0 %v3034, 77
        %v6805 = vpop.permute.xlu0 %6804
        %6806 = vrot.lane.b32.xlu0 %v3037, 77
        %v6807 = vpop.permute.xlu0 %6806
        %vm6808 = vcmp.lt.s32.totalorder %v393, 77
        %v6809 = vsel %vm6808, %v6801, %v6805
        %v6810 = vsel %vm6808, %v6803, %v6807
        %v6811 = vsel %vm6808, %v6797, %v6801
        %v6812 = vsel %vm6808, %v6799, %v6803
        %v6813 = vmul.f32 %v6812, %v3597
        %v6814 = vmul.f32 %v6810, %v3601
        %v6815 = vmul.f32 %v2973, %v6811
        %v6816 = vmul.f32 %v2974, %v6809
        %v6817 = vmul.f32 %v2975, %v6812
        %v6818 = vmul.f32 %v2976, %v6810
        %v6819 = vsel %vm2981, %v6817, 0.0
        %v6820 = vadd.f32 %v6815, %v6819
        %v6821 = vrot.slane %v6820, 4
        %v6822 = vadd.f32 %v6820, %v6821
        %v6823 = vrot.slane %v6822, 2
        %v6824 = vadd.f32 %v6822, %v6823
        %v6825 = vrot.slane %v6824, 1
        %v6826 = vadd.f32 %v6824, %v6825
        %v6827 = vsel %vm2981, %v6818, 0.0
        %v6828 = vadd.f32 %v6816, %v6827
        %v6829 = vrot.slane %v6828, 4
        %v6830 = vadd.f32 %v6828, %v6829
        %v6831 = vrot.slane %v6830, 2
        %v6832 = vadd.f32 %v6830, %v6831
        %v6833 = vrot.slane %v6832, 1
        %v6834 = vadd.f32 %v6832, %v6833
        %v6835 = vadd.f32 %v2989, %v6812
        %v6836 = vadd.f32 %v2997, %v6810
        %v6837 = vmul.f32 %v6826, 2.0
        %v6838 = vmul.f32 %v6834, 2.0
        %v6839 = vsub.f32 %v6835, %v6837
        %v6840 = vsub.f32 %v6836, %v6838
        %s6841 = sld [smem:[#allocation4 + $0x30]]
        %v6842 = vstv %s6841
        %v6843 = vadd.f32 %v6839, %v6842
        %v6844 = vadd.f32 %v6840, %v6842
        %v6845 = vsub.f32 0.0, %v6843
        %v6846 = vsub.f32 0.0, %v6844
        %v6847 = vmul.f32 %v6845, 1.442695
        %v6848 = vpow.pop %v6847
        %v6849 = vmul.f32 %v6846, 1.442695
        %v6850 = vpow.pop %v6849
        %v6853 = vrot.slane %v6813, 7
        %v6854 = vrot.slane %v6814, 7
        %v6857 = vmul.f32 %v6848, %v6853
        %v6858 = vmul.f32 %v6850, %v6854
        %v6859 = vlaneseq
        %v6860 = vshrl.u32 %v6859, 7
        %v6861 = vsub.s32 6, %v6860
        %v6862 = vrot.slane %v6857, %v6861
        %v6863 = vlaneseq
        %v6864 = vshrl.u32 %v6863, 7
        %v6865 = vsub.s32 6, %v6864
        %v6866 = vrot.slane %v6858, %v6865
        %v6867 = vmul.f32 %v6862, %v6811
        %v6868 = vmul.f32 %v6866, %v6809
        %v6869 = vadd.f32 %v6792, %v6867
        %v6870 = vadd.f32 %v6793, %v6868
        %v6871 = vadd.f32 %v6794, %v6857
        %v6872 = vadd.f32 %v6795, %v6858
        %v6873 = vrcp.pop %v6871
        %v6874 = vrcp.pop %v6872
        %v6875 = vlaneseq
        %v6876 = vshrl.u32 %v6875, 7
        %v6877 = vsub.s32 6, %v6876
        %v6878 = vrot.slane %v6873, %v6877
        %v6879 = vlaneseq
        %v6880 = vshrl.u32 %v6879, 7
        %v6881 = vsub.s32 6, %v6880
        %v6882 = vrot.slane %v6874, %v6881
        %v6883 = vmul.f32 %v6869, %v6878
        %v6884 = vmul.f32 %v6870, %v6882
        %6885 = vst [vmem:[#allocation3] sm:$0xf] %v6883
        %6886 = vst [vmem:[#allocation3 + $0x8] sm:$0xf] %v6884
        %v6887 = vld [vmem:[#allocation3] sm:$0xff]
        %v6888 = vld [vmem:[#allocation3 + $0x8] sm:$0xff]
        %v6889 = vld [vmem:[#allocation3 + $0x10] sm:$0xff]
        %v6890 = vld [vmem:[#allocation3 + $0x18] sm:$0x7f]
        %v6891 = vld [vmem:[#allocation3 + $0x20] sm:$0x7f]
        %v6892 = vld [vmem:[#allocation3 + $0x28] sm:$0x7f]
        %6893 = vrot.lane.b32.xlu0 %v6887, 17
        %v6894 = vpop.permute.xlu0 %6893
        %6895 = vrot.lane.b32.xlu0 %v6890, 17
        %v6896 = vpop.permute.xlu0 %6895
        %6897 = vrot.lane.b32.xlu0 %v6888, 17
        %v6898 = vpop.permute.xlu0 %6897
        %6899 = vrot.lane.b32.xlu0 %v6891, 17
        %v6900 = vpop.permute.xlu0 %6899
        %6901 = vrot.lane.b32.xlu0 %v6889, 17
        %v6902 = vpop.permute.xlu0 %6901
        %6903 = vrot.lane.b32.xlu0 %v6892, 17
        %v6904 = vpop.permute.xlu0 %6903
        %v6905 = vsel %vm394, %v6894, %v6898
        %v6906 = vsel %vm394, %v6896, %v6900
        %v6907 = vsel %vm394, %v6902, %v6894
        %v6908 = vsel %vm394, %v6904, %v6896
        %v6909 = vld [vmem:[%s399] ss:$8 sm:$0x3]
        %v6911 = vlaneseq
        %v6912 = vshrl.u32 %v6911, 7
        %v6913 = vsub.s32 0, %v6912
        %v6914 = vrot.slane %v6909, %v6913
        %v6915 = vlaneseq
        %v6916 = vshrl.u32 %v6915, 7
        %v6917 = vsub.s32 1, %v6916
        %v6918 = vrot.slane %v6909, %v6917
        %v6921 = vmul.f32 %v6907, %v6914
        %v6922 = vmul.f32 %v6905, %v6918
        %v6923 = vmul.f32 %v6908, %v6914
        %v6924 = vmul.f32 %v6906, %v6918
        %v6925 = vld [vmem:[%s6] sm:$0x7]
        %6926 = vrot.lane.b32.xlu0 %v6887, 16
        %v6927 = vpop.permute.xlu0 %6926
        %6928 = vrot.lane.b32.xlu0 %v6890, 16
        %v6929 = vpop.permute.xlu0 %6928
        %6930 = vrot.lane.b32.xlu0 %v6888, 16
        %v6931 = vpop.permute.xlu0 %6930
        %6932 = vrot.lane.b32.xlu0 %v6891, 16
        %v6933 = vpop.permute.xlu0 %6932
        %6934 = vrot.lane.b32.xlu0 %v6889, 16
        %v6935 = vpop.permute.xlu0 %6934
        %6936 = vrot.lane.b32.xlu0 %v6892, 16
        %v6937 = vpop.permute.xlu0 %6936
        %v6938 = vsel %vm432, %v6927, %v6931
        %v6939 = vsel %vm432, %v6929, %v6933
        %v6940 = vsel %vm432, %v6935, %v6927
        %v6941 = vsel %vm432, %v6937, %v6929
        %v6942 = vld [vmem:[%s437] ss:$8 sm:$0x3]
        %v6944 = vlaneseq
        %v6945 = vshrl.u32 %v6944, 7
        %v6946 = vsub.s32 0, %v6945
        %v6947 = vrot.slane %v6942, %v6946
        %v6948 = vlaneseq
        %v6949 = vshrl.u32 %v6948, 7
        %v6950 = vsub.s32 1, %v6949
        %v6951 = vrot.slane %v6942, %v6950
        %v6954 = vmul.f32 %v6940, %v6947
        %v6955 = vmul.f32 %v6938, %v6951
        %v6956 = vmul.f32 %v6941, %v6947
        %v6957 = vmul.f32 %v6939, %v6951
        %s6958 = scalar_lea.vmem %s6, 4
        %v6959 = vld [vmem:[%s6958] sm:$0x7]
        %vm6960 = vcmask 121856
        %v6962 = vsel %vm6960, %v6959, 0
        %vm6964 = vcmask 1046528
        %v6966 = vsel %vm6964, %v6956, 0
        %v6969 = vsel %vm6964, %v6957, 0
        %6971 = vmatprep.subr.mxu0 %v6955
        %6972 = vmatpush1.msra.mxu0 %v6954
        %6973 = vmatprep.subr.mxu0 %v6969
        %6974 = vmatpush1.msra.mxu0 %v6966
        %6975 = vmatprep.subr.mxu0 0.0
        %6976 = vmatpush1.msra.mxu0 0.0
        %6977 = vmatprep.subr.mxu0 0.0
        %6978 = vmatpush1.msra.mxu0 0.0
        %6979 = vmatprep.subr.mxu0 0.0
        %6980 = vmatpush1.msra.mxu0 0.0
        %6981 = vmatprep.subr.mxu0 0.0
        %6982 = vmatpush1.msra.mxu0 0.0
        %6983 = vmatprep.subr.mxu0 0.0
        %6984 = vmatpush1.msra.mxu0 0.0
        %6985 = vmatprep.subr.mxu0 0.0
        %6986 = vmatpush1.msra.mxu0 0.0
        %6987 = vmatprep.subr.mxu0 0.0
        %6988 = vmatpush1.msra.mxu0 0.0
        %6989 = vmatprep.subr.mxu0 0.0
        %6990 = vmatpush1.msra.mxu0 0.0
        %6991 = vmatprep.subr.mxu0 0.0
        %6992 = vmatpush1.msra.mxu0 0.0
        %6993 = vmatprep.subr.mxu0 0.0
        %6994 = vmatpush1.msra.mxu0 0.0
        %6995 = vmatprep.subr.mxu0 0.0
        %6996 = vmatpush1.msra.mxu0 0.0
        %6997 = vmatprep.subr.mxu0 0.0
        %6998 = vmatpush1.msra.mxu0 0.0
        %6999 = vmatprep.subr.mxu0 0.0
        %7000 = vmatpush1.msra.mxu0 0.0
        %7001 = vmatprep.subr.mxu0 0.0
        %7002 = vmatpush1.msra.mxu0 0.0
        %7003 = vmatprep.subr.mxu0 0.0
        %7004 = vmatpush1.msra.mxu0 0.0
        %7005 = vmatprep.subr.mxu0 0.0
        %7006 = vmatpush1.msra.mxu0 0.0
        %7007 = vmatprep.subr.mxu0 0.0
        %7008 = vmatpush1.msra.mxu0 0.0
        %7009 = vmatprep.subr.mxu0 0.0
        %7010 = vmatpush1.msra.mxu0 0.0
        %7011 = vmatprep.subr.mxu0 0.0
        %7012 = vmatpush1.msra.mxu0 0.0
        %7013 = vmatprep.subr.mxu0 0.0
        %7014 = vmatpush1.msra.mxu0 0.0
        %7015 = vmatprep.subr.mxu0 0.0
        %7016 = vmatpush1.msra.mxu0 0.0
        %7017 = vmatprep.subr.mxu0 0.0
        %7018 = vmatpush1.msra.mxu0 0.0
        %7019 = vmatprep.subr.mxu0 0.0
        %7020 = vmatpush1.msra.mxu0 0.0
        %7021 = vmatprep.subr.mxu0 0.0
        %7022 = vmatpush1.msra.mxu0 0.0
        %7023 = vmatprep.subr.mxu0 0.0
        %7024 = vmatpush1.msra.mxu0 0.0
        %7025 = vmatprep.subr.mxu0 0.0
        %7026 = vmatpush1.msra.mxu0 0.0
        %7027 = vmatprep.subr.mxu0 0.0
        %7028 = vmatpush1.msra.mxu0 0.0
        %7029 = vmatprep.subr.mxu0 0.0
        %7030 = vmatpush1.msra.mxu0 0.0
        %7031 = vmatprep.subr.mxu0 0.0
        %7032 = vmatpush1.msra.mxu0 0.0
        %7033 = vmatprep.subr.mxu0 0.0
        %7034 = vmatpush1.msra.mxu0 0.0
        %7035 = vmatprep.mubr.f32.mxu0 0.0
        %7036 = vmatmul.mubr.f32.gmra.mrb[0].mxu0 %v6962
        %v7037 = vpop.f32.mrb[0].mxu0
        %v7038 = vadd.f32 0.0, %v7037
        %v7039 = vpop.f32.mrb[0].mxu0
        %v7040 = vadd.f32 0.0, %v7039
        %7041 = vdwg.mxu0
        %v7043 = vsel %vm6960, %v6925, 0
        %v7046 = vsel %vm6964, %v6923, 0
        %v7049 = vsel %vm6964, %v6924, 0
        %7051 = vmatprep.subr.mxu0 %v6922
        %7052 = vmatpush1.msra.mxu0 %v6921
        %7053 = vmatprep.subr.mxu0 %v7049
        %7054 = vmatpush1.msra.mxu0 %v7046
        %7055 = vmatprep.subr.mxu0 0.0
        %7056 = vmatpush1.msra.mxu0 0.0
        %7057 = vmatprep.subr.mxu0 0.0
        %7058 = vmatpush1.msra.mxu0 0.0
        %7059 = vmatprep.subr.mxu0 0.0
        %7060 = vmatpush1.msra.mxu0 0.0
        %7061 = vmatprep.subr.mxu0 0.0
        %7062 = vmatpush1.msra.mxu0 0.0
        %7063 = vmatprep.subr.mxu0 0.0
        %7064 = vmatpush1.msra.mxu0 0.0
        %7065 = vmatprep.subr.mxu0 0.0
        %7066 = vmatpush1.msra.mxu0 0.0
        %7067 = vmatprep.subr.mxu0 0.0
        %7068 = vmatpush1.msra.mxu0 0.0
        %7069 = vmatprep.subr.mxu0 0.0
        %7070 = vmatpush1.msra.mxu0 0.0
        %7071 = vmatprep.subr.mxu0 0.0
        %7072 = vmatpush1.msra.mxu0 0.0
        %7073 = vmatprep.subr.mxu0 0.0
        %7074 = vmatpush1.msra.mxu0 0.0
        %7075 = vmatprep.subr.mxu0 0.0
        %7076 = vmatpush1.msra.mxu0 0.0
        %7077 = vmatprep.subr.mxu0 0.0
        %7078 = vmatpush1.msra.mxu0 0.0
        %7079 = vmatprep.subr.mxu0 0.0
        %7080 = vmatpush1.msra.mxu0 0.0
        %7081 = vmatprep.subr.mxu0 0.0
        %7082 = vmatpush1.msra.mxu0 0.0
        %7083 = vmatprep.subr.mxu0 0.0
        %7084 = vmatpush1.msra.mxu0 0.0
        %7085 = vmatprep.subr.mxu0 0.0
        %7086 = vmatpush1.msra.mxu0 0.0
        %7087 = vmatprep.subr.mxu0 0.0
        %7088 = vmatpush1.msra.mxu0 0.0
        %7089 = vmatprep.subr.mxu0 0.0
        %7090 = vmatpush1.msra.mxu0 0.0
        %7091 = vmatprep.subr.mxu0 0.0
        %7092 = vmatpush1.msra.mxu0 0.0
        %7093 = vmatprep.subr.mxu0 0.0
        %7094 = vmatpush1.msra.mxu0 0.0
        %7095 = vmatprep.subr.mxu0 0.0
        %7096 = vmatpush1.msra.mxu0 0.0
        %7097 = vmatprep.subr.mxu0 0.0
        %7098 = vmatpush1.msra.mxu0 0.0
        %7099 = vmatprep.subr.mxu0 0.0
        %7100 = vmatpush1.msra.mxu0 0.0
        %7101 = vmatprep.subr.mxu0 0.0
        %7102 = vmatpush1.msra.mxu0 0.0
        %7103 = vmatprep.subr.mxu0 0.0
        %7104 = vmatpush1.msra.mxu0 0.0
        %7105 = vmatprep.subr.mxu0 0.0
        %7106 = vmatpush1.msra.mxu0 0.0
        %7107 = vmatprep.subr.mxu0 0.0
        %7108 = vmatpush1.msra.mxu0 0.0
        %7109 = vmatprep.subr.mxu0 0.0
        %7110 = vmatpush1.msra.mxu0 0.0
        %7111 = vmatprep.subr.mxu0 0.0
        %7112 = vmatpush1.msra.mxu0 0.0
        %7113 = vmatprep.subr.mxu0 0.0
        %7114 = vmatpush1.msra.mxu0 0.0
        %7115 = vmatprep.mubr.f32.mxu0 0.0
        %7116 = vmatmul.mubr.f32.gmra.mrb[0].mxu0 %v7043
        %v7117 = vpop.f32.mrb[0].mxu0
        %v7118 = vadd.f32 %v7038, %v7117
        %v7119 = vpop.f32.mrb[0].mxu0
        %v7120 = vadd.f32 %v7040, %v7119
        %7121 = vdwg.mxu0
        %7122 = vrot.lane.b32.xlu0 %v6887, 15
        %v7123 = vpop.permute.xlu0 %7122
        %7124 = vrot.lane.b32.xlu0 %v6890, 15
        %v7125 = vpop.permute.xlu0 %7124
        %7126 = vrot.lane.b32.xlu0 %v6888, 15
        %v7127 = vpop.permute.xlu0 %7126
        %7128 = vrot.lane.b32.xlu0 %v6891, 15
        %v7129 = vpop.permute.xlu0 %7128
        %7130 = vrot.lane.b32.xlu0 %v6889, 15
        %v7131 = vpop.permute.xlu0 %7130
        %7132 = vrot.lane.b32.xlu0 %v6892, 15
        %v7133 = vpop.permute.xlu0 %7132
        %v7134 = vsel %vm687, %v7123, %v7127
        %v7135 = vsel %vm687, %v7125, %v7129
        %v7136 = vsel %vm687, %v7131, %v7123
        %v7137 = vsel %vm687, %v7133, %v7125
        %v7138 = vld [vmem:[%s692] ss:$8 sm:$0x3]
        %v7140 = vlaneseq
        %v7141 = vshrl.u32 %v7140, 7
        %v7142 = vsub.s32 0, %v7141
        %v7143 = vrot.slane %v7138, %v7142
        %v7144 = vlaneseq
        %v7145 = vshrl.u32 %v7144, 7
        %v7146 = vsub.s32 1, %v7145
        %v7147 = vrot.slane %v7138, %v7146
        %v7150 = vmul.f32 %v7136, %v7143
        %v7151 = vmul.f32 %v7134, %v7147
        %v7152 = vmul.f32 %v7137, %v7143
        %v7153 = vmul.f32 %v7135, %v7147
        %s7154 = scalar_lea.vmem %s6, 8
        %v7155 = vld [vmem:[%s7154] sm:$0x7]
        %v7157 = vsel %vm6960, %v7155, 0
        %v7160 = vsel %vm6964, %v7152, 0
        %v7163 = vsel %vm6964, %v7153, 0
        %7165 = vmatprep.subr.mxu0 %v7151
        %7166 = vmatpush1.msra.mxu0 %v7150
        %7167 = vmatprep.subr.mxu0 %v7163
        %7168 = vmatpush1.msra.mxu0 %v7160
        %7169 = vmatprep.subr.mxu0 0.0
        %7170 = vmatpush1.msra.mxu0 0.0
        %7171 = vmatprep.subr.mxu0 0.0
        %7172 = vmatpush1.msra.mxu0 0.0
        %7173 = vmatprep.subr.mxu0 0.0
        %7174 = vmatpush1.msra.mxu0 0.0
        %7175 = vmatprep.subr.mxu0 0.0
        %7176 = vmatpush1.msra.mxu0 0.0
        %7177 = vmatprep.subr.mxu0 0.0
        %7178 = vmatpush1.msra.mxu0 0.0
        %7179 = vmatprep.subr.mxu0 0.0
        %7180 = vmatpush1.msra.mxu0 0.0
        %7181 = vmatprep.subr.mxu0 0.0
        %7182 = vmatpush1.msra.mxu0 0.0
        %7183 = vmatprep.subr.mxu0 0.0
        %7184 = vmatpush1.msra.mxu0 0.0
        %7185 = vmatprep.subr.mxu0 0.0
        %7186 = vmatpush1.msra.mxu0 0.0
        %7187 = vmatprep.subr.mxu0 0.0
        %7188 = vmatpush1.msra.mxu0 0.0
        %7189 = vmatprep.subr.mxu0 0.0
        %7190 = vmatpush1.msra.mxu0 0.0
        %7191 = vmatprep.subr.mxu0 0.0
        %7192 = vmatpush1.msra.mxu0 0.0
        %7193 = vmatprep.subr.mxu0 0.0
        %7194 = vmatpush1.msra.mxu0 0.0
        %7195 = vmatprep.subr.mxu0 0.0
        %7196 = vmatpush1.msra.mxu0 0.0
        %7197 = vmatprep.subr.mxu0 0.0
        %7198 = vmatpush1.msra.mxu0 0.0
        %7199 = vmatprep.subr.mxu0 0.0
        %7200 = vmatpush1.msra.mxu0 0.0
        %7201 = vmatprep.subr.mxu0 0.0
        %7202 = vmatpush1.msra.mxu0 0.0
        %7203 = vmatprep.subr.mxu0 0.0
        %7204 = vmatpush1.msra.mxu0 0.0
        %7205 = vmatprep.subr.mxu0 0.0
        %7206 = vmatpush1.msra.mxu0 0.0
        %7207 = vmatprep.subr.mxu0 0.0
        %7208 = vmatpush1.msra.mxu0 0.0
        %7209 = vmatprep.subr.mxu0 0.0
        %7210 = vmatpush1.msra.mxu0 0.0
        %7211 = vmatprep.subr.mxu0 0.0
        %7212 = vmatpush1.msra.mxu0 0.0
        %7213 = vmatprep.subr.mxu0 0.0
        %7214 = vmatpush1.msra.mxu0 0.0
        %7215 = vmatprep.subr.mxu0 0.0
        %7216 = vmatpush1.msra.mxu0 0.0
        %7217 = vmatprep.subr.mxu0 0.0
        %7218 = vmatpush1.msra.mxu0 0.0
        %7219 = vmatprep.subr.mxu0 0.0
        %7220 = vmatpush1.msra.mxu0 0.0
        %7221 = vmatprep.subr.mxu0 0.0
        %7222 = vmatpush1.msra.mxu0 0.0
        %7223 = vmatprep.subr.mxu0 0.0
        %7224 = vmatpush1.msra.mxu0 0.0
        %7225 = vmatprep.subr.mxu0 0.0
        %7226 = vmatpush1.msra.mxu0 0.0
        %7227 = vmatprep.subr.mxu0 0.0
        %7228 = vmatpush1.msra.mxu0 0.0
        %7229 = vmatprep.mubr.f32.mxu0 0.0
        %7230 = vmatmul.mubr.f32.gmra.mrb[0].mxu0 %v7157
        %v7231 = vpop.f32.mrb[0].mxu0
        %v7232 = vadd.f32 0.0, %v7231
        %v7233 = vpop.f32.mrb[0].mxu0
        %v7234 = vadd.f32 0.0, %v7233
        %7235 = vdwg.mxu0
        %v7236 = vadd.f32 %v7118, %v7232
        %v7237 = vadd.f32 %v7120, %v7234
        %7238 = vrot.lane.b32.xlu0 %v6887, 1
        %v7239 = vpop.permute.xlu0 %7238
        %7240 = vrot.lane.b32.xlu0 %v6890, 1
        %v7241 = vpop.permute.xlu0 %7240
        %7242 = vrot.lane.b32.xlu0 %v6888, 1
        %v7243 = vpop.permute.xlu0 %7242
        %7244 = vrot.lane.b32.xlu0 %v6891, 1
        %v7245 = vpop.permute.xlu0 %7244
        %7246 = vrot.lane.b32.xlu0 %v6889, 1
        %v7247 = vpop.permute.xlu0 %7246
        %7248 = vrot.lane.b32.xlu0 %v6892, 1
        %v7249 = vpop.permute.xlu0 %7248
        %v7250 = vsel %vm841, %v7239, %v7243
        %v7251 = vsel %vm841, %v7241, %v7245
        %v7252 = vsel %vm841, %v7247, %v7239
        %v7253 = vsel %vm841, %v7249, %v7241
        %v7254 = vmul.f32 %v7252, %v6914
        %v7255 = vmul.f32 %v7250, %v6918
        %v7256 = vmul.f32 %v7253, %v6914
        %v7257 = vmul.f32 %v7251, %v6918
        %s7258 = scalar_lea.vmem %s6, 12
        %v7259 = vld [vmem:[%s7258] sm:$0x7]
        %v7261 = vsel %vm6960, %v7259, 0
        %v7264 = vsel %vm6964, %v7256, 0
        %v7267 = vsel %vm6964, %v7257, 0
        %7269 = vmatprep.subr.mxu0 %v7255
        %7270 = vmatpush1.msra.mxu0 %v7254
        %7271 = vmatprep.subr.mxu0 %v7267
        %7272 = vmatpush1.msra.mxu0 %v7264
        %7273 = vmatprep.subr.mxu0 0.0
        %7274 = vmatpush1.msra.mxu0 0.0
        %7275 = vmatprep.subr.mxu0 0.0
        %7276 = vmatpush1.msra.mxu0 0.0
        %7277 = vmatprep.subr.mxu0 0.0
        %7278 = vmatpush1.msra.mxu0 0.0
        %7279 = vmatprep.subr.mxu0 0.0
        %7280 = vmatpush1.msra.mxu0 0.0
        %7281 = vmatprep.subr.mxu0 0.0
        %7282 = vmatpush1.msra.mxu0 0.0
        %7283 = vmatprep.subr.mxu0 0.0
        %7284 = vmatpush1.msra.mxu0 0.0
        %7285 = vmatprep.subr.mxu0 0.0
        %7286 = vmatpush1.msra.mxu0 0.0
        %7287 = vmatprep.subr.mxu0 0.0
        %7288 = vmatpush1.msra.mxu0 0.0
        %7289 = vmatprep.subr.mxu0 0.0
        %7290 = vmatpush1.msra.mxu0 0.0
        %7291 = vmatprep.subr.mxu0 0.0
        %7292 = vmatpush1.msra.mxu0 0.0
        %7293 = vmatprep.subr.mxu0 0.0
        %7294 = vmatpush1.msra.mxu0 0.0
        %7295 = vmatprep.subr.mxu0 0.0
        %7296 = vmatpush1.msra.mxu0 0.0
        %7297 = vmatprep.subr.mxu0 0.0
        %7298 = vmatpush1.msra.mxu0 0.0
        %7299 = vmatprep.subr.mxu0 0.0
        %7300 = vmatpush1.msra.mxu0 0.0
        %7301 = vmatprep.subr.mxu0 0.0
        %7302 = vmatpush1.msra.mxu0 0.0
        %7303 = vmatprep.subr.mxu0 0.0
        %7304 = vmatpush1.msra.mxu0 0.0
        %7305 = vmatprep.subr.mxu0 0.0
        %7306 = vmatpush1.msra.mxu0 0.0
        %7307 = vmatprep.subr.mxu0 0.0
        %7308 = vmatpush1.msra.mxu0 0.0
        %7309 = vmatprep.subr.mxu0 0.0
        %7310 = vmatpush1.msra.mxu0 0.0
        %7311 = vmatprep.subr.mxu0 0.0
        %7312 = vmatpush1.msra.mxu0 0.0
        %7313 = vmatprep.subr.mxu0 0.0
        %7314 = vmatpush1.msra.mxu0 0.0
        %7315 = vmatprep.subr.mxu0 0.0
        %7316 = vmatpush1.msra.mxu0 0.0
        %7317 = vmatprep.subr.mxu0 0.0
        %7318 = vmatpush1.msra.mxu0 0.0
        %7319 = vmatprep.subr.mxu0 0.0
        %7320 = vmatpush1.msra.mxu0 0.0
        %7321 = vmatprep.subr.mxu0 0.0
        %7322 = vmatpush1.msra.mxu0 0.0
        %7323 = vmatprep.subr.mxu0 0.0
        %7324 = vmatpush1.msra.mxu0 0.0
        %7325 = vmatprep.subr.mxu0 0.0
        %7326 = vmatpush1.msra.mxu0 0.0
        %7327 = vmatprep.subr.mxu0 0.0
        %7328 = vmatpush1.msra.mxu0 0.0
        %7329 = vmatprep.subr.mxu0 0.0
        %7330 = vmatpush1.msra.mxu0 0.0
        %7331 = vmatprep.subr.mxu0 0.0
        %7332 = vmatpush1.msra.mxu0 0.0
        %7333 = vmatprep.mubr.f32.mxu0 0.0
        %7334 = vmatmul.mubr.f32.gmra.mrb[0].mxu0 %v7261
        %v7335 = vpop.f32.mrb[0].mxu0
        %v7336 = vadd.f32 0.0, %v7335
        %v7337 = vpop.f32.mrb[0].mxu0
        %v7338 = vadd.f32 0.0, %v7337
        %7339 = vdwg.mxu0
        %v7340 = vadd.f32 %v7236, %v7336
        %v7341 = vadd.f32 %v7237, %v7338
        %v7342 = vmul.f32 %v6887, %v6947
        %v7343 = vmul.f32 %v6888, %v6951
        %v7344 = vmul.f32 %v6890, %v6947
        %v7345 = vmul.f32 %v6891, %v6951
        %s7346 = scalar_lea.vmem %s6, 16
        %v7347 = vld [vmem:[%s7346] sm:$0x7]
        %v7349 = vsel %vm6960, %v7347, 0
        %v7352 = vsel %vm6964, %v7344, 0
        %v7355 = vsel %vm6964, %v7345, 0
        %7357 = vmatprep.subr.mxu0 %v7343
        %7358 = vmatpush1.msra.mxu0 %v7342
        %7359 = vmatprep.subr.mxu0 %v7355
        %7360 = vmatpush1.msra.mxu0 %v7352
        %7361 = vmatprep.subr.mxu0 0.0
        %7362 = vmatpush1.msra.mxu0 0.0
        %7363 = vmatprep.subr.mxu0 0.0
        %7364 = vmatpush1.msra.mxu0 0.0
        %7365 = vmatprep.subr.mxu0 0.0
        %7366 = vmatpush1.msra.mxu0 0.0
        %7367 = vmatprep.subr.mxu0 0.0
        %7368 = vmatpush1.msra.mxu0 0.0
        %7369 = vmatprep.subr.mxu0 0.0
        %7370 = vmatpush1.msra.mxu0 0.0
        %7371 = vmatprep.subr.mxu0 0.0
        %7372 = vmatpush1.msra.mxu0 0.0
        %7373 = vmatprep.subr.mxu0 0.0
        %7374 = vmatpush1.msra.mxu0 0.0
        %7375 = vmatprep.subr.mxu0 0.0
        %7376 = vmatpush1.msra.mxu0 0.0
        %7377 = vmatprep.subr.mxu0 0.0
        %7378 = vmatpush1.msra.mxu0 0.0
        %7379 = vmatprep.subr.mxu0 0.0
        %7380 = vmatpush1.msra.mxu0 0.0
        %7381 = vmatprep.subr.mxu0 0.0
        %7382 = vmatpush1.msra.mxu0 0.0
        %7383 = vmatprep.subr.mxu0 0.0
        %7384 = vmatpush1.msra.mxu0 0.0
        %7385 = vmatprep.subr.mxu0 0.0
        %7386 = vmatpush1.msra.mxu0 0.0
        %7387 = vmatprep.subr.mxu0 0.0
        %7388 = vmatpush1.msra.mxu0 0.0
        %7389 = vmatprep.subr.mxu0 0.0
        %7390 = vmatpush1.msra.mxu0 0.0
        %7391 = vmatprep.subr.mxu0 0.0
        %7392 = vmatpush1.msra.mxu0 0.0
        %7393 = vmatprep.subr.mxu0 0.0
        %7394 = vmatpush1.msra.mxu0 0.0
        %7395 = vmatprep.subr.mxu0 0.0
        %7396 = vmatpush1.msra.mxu0 0.0
        %7397 = vmatprep.subr.mxu0 0.0
        %7398 = vmatpush1.msra.mxu0 0.0
        %7399 = vmatprep.subr.mxu0 0.0
        %7400 = vmatpush1.msra.mxu0 0.0
        %7401 = vmatprep.subr.mxu0 0.0
        %7402 = vmatpush1.msra.mxu0 0.0
        %7403 = vmatprep.subr.mxu0 0.0
        %7404 = vmatpush1.msra.mxu0 0.0
        %7405 = vmatprep.subr.mxu0 0.0
        %7406 = vmatpush1.msra.mxu0 0.0
        %7407 = vmatprep.subr.mxu0 0.0
        %7408 = vmatpush1.msra.mxu0 0.0
        %7409 = vmatprep.subr.mxu0 0.0
        %7410 = vmatpush1.msra.mxu0 0.0
        %7411 = vmatprep.subr.mxu0 0.0
        %7412 = vmatpush1.msra.mxu0 0.0
        %7413 = vmatprep.subr.mxu0 0.0
        %7414 = vmatpush1.msra.mxu0 0.0
        %7415 = vmatprep.subr.mxu0 0.0
        %7416 = vmatpush1.msra.mxu0 0.0
        %7417 = vmatprep.subr.mxu0 0.0
        %7418 = vmatpush1.msra.mxu0 0.0
        %7419 = vmatprep.subr.mxu0 0.0
        %7420 = vmatpush1.msra.mxu0 0.0
        %7421 = vmatprep.mubr.f32.mxu0 0.0
        %7422 = vmatmul.mubr.f32.gmra.mrb[0].mxu0 %v7349
        %v7423 = vpop.f32.mrb[0].mxu0
        %v7424 = vadd.f32 0.0, %v7423
        %v7425 = vpop.f32.mrb[0].mxu0
        %v7426 = vadd.f32 0.0, %v7425
        %7427 = vdwg.mxu0
        %v7428 = vadd.f32 %v7340, %v7424
        %v7429 = vadd.f32 %v7341, %v7426
        %7430 = vrot.lane.b32.xlu0 %v6887, 127
        %v7431 = vpop.permute.xlu0 %7430
        %7432 = vrot.lane.b32.xlu0 %v6890, 127
        %v7433 = vpop.permute.xlu0 %7432
        %7434 = vrot.lane.b32.xlu0 %v6888, 127
        %v7435 = vpop.permute.xlu0 %7434
        %7436 = vrot.lane.b32.xlu0 %v6891, 127
        %v7437 = vpop.permute.xlu0 %7436
        %7438 = vrot.lane.b32.xlu0 %v6889, 127
        %v7439 = vpop.permute.xlu0 %7438
        %7440 = vrot.lane.b32.xlu0 %v6892, 127
        %v7441 = vpop.permute.xlu0 %7440
        %v7442 = vsel %vm1106, %v7435, %v7439
        %v7443 = vsel %vm1106, %v7437, %v7441
        %v7444 = vsel %vm1106, %v7431, %v7435
        %v7445 = vsel %vm1106, %v7433, %v7437
        %v7446 = vmul.f32 %v7444, %v7143
        %v7447 = vmul.f32 %v7442, %v7147
        %v7448 = vmul.f32 %v7445, %v7143
        %v7449 = vmul.f32 %v7443, %v7147
        %s7450 = scalar_lea.vmem %s6, 20
        %v7451 = vld [vmem:[%s7450] sm:$0x7]
        %v7453 = vsel %vm6960, %v7451, 0
        %v7456 = vsel %vm6964, %v7448, 0
        %v7459 = vsel %vm6964, %v7449, 0
        %7461 = vmatprep.subr.mxu0 %v7447
        %7462 = vmatpush1.msra.mxu0 %v7446
        %7463 = vmatprep.subr.mxu0 %v7459
        %7464 = vmatpush1.msra.mxu0 %v7456
        %7465 = vmatprep.subr.mxu0 0.0
        %7466 = vmatpush1.msra.mxu0 0.0
        %7467 = vmatprep.subr.mxu0 0.0
        %7468 = vmatpush1.msra.mxu0 0.0
        %7469 = vmatprep.subr.mxu0 0.0
        %7470 = vmatpush1.msra.mxu0 0.0
        %7471 = vmatprep.subr.mxu0 0.0
        %7472 = vmatpush1.msra.mxu0 0.0
        %7473 = vmatprep.subr.mxu0 0.0
        %7474 = vmatpush1.msra.mxu0 0.0
        %7475 = vmatprep.subr.mxu0 0.0
        %7476 = vmatpush1.msra.mxu0 0.0
        %7477 = vmatprep.subr.mxu0 0.0
        %7478 = vmatpush1.msra.mxu0 0.0
        %7479 = vmatprep.subr.mxu0 0.0
        %7480 = vmatpush1.msra.mxu0 0.0
        %7481 = vmatprep.subr.mxu0 0.0
        %7482 = vmatpush1.msra.mxu0 0.0
        %7483 = vmatprep.subr.mxu0 0.0
        %7484 = vmatpush1.msra.mxu0 0.0
        %7485 = vmatprep.subr.mxu0 0.0
        %7486 = vmatpush1.msra.mxu0 0.0
        %7487 = vmatprep.subr.mxu0 0.0
        %7488 = vmatpush1.msra.mxu0 0.0
        %7489 = vmatprep.subr.mxu0 0.0
        %7490 = vmatpush1.msra.mxu0 0.0
        %7491 = vmatprep.subr.mxu0 0.0
        %7492 = vmatpush1.msra.mxu0 0.0
        %7493 = vmatprep.subr.mxu0 0.0
        %7494 = vmatpush1.msra.mxu0 0.0
        %7495 = vmatprep.subr.mxu0 0.0
        %7496 = vmatpush1.msra.mxu0 0.0
        %7497 = vmatprep.subr.mxu0 0.0
        %7498 = vmatpush1.msra.mxu0 0.0
        %7499 = vmatprep.subr.mxu0 0.0
        %7500 = vmatpush1.msra.mxu0 0.0
        %7501 = vmatprep.subr.mxu0 0.0
        %7502 = vmatpush1.msra.mxu0 0.0
        %7503 = vmatprep.subr.mxu0 0.0
        %7504 = vmatpush1.msra.mxu0 0.0
        %7505 = vmatprep.subr.mxu0 0.0
        %7506 = vmatpush1.msra.mxu0 0.0
        %7507 = vmatprep.subr.mxu0 0.0
        %7508 = vmatpush1.msra.mxu0 0.0
        %7509 = vmatprep.subr.mxu0 0.0
        %7510 = vmatpush1.msra.mxu0 0.0
        %7511 = vmatprep.subr.mxu0 0.0
        %7512 = vmatpush1.msra.mxu0 0.0
        %7513 = vmatprep.subr.mxu0 0.0
        %7514 = vmatpush1.msra.mxu0 0.0
        %7515 = vmatprep.subr.mxu0 0.0
        %7516 = vmatpush1.msra.mxu0 0.0
        %7517 = vmatprep.subr.mxu0 0.0
        %7518 = vmatpush1.msra.mxu0 0.0
        %7519 = vmatprep.subr.mxu0 0.0
        %7520 = vmatpush1.msra.mxu0 0.0
        %7521 = vmatprep.subr.mxu0 0.0
        %7522 = vmatpush1.msra.mxu0 0.0
        %7523 = vmatprep.subr.mxu0 0.0
        %7524 = vmatpush1.msra.mxu0 0.0
        %7525 = vmatprep.mubr.f32.mxu0 0.0
        %7526 = vmatmul.mubr.f32.gmra.mrb[0].mxu0 %v7453
        %v7527 = vpop.f32.mrb[0].mxu0
        %v7528 = vadd.f32 0.0, %v7527
        %v7529 = vpop.f32.mrb[0].mxu0
        %v7530 = vadd.f32 0.0, %v7529
        %7531 = vdwg.mxu0
        %v7532 = vadd.f32 %v7428, %v7528
        %v7533 = vadd.f32 %v7429, %v7530
        %7534 = vrot.lane.b32.xlu0 %v6887, 113
        %v7535 = vpop.permute.xlu0 %7534
        %7536 = vrot.lane.b32.xlu0 %v6890, 113
        %v7537 = vpop.permute.xlu0 %7536
        %7538 = vrot.lane.b32.xlu0 %v6888, 113
        %v7539 = vpop.permute.xlu0 %7538
        %7540 = vrot.lane.b32.xlu0 %v6891, 113
        %v7541 = vpop.permute.xlu0 %7540
        %7542 = vrot.lane.b32.xlu0 %v6889, 113
        %v7543 = vpop.permute.xlu0 %7542
        %7544 = vrot.lane.b32.xlu0 %v6892, 113
        %v7545 = vpop.permute.xlu0 %7544
        %v7546 = vsel %vm1247, %v7539, %v7543
        %v7547 = vsel %vm1247, %v7541, %v7545
        %v7548 = vsel %vm1247, %v7535, %v7539
        %v7549 = vsel %vm1247, %v7537, %v7541
        %v7550 = vmul.f32 %v7548, %v6914
        %v7551 = vmul.f32 %v7546, %v6918
        %v7552 = vmul.f32 %v7549, %v6914
        %v7553 = vmul.f32 %v7547, %v6918
        %s7554 = scalar_lea.vmem %s6, 24
        %v7555 = vld [vmem:[%s7554] sm:$0x7]
        %v7557 = vsel %vm6960, %v7555, 0
        %v7560 = vsel %vm6964, %v7552, 0
        %v7563 = vsel %vm6964, %v7553, 0
        %7565 = vmatprep.subr.mxu0 %v7551
        %7566 = vmatpush1.msra.mxu0 %v7550
        %7567 = vmatprep.subr.mxu0 %v7563
        %7568 = vmatpush1.msra.mxu0 %v7560
        %7569 = vmatprep.subr.mxu0 0.0
        %7570 = vmatpush1.msra.mxu0 0.0
        %7571 = vmatprep.subr.mxu0 0.0
        %7572 = vmatpush1.msra.mxu0 0.0
        %7573 = vmatprep.subr.mxu0 0.0
        %7574 = vmatpush1.msra.mxu0 0.0
        %7575 = vmatprep.subr.mxu0 0.0
        %7576 = vmatpush1.msra.mxu0 0.0
        %7577 = vmatprep.subr.mxu0 0.0
        %7578 = vmatpush1.msra.mxu0 0.0
        %7579 = vmatprep.subr.mxu0 0.0
        %7580 = vmatpush1.msra.mxu0 0.0
        %7581 = vmatprep.subr.mxu0 0.0
        %7582 = vmatpush1.msra.mxu0 0.0
        %7583 = vmatprep.subr.mxu0 0.0
        %7584 = vmatpush1.msra.mxu0 0.0
        %7585 = vmatprep.subr.mxu0 0.0
        %7586 = vmatpush1.msra.mxu0 0.0
        %7587 = vmatprep.subr.mxu0 0.0
        %7588 = vmatpush1.msra.mxu0 0.0
        %7589 = vmatprep.subr.mxu0 0.0
        %7590 = vmatpush1.msra.mxu0 0.0
        %7591 = vmatprep.subr.mxu0 0.0
        %7592 = vmatpush1.msra.mxu0 0.0
        %7593 = vmatprep.subr.mxu0 0.0
        %7594 = vmatpush1.msra.mxu0 0.0
        %7595 = vmatprep.subr.mxu0 0.0
        %7596 = vmatpush1.msra.mxu0 0.0
        %7597 = vmatprep.subr.mxu0 0.0
        %7598 = vmatpush1.msra.mxu0 0.0
        %7599 = vmatprep.subr.mxu0 0.0
        %7600 = vmatpush1.msra.mxu0 0.0
        %7601 = vmatprep.subr.mxu0 0.0
        %7602 = vmatpush1.msra.mxu0 0.0
        %7603 = vmatprep.subr.mxu0 0.0
        %7604 = vmatpush1.msra.mxu0 0.0
        %7605 = vmatprep.subr.mxu0 0.0
        %7606 = vmatpush1.msra.mxu0 0.0
        %7607 = vmatprep.subr.mxu0 0.0
        %7608 = vmatpush1.msra.mxu0 0.0
        %7609 = vmatprep.subr.mxu0 0.0
        %7610 = vmatpush1.msra.mxu0 0.0
        %7611 = vmatprep.subr.mxu0 0.0
        %7612 = vmatpush1.msra.mxu0 0.0
        %7613 = vmatprep.subr.mxu0 0.0
        %7614 = vmatpush1.msra.mxu0 0.0
        %7615 = vmatprep.subr.mxu0 0.0
        %7616 = vmatpush1.msra.mxu0 0.0
        %7617 = vmatprep.subr.mxu0 0.0
        %7618 = vmatpush1.msra.mxu0 0.0
        %7619 = vmatprep.subr.mxu0 0.0
        %7620 = vmatpush1.msra.mxu0 0.0
        %7621 = vmatprep.subr.mxu0 0.0
        %7622 = vmatpush1.msra.mxu0 0.0
        %7623 = vmatprep.subr.mxu0 0.0
        %7624 = vmatpush1.msra.mxu0 0.0
        %7625 = vmatprep.subr.mxu0 0.0
        %7626 = vmatpush1.msra.mxu0 0.0
        %7627 = vmatprep.subr.mxu0 0.0
        %7628 = vmatpush1.msra.mxu0 0.0
        %7629 = vmatprep.mubr.f32.mxu0 0.0
        %7630 = vmatmul.mubr.f32.gmra.mrb[0].mxu0 %v7557
        %v7631 = vpop.f32.mrb[0].mxu0
        %v7632 = vadd.f32 0.0, %v7631
        %v7633 = vpop.f32.mrb[0].mxu0
        %v7634 = vadd.f32 0.0, %v7633
        %7635 = vdwg.mxu0
        %v7636 = vadd.f32 %v7532, %v7632
        %v7637 = vadd.f32 %v7533, %v7634
        %7638 = vrot.lane.b32.xlu0 %v6887, 112
        %v7639 = vpop.permute.xlu0 %7638
        %7640 = vrot.lane.b32.xlu0 %v6890, 112
        %v7641 = vpop.permute.xlu0 %7640
        %7642 = vrot.lane.b32.xlu0 %v6888, 112
        %v7643 = vpop.permute.xlu0 %7642
        %7644 = vrot.lane.b32.xlu0 %v6891, 112
        %v7645 = vpop.permute.xlu0 %7644
        %7646 = vrot.lane.b32.xlu0 %v6889, 112
        %v7647 = vpop.permute.xlu0 %7646
        %7648 = vrot.lane.b32.xlu0 %v6892, 112
        %v7649 = vpop.permute.xlu0 %7648
        %v7650 = vsel %vm1388, %v7643, %v7647
        %v7651 = vsel %vm1388, %v7645, %v7649
        %v7652 = vsel %vm1388, %v7639, %v7643
        %v7653 = vsel %vm1388, %v7641, %v7645
        %v7654 = vmul.f32 %v7652, %v6947
        %v7655 = vmul.f32 %v7650, %v6951
        %v7656 = vmul.f32 %v7653, %v6947
        %v7657 = vmul.f32 %v7651, %v6951
        %s7658 = scalar_lea.vmem %s6, 28
        %v7659 = vld [vmem:[%s7658] sm:$0x7]
        %v7661 = vsel %vm6960, %v7659, 0
        %v7664 = vsel %vm6964, %v7656, 0
        %v7667 = vsel %vm6964, %v7657, 0
        %7669 = vmatprep.subr.mxu0 %v7655
        %7670 = vmatpush1.msra.mxu0 %v7654
        %7671 = vmatprep.subr.mxu0 %v7667
        %7672 = vmatpush1.msra.mxu0 %v7664
        %7673 = vmatprep.subr.mxu0 0.0
        %7674 = vmatpush1.msra.mxu0 0.0
        %7675 = vmatprep.subr.mxu0 0.0
        %7676 = vmatpush1.msra.mxu0 0.0
        %7677 = vmatprep.subr.mxu0 0.0
        %7678 = vmatpush1.msra.mxu0 0.0
        %7679 = vmatprep.subr.mxu0 0.0
        %7680 = vmatpush1.msra.mxu0 0.0
        %7681 = vmatprep.subr.mxu0 0.0
        %7682 = vmatpush1.msra.mxu0 0.0
        %7683 = vmatprep.subr.mxu0 0.0
        %7684 = vmatpush1.msra.mxu0 0.0
        %7685 = vmatprep.subr.mxu0 0.0
        %7686 = vmatpush1.msra.mxu0 0.0
        %7687 = vmatprep.subr.mxu0 0.0
        %7688 = vmatpush1.msra.mxu0 0.0
        %7689 = vmatprep.subr.mxu0 0.0
        %7690 = vmatpush1.msra.mxu0 0.0
        %7691 = vmatprep.subr.mxu0 0.0
        %7692 = vmatpush1.msra.mxu0 0.0
        %7693 = vmatprep.subr.mxu0 0.0
        %7694 = vmatpush1.msra.mxu0 0.0
        %7695 = vmatprep.subr.mxu0 0.0
        %7696 = vmatpush1.msra.mxu0 0.0
        %7697 = vmatprep.subr.mxu0 0.0
        %7698 = vmatpush1.msra.mxu0 0.0
        %7699 = vmatprep.subr.mxu0 0.0
        %7700 = vmatpush1.msra.mxu0 0.0
        %7701 = vmatprep.subr.mxu0 0.0
        %7702 = vmatpush1.msra.mxu0 0.0
        %7703 = vmatprep.subr.mxu0 0.0
        %7704 = vmatpush1.msra.mxu0 0.0
        %7705 = vmatprep.subr.mxu0 0.0
        %7706 = vmatpush1.msra.mxu0 0.0
        %7707 = vmatprep.subr.mxu0 0.0
        %7708 = vmatpush1.msra.mxu0 0.0
        %7709 = vmatprep.subr.mxu0 0.0
        %7710 = vmatpush1.msra.mxu0 0.0
        %7711 = vmatprep.subr.mxu0 0.0
        %7712 = vmatpush1.msra.mxu0 0.0
        %7713 = vmatprep.subr.mxu0 0.0
        %7714 = vmatpush1.msra.mxu0 0.0
        %7715 = vmatprep.subr.mxu0 0.0
        %7716 = vmatpush1.msra.mxu0 0.0
        %7717 = vmatprep.subr.mxu0 0.0
        %7718 = vmatpush1.msra.mxu0 0.0
        %7719 = vmatprep.subr.mxu0 0.0
        %7720 = vmatpush1.msra.mxu0 0.0
        %7721 = vmatprep.subr.mxu0 0.0
        %7722 = vmatpush1.msra.mxu0 0.0
        %7723 = vmatprep.subr.mxu0 0.0
        %7724 = vmatpush1.msra.mxu0 0.0
        %7725 = vmatprep.subr.mxu0 0.0
        %7726 = vmatpush1.msra.mxu0 0.0
        %7727 = vmatprep.subr.mxu0 0.0
        %7728 = vmatpush1.msra.mxu0 0.0
        %7729 = vmatprep.subr.mxu0 0.0
        %7730 = vmatpush1.msra.mxu0 0.0
        %7731 = vmatprep.subr.mxu0 0.0
        %7732 = vmatpush1.msra.mxu0 0.0
        %7733 = vmatprep.mubr.f32.mxu0 0.0
        %7734 = vmatmul.mubr.f32.gmra.mrb[0].mxu0 %v7661
        %v7735 = vpop.f32.mrb[0].mxu0
        %v7736 = vadd.f32 0.0, %v7735
        %v7737 = vpop.f32.mrb[0].mxu0
        %v7738 = vadd.f32 0.0, %v7737
        %7739 = vdwg.mxu0
        %v7740 = vadd.f32 %v7636, %v7736
        %v7741 = vadd.f32 %v7637, %v7738
        %7742 = vrot.lane.b32.xlu0 %v6887, 111
        %v7743 = vpop.permute.xlu0 %7742
        %7744 = vrot.lane.b32.xlu0 %v6890, 111
        %v7745 = vpop.permute.xlu0 %7744
        %7746 = vrot.lane.b32.xlu0 %v6888, 111
        %v7747 = vpop.permute.xlu0 %7746
        %7748 = vrot.lane.b32.xlu0 %v6891, 111
        %v7749 = vpop.permute.xlu0 %7748
        %7750 = vrot.lane.b32.xlu0 %v6889, 111
        %v7751 = vpop.permute.xlu0 %7750
        %7752 = vrot.lane.b32.xlu0 %v6892, 111
        %v7753 = vpop.permute.xlu0 %7752
        %v7754 = vsel %vm1529, %v7747, %v7751
        %v7755 = vsel %vm1529, %v7749, %v7753
        %v7756 = vsel %vm1529, %v7743, %v7747
        %v7757 = vsel %vm1529, %v7745, %v7749
        %v7758 = vmul.f32 %v7756, %v7143
        %v7759 = vmul.f32 %v7754, %v7147
        %v7760 = vmul.f32 %v7757, %v7143
        %v7761 = vmul.f32 %v7755, %v7147
        %s7762 = scalar_lea.vmem %s6, 32
        %v7763 = vld [vmem:[%s7762] sm:$0x7]
        %v7765 = vsel %vm6960, %v7763, 0
        %v7768 = vsel %vm6964, %v7760, 0
        %v7771 = vsel %vm6964, %v7761, 0
        %7773 = vmatprep.subr.mxu0 %v7759
        %7774 = vmatpush1.msra.mxu0 %v7758
        %7775 = vmatprep.subr.mxu0 %v7771
        %7776 = vmatpush1.msra.mxu0 %v7768
        %7777 = vmatprep.subr.mxu0 0.0
        %7778 = vmatpush1.msra.mxu0 0.0
        %7779 = vmatprep.subr.mxu0 0.0
        %7780 = vmatpush1.msra.mxu0 0.0
        %7781 = vmatprep.subr.mxu0 0.0
        %7782 = vmatpush1.msra.mxu0 0.0
        %7783 = vmatprep.subr.mxu0 0.0
        %7784 = vmatpush1.msra.mxu0 0.0
        %7785 = vmatprep.subr.mxu0 0.0
        %7786 = vmatpush1.msra.mxu0 0.0
        %7787 = vmatprep.subr.mxu0 0.0
        %7788 = vmatpush1.msra.mxu0 0.0
        %7789 = vmatprep.subr.mxu0 0.0
        %7790 = vmatpush1.msra.mxu0 0.0
        %7791 = vmatprep.subr.mxu0 0.0
        %7792 = vmatpush1.msra.mxu0 0.0
        %7793 = vmatprep.subr.mxu0 0.0
        %7794 = vmatpush1.msra.mxu0 0.0
        %7795 = vmatprep.subr.mxu0 0.0
        %7796 = vmatpush1.msra.mxu0 0.0
        %7797 = vmatprep.subr.mxu0 0.0
        %7798 = vmatpush1.msra.mxu0 0.0
        %7799 = vmatprep.subr.mxu0 0.0
        %7800 = vmatpush1.msra.mxu0 0.0
        %7801 = vmatprep.subr.mxu0 0.0
        %7802 = vmatpush1.msra.mxu0 0.0
        %7803 = vmatprep.subr.mxu0 0.0
        %7804 = vmatpush1.msra.mxu0 0.0
        %7805 = vmatprep.subr.mxu0 0.0
        %7806 = vmatpush1.msra.mxu0 0.0
        %7807 = vmatprep.subr.mxu0 0.0
        %7808 = vmatpush1.msra.mxu0 0.0
        %7809 = vmatprep.subr.mxu0 0.0
        %7810 = vmatpush1.msra.mxu0 0.0
        %7811 = vmatprep.subr.mxu0 0.0
        %7812 = vmatpush1.msra.mxu0 0.0
        %7813 = vmatprep.subr.mxu0 0.0
        %7814 = vmatpush1.msra.mxu0 0.0
        %7815 = vmatprep.subr.mxu0 0.0
        %7816 = vmatpush1.msra.mxu0 0.0
        %7817 = vmatprep.subr.mxu0 0.0
        %7818 = vmatpush1.msra.mxu0 0.0
        %7819 = vmatprep.subr.mxu0 0.0
        %7820 = vmatpush1.msra.mxu0 0.0
        %7821 = vmatprep.subr.mxu0 0.0
        %7822 = vmatpush1.msra.mxu0 0.0
        %7823 = vmatprep.subr.mxu0 0.0
        %7824 = vmatpush1.msra.mxu0 0.0
        %7825 = vmatprep.subr.mxu0 0.0
        %7826 = vmatpush1.msra.mxu0 0.0
        %7827 = vmatprep.subr.mxu0 0.0
        %7828 = vmatpush1.msra.mxu0 0.0
        %7829 = vmatprep.subr.mxu0 0.0
        %7830 = vmatpush1.msra.mxu0 0.0
        %7831 = vmatprep.subr.mxu0 0.0
        %7832 = vmatpush1.msra.mxu0 0.0
        %7833 = vmatprep.subr.mxu0 0.0
        %7834 = vmatpush1.msra.mxu0 0.0
        %7835 = vmatprep.subr.mxu0 0.0
        %7836 = vmatpush1.msra.mxu0 0.0
        %7837 = vmatprep.mubr.f32.mxu0 0.0
        %7838 = vmatmul.mubr.f32.gmra.mrb[0].mxu0 %v7765
        %v7839 = vpop.f32.mrb[0].mxu0
        %v7840 = vadd.f32 0.0, %v7839
        %v7841 = vpop.f32.mrb[0].mxu0
        %v7842 = vadd.f32 0.0, %v7841
        %7843 = vdwg.mxu0
        %v7844 = vadd.f32 %v7740, %v7840
        %v7845 = vadd.f32 %v7741, %v7842
        %v7846 = vld [vmem:[%s7] sm:$0x7]
        %7848 = vset.pattern.permute.xlu0 0
        %7849 = vperm.xlu0 %7848, %v7846
        %v7850 = vpop.permute.xlu0 %7849
        %v7852 = vadd.f32 %v7844, %v7850
        %v7853 = vadd.f32 %v7845, %v7850
        %v7854 = vld [vmem:[%s368] sm:$0x38]
        %v7855 = vld [vmem:[%s368 + $0x8] sm:$0x38]
        %v7858 = vrot.slane %v7852, 5
        %v7859 = vrot.slane %v7853, 5
        %v7862 = vmul.f32 %v7854, %v7858
        %v7863 = vmul.f32 %v7855, %v7859
        %v7866 = vcombine.low %v7862, %v7863
        %v7867 = vcombine.high %v7862, %v7863
        %vm7868 = vcmask 1040384
        %vm7869 = vcmask 1044484
        %vm7870 = vmor %vm7868, %vm7869
        %v7871 = vrot.slane %v7866, 7
        %v7872 = vrot.slane %v7871, 4
        %v7873 = vrot.slane %v7867, 7
        %v7874 = vsel %vm7870, %v7872, %v7873
        %7876 = vst [vmem:[%s373] sm:$0x77] %v7874
        %p7877 = scmp.lt.s32.totalorder %s22, 3
        %s7878 = scalar_select %p7877, %s22, 3
        %s7879 = smul.addr %s7878, 2
        %s7880 = smul.addr %s7879, 4
        %s7881 = scalar_lea.vmem %s10, %s7880
        // Predicated region
        $region65: #{forward.1} parent=59 // pred_check
          %p7882 = pneg %p255
        $region66: #{forward.1} parent=59 // pred_check_branch
          %7884 = sbr.rel (%p7882) target = $region68
        $region67: #{forward.1} parent=59 // pred_region
          _
        $region68: #{forward.1} parent=59 // pred_fallthru
          _
      $region60: #{forward.1} parent=5 // pred_fallthru
        _
      %p7885 = scmp.le.s32.totalorder 2, %s17
      // Predicated region
      $region69: #{forward.1} parent=5 // pred_check
        %p7886 = pneg %p7885
      $region70: #{forward.1} parent=5 // pred_check_branch
        %7888 = sbr.rel (%p7886) target = $region72
      $region71: #{forward.1} parent=5 // pred_region
        %s7889 = ssub.s32 %s17, 2
        // Predicated region
        $region73: #{forward.1} parent=71 // pred_check
          %p7890 = pneg %p261
        $region74: #{forward.1} parent=71 // pred_check_branch
          %7892 = sbr.rel (%p7890) target = $region76
        $region75: #{forward.1} parent=71 // pred_region
          %p7893 = scmp.lt.s32.totalorder %s23, 3
          %s7894 = scalar_select %p7893, %s23, 3
          %s7895 = smul.addr %s7894, 2
          %s7896 = smul.addr %s7895, 4
          %s7897 = scalar_lea.vmem %s10, %s7896
        $region76: #{forward.1} parent=71 // pred_fallthru
          _
      $region72: #{forward.1} parent=5 // pred_fallthru
        _
    $region6: #{forward.1} parent=1 // loop_footer
      %s21 = sadd.s32 1, %s17
    $region7: #{forward.1} parent=1 // loop_footer_branch
      %16 = sbr.rel target = $region3
    $region8: #{forward.1} parent=1 // loop_exit
      _
    %7898 = vsyncpa [#allocation5], 1
    %s7899 = scalar_lea.sflag [#allocation5], 1
    %7900 = vsyncpa %s7899, 1

</llo_original>
